<compile_context>
chip_gen: v7x
topology: tpu7x:2x2x1
jax: 0.10.0
libtpu: 0.0.40
codegen_flags: <defaults>
</compile_context>

<pallas_src>
import functools

import jax
import jax.numpy as jnp
from jax.experimental import pallas as pl
from jax.experimental.pallas import tpu as pltpu


def ham_kernel(x_ref, w1t_ref, w2_ref, sw_ref, sb_ref, o_ref,
               pad_a_ref, pad_m_ref, sa_ref, *, H, W):
    """One (block_b, C, H*W) tile per grid step, fully batched.

    x_ref     : (Bb, C, HW)        VMEM input (C on sublanes, HW on lanes)
    w1t_ref   : (C, hid)           VMEM first 1x1 conv weight, transposed
    w2_ref    : (C, hid)           VMEM second 1x1 conv weight
    sw_ref    : (2*7*7,)           SMEM 7x7 spatial conv weight [chan, ky, kx]
    sb_ref    : (1,)               SMEM spatial conv bias
    o_ref     : (Bb, C, HW)        VMEM output
    pad_a_ref : (H+6, Bb, W+6)     VMEM zero-halo buffer for the avg map
    pad_m_ref : (H+6, Bb, W+6)     VMEM zero-halo buffer for the max map
    sa_ref    : (Bb, HW)           VMEM flat spatial-attention map
    """
    block_b, C, HW = x_ref.shape
    Hp, Wp = H + 6, W + 6

    x = x_ref[...].astype(jnp.float32)                     # (Bb, C, HW)
    w1t = w1t_ref[...].astype(jnp.float32)                 # (C, hid)
    w2 = w2_ref[...].astype(jnp.float32)                   # (C, hid)

    # ---------------- Channel attention (batched) ----------------
    avg_c = jnp.mean(x, axis=2, keepdims=True)             # (Bb, C, 1)  avg pool
    max_c = jnp.max(x, axis=2, keepdims=True)              # (Bb, C, 1)  max pool

    def mlp(v):                                            # (Bb, C, 1) -> (Bb, C, 1)
        h = jnp.sum(v * w1t[None, :, :], axis=1, keepdims=True)      # (Bb, 1, hid)
        h = jnp.maximum(h, 0.0)                                       # ReLU
        return jnp.sum(h * w2[None, :, :], axis=2, keepdims=True)     # (Bb, C, 1)

    ca = jax.nn.sigmoid(mlp(avg_c) + mlp(max_c))           # (Bb, C, 1)
    out1 = x * ca                                          # (Bb, C, HW) channel-attended

    # ---------------- Spatial attention ----------------
    # Channel mean/max on the VPU/XLU (no MXU needed for an 8-row matmul).
    avg_s = jnp.mean(out1, axis=1)                         # (Bb, HW)
    max_s = jnp.max(out1, axis=1)                          # (Bb, HW)

    # Zero the halo buffers every step (tiny; safe under core-parallel grid
    # partitioning where program_id 0 may never run on the second core).
    zeros = jnp.zeros((Hp, block_b, Wp), jnp.float32)
    pad_a_ref[...] = zeros
    pad_m_ref[...] = zeros

    # Scatter the flat maps into the 2-D halo buffers.  Row h of the flat map
    # is a (Bb, W) lane slice whose (sublane, lane) layout already matches the
    # destination, so each row is a single masked store.
    for h in range(H):
        pad_a_ref[3 + h, :, 3:3 + W] = avg_s[:, h * W:(h + 1) * W]
        pad_m_ref[3 + h, :, 3:3 + W] = max_s[:, h * W:(h + 1) * W]

    # Hoisted SMEM scalar reads: once per grid step, not per batch element.
    w_avg = [sw_ref[i] for i in range(49)]
    w_max = [sw_ref[49 + i] for i in range(49)]
    bias = sb_ref[0]

    # 7x7 SAME conv: one lane-offset slice per (kx, buffer), ky taps are free
    # major-axis slices of that band.  The zero halo supplies the padding, so
    # no validity masks are needed.
    acc = jnp.full((H, block_b, W), bias, dtype=jnp.float32)
    for kx in range(7):
        band_a = pad_a_ref[:, :, kx:kx + W]                # (Hp, Bb, W)
        band_m = pad_m_ref[:, :, kx:kx + W]                # (Hp, Bb, W)
        for ky in range(7):
            acc = (acc
                   + w_avg[ky * 7 + kx] * band_a[ky:ky + H]
                   + w_max[ky * 7 + kx] * band_m[ky:ky + H])
    sa = jax.nn.sigmoid(acc)                               # (H, Bb, W)

    # Back to the flat lane-dense layout: row h of sa is already (Bb, W) in
    # (sublane, lane) layout, so each row is one masked lane store.
    for h in range(H):
        sa_ref[:, h * W:(h + 1) * W] = sa[h]
    sa_flat = sa_ref[...]                                  # (Bb, HW)

    # ---------------- Apply & store (lane-dense (C, HW) stores) ----------------
    for b in range(block_b):
        o_ref[b] = (out1[b] * sa_flat[b:b + 1, :]).astype(o_ref.dtype)


def _tpu_vmem_capacity_bytes():
    """Physical per-core VMEM, with a conservative (v7x-sized) fallback."""
    try:
        return int(pltpu.get_tpu_info().vmem_capacity_bytes)
    except Exception:
        return 64 * 1024 * 1024


def _pick_block_b(batch, bytes_per_elem, budget, min_block_bytes=512 * 1024):
    """Largest divisor of `batch` whose honest VMEM footprint fits `budget`,
    preferring an even number of grid steps (keeps both TensorCores of a
    megacore / v7x chip busy) unless that would shrink blocks below ~512 KiB."""
    fits = [d for d in range(1, batch + 1)
            if batch % d == 0 and d * bytes_per_elem <= budget]
    if not fits:
        return 1
    best = max(fits)
    even = [d for d in fits
            if (batch // d) % 2 == 0 and d * bytes_per_elem >= min_block_bytes]
    if even:
        best = max(even)
    return best


def ham_pallas(x_nchw, w1, w2, sw, sb):
    """x_nchw: (B, C, H, W); w1: (C//16, C); w2: (C, C//16);
    sw: (1, 2, 7, 7); sb: (1,)."""
    B, C, H, W = x_nchw.shape
    HW = H * W
    hid = w1.shape[0]
    Hp, Wp = H + 6, W + 6

    # Free reshapes only -- no NCHW<->NHWC transposes around the kernel.
    x_flat = x_nchw.reshape(B, C, HW)
    w1t = jnp.asarray(w1, jnp.float32).T                  # (C, hid)
    w2f = jnp.asarray(w2, jnp.float32)                    # (C, hid)
    sw_flat = sw.reshape(-1).astype(jnp.float32)          # (98,) [avg taps | max taps]
    sbf = sb.astype(jnp.float32)

    # Generation-aware VMEM limits and block budgets.
    vmem_phys = _tpu_vmem_capacity_bytes()
    small_vmem = vmem_phys <= 80 * 1024 * 1024            # v7x-class (64 MiB / TC)
    vmem_limit = (40 if small_vmem else 80) * 1024 * 1024
    block_budget = (8 if small_vmem else 16) * 1024 * 1024

    # Honest per-batch-element VMEM footprint: double-buffered in/out blocks
    # plus the in-kernel f32 working copies (x, out1), flat maps and the
    # halo / sa scratch (which scale with block_b).
    itemsize = x_nchw.dtype.itemsize
    bytes_per_elem = (C * HW * (4 * itemsize + 2 * 4)
                      + HW * 4 * 3
                      + 2 * Hp * Wp * 4)
    block_b = _pick_block_b(B, bytes_per_elem, block_budget)
    grid = (B // block_b,)

    kernel = functools.partial(ham_kernel, H=H, W=W)

    out_flat = pl.pallas_call(
        kernel,
        out_shape=jax.ShapeDtypeStruct((B, C, HW), x_nchw.dtype),
        grid_spec=pltpu.PrefetchScalarGridSpec(
            num_scalar_prefetch=0,
            grid=grid,
            in_specs=[
                pl.BlockSpec((block_b, C, HW), lambda g: (g, 0, 0)),
                pl.BlockSpec((C, hid), lambda g: (0, 0)),
                pl.BlockSpec((C, hid), lambda g: (0, 0)),
                pl.BlockSpec(memory_space=pltpu.MemorySpace.SMEM),
                pl.BlockSpec(memory_space=pltpu.MemorySpace.SMEM),
            ],
            out_specs=pl.BlockSpec((block_b, C, HW), lambda g: (g, 0, 0)),
            scratch_shapes=[
                pltpu.VMEM((Hp, block_b, Wp), jnp.float32),   # avg halo buffer
                pltpu.VMEM((Hp, block_b, Wp), jnp.float32),   # max halo buffer
                pltpu.VMEM((block_b, HW), jnp.float32),       # flat spatial attention
            ],
        ),
        compiler_params=pltpu.CompilerParams(
            dimension_semantics=("parallel",),
            vmem_limit_bytes=vmem_limit,
        ),
    )(x_flat, w1t, w2f, sw_flat, sbf)

    return out_flat.reshape(B, C, H, W)


def ham_reference(x, w1, w2, sw, sb):
    """Pure-JAX reference mirroring the PyTorch HAM forward (NCHW)."""
    avg = jnp.mean(x, axis=(2, 3))                          # (B, C)
    mx = jnp.max(x, axis=(2, 3))                            # (B, C)

    def mlp(v):
        return jnp.maximum(v @ w1.T, 0.0) @ w2.T            # (B, C)

    ca = jax.nn.sigmoid(mlp(avg) + mlp(mx))                 # (B, C)
    out1 = x * ca[:, :, None, None]

    avgm = jnp.mean(out1, axis=1, keepdims=True)            # (B, 1, H, W)
    maxm = jnp.max(out1, axis=1, keepdims=True)             # (B, 1, H, W)
    sp_in = jnp.concatenate([avgm, maxm], axis=1)           # (B, 2, H, W)
    conv = jax.lax.conv_general_dilated(
        sp_in, sw, window_strides=(1, 1), padding=((3, 3), (3, 3)),
        dimension_numbers=("NCHW", "OIHW", "NCHW")) + sb[0]
    sa = jax.nn.sigmoid(conv)                               # (B, 1, H, W)
    return out1 * sa


if __name__ == "__main__":
    B, C, H, W = 2, 32, 16, 16        # channel=32 -> hidden = channel // 16 = 2
    hid = C // 16

    key = jax.random.PRNGKey(0)
    kx, k1, k2, k3 = jax.random.split(key, 4)

    x = jax.random.normal(kx, (B, C, H, W), dtype=jnp.float32)
    w1 = jax.random.normal(k1, (hid, C), dtype=jnp.float32) * 0.2     # conv1 1x1, no bias
    w2 = jax.random.normal(k2, (C, hid), dtype=jnp.float32) * 0.2     # conv2 1x1, no bias
    sw = jax.random.normal(k3, (1, 2, 7, 7), dtype=jnp.float32) * 0.1 # 7x7 spatial conv
    sb = jnp.array([0.05], dtype=jnp.float32)                          # its bias

    out = jax.block_until_ready(ham_pallas(x, w1, w2, sw, sb))

    ref = jax.block_until_ready(ham_reference(x, w1, w2, sw, sb))
    max_err = float(jnp.max(jnp.abs(out - ref)))
    assert out.shape == (B, C, H, W)
    # Kernel math is exact f32 on the VPU; tolerance covers the reference's
    # default-precision conv/matmuls and EUP sigmoid rounding.
    assert max_err < 2e-3, f"mismatch vs reference: {max_err}"

    print("KERNEL_OK")
</pallas_src>

<mosaic_0001>
module attributes {stable_mosaic.version = 11 : i64} {
  func.func @ham_kernel(%arg0: i32, %arg1: memref<2x32x256xf32, #tpu.memory_space<vmem>>, %arg2: memref<32x2xf32, #tpu.memory_space<vmem>>, %arg3: memref<32x2xf32, #tpu.memory_space<vmem>>, %arg4: memref<98xf32, #tpu.memory_space<smem>>, %arg5: memref<1xf32, #tpu.memory_space<smem>>, %arg6: memref<2x32x256xf32, #tpu.memory_space<vmem>>, %arg7: memref<22x2x22xf32, #tpu.memory_space<vmem>>, %arg8: memref<22x2x22xf32, #tpu.memory_space<vmem>>, %arg9: memref<2x256xf32, #tpu.memory_space<vmem>>) attributes {dimension_semantics = [#tpu.dimension_semantics<parallel>], iteration_bounds = array<i64: 1>, scalar_prefetch = 0 : i64, scratch_operands = 3 : i64, tpu.core_type = #tpu.core_type<tc>, window_params = [{transform_indices = @transform_0, window_bounds = array<i64: 2, 32, 256>}, {pipeline_mode = #tpu.pipeline_mode<synchronous>, transform_indices = @transform_1, window_bounds = array<i64: 32, 2>}, {pipeline_mode = #tpu.pipeline_mode<synchronous>, transform_indices = @transform_2, window_bounds = array<i64: 32, 2>}, {transform_indices = @transform_3, window_bounds = array<i64: 98>}, {transform_indices = @transform_4, window_bounds = array<i64: 1>}, {transform_indices = @transform_5, window_bounds = array<i64: 2, 32, 256>}]} {
    %c0 = arith.constant 0 : index
    %c0_0 = arith.constant 0 : index
    %c0_1 = arith.constant 0 : index
    %0 = vector.load %arg1[%c0, %c0_0, %c0_1] : memref<2x32x256xf32, #tpu.memory_space<vmem>>, vector<2x32x256xf32>
    %c0_2 = arith.constant 0 : index
    %c0_3 = arith.constant 0 : index
    %1 = vector.load %arg2[%c0_2, %c0_3] : memref<32x2xf32, #tpu.memory_space<vmem>>, vector<32x2xf32>
    %c0_4 = arith.constant 0 : index
    %c0_5 = arith.constant 0 : index
    %2 = vector.load %arg3[%c0_4, %c0_5] : memref<32x2xf32, #tpu.memory_space<vmem>>, vector<32x2xf32>
    %cst = arith.constant dense<0.000000e+00> : vector<2x32xf32>
    %3 = vector.multi_reduction <add>, %0, %cst [2] : vector<2x32x256xf32> to vector<2x32xf32>
    %4 = vector.shape_cast %3 : vector<2x32xf32> to vector<2x32x1xf32>
    %cst_6 = arith.constant 2.560000e+02 : f32
    %5 = vector.broadcast %cst_6 : f32 to vector<2x32x1xf32>
    %6 = arith.divf %4, %5 : vector<2x32x1xf32>
    %cst_7 = arith.constant dense<0xFF800000> : vector<2x32xf32>
    %7 = vector.multi_reduction <maximumf>, %0, %cst_7 [2] : vector<2x32x256xf32> to vector<2x32xf32>
    %8 = vector.shape_cast %7 : vector<2x32xf32> to vector<2x32x1xf32>
    %9 = vector.shape_cast %1 : vector<32x2xf32> to vector<1x32x2xf32>
    %10 = vector.broadcast %6 : vector<2x32x1xf32> to vector<2x32x2xf32>
    %11 = vector.broadcast %9 : vector<1x32x2xf32> to vector<2x32x2xf32>
    %12 = arith.mulf %10, %11 : vector<2x32x2xf32>
    %cst_8 = arith.constant dense<0.000000e+00> : vector<2x2xf32>
    %13 = vector.multi_reduction <add>, %12, %cst_8 [1] : vector<2x32x2xf32> to vector<2x2xf32>
    %14 = vector.shape_cast %13 : vector<2x2xf32> to vector<2x1x2xf32>
    %cst_9 = arith.constant 0.000000e+00 : f32
    %15 = vector.broadcast %cst_9 : f32 to vector<2x1x2xf32>
    %16 = arith.maximumf %14, %15 : vector<2x1x2xf32>
    %17 = vector.shape_cast %2 : vector<32x2xf32> to vector<1x32x2xf32>
    %18 = vector.broadcast %16 : vector<2x1x2xf32> to vector<2x32x2xf32>
    %19 = vector.broadcast %17 : vector<1x32x2xf32> to vector<2x32x2xf32>
    %20 = arith.mulf %18, %19 : vector<2x32x2xf32>
    %cst_10 = arith.constant dense<0.000000e+00> : vector<2x32xf32>
    %21 = vector.multi_reduction <add>, %20, %cst_10 [2] : vector<2x32x2xf32> to vector<2x32xf32>
    %22 = vector.shape_cast %21 : vector<2x32xf32> to vector<2x32x1xf32>
    %23 = vector.shape_cast %1 : vector<32x2xf32> to vector<1x32x2xf32>
    %24 = vector.broadcast %8 : vector<2x32x1xf32> to vector<2x32x2xf32>
    %25 = vector.broadcast %23 : vector<1x32x2xf32> to vector<2x32x2xf32>
    %26 = arith.mulf %24, %25 : vector<2x32x2xf32>
    %cst_11 = arith.constant dense<0.000000e+00> : vector<2x2xf32>
    %27 = vector.multi_reduction <add>, %26, %cst_11 [1] : vector<2x32x2xf32> to vector<2x2xf32>
    %28 = vector.shape_cast %27 : vector<2x2xf32> to vector<2x1x2xf32>
    %cst_12 = arith.constant 0.000000e+00 : f32
    %29 = vector.broadcast %cst_12 : f32 to vector<2x1x2xf32>
    %30 = arith.maximumf %28, %29 : vector<2x1x2xf32>
    %31 = vector.shape_cast %2 : vector<32x2xf32> to vector<1x32x2xf32>
    %32 = vector.broadcast %30 : vector<2x1x2xf32> to vector<2x32x2xf32>
    %33 = vector.broadcast %31 : vector<1x32x2xf32> to vector<2x32x2xf32>
    %34 = arith.mulf %32, %33 : vector<2x32x2xf32>
    %cst_13 = arith.constant dense<0.000000e+00> : vector<2x32xf32>
    %35 = vector.multi_reduction <add>, %34, %cst_13 [2] : vector<2x32x2xf32> to vector<2x32xf32>
    %36 = vector.shape_cast %35 : vector<2x32xf32> to vector<2x32x1xf32>
    %37 = arith.addf %22, %36 : vector<2x32x1xf32>
    %38 = arith.negf %37 : vector<2x32x1xf32>
    %39 = math.exp %38 : vector<2x32x1xf32>
    %cst_14 = arith.constant 1.000000e+00 : f32
    %40 = vector.broadcast %cst_14 : f32 to vector<2x32x1xf32>
    %41 = arith.addf %40, %39 : vector<2x32x1xf32>
    %42 = arith.divf %40, %41 : vector<2x32x1xf32>
    %43 = vector.broadcast %42 : vector<2x32x1xf32> to vector<2x32x256xf32>
    %44 = arith.mulf %0, %43 : vector<2x32x256xf32>
    %cst_15 = arith.constant dense<0.000000e+00> : vector<2x256xf32>
    %45 = vector.multi_reduction <add>, %44, %cst_15 [1] : vector<2x32x256xf32> to vector<2x256xf32>
    %cst_16 = arith.constant 3.200000e+01 : f32
    %46 = vector.broadcast %cst_16 : f32 to vector<2x256xf32>
    %47 = arith.divf %45, %46 : vector<2x256xf32>
    %cst_17 = arith.constant dense<0xFF800000> : vector<2x256xf32>
    %48 = vector.multi_reduction <maximumf>, %44, %cst_17 [1] : vector<2x32x256xf32> to vector<2x256xf32>
    %cst_18 = arith.constant 0.000000e+00 : f32
    %49 = vector.broadcast %cst_18 : f32 to vector<22x2x22xf32>
    %c0_19 = arith.constant 0 : index
    %c0_20 = arith.constant 0 : index
    %c0_21 = arith.constant 0 : index
    %50 = vector.load %arg7[%c0_19, %c0_20, %c0_21] : memref<22x2x22xf32, #tpu.memory_space<vmem>>, vector<22x2x22xf32>
    tpu.vector_store %arg7[%c0_19, %c0_20, %c0_21], %49 {strides = array<i32>} : memref<22x2x22xf32, #tpu.memory_space<vmem>>, vector<22x2x22xf32>,
    %c0_22 = arith.constant 0 : index
    %c0_23 = arith.constant 0 : index
    %c0_24 = arith.constant 0 : index
    %51 = vector.load %arg8[%c0_22, %c0_23, %c0_24] : memref<22x2x22xf32, #tpu.memory_space<vmem>>, vector<22x2x22xf32>
    tpu.vector_store %arg8[%c0_22, %c0_23, %c0_24], %49 {strides = array<i32>} : memref<22x2x22xf32, #tpu.memory_space<vmem>>, vector<22x2x22xf32>,
    %52 = vector.extract_strided_slice %47 {offsets = [0, 0], sizes = [2, 16], strides = [1, 1]} : vector<2x256xf32> to vector<2x16xf32>
    %c3 = arith.constant 3 : index
    %c0_25 = arith.constant 0 : index
    %c3_26 = arith.constant 3 : index
    %53 = vector.load %arg7[%c3, %c0_25, %c3_26] : memref<22x2x22xf32, #tpu.memory_space<vmem>>, vector<1x2x16xf32>
    %54 = vector.shape_cast %53 : vector<1x2x16xf32> to vector<2x16xf32>
    %55 = vector.shape_cast %52 : vector<2x16xf32> to vector<1x2x16xf32>
    tpu.vector_store %arg7[%c3, %c0_25, %c3_26], %55 {strides = array<i32>} : memref<22x2x22xf32, #tpu.memory_space<vmem>>, vector<1x2x16xf32>,
    %56 = vector.extract_strided_slice %48 {offsets = [0, 0], sizes = [2, 16], strides = [1, 1]} : vector<2x256xf32> to vector<2x16xf32>
    %c3_27 = arith.constant 3 : index
    %c0_28 = arith.constant 0 : index
    %c3_29 = arith.constant 3 : index
    %57 = vector.load %arg8[%c3_27, %c0_28, %c3_29] : memref<22x2x22xf32, #tpu.memory_space<vmem>>, vector<1x2x16xf32>
    %58 = vector.shape_cast %57 : vector<1x2x16xf32> to vector<2x16xf32>
    %59 = vector.shape_cast %56 : vector<2x16xf32> to vector<1x2x16xf32>
    tpu.vector_store %arg8[%c3_27, %c0_28, %c3_29], %59 {strides = array<i32>} : memref<22x2x22xf32, #tpu.memory_space<vmem>>, vector<1x2x16xf32>,
    %60 = vector.extract_strided_slice %47 {offsets = [0, 16], sizes = [2, 16], strides = [1, 1]} : vector<2x256xf32> to vector<2x16xf32>
    %c4 = arith.constant 4 : index
    %c0_30 = arith.constant 0 : index
    %c3_31 = arith.constant 3 : index
    %61 = vector.load %arg7[%c4, %c0_30, %c3_31] : memref<22x2x22xf32, #tpu.memory_space<vmem>>, vector<1x2x16xf32>
    %62 = vector.shape_cast %61 : vector<1x2x16xf32> to vector<2x16xf32>
    %63 = vector.shape_cast %60 : vector<2x16xf32> to vector<1x2x16xf32>
    tpu.vector_store %arg7[%c4, %c0_30, %c3_31], %63 {strides = array<i32>} : memref<22x2x22xf32, #tpu.memory_space<vmem>>, vector<1x2x16xf32>,
    %64 = vector.extract_strided_slice %48 {offsets = [0, 16], sizes = [2, 16], strides = [1, 1]} : vector<2x256xf32> to vector<2x16xf32>
    %c4_32 = arith.constant 4 : index
    %c0_33 = arith.constant 0 : index
    %c3_34 = arith.constant 3 : index
    %65 = vector.load %arg8[%c4_32, %c0_33, %c3_34] : memref<22x2x22xf32, #tpu.memory_space<vmem>>, vector<1x2x16xf32>
    %66 = vector.shape_cast %65 : vector<1x2x16xf32> to vector<2x16xf32>
    %67 = vector.shape_cast %64 : vector<2x16xf32> to vector<1x2x16xf32>
    tpu.vector_store %arg8[%c4_32, %c0_33, %c3_34], %67 {strides = array<i32>} : memref<22x2x22xf32, #tpu.memory_space<vmem>>, vector<1x2x16xf32>,
    %68 = vector.extract_strided_slice %47 {offsets = [0, 32], sizes = [2, 16], strides = [1, 1]} : vector<2x256xf32> to vector<2x16xf32>
    %c5 = arith.constant 5 : index
    %c0_35 = arith.constant 0 : index
    %c3_36 = arith.constant 3 : index
    %69 = vector.load %arg7[%c5, %c0_35, %c3_36] : memref<22x2x22xf32, #tpu.memory_space<vmem>>, vector<1x2x16xf32>
    %70 = vector.shape_cast %69 : vector<1x2x16xf32> to vector<2x16xf32>
    %71 = vector.shape_cast %68 : vector<2x16xf32> to vector<1x2x16xf32>
    tpu.vector_store %arg7[%c5, %c0_35, %c3_36], %71 {strides = array<i32>} : memref<22x2x22xf32, #tpu.memory_space<vmem>>, vector<1x2x16xf32>,
    %72 = vector.extract_strided_slice %48 {offsets = [0, 32], sizes = [2, 16], strides = [1, 1]} : vector<2x256xf32> to vector<2x16xf32>
    %c5_37 = arith.constant 5 : index
    %c0_38 = arith.constant 0 : index
    %c3_39 = arith.constant 3 : index
    %73 = vector.load %arg8[%c5_37, %c0_38, %c3_39] : memref<22x2x22xf32, #tpu.memory_space<vmem>>, vector<1x2x16xf32>
    %74 = vector.shape_cast %73 : vector<1x2x16xf32> to vector<2x16xf32>
    %75 = vector.shape_cast %72 : vector<2x16xf32> to vector<1x2x16xf32>
    tpu.vector_store %arg8[%c5_37, %c0_38, %c3_39], %75 {strides = array<i32>} : memref<22x2x22xf32, #tpu.memory_space<vmem>>, vector<1x2x16xf32>,
    %76 = vector.extract_strided_slice %47 {offsets = [0, 48], sizes = [2, 16], strides = [1, 1]} : vector<2x256xf32> to vector<2x16xf32>
    %c6 = arith.constant 6 : index
    %c0_40 = arith.constant 0 : index
    %c3_41 = arith.constant 3 : index
    %77 = vector.load %arg7[%c6, %c0_40, %c3_41] : memref<22x2x22xf32, #tpu.memory_space<vmem>>, vector<1x2x16xf32>
    %78 = vector.shape_cast %77 : vector<1x2x16xf32> to vector<2x16xf32>
    %79 = vector.shape_cast %76 : vector<2x16xf32> to vector<1x2x16xf32>
    tpu.vector_store %arg7[%c6, %c0_40, %c3_41], %79 {strides = array<i32>} : memref<22x2x22xf32, #tpu.memory_space<vmem>>, vector<1x2x16xf32>,
    %80 = vector.extract_strided_slice %48 {offsets = [0, 48], sizes = [2, 16], strides = [1, 1]} : vector<2x256xf32> to vector<2x16xf32>
    %c6_42 = arith.constant 6 : index
    %c0_43 = arith.constant 0 : index
    %c3_44 = arith.constant 3 : index
    %81 = vector.load %arg8[%c6_42, %c0_43, %c3_44] : memref<22x2x22xf32, #tpu.memory_space<vmem>>, vector<1x2x16xf32>
    %82 = vector.shape_cast %81 : vector<1x2x16xf32> to vector<2x16xf32>
    %83 = vector.shape_cast %80 : vector<2x16xf32> to vector<1x2x16xf32>
    tpu.vector_store %arg8[%c6_42, %c0_43, %c3_44], %83 {strides = array<i32>} : memref<22x2x22xf32, #tpu.memory_space<vmem>>, vector<1x2x16xf32>,
    %84 = vector.extract_strided_slice %47 {offsets = [0, 64], sizes = [2, 16], strides = [1, 1]} : vector<2x256xf32> to vector<2x16xf32>
    %c7 = arith.constant 7 : index
    %c0_45 = arith.constant 0 : index
    %c3_46 = arith.constant 3 : index
    %85 = vector.load %arg7[%c7, %c0_45, %c3_46] : memref<22x2x22xf32, #tpu.memory_space<vmem>>, vector<1x2x16xf32>
    %86 = vector.shape_cast %85 : vector<1x2x16xf32> to vector<2x16xf32>
    %87 = vector.shape_cast %84 : vector<2x16xf32> to vector<1x2x16xf32>
    tpu.vector_store %arg7[%c7, %c0_45, %c3_46], %87 {strides = array<i32>} : memref<22x2x22xf32, #tpu.memory_space<vmem>>, vector<1x2x16xf32>,
    %88 = vector.extract_strided_slice %48 {offsets = [0, 64], sizes = [2, 16], strides = [1, 1]} : vector<2x256xf32> to vector<2x16xf32>
    %c7_47 = arith.constant 7 : index
    %c0_48 = arith.constant 0 : index
    %c3_49 = arith.constant 3 : index
    %89 = vector.load %arg8[%c7_47, %c0_48, %c3_49] : memref<22x2x22xf32, #tpu.memory_space<vmem>>, vector<1x2x16xf32>
    %90 = vector.shape_cast %89 : vector<1x2x16xf32> to vector<2x16xf32>
    %91 = vector.shape_cast %88 : vector<2x16xf32> to vector<1x2x16xf32>
    tpu.vector_store %arg8[%c7_47, %c0_48, %c3_49], %91 {strides = array<i32>} : memref<22x2x22xf32, #tpu.memory_space<vmem>>, vector<1x2x16xf32>,
    %92 = vector.extract_strided_slice %47 {offsets = [0, 80], sizes = [2, 16], strides = [1, 1]} : vector<2x256xf32> to vector<2x16xf32>
    %c8 = arith.constant 8 : index
    %c0_50 = arith.constant 0 : index
    %c3_51 = arith.constant 3 : index
    %93 = vector.load %arg7[%c8, %c0_50, %c3_51] : memref<22x2x22xf32, #tpu.memory_space<vmem>>, vector<1x2x16xf32>
    %94 = vector.shape_cast %93 : vector<1x2x16xf32> to vector<2x16xf32>
    %95 = vector.shape_cast %92 : vector<2x16xf32> to vector<1x2x16xf32>
    tpu.vector_store %arg7[%c8, %c0_50, %c3_51], %95 {strides = array<i32>} : memref<22x2x22xf32, #tpu.memory_space<vmem>>, vector<1x2x16xf32>,
    %96 = vector.extract_strided_slice %48 {offsets = [0, 80], sizes = [2, 16], strides = [1, 1]} : vector<2x256xf32> to vector<2x16xf32>
    %c8_52 = arith.constant 8 : index
    %c0_53 = arith.constant 0 : index
    %c3_54 = arith.constant 3 : index
    %97 = vector.load %arg8[%c8_52, %c0_53, %c3_54] : memref<22x2x22xf32, #tpu.memory_space<vmem>>, vector<1x2x16xf32>
    %98 = vector.shape_cast %97 : vector<1x2x16xf32> to vector<2x16xf32>
    %99 = vector.shape_cast %96 : vector<2x16xf32> to vector<1x2x16xf32>
    tpu.vector_store %arg8[%c8_52, %c0_53, %c3_54], %99 {strides = array<i32>} : memref<22x2x22xf32, #tpu.memory_space<vmem>>, vector<1x2x16xf32>,
    %100 = vector.extract_strided_slice %47 {offsets = [0, 96], sizes = [2, 16], strides = [1, 1]} : vector<2x256xf32> to vector<2x16xf32>
    %c9 = arith.constant 9 : index
    %c0_55 = arith.constant 0 : index
    %c3_56 = arith.constant 3 : index
    %101 = vector.load %arg7[%c9, %c0_55, %c3_56] : memref<22x2x22xf32, #tpu.memory_space<vmem>>, vector<1x2x16xf32>
    %102 = vector.shape_cast %101 : vector<1x2x16xf32> to vector<2x16xf32>
    %103 = vector.shape_cast %100 : vector<2x16xf32> to vector<1x2x16xf32>
    tpu.vector_store %arg7[%c9, %c0_55, %c3_56], %103 {strides = array<i32>} : memref<22x2x22xf32, #tpu.memory_space<vmem>>, vector<1x2x16xf32>,
    %104 = vector.extract_strided_slice %48 {offsets = [0, 96], sizes = [2, 16], strides = [1, 1]} : vector<2x256xf32> to vector<2x16xf32>
    %c9_57 = arith.constant 9 : index
    %c0_58 = arith.constant 0 : index
    %c3_59 = arith.constant 3 : index
    %105 = vector.load %arg8[%c9_57, %c0_58, %c3_59] : memref<22x2x22xf32, #tpu.memory_space<vmem>>, vector<1x2x16xf32>
    %106 = vector.shape_cast %105 : vector<1x2x16xf32> to vector<2x16xf32>
    %107 = vector.shape_cast %104 : vector<2x16xf32> to vector<1x2x16xf32>
    tpu.vector_store %arg8[%c9_57, %c0_58, %c3_59], %107 {strides = array<i32>} : memref<22x2x22xf32, #tpu.memory_space<vmem>>, vector<1x2x16xf32>,
    %108 = vector.extract_strided_slice %47 {offsets = [0, 112], sizes = [2, 16], strides = [1, 1]} : vector<2x256xf32> to vector<2x16xf32>
    %c10 = arith.constant 10 : index
    %c0_60 = arith.constant 0 : index
    %c3_61 = arith.constant 3 : index
    %109 = vector.load %arg7[%c10, %c0_60, %c3_61] : memref<22x2x22xf32, #tpu.memory_space<vmem>>, vector<1x2x16xf32>
    %110 = vector.shape_cast %109 : vector<1x2x16xf32> to vector<2x16xf32>
    %111 = vector.shape_cast %108 : vector<2x16xf32> to vector<1x2x16xf32>
    tpu.vector_store %arg7[%c10, %c0_60, %c3_61], %111 {strides = array<i32>} : memref<22x2x22xf32, #tpu.memory_space<vmem>>, vector<1x2x16xf32>,
    %112 = vector.extract_strided_slice %48 {offsets = [0, 112], sizes = [2, 16], strides = [1, 1]} : vector<2x256xf32> to vector<2x16xf32>
    %c10_62 = arith.constant 10 : index
    %c0_63 = arith.constant 0 : index
    %c3_64 = arith.constant 3 : index
    %113 = vector.load %arg8[%c10_62, %c0_63, %c3_64] : memref<22x2x22xf32, #tpu.memory_space<vmem>>, vector<1x2x16xf32>
    %114 = vector.shape_cast %113 : vector<1x2x16xf32> to vector<2x16xf32>
    %115 = vector.shape_cast %112 : vector<2x16xf32> to vector<1x2x16xf32>
    tpu.vector_store %arg8[%c10_62, %c0_63, %c3_64], %115 {strides = array<i32>} : memref<22x2x22xf32, #tpu.memory_space<vmem>>, vector<1x2x16xf32>,
    %116 = vector.extract_strided_slice %47 {offsets = [0, 128], sizes = [2, 16], strides = [1, 1]} : vector<2x256xf32> to vector<2x16xf32>
    %c11 = arith.constant 11 : index
    %c0_65 = arith.constant 0 : index
    %c3_66 = arith.constant 3 : index
    %117 = vector.load %arg7[%c11, %c0_65, %c3_66] : memref<22x2x22xf32, #tpu.memory_space<vmem>>, vector<1x2x16xf32>
    %118 = vector.shape_cast %117 : vector<1x2x16xf32> to vector<2x16xf32>
    %119 = vector.shape_cast %116 : vector<2x16xf32> to vector<1x2x16xf32>
    tpu.vector_store %arg7[%c11, %c0_65, %c3_66], %119 {strides = array<i32>} : memref<22x2x22xf32, #tpu.memory_space<vmem>>, vector<1x2x16xf32>,
    %120 = vector.extract_strided_slice %48 {offsets = [0, 128], sizes = [2, 16], strides = [1, 1]} : vector<2x256xf32> to vector<2x16xf32>
    %c11_67 = arith.constant 11 : index
    %c0_68 = arith.constant 0 : index
    %c3_69 = arith.constant 3 : index
    %121 = vector.load %arg8[%c11_67, %c0_68, %c3_69] : memref<22x2x22xf32, #tpu.memory_space<vmem>>, vector<1x2x16xf32>
    %122 = vector.shape_cast %121 : vector<1x2x16xf32> to vector<2x16xf32>
    %123 = vector.shape_cast %120 : vector<2x16xf32> to vector<1x2x16xf32>
    tpu.vector_store %arg8[%c11_67, %c0_68, %c3_69], %123 {strides = array<i32>} : memref<22x2x22xf32, #tpu.memory_space<vmem>>, vector<1x2x16xf32>,
    %124 = vector.extract_strided_slice %47 {offsets = [0, 144], sizes = [2, 16], strides = [1, 1]} : vector<2x256xf32> to vector<2x16xf32>
    %c12 = arith.constant 12 : index
    %c0_70 = arith.constant 0 : index
    %c3_71 = arith.constant 3 : index
    %125 = vector.load %arg7[%c12, %c0_70, %c3_71] : memref<22x2x22xf32, #tpu.memory_space<vmem>>, vector<1x2x16xf32>
    %126 = vector.shape_cast %125 : vector<1x2x16xf32> to vector<2x16xf32>
    %127 = vector.shape_cast %124 : vector<2x16xf32> to vector<1x2x16xf32>
    tpu.vector_store %arg7[%c12, %c0_70, %c3_71], %127 {strides = array<i32>} : memref<22x2x22xf32, #tpu.memory_space<vmem>>, vector<1x2x16xf32>,
    %128 = vector.extract_strided_slice %48 {offsets = [0, 144], sizes = [2, 16], strides = [1, 1]} : vector<2x256xf32> to vector<2x16xf32>
    %c12_72 = arith.constant 12 : index
    %c0_73 = arith.constant 0 : index
    %c3_74 = arith.constant 3 : index
    %129 = vector.load %arg8[%c12_72, %c0_73, %c3_74] : memref<22x2x22xf32, #tpu.memory_space<vmem>>, vector<1x2x16xf32>
    %130 = vector.shape_cast %129 : vector<1x2x16xf32> to vector<2x16xf32>
    %131 = vector.shape_cast %128 : vector<2x16xf32> to vector<1x2x16xf32>
    tpu.vector_store %arg8[%c12_72, %c0_73, %c3_74], %131 {strides = array<i32>} : memref<22x2x22xf32, #tpu.memory_space<vmem>>, vector<1x2x16xf32>,
    %132 = vector.extract_strided_slice %47 {offsets = [0, 160], sizes = [2, 16], strides = [1, 1]} : vector<2x256xf32> to vector<2x16xf32>
    %c13 = arith.constant 13 : index
    %c0_75 = arith.constant 0 : index
    %c3_76 = arith.constant 3 : index
    %133 = vector.load %arg7[%c13, %c0_75, %c3_76] : memref<22x2x22xf32, #tpu.memory_space<vmem>>, vector<1x2x16xf32>
    %134 = vector.shape_cast %133 : vector<1x2x16xf32> to vector<2x16xf32>
    %135 = vector.shape_cast %132 : vector<2x16xf32> to vector<1x2x16xf32>
    tpu.vector_store %arg7[%c13, %c0_75, %c3_76], %135 {strides = array<i32>} : memref<22x2x22xf32, #tpu.memory_space<vmem>>, vector<1x2x16xf32>,
    %136 = vector.extract_strided_slice %48 {offsets = [0, 160], sizes = [2, 16], strides = [1, 1]} : vector<2x256xf32> to vector<2x16xf32>
    %c13_77 = arith.constant 13 : index
    %c0_78 = arith.constant 0 : index
    %c3_79 = arith.constant 3 : index
    %137 = vector.load %arg8[%c13_77, %c0_78, %c3_79] : memref<22x2x22xf32, #tpu.memory_space<vmem>>, vector<1x2x16xf32>
    %138 = vector.shape_cast %137 : vector<1x2x16xf32> to vector<2x16xf32>
    %139 = vector.shape_cast %136 : vector<2x16xf32> to vector<1x2x16xf32>
    tpu.vector_store %arg8[%c13_77, %c0_78, %c3_79], %139 {strides = array<i32>} : memref<22x2x22xf32, #tpu.memory_space<vmem>>, vector<1x2x16xf32>,
    %140 = vector.extract_strided_slice %47 {offsets = [0, 176], sizes = [2, 16], strides = [1, 1]} : vector<2x256xf32> to vector<2x16xf32>
    %c14 = arith.constant 14 : index
    %c0_80 = arith.constant 0 : index
    %c3_81 = arith.constant 3 : index
    %141 = vector.load %arg7[%c14, %c0_80, %c3_81] : memref<22x2x22xf32, #tpu.memory_space<vmem>>, vector<1x2x16xf32>
    %142 = vector.shape_cast %141 : vector<1x2x16xf32> to vector<2x16xf32>
    %143 = vector.shape_cast %140 : vector<2x16xf32> to vector<1x2x16xf32>
    tpu.vector_store %arg7[%c14, %c0_80, %c3_81], %143 {strides = array<i32>} : memref<22x2x22xf32, #tpu.memory_space<vmem>>, vector<1x2x16xf32>,
    %144 = vector.extract_strided_slice %48 {offsets = [0, 176], sizes = [2, 16], strides = [1, 1]} : vector<2x256xf32> to vector<2x16xf32>
    %c14_82 = arith.constant 14 : index
    %c0_83 = arith.constant 0 : index
    %c3_84 = arith.constant 3 : index
    %145 = vector.load %arg8[%c14_82, %c0_83, %c3_84] : memref<22x2x22xf32, #tpu.memory_space<vmem>>, vector<1x2x16xf32>
    %146 = vector.shape_cast %145 : vector<1x2x16xf32> to vector<2x16xf32>
    %147 = vector.shape_cast %144 : vector<2x16xf32> to vector<1x2x16xf32>
    tpu.vector_store %arg8[%c14_82, %c0_83, %c3_84], %147 {strides = array<i32>} : memref<22x2x22xf32, #tpu.memory_space<vmem>>, vector<1x2x16xf32>,
    %148 = vector.extract_strided_slice %47 {offsets = [0, 192], sizes = [2, 16], strides = [1, 1]} : vector<2x256xf32> to vector<2x16xf32>
    %c15 = arith.constant 15 : index
    %c0_85 = arith.constant 0 : index
    %c3_86 = arith.constant 3 : index
    %149 = vector.load %arg7[%c15, %c0_85, %c3_86] : memref<22x2x22xf32, #tpu.memory_space<vmem>>, vector<1x2x16xf32>
    %150 = vector.shape_cast %149 : vector<1x2x16xf32> to vector<2x16xf32>
    %151 = vector.shape_cast %148 : vector<2x16xf32> to vector<1x2x16xf32>
    tpu.vector_store %arg7[%c15, %c0_85, %c3_86], %151 {strides = array<i32>} : memref<22x2x22xf32, #tpu.memory_space<vmem>>, vector<1x2x16xf32>,
    %152 = vector.extract_strided_slice %48 {offsets = [0, 192], sizes = [2, 16], strides = [1, 1]} : vector<2x256xf32> to vector<2x16xf32>
    %c15_87 = arith.constant 15 : index
    %c0_88 = arith.constant 0 : index
    %c3_89 = arith.constant 3 : index
    %153 = vector.load %arg8[%c15_87, %c0_88, %c3_89] : memref<22x2x22xf32, #tpu.memory_space<vmem>>, vector<1x2x16xf32>
    %154 = vector.shape_cast %153 : vector<1x2x16xf32> to vector<2x16xf32>
    %155 = vector.shape_cast %152 : vector<2x16xf32> to vector<1x2x16xf32>
    tpu.vector_store %arg8[%c15_87, %c0_88, %c3_89], %155 {strides = array<i32>} : memref<22x2x22xf32, #tpu.memory_space<vmem>>, vector<1x2x16xf32>,
    %156 = vector.extract_strided_slice %47 {offsets = [0, 208], sizes = [2, 16], strides = [1, 1]} : vector<2x256xf32> to vector<2x16xf32>
    %c16 = arith.constant 16 : index
    %c0_90 = arith.constant 0 : index
    %c3_91 = arith.constant 3 : index
    %157 = vector.load %arg7[%c16, %c0_90, %c3_91] : memref<22x2x22xf32, #tpu.memory_space<vmem>>, vector<1x2x16xf32>
    %158 = vector.shape_cast %157 : vector<1x2x16xf32> to vector<2x16xf32>
    %159 = vector.shape_cast %156 : vector<2x16xf32> to vector<1x2x16xf32>
    tpu.vector_store %arg7[%c16, %c0_90, %c3_91], %159 {strides = array<i32>} : memref<22x2x22xf32, #tpu.memory_space<vmem>>, vector<1x2x16xf32>,
    %160 = vector.extract_strided_slice %48 {offsets = [0, 208], sizes = [2, 16], strides = [1, 1]} : vector<2x256xf32> to vector<2x16xf32>
    %c16_92 = arith.constant 16 : index
    %c0_93 = arith.constant 0 : index
    %c3_94 = arith.constant 3 : index
    %161 = vector.load %arg8[%c16_92, %c0_93, %c3_94] : memref<22x2x22xf32, #tpu.memory_space<vmem>>, vector<1x2x16xf32>
    %162 = vector.shape_cast %161 : vector<1x2x16xf32> to vector<2x16xf32>
    %163 = vector.shape_cast %160 : vector<2x16xf32> to vector<1x2x16xf32>
    tpu.vector_store %arg8[%c16_92, %c0_93, %c3_94], %163 {strides = array<i32>} : memref<22x2x22xf32, #tpu.memory_space<vmem>>, vector<1x2x16xf32>,
    %164 = vector.extract_strided_slice %47 {offsets = [0, 224], sizes = [2, 16], strides = [1, 1]} : vector<2x256xf32> to vector<2x16xf32>
    %c17 = arith.constant 17 : index
    %c0_95 = arith.constant 0 : index
    %c3_96 = arith.constant 3 : index
    %165 = vector.load %arg7[%c17, %c0_95, %c3_96] : memref<22x2x22xf32, #tpu.memory_space<vmem>>, vector<1x2x16xf32>
    %166 = vector.shape_cast %165 : vector<1x2x16xf32> to vector<2x16xf32>
    %167 = vector.shape_cast %164 : vector<2x16xf32> to vector<1x2x16xf32>
    tpu.vector_store %arg7[%c17, %c0_95, %c3_96], %167 {strides = array<i32>} : memref<22x2x22xf32, #tpu.memory_space<vmem>>, vector<1x2x16xf32>,
    %168 = vector.extract_strided_slice %48 {offsets = [0, 224], sizes = [2, 16], strides = [1, 1]} : vector<2x256xf32> to vector<2x16xf32>
    %c17_97 = arith.constant 17 : index
    %c0_98 = arith.constant 0 : index
    %c3_99 = arith.constant 3 : index
    %169 = vector.load %arg8[%c17_97, %c0_98, %c3_99] : memref<22x2x22xf32, #tpu.memory_space<vmem>>, vector<1x2x16xf32>
    %170 = vector.shape_cast %169 : vector<1x2x16xf32> to vector<2x16xf32>
    %171 = vector.shape_cast %168 : vector<2x16xf32> to vector<1x2x16xf32>
    tpu.vector_store %arg8[%c17_97, %c0_98, %c3_99], %171 {strides = array<i32>} : memref<22x2x22xf32, #tpu.memory_space<vmem>>, vector<1x2x16xf32>,
    %172 = vector.extract_strided_slice %47 {offsets = [0, 240], sizes = [2, 16], strides = [1, 1]} : vector<2x256xf32> to vector<2x16xf32>
    %c18 = arith.constant 18 : index
    %c0_100 = arith.constant 0 : index
    %c3_101 = arith.constant 3 : index
    %173 = vector.load %arg7[%c18, %c0_100, %c3_101] : memref<22x2x22xf32, #tpu.memory_space<vmem>>, vector<1x2x16xf32>
    %174 = vector.shape_cast %173 : vector<1x2x16xf32> to vector<2x16xf32>
    %175 = vector.shape_cast %172 : vector<2x16xf32> to vector<1x2x16xf32>
    tpu.vector_store %arg7[%c18, %c0_100, %c3_101], %175 {strides = array<i32>} : memref<22x2x22xf32, #tpu.memory_space<vmem>>, vector<1x2x16xf32>,
    %176 = vector.extract_strided_slice %48 {offsets = [0, 240], sizes = [2, 16], strides = [1, 1]} : vector<2x256xf32> to vector<2x16xf32>
    %c18_102 = arith.constant 18 : index
    %c0_103 = arith.constant 0 : index
    %c3_104 = arith.constant 3 : index
    %177 = vector.load %arg8[%c18_102, %c0_103, %c3_104] : memref<22x2x22xf32, #tpu.memory_space<vmem>>, vector<1x2x16xf32>
    %178 = vector.shape_cast %177 : vector<1x2x16xf32> to vector<2x16xf32>
    %179 = vector.shape_cast %176 : vector<2x16xf32> to vector<1x2x16xf32>
    tpu.vector_store %arg8[%c18_102, %c0_103, %c3_104], %179 {strides = array<i32>} : memref<22x2x22xf32, #tpu.memory_space<vmem>>, vector<1x2x16xf32>,
    %c0_105 = arith.constant 0 : index
    %180 = memref.load %arg4[%c0_105] : memref<98xf32, #tpu.memory_space<smem>>
    %c1 = arith.constant 1 : index
    %181 = memref.load %arg4[%c1] : memref<98xf32, #tpu.memory_space<smem>>
    %c2 = arith.constant 2 : index
    %182 = memref.load %arg4[%c2] : memref<98xf32, #tpu.memory_space<smem>>
    %c3_106 = arith.constant 3 : index
    %183 = memref.load %arg4[%c3_106] : memref<98xf32, #tpu.memory_space<smem>>
    %c4_107 = arith.constant 4 : index
    %184 = memref.load %arg4[%c4_107] : memref<98xf32, #tpu.memory_space<smem>>
    %c5_108 = arith.constant 5 : index
    %185 = memref.load %arg4[%c5_108] : memref<98xf32, #tpu.memory_space<smem>>
    %c6_109 = arith.constant 6 : index
    %186 = memref.load %arg4[%c6_109] : memref<98xf32, #tpu.memory_space<smem>>
    %c7_110 = arith.constant 7 : index
    %187 = memref.load %arg4[%c7_110] : memref<98xf32, #tpu.memory_space<smem>>
    %c8_111 = arith.constant 8 : index
    %188 = memref.load %arg4[%c8_111] : memref<98xf32, #tpu.memory_space<smem>>
    %c9_112 = arith.constant 9 : index
    %189 = memref.load %arg4[%c9_112] : memref<98xf32, #tpu.memory_space<smem>>
    %c10_113 = arith.constant 10 : index
    %190 = memref.load %arg4[%c10_113] : memref<98xf32, #tpu.memory_space<smem>>
    %c11_114 = arith.constant 11 : index
    %191 = memref.load %arg4[%c11_114] : memref<98xf32, #tpu.memory_space<smem>>
    %c12_115 = arith.constant 12 : index
    %192 = memref.load %arg4[%c12_115] : memref<98xf32, #tpu.memory_space<smem>>
    %c13_116 = arith.constant 13 : index
    %193 = memref.load %arg4[%c13_116] : memref<98xf32, #tpu.memory_space<smem>>
    %c14_117 = arith.constant 14 : index
    %194 = memref.load %arg4[%c14_117] : memref<98xf32, #tpu.memory_space<smem>>
    %c15_118 = arith.constant 15 : index
    %195 = memref.load %arg4[%c15_118] : memref<98xf32, #tpu.memory_space<smem>>
    %c16_119 = arith.constant 16 : index
    %196 = memref.load %arg4[%c16_119] : memref<98xf32, #tpu.memory_space<smem>>
    %c17_120 = arith.constant 17 : index
    %197 = memref.load %arg4[%c17_120] : memref<98xf32, #tpu.memory_space<smem>>
    %c18_121 = arith.constant 18 : index
    %198 = memref.load %arg4[%c18_121] : memref<98xf32, #tpu.memory_space<smem>>
    %c19 = arith.constant 19 : index
    %199 = memref.load %arg4[%c19] : memref<98xf32, #tpu.memory_space<smem>>
    %c20 = arith.constant 20 : index
    %200 = memref.load %arg4[%c20] : memref<98xf32, #tpu.memory_space<smem>>
    %c21 = arith.constant 21 : index
    %201 = memref.load %arg4[%c21] : memref<98xf32, #tpu.memory_space<smem>>
    %c22 = arith.constant 22 : index
    %202 = memref.load %arg4[%c22] : memref<98xf32, #tpu.memory_space<smem>>
    %c23 = arith.constant 23 : index
    %203 = memref.load %arg4[%c23] : memref<98xf32, #tpu.memory_space<smem>>
    %c24 = arith.constant 24 : index
    %204 = memref.load %arg4[%c24] : memref<98xf32, #tpu.memory_space<smem>>
    %c25 = arith.constant 25 : index
    %205 = memref.load %arg4[%c25] : memref<98xf32, #tpu.memory_space<smem>>
    %c26 = arith.constant 26 : index
    %206 = memref.load %arg4[%c26] : memref<98xf32, #tpu.memory_space<smem>>
    %c27 = arith.constant 27 : index
    %207 = memref.load %arg4[%c27] : memref<98xf32, #tpu.memory_space<smem>>
    %c28 = arith.constant 28 : index
    %208 = memref.load %arg4[%c28] : memref<98xf32, #tpu.memory_space<smem>>
    %c29 = arith.constant 29 : index
    %209 = memref.load %arg4[%c29] : memref<98xf32, #tpu.memory_space<smem>>
    %c30 = arith.constant 30 : index
    %210 = memref.load %arg4[%c30] : memref<98xf32, #tpu.memory_space<smem>>
    %c31 = arith.constant 31 : index
    %211 = memref.load %arg4[%c31] : memref<98xf32, #tpu.memory_space<smem>>
    %c32 = arith.constant 32 : index
    %212 = memref.load %arg4[%c32] : memref<98xf32, #tpu.memory_space<smem>>
    %c33 = arith.constant 33 : index
    %213 = memref.load %arg4[%c33] : memref<98xf32, #tpu.memory_space<smem>>
    %c34 = arith.constant 34 : index
    %214 = memref.load %arg4[%c34] : memref<98xf32, #tpu.memory_space<smem>>
    %c35 = arith.constant 35 : index
    %215 = memref.load %arg4[%c35] : memref<98xf32, #tpu.memory_space<smem>>
    %c36 = arith.constant 36 : index
    %216 = memref.load %arg4[%c36] : memref<98xf32, #tpu.memory_space<smem>>
    %c37 = arith.constant 37 : index
    %217 = memref.load %arg4[%c37] : memref<98xf32, #tpu.memory_space<smem>>
    %c38 = arith.constant 38 : index
    %218 = memref.load %arg4[%c38] : memref<98xf32, #tpu.memory_space<smem>>
    %c39 = arith.constant 39 : index
    %219 = memref.load %arg4[%c39] : memref<98xf32, #tpu.memory_space<smem>>
    %c40 = arith.constant 40 : index
    %220 = memref.load %arg4[%c40] : memref<98xf32, #tpu.memory_space<smem>>
    %c41 = arith.constant 41 : index
    %221 = memref.load %arg4[%c41] : memref<98xf32, #tpu.memory_space<smem>>
    %c42 = arith.constant 42 : index
    %222 = memref.load %arg4[%c42] : memref<98xf32, #tpu.memory_space<smem>>
    %c43 = arith.constant 43 : index
    %223 = memref.load %arg4[%c43] : memref<98xf32, #tpu.memory_space<smem>>
    %c44 = arith.constant 44 : index
    %224 = memref.load %arg4[%c44] : memref<98xf32, #tpu.memory_space<smem>>
    %c45 = arith.constant 45 : index
    %225 = memref.load %arg4[%c45] : memref<98xf32, #tpu.memory_space<smem>>
    %c46 = arith.constant 46 : index
    %226 = memref.load %arg4[%c46] : memref<98xf32, #tpu.memory_space<smem>>
    %c47 = arith.constant 47 : index
    %227 = memref.load %arg4[%c47] : memref<98xf32, #tpu.memory_space<smem>>
    %c48 = arith.constant 48 : index
    %228 = memref.load %arg4[%c48] : memref<98xf32, #tpu.memory_space<smem>>
    %c49 = arith.constant 49 : index
    %229 = memref.load %arg4[%c49] : memref<98xf32, #tpu.memory_space<smem>>
    %c50 = arith.constant 50 : index
    %230 = memref.load %arg4[%c50] : memref<98xf32, #tpu.memory_space<smem>>
    %c51 = arith.constant 51 : index
    %231 = memref.load %arg4[%c51] : memref<98xf32, #tpu.memory_space<smem>>
    %c52 = arith.constant 52 : index
    %232 = memref.load %arg4[%c52] : memref<98xf32, #tpu.memory_space<smem>>
    %c53 = arith.constant 53 : index
    %233 = memref.load %arg4[%c53] : memref<98xf32, #tpu.memory_space<smem>>
    %c54 = arith.constant 54 : index
    %234 = memref.load %arg4[%c54] : memref<98xf32, #tpu.memory_space<smem>>
    %c55 = arith.constant 55 : index
    %235 = memref.load %arg4[%c55] : memref<98xf32, #tpu.memory_space<smem>>
    %c56 = arith.constant 56 : index
    %236 = memref.load %arg4[%c56] : memref<98xf32, #tpu.memory_space<smem>>
    %c57 = arith.constant 57 : index
    %237 = memref.load %arg4[%c57] : memref<98xf32, #tpu.memory_space<smem>>
    %c58 = arith.constant 58 : index
    %238 = memref.load %arg4[%c58] : memref<98xf32, #tpu.memory_space<smem>>
    %c59 = arith.constant 59 : index
    %239 = memref.load %arg4[%c59] : memref<98xf32, #tpu.memory_space<smem>>
    %c60 = arith.constant 60 : index
    %240 = memref.load %arg4[%c60] : memref<98xf32, #tpu.memory_space<smem>>
    %c61 = arith.constant 61 : index
    %241 = memref.load %arg4[%c61] : memref<98xf32, #tpu.memory_space<smem>>
    %c62 = arith.constant 62 : index
    %242 = memref.load %arg4[%c62] : memref<98xf32, #tpu.memory_space<smem>>
    %c63 = arith.constant 63 : index
    %243 = memref.load %arg4[%c63] : memref<98xf32, #tpu.memory_space<smem>>
    %c64 = arith.constant 64 : index
    %244 = memref.load %arg4[%c64] : memref<98xf32, #tpu.memory_space<smem>>
    %c65 = arith.constant 65 : index
    %245 = memref.load %arg4[%c65] : memref<98xf32, #tpu.memory_space<smem>>
    %c66 = arith.constant 66 : index
    %246 = memref.load %arg4[%c66] : memref<98xf32, #tpu.memory_space<smem>>
    %c67 = arith.constant 67 : index
    %247 = memref.load %arg4[%c67] : memref<98xf32, #tpu.memory_space<smem>>
    %c68 = arith.constant 68 : index
    %248 = memref.load %arg4[%c68] : memref<98xf32, #tpu.memory_space<smem>>
    %c69 = arith.constant 69 : index
    %249 = memref.load %arg4[%c69] : memref<98xf32, #tpu.memory_space<smem>>
    %c70 = arith.constant 70 : index
    %250 = memref.load %arg4[%c70] : memref<98xf32, #tpu.memory_space<smem>>
    %c71 = arith.constant 71 : index
    %251 = memref.load %arg4[%c71] : memref<98xf32, #tpu.memory_space<smem>>
    %c72 = arith.constant 72 : index
    %252 = memref.load %arg4[%c72] : memref<98xf32, #tpu.memory_space<smem>>
    %c73 = arith.constant 73 : index
    %253 = memref.load %arg4[%c73] : memref<98xf32, #tpu.memory_space<smem>>
    %c74 = arith.constant 74 : index
    %254 = memref.load %arg4[%c74] : memref<98xf32, #tpu.memory_space<smem>>
    %c75 = arith.constant 75 : index
    %255 = memref.load %arg4[%c75] : memref<98xf32, #tpu.memory_space<smem>>
    %c76 = arith.constant 76 : index
    %256 = memref.load %arg4[%c76] : memref<98xf32, #tpu.memory_space<smem>>
    %c77 = arith.constant 77 : index
    %257 = memref.load %arg4[%c77] : memref<98xf32, #tpu.memory_space<smem>>
    %c78 = arith.constant 78 : index
    %258 = memref.load %arg4[%c78] : memref<98xf32, #tpu.memory_space<smem>>
    %c79 = arith.constant 79 : index
    %259 = memref.load %arg4[%c79] : memref<98xf32, #tpu.memory_space<smem>>
    %c80 = arith.constant 80 : index
    %260 = memref.load %arg4[%c80] : memref<98xf32, #tpu.memory_space<smem>>
    %c81 = arith.constant 81 : index
    %261 = memref.load %arg4[%c81] : memref<98xf32, #tpu.memory_space<smem>>
    %c82 = arith.constant 82 : index
    %262 = memref.load %arg4[%c82] : memref<98xf32, #tpu.memory_space<smem>>
    %c83 = arith.constant 83 : index
    %263 = memref.load %arg4[%c83] : memref<98xf32, #tpu.memory_space<smem>>
    %c84 = arith.constant 84 : index
    %264 = memref.load %arg4[%c84] : memref<98xf32, #tpu.memory_space<smem>>
    %c85 = arith.constant 85 : index
    %265 = memref.load %arg4[%c85] : memref<98xf32, #tpu.memory_space<smem>>
    %c86 = arith.constant 86 : index
    %266 = memref.load %arg4[%c86] : memref<98xf32, #tpu.memory_space<smem>>
    %c87 = arith.constant 87 : index
    %267 = memref.load %arg4[%c87] : memref<98xf32, #tpu.memory_space<smem>>
    %c88 = arith.constant 88 : index
    %268 = memref.load %arg4[%c88] : memref<98xf32, #tpu.memory_space<smem>>
    %c89 = arith.constant 89 : index
    %269 = memref.load %arg4[%c89] : memref<98xf32, #tpu.memory_space<smem>>
    %c90 = arith.constant 90 : index
    %270 = memref.load %arg4[%c90] : memref<98xf32, #tpu.memory_space<smem>>
    %c91 = arith.constant 91 : index
    %271 = memref.load %arg4[%c91] : memref<98xf32, #tpu.memory_space<smem>>
    %c92 = arith.constant 92 : index
    %272 = memref.load %arg4[%c92] : memref<98xf32, #tpu.memory_space<smem>>
    %c93 = arith.constant 93 : index
    %273 = memref.load %arg4[%c93] : memref<98xf32, #tpu.memory_space<smem>>
    %c94 = arith.constant 94 : index
    %274 = memref.load %arg4[%c94] : memref<98xf32, #tpu.memory_space<smem>>
    %c95 = arith.constant 95 : index
    %275 = memref.load %arg4[%c95] : memref<98xf32, #tpu.memory_space<smem>>
    %c96 = arith.constant 96 : index
    %276 = memref.load %arg4[%c96] : memref<98xf32, #tpu.memory_space<smem>>
    %c97 = arith.constant 97 : index
    %277 = memref.load %arg4[%c97] : memref<98xf32, #tpu.memory_space<smem>>
    %c0_122 = arith.constant 0 : index
    %278 = memref.load %arg5[%c0_122] : memref<1xf32, #tpu.memory_space<smem>>
    %279 = vector.broadcast %278 : f32 to vector<16x2x16xf32>
    %c0_123 = arith.constant 0 : index
    %c0_124 = arith.constant 0 : index
    %c0_125 = arith.constant 0 : index
    %280 = vector.load %arg7[%c0_123, %c0_124, %c0_125] : memref<22x2x22xf32, #tpu.memory_space<vmem>>, vector<22x2x16xf32>
    %c0_126 = arith.constant 0 : index
    %c0_127 = arith.constant 0 : index
    %c0_128 = arith.constant 0 : index
    %281 = vector.load %arg8[%c0_126, %c0_127, %c0_128] : memref<22x2x22xf32, #tpu.memory_space<vmem>>, vector<22x2x16xf32>
    %282 = vector.extract_strided_slice %280 {offsets = [0, 0, 0], sizes = [16, 2, 16], strides = [1, 1, 1]} : vector<22x2x16xf32> to vector<16x2x16xf32>
    %283 = vector.broadcast %180 : f32 to vector<16x2x16xf32>
    %284 = arith.mulf %283, %282 : vector<16x2x16xf32>
    %285 = arith.addf %279, %284 : vector<16x2x16xf32>
    %286 = vector.extract_strided_slice %281 {offsets = [0, 0, 0], sizes = [16, 2, 16], strides = [1, 1, 1]} : vector<22x2x16xf32> to vector<16x2x16xf32>
    %287 = vector.broadcast %229 : f32 to vector<16x2x16xf32>
    %288 = arith.mulf %287, %286 : vector<16x2x16xf32>
    %289 = arith.addf %285, %288 : vector<16x2x16xf32>
    %290 = vector.extract_strided_slice %280 {offsets = [1, 0, 0], sizes = [16, 2, 16], strides = [1, 1, 1]} : vector<22x2x16xf32> to vector<16x2x16xf32>
    %291 = vector.broadcast %187 : f32 to vector<16x2x16xf32>
    %292 = arith.mulf %291, %290 : vector<16x2x16xf32>
    %293 = arith.addf %289, %292 : vector<16x2x16xf32>
    %294 = vector.extract_strided_slice %281 {offsets = [1, 0, 0], sizes = [16, 2, 16], strides = [1, 1, 1]} : vector<22x2x16xf32> to vector<16x2x16xf32>
    %295 = vector.broadcast %236 : f32 to vector<16x2x16xf32>
    %296 = arith.mulf %295, %294 : vector<16x2x16xf32>
    %297 = arith.addf %293, %296 : vector<16x2x16xf32>
    %298 = vector.extract_strided_slice %280 {offsets = [2, 0, 0], sizes = [16, 2, 16], strides = [1, 1, 1]} : vector<22x2x16xf32> to vector<16x2x16xf32>
    %299 = vector.broadcast %194 : f32 to vector<16x2x16xf32>
    %300 = arith.mulf %299, %298 : vector<16x2x16xf32>
    %301 = arith.addf %297, %300 : vector<16x2x16xf32>
    %302 = vector.extract_strided_slice %281 {offsets = [2, 0, 0], sizes = [16, 2, 16], strides = [1, 1, 1]} : vector<22x2x16xf32> to vector<16x2x16xf32>
    %303 = vector.broadcast %243 : f32 to vector<16x2x16xf32>
    %304 = arith.mulf %303, %302 : vector<16x2x16xf32>
    %305 = arith.addf %301, %304 : vector<16x2x16xf32>
    %306 = vector.extract_strided_slice %280 {offsets = [3, 0, 0], sizes = [16, 2, 16], strides = [1, 1, 1]} : vector<22x2x16xf32> to vector<16x2x16xf32>
    %307 = vector.broadcast %201 : f32 to vector<16x2x16xf32>
    %308 = arith.mulf %307, %306 : vector<16x2x16xf32>
    %309 = arith.addf %305, %308 : vector<16x2x16xf32>
    %310 = vector.extract_strided_slice %281 {offsets = [3, 0, 0], sizes = [16, 2, 16], strides = [1, 1, 1]} : vector<22x2x16xf32> to vector<16x2x16xf32>
    %311 = vector.broadcast %250 : f32 to vector<16x2x16xf32>
    %312 = arith.mulf %311, %310 : vector<16x2x16xf32>
    %313 = arith.addf %309, %312 : vector<16x2x16xf32>
    %314 = vector.extract_strided_slice %280 {offsets = [4, 0, 0], sizes = [16, 2, 16], strides = [1, 1, 1]} : vector<22x2x16xf32> to vector<16x2x16xf32>
    %315 = vector.broadcast %208 : f32 to vector<16x2x16xf32>
    %316 = arith.mulf %315, %314 : vector<16x2x16xf32>
    %317 = arith.addf %313, %316 : vector<16x2x16xf32>
    %318 = vector.extract_strided_slice %281 {offsets = [4, 0, 0], sizes = [16, 2, 16], strides = [1, 1, 1]} : vector<22x2x16xf32> to vector<16x2x16xf32>
    %319 = vector.broadcast %257 : f32 to vector<16x2x16xf32>
    %320 = arith.mulf %319, %318 : vector<16x2x16xf32>
    %321 = arith.addf %317, %320 : vector<16x2x16xf32>
    %322 = vector.extract_strided_slice %280 {offsets = [5, 0, 0], sizes = [16, 2, 16], strides = [1, 1, 1]} : vector<22x2x16xf32> to vector<16x2x16xf32>
    %323 = vector.broadcast %215 : f32 to vector<16x2x16xf32>
    %324 = arith.mulf %323, %322 : vector<16x2x16xf32>
    %325 = arith.addf %321, %324 : vector<16x2x16xf32>
    %326 = vector.extract_strided_slice %281 {offsets = [5, 0, 0], sizes = [16, 2, 16], strides = [1, 1, 1]} : vector<22x2x16xf32> to vector<16x2x16xf32>
    %327 = vector.broadcast %264 : f32 to vector<16x2x16xf32>
    %328 = arith.mulf %327, %326 : vector<16x2x16xf32>
    %329 = arith.addf %325, %328 : vector<16x2x16xf32>
    %330 = vector.extract_strided_slice %280 {offsets = [6, 0, 0], sizes = [16, 2, 16], strides = [1, 1, 1]} : vector<22x2x16xf32> to vector<16x2x16xf32>
    %331 = vector.broadcast %222 : f32 to vector<16x2x16xf32>
    %332 = arith.mulf %331, %330 : vector<16x2x16xf32>
    %333 = arith.addf %329, %332 : vector<16x2x16xf32>
    %334 = vector.extract_strided_slice %281 {offsets = [6, 0, 0], sizes = [16, 2, 16], strides = [1, 1, 1]} : vector<22x2x16xf32> to vector<16x2x16xf32>
    %335 = vector.broadcast %271 : f32 to vector<16x2x16xf32>
    %336 = arith.mulf %335, %334 : vector<16x2x16xf32>
    %337 = arith.addf %333, %336 : vector<16x2x16xf32>
    %c0_129 = arith.constant 0 : index
    %c0_130 = arith.constant 0 : index
    %c1_131 = arith.constant 1 : index
    %338 = vector.load %arg7[%c0_129, %c0_130, %c1_131] : memref<22x2x22xf32, #tpu.memory_space<vmem>>, vector<22x2x16xf32>
    %c0_132 = arith.constant 0 : index
    %c0_133 = arith.constant 0 : index
    %c1_134 = arith.constant 1 : index
    %339 = vector.load %arg8[%c0_132, %c0_133, %c1_134] : memref<22x2x22xf32, #tpu.memory_space<vmem>>, vector<22x2x16xf32>
    %340 = vector.extract_strided_slice %338 {offsets = [0, 0, 0], sizes = [16, 2, 16], strides = [1, 1, 1]} : vector<22x2x16xf32> to vector<16x2x16xf32>
    %341 = vector.broadcast %181 : f32 to vector<16x2x16xf32>
    %342 = arith.mulf %341, %340 : vector<16x2x16xf32>
    %343 = arith.addf %337, %342 : vector<16x2x16xf32>
    %344 = vector.extract_strided_slice %339 {offsets = [0, 0, 0], sizes = [16, 2, 16], strides = [1, 1, 1]} : vector<22x2x16xf32> to vector<16x2x16xf32>
    %345 = vector.broadcast %230 : f32 to vector<16x2x16xf32>
    %346 = arith.mulf %345, %344 : vector<16x2x16xf32>
    %347 = arith.addf %343, %346 : vector<16x2x16xf32>
    %348 = vector.extract_strided_slice %338 {offsets = [1, 0, 0], sizes = [16, 2, 16], strides = [1, 1, 1]} : vector<22x2x16xf32> to vector<16x2x16xf32>
    %349 = vector.broadcast %188 : f32 to vector<16x2x16xf32>
    %350 = arith.mulf %349, %348 : vector<16x2x16xf32>
    %351 = arith.addf %347, %350 : vector<16x2x16xf32>
    %352 = vector.extract_strided_slice %339 {offsets = [1, 0, 0], sizes = [16, 2, 16], strides = [1, 1, 1]} : vector<22x2x16xf32> to vector<16x2x16xf32>
    %353 = vector.broadcast %237 : f32 to vector<16x2x16xf32>
    %354 = arith.mulf %353, %352 : vector<16x2x16xf32>
    %355 = arith.addf %351, %354 : vector<16x2x16xf32>
    %356 = vector.extract_strided_slice %338 {offsets = [2, 0, 0], sizes = [16, 2, 16], strides = [1, 1, 1]} : vector<22x2x16xf32> to vector<16x2x16xf32>
    %357 = vector.broadcast %195 : f32 to vector<16x2x16xf32>
    %358 = arith.mulf %357, %356 : vector<16x2x16xf32>
    %359 = arith.addf %355, %358 : vector<16x2x16xf32>
    %360 = vector.extract_strided_slice %339 {offsets = [2, 0, 0], sizes = [16, 2, 16], strides = [1, 1, 1]} : vector<22x2x16xf32> to vector<16x2x16xf32>
    %361 = vector.broadcast %244 : f32 to vector<16x2x16xf32>
    %362 = arith.mulf %361, %360 : vector<16x2x16xf32>
    %363 = arith.addf %359, %362 : vector<16x2x16xf32>
    %364 = vector.extract_strided_slice %338 {offsets = [3, 0, 0], sizes = [16, 2, 16], strides = [1, 1, 1]} : vector<22x2x16xf32> to vector<16x2x16xf32>
    %365 = vector.broadcast %202 : f32 to vector<16x2x16xf32>
    %366 = arith.mulf %365, %364 : vector<16x2x16xf32>
    %367 = arith.addf %363, %366 : vector<16x2x16xf32>
    %368 = vector.extract_strided_slice %339 {offsets = [3, 0, 0], sizes = [16, 2, 16], strides = [1, 1, 1]} : vector<22x2x16xf32> to vector<16x2x16xf32>
    %369 = vector.broadcast %251 : f32 to vector<16x2x16xf32>
    %370 = arith.mulf %369, %368 : vector<16x2x16xf32>
    %371 = arith.addf %367, %370 : vector<16x2x16xf32>
    %372 = vector.extract_strided_slice %338 {offsets = [4, 0, 0], sizes = [16, 2, 16], strides = [1, 1, 1]} : vector<22x2x16xf32> to vector<16x2x16xf32>
    %373 = vector.broadcast %209 : f32 to vector<16x2x16xf32>
    %374 = arith.mulf %373, %372 : vector<16x2x16xf32>
    %375 = arith.addf %371, %374 : vector<16x2x16xf32>
    %376 = vector.extract_strided_slice %339 {offsets = [4, 0, 0], sizes = [16, 2, 16], strides = [1, 1, 1]} : vector<22x2x16xf32> to vector<16x2x16xf32>
    %377 = vector.broadcast %258 : f32 to vector<16x2x16xf32>
    %378 = arith.mulf %377, %376 : vector<16x2x16xf32>
    %379 = arith.addf %375, %378 : vector<16x2x16xf32>
    %380 = vector.extract_strided_slice %338 {offsets = [5, 0, 0], sizes = [16, 2, 16], strides = [1, 1, 1]} : vector<22x2x16xf32> to vector<16x2x16xf32>
    %381 = vector.broadcast %216 : f32 to vector<16x2x16xf32>
    %382 = arith.mulf %381, %380 : vector<16x2x16xf32>
    %383 = arith.addf %379, %382 : vector<16x2x16xf32>
    %384 = vector.extract_strided_slice %339 {offsets = [5, 0, 0], sizes = [16, 2, 16], strides = [1, 1, 1]} : vector<22x2x16xf32> to vector<16x2x16xf32>
    %385 = vector.broadcast %265 : f32 to vector<16x2x16xf32>
    %386 = arith.mulf %385, %384 : vector<16x2x16xf32>
    %387 = arith.addf %383, %386 : vector<16x2x16xf32>
    %388 = vector.extract_strided_slice %338 {offsets = [6, 0, 0], sizes = [16, 2, 16], strides = [1, 1, 1]} : vector<22x2x16xf32> to vector<16x2x16xf32>
    %389 = vector.broadcast %223 : f32 to vector<16x2x16xf32>
    %390 = arith.mulf %389, %388 : vector<16x2x16xf32>
    %391 = arith.addf %387, %390 : vector<16x2x16xf32>
    %392 = vector.extract_strided_slice %339 {offsets = [6, 0, 0], sizes = [16, 2, 16], strides = [1, 1, 1]} : vector<22x2x16xf32> to vector<16x2x16xf32>
    %393 = vector.broadcast %272 : f32 to vector<16x2x16xf32>
    %394 = arith.mulf %393, %392 : vector<16x2x16xf32>
    %395 = arith.addf %391, %394 : vector<16x2x16xf32>
    %c0_135 = arith.constant 0 : index
    %c0_136 = arith.constant 0 : index
    %c2_137 = arith.constant 2 : index
    %396 = vector.load %arg7[%c0_135, %c0_136, %c2_137] : memref<22x2x22xf32, #tpu.memory_space<vmem>>, vector<22x2x16xf32>
    %c0_138 = arith.constant 0 : index
    %c0_139 = arith.constant 0 : index
    %c2_140 = arith.constant 2 : index
    %397 = vector.load %arg8[%c0_138, %c0_139, %c2_140] : memref<22x2x22xf32, #tpu.memory_space<vmem>>, vector<22x2x16xf32>
    %398 = vector.extract_strided_slice %396 {offsets = [0, 0, 0], sizes = [16, 2, 16], strides = [1, 1, 1]} : vector<22x2x16xf32> to vector<16x2x16xf32>
    %399 = vector.broadcast %182 : f32 to vector<16x2x16xf32>
    %400 = arith.mulf %399, %398 : vector<16x2x16xf32>
    %401 = arith.addf %395, %400 : vector<16x2x16xf32>
    %402 = vector.extract_strided_slice %397 {offsets = [0, 0, 0], sizes = [16, 2, 16], strides = [1, 1, 1]} : vector<22x2x16xf32> to vector<16x2x16xf32>
    %403 = vector.broadcast %231 : f32 to vector<16x2x16xf32>
    %404 = arith.mulf %403, %402 : vector<16x2x16xf32>
    %405 = arith.addf %401, %404 : vector<16x2x16xf32>
    %406 = vector.extract_strided_slice %396 {offsets = [1, 0, 0], sizes = [16, 2, 16], strides = [1, 1, 1]} : vector<22x2x16xf32> to vector<16x2x16xf32>
    %407 = vector.broadcast %189 : f32 to vector<16x2x16xf32>
    %408 = arith.mulf %407, %406 : vector<16x2x16xf32>
    %409 = arith.addf %405, %408 : vector<16x2x16xf32>
    %410 = vector.extract_strided_slice %397 {offsets = [1, 0, 0], sizes = [16, 2, 16], strides = [1, 1, 1]} : vector<22x2x16xf32> to vector<16x2x16xf32>
    %411 = vector.broadcast %238 : f32 to vector<16x2x16xf32>
    %412 = arith.mulf %411, %410 : vector<16x2x16xf32>
    %413 = arith.addf %409, %412 : vector<16x2x16xf32>
    %414 = vector.extract_strided_slice %396 {offsets = [2, 0, 0], sizes = [16, 2, 16], strides = [1, 1, 1]} : vector<22x2x16xf32> to vector<16x2x16xf32>
    %415 = vector.broadcast %196 : f32 to vector<16x2x16xf32>
    %416 = arith.mulf %415, %414 : vector<16x2x16xf32>
    %417 = arith.addf %413, %416 : vector<16x2x16xf32>
    %418 = vector.extract_strided_slice %397 {offsets = [2, 0, 0], sizes = [16, 2, 16], strides = [1, 1, 1]} : vector<22x2x16xf32> to vector<16x2x16xf32>
    %419 = vector.broadcast %245 : f32 to vector<16x2x16xf32>
    %420 = arith.mulf %419, %418 : vector<16x2x16xf32>
    %421 = arith.addf %417, %420 : vector<16x2x16xf32>
    %422 = vector.extract_strided_slice %396 {offsets = [3, 0, 0], sizes = [16, 2, 16], strides = [1, 1, 1]} : vector<22x2x16xf32> to vector<16x2x16xf32>
    %423 = vector.broadcast %203 : f32 to vector<16x2x16xf32>
    %424 = arith.mulf %423, %422 : vector<16x2x16xf32>
    %425 = arith.addf %421, %424 : vector<16x2x16xf32>
    %426 = vector.extract_strided_slice %397 {offsets = [3, 0, 0], sizes = [16, 2, 16], strides = [1, 1, 1]} : vector<22x2x16xf32> to vector<16x2x16xf32>
    %427 = vector.broadcast %252 : f32 to vector<16x2x16xf32>
    %428 = arith.mulf %427, %426 : vector<16x2x16xf32>
    %429 = arith.addf %425, %428 : vector<16x2x16xf32>
    %430 = vector.extract_strided_slice %396 {offsets = [4, 0, 0], sizes = [16, 2, 16], strides = [1, 1, 1]} : vector<22x2x16xf32> to vector<16x2x16xf32>
    %431 = vector.broadcast %210 : f32 to vector<16x2x16xf32>
    %432 = arith.mulf %431, %430 : vector<16x2x16xf32>
    %433 = arith.addf %429, %432 : vector<16x2x16xf32>
    %434 = vector.extract_strided_slice %397 {offsets = [4, 0, 0], sizes = [16, 2, 16], strides = [1, 1, 1]} : vector<22x2x16xf32> to vector<16x2x16xf32>
    %435 = vector.broadcast %259 : f32 to vector<16x2x16xf32>
    %436 = arith.mulf %435, %434 : vector<16x2x16xf32>
    %437 = arith.addf %433, %436 : vector<16x2x16xf32>
    %438 = vector.extract_strided_slice %396 {offsets = [5, 0, 0], sizes = [16, 2, 16], strides = [1, 1, 1]} : vector<22x2x16xf32> to vector<16x2x16xf32>
    %439 = vector.broadcast %217 : f32 to vector<16x2x16xf32>
    %440 = arith.mulf %439, %438 : vector<16x2x16xf32>
    %441 = arith.addf %437, %440 : vector<16x2x16xf32>
    %442 = vector.extract_strided_slice %397 {offsets = [5, 0, 0], sizes = [16, 2, 16], strides = [1, 1, 1]} : vector<22x2x16xf32> to vector<16x2x16xf32>
    %443 = vector.broadcast %266 : f32 to vector<16x2x16xf32>
    %444 = arith.mulf %443, %442 : vector<16x2x16xf32>
    %445 = arith.addf %441, %444 : vector<16x2x16xf32>
    %446 = vector.extract_strided_slice %396 {offsets = [6, 0, 0], sizes = [16, 2, 16], strides = [1, 1, 1]} : vector<22x2x16xf32> to vector<16x2x16xf32>
    %447 = vector.broadcast %224 : f32 to vector<16x2x16xf32>
    %448 = arith.mulf %447, %446 : vector<16x2x16xf32>
    %449 = arith.addf %445, %448 : vector<16x2x16xf32>
    %450 = vector.extract_strided_slice %397 {offsets = [6, 0, 0], sizes = [16, 2, 16], strides = [1, 1, 1]} : vector<22x2x16xf32> to vector<16x2x16xf32>
    %451 = vector.broadcast %273 : f32 to vector<16x2x16xf32>
    %452 = arith.mulf %451, %450 : vector<16x2x16xf32>
    %453 = arith.addf %449, %452 : vector<16x2x16xf32>
    %c0_141 = arith.constant 0 : index
    %c0_142 = arith.constant 0 : index
    %c3_143 = arith.constant 3 : index
    %454 = vector.load %arg7[%c0_141, %c0_142, %c3_143] : memref<22x2x22xf32, #tpu.memory_space<vmem>>, vector<22x2x16xf32>
    %c0_144 = arith.constant 0 : index
    %c0_145 = arith.constant 0 : index
    %c3_146 = arith.constant 3 : index
    %455 = vector.load %arg8[%c0_144, %c0_145, %c3_146] : memref<22x2x22xf32, #tpu.memory_space<vmem>>, vector<22x2x16xf32>
    %456 = vector.extract_strided_slice %454 {offsets = [0, 0, 0], sizes = [16, 2, 16], strides = [1, 1, 1]} : vector<22x2x16xf32> to vector<16x2x16xf32>
    %457 = vector.broadcast %183 : f32 to vector<16x2x16xf32>
    %458 = arith.mulf %457, %456 : vector<16x2x16xf32>
    %459 = arith.addf %453, %458 : vector<16x2x16xf32>
    %460 = vector.extract_strided_slice %455 {offsets = [0, 0, 0], sizes = [16, 2, 16], strides = [1, 1, 1]} : vector<22x2x16xf32> to vector<16x2x16xf32>
    %461 = vector.broadcast %232 : f32 to vector<16x2x16xf32>
    %462 = arith.mulf %461, %460 : vector<16x2x16xf32>
    %463 = arith.addf %459, %462 : vector<16x2x16xf32>
    %464 = vector.extract_strided_slice %454 {offsets = [1, 0, 0], sizes = [16, 2, 16], strides = [1, 1, 1]} : vector<22x2x16xf32> to vector<16x2x16xf32>
    %465 = vector.broadcast %190 : f32 to vector<16x2x16xf32>
    %466 = arith.mulf %465, %464 : vector<16x2x16xf32>
    %467 = arith.addf %463, %466 : vector<16x2x16xf32>
    %468 = vector.extract_strided_slice %455 {offsets = [1, 0, 0], sizes = [16, 2, 16], strides = [1, 1, 1]} : vector<22x2x16xf32> to vector<16x2x16xf32>
    %469 = vector.broadcast %239 : f32 to vector<16x2x16xf32>
    %470 = arith.mulf %469, %468 : vector<16x2x16xf32>
    %471 = arith.addf %467, %470 : vector<16x2x16xf32>
    %472 = vector.extract_strided_slice %454 {offsets = [2, 0, 0], sizes = [16, 2, 16], strides = [1, 1, 1]} : vector<22x2x16xf32> to vector<16x2x16xf32>
    %473 = vector.broadcast %197 : f32 to vector<16x2x16xf32>
    %474 = arith.mulf %473, %472 : vector<16x2x16xf32>
    %475 = arith.addf %471, %474 : vector<16x2x16xf32>
    %476 = vector.extract_strided_slice %455 {offsets = [2, 0, 0], sizes = [16, 2, 16], strides = [1, 1, 1]} : vector<22x2x16xf32> to vector<16x2x16xf32>
    %477 = vector.broadcast %246 : f32 to vector<16x2x16xf32>
    %478 = arith.mulf %477, %476 : vector<16x2x16xf32>
    %479 = arith.addf %475, %478 : vector<16x2x16xf32>
    %480 = vector.extract_strided_slice %454 {offsets = [3, 0, 0], sizes = [16, 2, 16], strides = [1, 1, 1]} : vector<22x2x16xf32> to vector<16x2x16xf32>
    %481 = vector.broadcast %204 : f32 to vector<16x2x16xf32>
    %482 = arith.mulf %481, %480 : vector<16x2x16xf32>
    %483 = arith.addf %479, %482 : vector<16x2x16xf32>
    %484 = vector.extract_strided_slice %455 {offsets = [3, 0, 0], sizes = [16, 2, 16], strides = [1, 1, 1]} : vector<22x2x16xf32> to vector<16x2x16xf32>
    %485 = vector.broadcast %253 : f32 to vector<16x2x16xf32>
    %486 = arith.mulf %485, %484 : vector<16x2x16xf32>
    %487 = arith.addf %483, %486 : vector<16x2x16xf32>
    %488 = vector.extract_strided_slice %454 {offsets = [4, 0, 0], sizes = [16, 2, 16], strides = [1, 1, 1]} : vector<22x2x16xf32> to vector<16x2x16xf32>
    %489 = vector.broadcast %211 : f32 to vector<16x2x16xf32>
    %490 = arith.mulf %489, %488 : vector<16x2x16xf32>
    %491 = arith.addf %487, %490 : vector<16x2x16xf32>
    %492 = vector.extract_strided_slice %455 {offsets = [4, 0, 0], sizes = [16, 2, 16], strides = [1, 1, 1]} : vector<22x2x16xf32> to vector<16x2x16xf32>
    %493 = vector.broadcast %260 : f32 to vector<16x2x16xf32>
    %494 = arith.mulf %493, %492 : vector<16x2x16xf32>
    %495 = arith.addf %491, %494 : vector<16x2x16xf32>
    %496 = vector.extract_strided_slice %454 {offsets = [5, 0, 0], sizes = [16, 2, 16], strides = [1, 1, 1]} : vector<22x2x16xf32> to vector<16x2x16xf32>
    %497 = vector.broadcast %218 : f32 to vector<16x2x16xf32>
    %498 = arith.mulf %497, %496 : vector<16x2x16xf32>
    %499 = arith.addf %495, %498 : vector<16x2x16xf32>
    %500 = vector.extract_strided_slice %455 {offsets = [5, 0, 0], sizes = [16, 2, 16], strides = [1, 1, 1]} : vector<22x2x16xf32> to vector<16x2x16xf32>
    %501 = vector.broadcast %267 : f32 to vector<16x2x16xf32>
    %502 = arith.mulf %501, %500 : vector<16x2x16xf32>
    %503 = arith.addf %499, %502 : vector<16x2x16xf32>
    %504 = vector.extract_strided_slice %454 {offsets = [6, 0, 0], sizes = [16, 2, 16], strides = [1, 1, 1]} : vector<22x2x16xf32> to vector<16x2x16xf32>
    %505 = vector.broadcast %225 : f32 to vector<16x2x16xf32>
    %506 = arith.mulf %505, %504 : vector<16x2x16xf32>
    %507 = arith.addf %503, %506 : vector<16x2x16xf32>
    %508 = vector.extract_strided_slice %455 {offsets = [6, 0, 0], sizes = [16, 2, 16], strides = [1, 1, 1]} : vector<22x2x16xf32> to vector<16x2x16xf32>
    %509 = vector.broadcast %274 : f32 to vector<16x2x16xf32>
    %510 = arith.mulf %509, %508 : vector<16x2x16xf32>
    %511 = arith.addf %507, %510 : vector<16x2x16xf32>
    %c0_147 = arith.constant 0 : index
    %c0_148 = arith.constant 0 : index
    %c4_149 = arith.constant 4 : index
    %512 = vector.load %arg7[%c0_147, %c0_148, %c4_149] : memref<22x2x22xf32, #tpu.memory_space<vmem>>, vector<22x2x16xf32>
    %c0_150 = arith.constant 0 : index
    %c0_151 = arith.constant 0 : index
    %c4_152 = arith.constant 4 : index
    %513 = vector.load %arg8[%c0_150, %c0_151, %c4_152] : memref<22x2x22xf32, #tpu.memory_space<vmem>>, vector<22x2x16xf32>
    %514 = vector.extract_strided_slice %512 {offsets = [0, 0, 0], sizes = [16, 2, 16], strides = [1, 1, 1]} : vector<22x2x16xf32> to vector<16x2x16xf32>
    %515 = vector.broadcast %184 : f32 to vector<16x2x16xf32>
    %516 = arith.mulf %515, %514 : vector<16x2x16xf32>
    %517 = arith.addf %511, %516 : vector<16x2x16xf32>
    %518 = vector.extract_strided_slice %513 {offsets = [0, 0, 0], sizes = [16, 2, 16], strides = [1, 1, 1]} : vector<22x2x16xf32> to vector<16x2x16xf32>
    %519 = vector.broadcast %233 : f32 to vector<16x2x16xf32>
    %520 = arith.mulf %519, %518 : vector<16x2x16xf32>
    %521 = arith.addf %517, %520 : vector<16x2x16xf32>
    %522 = vector.extract_strided_slice %512 {offsets = [1, 0, 0], sizes = [16, 2, 16], strides = [1, 1, 1]} : vector<22x2x16xf32> to vector<16x2x16xf32>
    %523 = vector.broadcast %191 : f32 to vector<16x2x16xf32>
    %524 = arith.mulf %523, %522 : vector<16x2x16xf32>
    %525 = arith.addf %521, %524 : vector<16x2x16xf32>
    %526 = vector.extract_strided_slice %513 {offsets = [1, 0, 0], sizes = [16, 2, 16], strides = [1, 1, 1]} : vector<22x2x16xf32> to vector<16x2x16xf32>
    %527 = vector.broadcast %240 : f32 to vector<16x2x16xf32>
    %528 = arith.mulf %527, %526 : vector<16x2x16xf32>
    %529 = arith.addf %525, %528 : vector<16x2x16xf32>
    %530 = vector.extract_strided_slice %512 {offsets = [2, 0, 0], sizes = [16, 2, 16], strides = [1, 1, 1]} : vector<22x2x16xf32> to vector<16x2x16xf32>
    %531 = vector.broadcast %198 : f32 to vector<16x2x16xf32>
    %532 = arith.mulf %531, %530 : vector<16x2x16xf32>
    %533 = arith.addf %529, %532 : vector<16x2x16xf32>
    %534 = vector.extract_strided_slice %513 {offsets = [2, 0, 0], sizes = [16, 2, 16], strides = [1, 1, 1]} : vector<22x2x16xf32> to vector<16x2x16xf32>
    %535 = vector.broadcast %247 : f32 to vector<16x2x16xf32>
    %536 = arith.mulf %535, %534 : vector<16x2x16xf32>
    %537 = arith.addf %533, %536 : vector<16x2x16xf32>
    %538 = vector.extract_strided_slice %512 {offsets = [3, 0, 0], sizes = [16, 2, 16], strides = [1, 1, 1]} : vector<22x2x16xf32> to vector<16x2x16xf32>
    %539 = vector.broadcast %205 : f32 to vector<16x2x16xf32>
    %540 = arith.mulf %539, %538 : vector<16x2x16xf32>
    %541 = arith.addf %537, %540 : vector<16x2x16xf32>
    %542 = vector.extract_strided_slice %513 {offsets = [3, 0, 0], sizes = [16, 2, 16], strides = [1, 1, 1]} : vector<22x2x16xf32> to vector<16x2x16xf32>
    %543 = vector.broadcast %254 : f32 to vector<16x2x16xf32>
    %544 = arith.mulf %543, %542 : vector<16x2x16xf32>
    %545 = arith.addf %541, %544 : vector<16x2x16xf32>
    %546 = vector.extract_strided_slice %512 {offsets = [4, 0, 0], sizes = [16, 2, 16], strides = [1, 1, 1]} : vector<22x2x16xf32> to vector<16x2x16xf32>
    %547 = vector.broadcast %212 : f32 to vector<16x2x16xf32>
    %548 = arith.mulf %547, %546 : vector<16x2x16xf32>
    %549 = arith.addf %545, %548 : vector<16x2x16xf32>
    %550 = vector.extract_strided_slice %513 {offsets = [4, 0, 0], sizes = [16, 2, 16], strides = [1, 1, 1]} : vector<22x2x16xf32> to vector<16x2x16xf32>
    %551 = vector.broadcast %261 : f32 to vector<16x2x16xf32>
    %552 = arith.mulf %551, %550 : vector<16x2x16xf32>
    %553 = arith.addf %549, %552 : vector<16x2x16xf32>
    %554 = vector.extract_strided_slice %512 {offsets = [5, 0, 0], sizes = [16, 2, 16], strides = [1, 1, 1]} : vector<22x2x16xf32> to vector<16x2x16xf32>
    %555 = vector.broadcast %219 : f32 to vector<16x2x16xf32>
    %556 = arith.mulf %555, %554 : vector<16x2x16xf32>
    %557 = arith.addf %553, %556 : vector<16x2x16xf32>
    %558 = vector.extract_strided_slice %513 {offsets = [5, 0, 0], sizes = [16, 2, 16], strides = [1, 1, 1]} : vector<22x2x16xf32> to vector<16x2x16xf32>
    %559 = vector.broadcast %268 : f32 to vector<16x2x16xf32>
    %560 = arith.mulf %559, %558 : vector<16x2x16xf32>
    %561 = arith.addf %557, %560 : vector<16x2x16xf32>
    %562 = vector.extract_strided_slice %512 {offsets = [6, 0, 0], sizes = [16, 2, 16], strides = [1, 1, 1]} : vector<22x2x16xf32> to vector<16x2x16xf32>
    %563 = vector.broadcast %226 : f32 to vector<16x2x16xf32>
    %564 = arith.mulf %563, %562 : vector<16x2x16xf32>
    %565 = arith.addf %561, %564 : vector<16x2x16xf32>
    %566 = vector.extract_strided_slice %513 {offsets = [6, 0, 0], sizes = [16, 2, 16], strides = [1, 1, 1]} : vector<22x2x16xf32> to vector<16x2x16xf32>
    %567 = vector.broadcast %275 : f32 to vector<16x2x16xf32>
    %568 = arith.mulf %567, %566 : vector<16x2x16xf32>
    %569 = arith.addf %565, %568 : vector<16x2x16xf32>
    %c0_153 = arith.constant 0 : index
    %c0_154 = arith.constant 0 : index
    %c5_155 = arith.constant 5 : index
    %570 = vector.load %arg7[%c0_153, %c0_154, %c5_155] : memref<22x2x22xf32, #tpu.memory_space<vmem>>, vector<22x2x16xf32>
    %c0_156 = arith.constant 0 : index
    %c0_157 = arith.constant 0 : index
    %c5_158 = arith.constant 5 : index
    %571 = vector.load %arg8[%c0_156, %c0_157, %c5_158] : memref<22x2x22xf32, #tpu.memory_space<vmem>>, vector<22x2x16xf32>
    %572 = vector.extract_strided_slice %570 {offsets = [0, 0, 0], sizes = [16, 2, 16], strides = [1, 1, 1]} : vector<22x2x16xf32> to vector<16x2x16xf32>
    %573 = vector.broadcast %185 : f32 to vector<16x2x16xf32>
    %574 = arith.mulf %573, %572 : vector<16x2x16xf32>
    %575 = arith.addf %569, %574 : vector<16x2x16xf32>
    %576 = vector.extract_strided_slice %571 {offsets = [0, 0, 0], sizes = [16, 2, 16], strides = [1, 1, 1]} : vector<22x2x16xf32> to vector<16x2x16xf32>
    %577 = vector.broadcast %234 : f32 to vector<16x2x16xf32>
    %578 = arith.mulf %577, %576 : vector<16x2x16xf32>
    %579 = arith.addf %575, %578 : vector<16x2x16xf32>
    %580 = vector.extract_strided_slice %570 {offsets = [1, 0, 0], sizes = [16, 2, 16], strides = [1, 1, 1]} : vector<22x2x16xf32> to vector<16x2x16xf32>
    %581 = vector.broadcast %192 : f32 to vector<16x2x16xf32>
    %582 = arith.mulf %581, %580 : vector<16x2x16xf32>
    %583 = arith.addf %579, %582 : vector<16x2x16xf32>
    %584 = vector.extract_strided_slice %571 {offsets = [1, 0, 0], sizes = [16, 2, 16], strides = [1, 1, 1]} : vector<22x2x16xf32> to vector<16x2x16xf32>
    %585 = vector.broadcast %241 : f32 to vector<16x2x16xf32>
    %586 = arith.mulf %585, %584 : vector<16x2x16xf32>
    %587 = arith.addf %583, %586 : vector<16x2x16xf32>
    %588 = vector.extract_strided_slice %570 {offsets = [2, 0, 0], sizes = [16, 2, 16], strides = [1, 1, 1]} : vector<22x2x16xf32> to vector<16x2x16xf32>
    %589 = vector.broadcast %199 : f32 to vector<16x2x16xf32>
    %590 = arith.mulf %589, %588 : vector<16x2x16xf32>
    %591 = arith.addf %587, %590 : vector<16x2x16xf32>
    %592 = vector.extract_strided_slice %571 {offsets = [2, 0, 0], sizes = [16, 2, 16], strides = [1, 1, 1]} : vector<22x2x16xf32> to vector<16x2x16xf32>
    %593 = vector.broadcast %248 : f32 to vector<16x2x16xf32>
    %594 = arith.mulf %593, %592 : vector<16x2x16xf32>
    %595 = arith.addf %591, %594 : vector<16x2x16xf32>
    %596 = vector.extract_strided_slice %570 {offsets = [3, 0, 0], sizes = [16, 2, 16], strides = [1, 1, 1]} : vector<22x2x16xf32> to vector<16x2x16xf32>
    %597 = vector.broadcast %206 : f32 to vector<16x2x16xf32>
    %598 = arith.mulf %597, %596 : vector<16x2x16xf32>
    %599 = arith.addf %595, %598 : vector<16x2x16xf32>
    %600 = vector.extract_strided_slice %571 {offsets = [3, 0, 0], sizes = [16, 2, 16], strides = [1, 1, 1]} : vector<22x2x16xf32> to vector<16x2x16xf32>
    %601 = vector.broadcast %255 : f32 to vector<16x2x16xf32>
    %602 = arith.mulf %601, %600 : vector<16x2x16xf32>
    %603 = arith.addf %599, %602 : vector<16x2x16xf32>
    %604 = vector.extract_strided_slice %570 {offsets = [4, 0, 0], sizes = [16, 2, 16], strides = [1, 1, 1]} : vector<22x2x16xf32> to vector<16x2x16xf32>
    %605 = vector.broadcast %213 : f32 to vector<16x2x16xf32>
    %606 = arith.mulf %605, %604 : vector<16x2x16xf32>
    %607 = arith.addf %603, %606 : vector<16x2x16xf32>
    %608 = vector.extract_strided_slice %571 {offsets = [4, 0, 0], sizes = [16, 2, 16], strides = [1, 1, 1]} : vector<22x2x16xf32> to vector<16x2x16xf32>
    %609 = vector.broadcast %262 : f32 to vector<16x2x16xf32>
    %610 = arith.mulf %609, %608 : vector<16x2x16xf32>
    %611 = arith.addf %607, %610 : vector<16x2x16xf32>
    %612 = vector.extract_strided_slice %570 {offsets = [5, 0, 0], sizes = [16, 2, 16], strides = [1, 1, 1]} : vector<22x2x16xf32> to vector<16x2x16xf32>
    %613 = vector.broadcast %220 : f32 to vector<16x2x16xf32>
    %614 = arith.mulf %613, %612 : vector<16x2x16xf32>
    %615 = arith.addf %611, %614 : vector<16x2x16xf32>
    %616 = vector.extract_strided_slice %571 {offsets = [5, 0, 0], sizes = [16, 2, 16], strides = [1, 1, 1]} : vector<22x2x16xf32> to vector<16x2x16xf32>
    %617 = vector.broadcast %269 : f32 to vector<16x2x16xf32>
    %618 = arith.mulf %617, %616 : vector<16x2x16xf32>
    %619 = arith.addf %615, %618 : vector<16x2x16xf32>
    %620 = vector.extract_strided_slice %570 {offsets = [6, 0, 0], sizes = [16, 2, 16], strides = [1, 1, 1]} : vector<22x2x16xf32> to vector<16x2x16xf32>
    %621 = vector.broadcast %227 : f32 to vector<16x2x16xf32>
    %622 = arith.mulf %621, %620 : vector<16x2x16xf32>
    %623 = arith.addf %619, %622 : vector<16x2x16xf32>
    %624 = vector.extract_strided_slice %571 {offsets = [6, 0, 0], sizes = [16, 2, 16], strides = [1, 1, 1]} : vector<22x2x16xf32> to vector<16x2x16xf32>
    %625 = vector.broadcast %276 : f32 to vector<16x2x16xf32>
    %626 = arith.mulf %625, %624 : vector<16x2x16xf32>
    %627 = arith.addf %623, %626 : vector<16x2x16xf32>
    %c0_159 = arith.constant 0 : index
    %c0_160 = arith.constant 0 : index
    %c6_161 = arith.constant 6 : index
    %628 = vector.load %arg7[%c0_159, %c0_160, %c6_161] : memref<22x2x22xf32, #tpu.memory_space<vmem>>, vector<22x2x16xf32>
    %c0_162 = arith.constant 0 : index
    %c0_163 = arith.constant 0 : index
    %c6_164 = arith.constant 6 : index
    %629 = vector.load %arg8[%c0_162, %c0_163, %c6_164] : memref<22x2x22xf32, #tpu.memory_space<vmem>>, vector<22x2x16xf32>
    %630 = vector.extract_strided_slice %628 {offsets = [0, 0, 0], sizes = [16, 2, 16], strides = [1, 1, 1]} : vector<22x2x16xf32> to vector<16x2x16xf32>
    %631 = vector.broadcast %186 : f32 to vector<16x2x16xf32>
    %632 = arith.mulf %631, %630 : vector<16x2x16xf32>
    %633 = arith.addf %627, %632 : vector<16x2x16xf32>
    %634 = vector.extract_strided_slice %629 {offsets = [0, 0, 0], sizes = [16, 2, 16], strides = [1, 1, 1]} : vector<22x2x16xf32> to vector<16x2x16xf32>
    %635 = vector.broadcast %235 : f32 to vector<16x2x16xf32>
    %636 = arith.mulf %635, %634 : vector<16x2x16xf32>
    %637 = arith.addf %633, %636 : vector<16x2x16xf32>
    %638 = vector.extract_strided_slice %628 {offsets = [1, 0, 0], sizes = [16, 2, 16], strides = [1, 1, 1]} : vector<22x2x16xf32> to vector<16x2x16xf32>
    %639 = vector.broadcast %193 : f32 to vector<16x2x16xf32>
    %640 = arith.mulf %639, %638 : vector<16x2x16xf32>
    %641 = arith.addf %637, %640 : vector<16x2x16xf32>
    %642 = vector.extract_strided_slice %629 {offsets = [1, 0, 0], sizes = [16, 2, 16], strides = [1, 1, 1]} : vector<22x2x16xf32> to vector<16x2x16xf32>
    %643 = vector.broadcast %242 : f32 to vector<16x2x16xf32>
    %644 = arith.mulf %643, %642 : vector<16x2x16xf32>
    %645 = arith.addf %641, %644 : vector<16x2x16xf32>
    %646 = vector.extract_strided_slice %628 {offsets = [2, 0, 0], sizes = [16, 2, 16], strides = [1, 1, 1]} : vector<22x2x16xf32> to vector<16x2x16xf32>
    %647 = vector.broadcast %200 : f32 to vector<16x2x16xf32>
    %648 = arith.mulf %647, %646 : vector<16x2x16xf32>
    %649 = arith.addf %645, %648 : vector<16x2x16xf32>
    %650 = vector.extract_strided_slice %629 {offsets = [2, 0, 0], sizes = [16, 2, 16], strides = [1, 1, 1]} : vector<22x2x16xf32> to vector<16x2x16xf32>
    %651 = vector.broadcast %249 : f32 to vector<16x2x16xf32>
    %652 = arith.mulf %651, %650 : vector<16x2x16xf32>
    %653 = arith.addf %649, %652 : vector<16x2x16xf32>
    %654 = vector.extract_strided_slice %628 {offsets = [3, 0, 0], sizes = [16, 2, 16], strides = [1, 1, 1]} : vector<22x2x16xf32> to vector<16x2x16xf32>
    %655 = vector.broadcast %207 : f32 to vector<16x2x16xf32>
    %656 = arith.mulf %655, %654 : vector<16x2x16xf32>
    %657 = arith.addf %653, %656 : vector<16x2x16xf32>
    %658 = vector.extract_strided_slice %629 {offsets = [3, 0, 0], sizes = [16, 2, 16], strides = [1, 1, 1]} : vector<22x2x16xf32> to vector<16x2x16xf32>
    %659 = vector.broadcast %256 : f32 to vector<16x2x16xf32>
    %660 = arith.mulf %659, %658 : vector<16x2x16xf32>
    %661 = arith.addf %657, %660 : vector<16x2x16xf32>
    %662 = vector.extract_strided_slice %628 {offsets = [4, 0, 0], sizes = [16, 2, 16], strides = [1, 1, 1]} : vector<22x2x16xf32> to vector<16x2x16xf32>
    %663 = vector.broadcast %214 : f32 to vector<16x2x16xf32>
    %664 = arith.mulf %663, %662 : vector<16x2x16xf32>
    %665 = arith.addf %661, %664 : vector<16x2x16xf32>
    %666 = vector.extract_strided_slice %629 {offsets = [4, 0, 0], sizes = [16, 2, 16], strides = [1, 1, 1]} : vector<22x2x16xf32> to vector<16x2x16xf32>
    %667 = vector.broadcast %263 : f32 to vector<16x2x16xf32>
    %668 = arith.mulf %667, %666 : vector<16x2x16xf32>
    %669 = arith.addf %665, %668 : vector<16x2x16xf32>
    %670 = vector.extract_strided_slice %628 {offsets = [5, 0, 0], sizes = [16, 2, 16], strides = [1, 1, 1]} : vector<22x2x16xf32> to vector<16x2x16xf32>
    %671 = vector.broadcast %221 : f32 to vector<16x2x16xf32>
    %672 = arith.mulf %671, %670 : vector<16x2x16xf32>
    %673 = arith.addf %669, %672 : vector<16x2x16xf32>
    %674 = vector.extract_strided_slice %629 {offsets = [5, 0, 0], sizes = [16, 2, 16], strides = [1, 1, 1]} : vector<22x2x16xf32> to vector<16x2x16xf32>
    %675 = vector.broadcast %270 : f32 to vector<16x2x16xf32>
    %676 = arith.mulf %675, %674 : vector<16x2x16xf32>
    %677 = arith.addf %673, %676 : vector<16x2x16xf32>
    %678 = vector.extract_strided_slice %628 {offsets = [6, 0, 0], sizes = [16, 2, 16], strides = [1, 1, 1]} : vector<22x2x16xf32> to vector<16x2x16xf32>
    %679 = vector.broadcast %228 : f32 to vector<16x2x16xf32>
    %680 = arith.mulf %679, %678 : vector<16x2x16xf32>
    %681 = arith.addf %677, %680 : vector<16x2x16xf32>
    %682 = vector.extract_strided_slice %629 {offsets = [6, 0, 0], sizes = [16, 2, 16], strides = [1, 1, 1]} : vector<22x2x16xf32> to vector<16x2x16xf32>
    %683 = vector.broadcast %277 : f32 to vector<16x2x16xf32>
    %684 = arith.mulf %683, %682 : vector<16x2x16xf32>
    %685 = arith.addf %681, %684 : vector<16x2x16xf32>
    %686 = arith.negf %685 : vector<16x2x16xf32>
    %687 = math.exp %686 : vector<16x2x16xf32>
    %cst_165 = arith.constant 1.000000e+00 : f32
    %688 = vector.broadcast %cst_165 : f32 to vector<16x2x16xf32>
    %689 = arith.addf %688, %687 : vector<16x2x16xf32>
    %690 = arith.divf %688, %689 : vector<16x2x16xf32>
    %691 = vector.extract_strided_slice %690 {offsets = [0, 0, 0], sizes = [1, 2, 16], strides = [1, 1, 1]} : vector<16x2x16xf32> to vector<1x2x16xf32>
    %692 = vector.shape_cast %691 : vector<1x2x16xf32> to vector<2x16xf32>
    %c0_166 = arith.constant 0 : index
    %c0_167 = arith.constant 0 : index
    %693 = vector.load %arg9[%c0_166, %c0_167] : memref<2x256xf32, #tpu.memory_space<vmem>>, vector<2x16xf32>
    tpu.vector_store %arg9[%c0_166, %c0_167], %692 {strides = array<i32>} : memref<2x256xf32, #tpu.memory_space<vmem>>, vector<2x16xf32>,
    %694 = vector.extract_strided_slice %690 {offsets = [1, 0, 0], sizes = [1, 2, 16], strides = [1, 1, 1]} : vector<16x2x16xf32> to vector<1x2x16xf32>
    %695 = vector.shape_cast %694 : vector<1x2x16xf32> to vector<2x16xf32>
    %c0_168 = arith.constant 0 : index
    %c16_169 = arith.constant 16 : index
    %696 = vector.load %arg9[%c0_168, %c16_169] : memref<2x256xf32, #tpu.memory_space<vmem>>, vector<2x16xf32>
    tpu.vector_store %arg9[%c0_168, %c16_169], %695 {strides = array<i32>} : memref<2x256xf32, #tpu.memory_space<vmem>>, vector<2x16xf32>,
    %697 = vector.extract_strided_slice %690 {offsets = [2, 0, 0], sizes = [1, 2, 16], strides = [1, 1, 1]} : vector<16x2x16xf32> to vector<1x2x16xf32>
    %698 = vector.shape_cast %697 : vector<1x2x16xf32> to vector<2x16xf32>
    %c0_170 = arith.constant 0 : index
    %c32_171 = arith.constant 32 : index
    %699 = vector.load %arg9[%c0_170, %c32_171] : memref<2x256xf32, #tpu.memory_space<vmem>>, vector<2x16xf32>
    tpu.vector_store %arg9[%c0_170, %c32_171], %698 {strides = array<i32>} : memref<2x256xf32, #tpu.memory_space<vmem>>, vector<2x16xf32>,
    %700 = vector.extract_strided_slice %690 {offsets = [3, 0, 0], sizes = [1, 2, 16], strides = [1, 1, 1]} : vector<16x2x16xf32> to vector<1x2x16xf32>
    %701 = vector.shape_cast %700 : vector<1x2x16xf32> to vector<2x16xf32>
    %c0_172 = arith.constant 0 : index
    %c48_173 = arith.constant 48 : index
    %702 = vector.load %arg9[%c0_172, %c48_173] : memref<2x256xf32, #tpu.memory_space<vmem>>, vector<2x16xf32>
    tpu.vector_store %arg9[%c0_172, %c48_173], %701 {strides = array<i32>} : memref<2x256xf32, #tpu.memory_space<vmem>>, vector<2x16xf32>,
    %703 = vector.extract_strided_slice %690 {offsets = [4, 0, 0], sizes = [1, 2, 16], strides = [1, 1, 1]} : vector<16x2x16xf32> to vector<1x2x16xf32>
    %704 = vector.shape_cast %703 : vector<1x2x16xf32> to vector<2x16xf32>
    %c0_174 = arith.constant 0 : index
    %c64_175 = arith.constant 64 : index
    %705 = vector.load %arg9[%c0_174, %c64_175] : memref<2x256xf32, #tpu.memory_space<vmem>>, vector<2x16xf32>
    tpu.vector_store %arg9[%c0_174, %c64_175], %704 {strides = array<i32>} : memref<2x256xf32, #tpu.memory_space<vmem>>, vector<2x16xf32>,
    %706 = vector.extract_strided_slice %690 {offsets = [5, 0, 0], sizes = [1, 2, 16], strides = [1, 1, 1]} : vector<16x2x16xf32> to vector<1x2x16xf32>
    %707 = vector.shape_cast %706 : vector<1x2x16xf32> to vector<2x16xf32>
    %c0_176 = arith.constant 0 : index
    %c80_177 = arith.constant 80 : index
    %708 = vector.load %arg9[%c0_176, %c80_177] : memref<2x256xf32, #tpu.memory_space<vmem>>, vector<2x16xf32>
    tpu.vector_store %arg9[%c0_176, %c80_177], %707 {strides = array<i32>} : memref<2x256xf32, #tpu.memory_space<vmem>>, vector<2x16xf32>,
    %709 = vector.extract_strided_slice %690 {offsets = [6, 0, 0], sizes = [1, 2, 16], strides = [1, 1, 1]} : vector<16x2x16xf32> to vector<1x2x16xf32>
    %710 = vector.shape_cast %709 : vector<1x2x16xf32> to vector<2x16xf32>
    %c0_178 = arith.constant 0 : index
    %c96_179 = arith.constant 96 : index
    %711 = vector.load %arg9[%c0_178, %c96_179] : memref<2x256xf32, #tpu.memory_space<vmem>>, vector<2x16xf32>
    tpu.vector_store %arg9[%c0_178, %c96_179], %710 {strides = array<i32>} : memref<2x256xf32, #tpu.memory_space<vmem>>, vector<2x16xf32>,
    %712 = vector.extract_strided_slice %690 {offsets = [7, 0, 0], sizes = [1, 2, 16], strides = [1, 1, 1]} : vector<16x2x16xf32> to vector<1x2x16xf32>
    %713 = vector.shape_cast %712 : vector<1x2x16xf32> to vector<2x16xf32>
    %c0_180 = arith.constant 0 : index
    %c112 = arith.constant 112 : index
    %714 = vector.load %arg9[%c0_180, %c112] : memref<2x256xf32, #tpu.memory_space<vmem>>, vector<2x16xf32>
    tpu.vector_store %arg9[%c0_180, %c112], %713 {strides = array<i32>} : memref<2x256xf32, #tpu.memory_space<vmem>>, vector<2x16xf32>,
    %715 = vector.extract_strided_slice %690 {offsets = [8, 0, 0], sizes = [1, 2, 16], strides = [1, 1, 1]} : vector<16x2x16xf32> to vector<1x2x16xf32>
    %716 = vector.shape_cast %715 : vector<1x2x16xf32> to vector<2x16xf32>
    %c0_181 = arith.constant 0 : index
    %c128 = arith.constant 128 : index
    %717 = vector.load %arg9[%c0_181, %c128] : memref<2x256xf32, #tpu.memory_space<vmem>>, vector<2x16xf32>
    tpu.vector_store %arg9[%c0_181, %c128], %716 {strides = array<i32>} : memref<2x256xf32, #tpu.memory_space<vmem>>, vector<2x16xf32>,
    %718 = vector.extract_strided_slice %690 {offsets = [9, 0, 0], sizes = [1, 2, 16], strides = [1, 1, 1]} : vector<16x2x16xf32> to vector<1x2x16xf32>
    %719 = vector.shape_cast %718 : vector<1x2x16xf32> to vector<2x16xf32>
    %c0_182 = arith.constant 0 : index
    %c144 = arith.constant 144 : index
    %720 = vector.load %arg9[%c0_182, %c144] : memref<2x256xf32, #tpu.memory_space<vmem>>, vector<2x16xf32>
    tpu.vector_store %arg9[%c0_182, %c144], %719 {strides = array<i32>} : memref<2x256xf32, #tpu.memory_space<vmem>>, vector<2x16xf32>,
    %721 = vector.extract_strided_slice %690 {offsets = [10, 0, 0], sizes = [1, 2, 16], strides = [1, 1, 1]} : vector<16x2x16xf32> to vector<1x2x16xf32>
    %722 = vector.shape_cast %721 : vector<1x2x16xf32> to vector<2x16xf32>
    %c0_183 = arith.constant 0 : index
    %c160 = arith.constant 160 : index
    %723 = vector.load %arg9[%c0_183, %c160] : memref<2x256xf32, #tpu.memory_space<vmem>>, vector<2x16xf32>
    tpu.vector_store %arg9[%c0_183, %c160], %722 {strides = array<i32>} : memref<2x256xf32, #tpu.memory_space<vmem>>, vector<2x16xf32>,
    %724 = vector.extract_strided_slice %690 {offsets = [11, 0, 0], sizes = [1, 2, 16], strides = [1, 1, 1]} : vector<16x2x16xf32> to vector<1x2x16xf32>
    %725 = vector.shape_cast %724 : vector<1x2x16xf32> to vector<2x16xf32>
    %c0_184 = arith.constant 0 : index
    %c176 = arith.constant 176 : index
    %726 = vector.load %arg9[%c0_184, %c176] : memref<2x256xf32, #tpu.memory_space<vmem>>, vector<2x16xf32>
    tpu.vector_store %arg9[%c0_184, %c176], %725 {strides = array<i32>} : memref<2x256xf32, #tpu.memory_space<vmem>>, vector<2x16xf32>,
    %727 = vector.extract_strided_slice %690 {offsets = [12, 0, 0], sizes = [1, 2, 16], strides = [1, 1, 1]} : vector<16x2x16xf32> to vector<1x2x16xf32>
    %728 = vector.shape_cast %727 : vector<1x2x16xf32> to vector<2x16xf32>
    %c0_185 = arith.constant 0 : index
    %c192 = arith.constant 192 : index
    %729 = vector.load %arg9[%c0_185, %c192] : memref<2x256xf32, #tpu.memory_space<vmem>>, vector<2x16xf32>
    tpu.vector_store %arg9[%c0_185, %c192], %728 {strides = array<i32>} : memref<2x256xf32, #tpu.memory_space<vmem>>, vector<2x16xf32>,
    %730 = vector.extract_strided_slice %690 {offsets = [13, 0, 0], sizes = [1, 2, 16], strides = [1, 1, 1]} : vector<16x2x16xf32> to vector<1x2x16xf32>
    %731 = vector.shape_cast %730 : vector<1x2x16xf32> to vector<2x16xf32>
    %c0_186 = arith.constant 0 : index
    %c208 = arith.constant 208 : index
    %732 = vector.load %arg9[%c0_186, %c208] : memref<2x256xf32, #tpu.memory_space<vmem>>, vector<2x16xf32>
    tpu.vector_store %arg9[%c0_186, %c208], %731 {strides = array<i32>} : memref<2x256xf32, #tpu.memory_space<vmem>>, vector<2x16xf32>,
    %733 = vector.extract_strided_slice %690 {offsets = [14, 0, 0], sizes = [1, 2, 16], strides = [1, 1, 1]} : vector<16x2x16xf32> to vector<1x2x16xf32>
    %734 = vector.shape_cast %733 : vector<1x2x16xf32> to vector<2x16xf32>
    %c0_187 = arith.constant 0 : index
    %c224 = arith.constant 224 : index
    %735 = vector.load %arg9[%c0_187, %c224] : memref<2x256xf32, #tpu.memory_space<vmem>>, vector<2x16xf32>
    tpu.vector_store %arg9[%c0_187, %c224], %734 {strides = array<i32>} : memref<2x256xf32, #tpu.memory_space<vmem>>, vector<2x16xf32>,
    %736 = vector.extract_strided_slice %690 {offsets = [15, 0, 0], sizes = [1, 2, 16], strides = [1, 1, 1]} : vector<16x2x16xf32> to vector<1x2x16xf32>
    %737 = vector.shape_cast %736 : vector<1x2x16xf32> to vector<2x16xf32>
    %c0_188 = arith.constant 0 : index
    %c240 = arith.constant 240 : index
    %738 = vector.load %arg9[%c0_188, %c240] : memref<2x256xf32, #tpu.memory_space<vmem>>, vector<2x16xf32>
    tpu.vector_store %arg9[%c0_188, %c240], %737 {strides = array<i32>} : memref<2x256xf32, #tpu.memory_space<vmem>>, vector<2x16xf32>,
    %c0_189 = arith.constant 0 : index
    %c0_190 = arith.constant 0 : index
    %739 = vector.load %arg9[%c0_189, %c0_190] : memref<2x256xf32, #tpu.memory_space<vmem>>, vector<2x256xf32>
    %740 = vector.extract_strided_slice %44 {offsets = [0, 0, 0], sizes = [1, 32, 256], strides = [1, 1, 1]} : vector<2x32x256xf32> to vector<1x32x256xf32>
    %741 = vector.shape_cast %740 : vector<1x32x256xf32> to vector<32x256xf32>
    %742 = vector.extract_strided_slice %739 {offsets = [0, 0], sizes = [1, 256], strides = [1, 1]} : vector<2x256xf32> to vector<1x256xf32>
    %743 = vector.broadcast %742 : vector<1x256xf32> to vector<32x256xf32>
    %744 = arith.mulf %741, %743 : vector<32x256xf32>
    %c0_191 = arith.constant 0 : index
    %c0_192 = arith.constant 0 : index
    %c0_193 = arith.constant 0 : index
    %745 = vector.load %arg6[%c0_191, %c0_192, %c0_193] : memref<2x32x256xf32, #tpu.memory_space<vmem>>, vector<1x32x256xf32>
    %746 = vector.shape_cast %745 : vector<1x32x256xf32> to vector<32x256xf32>
    %747 = vector.shape_cast %744 : vector<32x256xf32> to vector<1x32x256xf32>
    tpu.vector_store %arg6[%c0_191, %c0_192, %c0_193], %747 {strides = array<i32>} : memref<2x32x256xf32, #tpu.memory_space<vmem>>, vector<1x32x256xf32>,
    %748 = vector.extract_strided_slice %44 {offsets = [1, 0, 0], sizes = [1, 32, 256], strides = [1, 1, 1]} : vector<2x32x256xf32> to vector<1x32x256xf32>
    %749 = vector.shape_cast %748 : vector<1x32x256xf32> to vector<32x256xf32>
    %750 = vector.extract_strided_slice %739 {offsets = [1, 0], sizes = [1, 256], strides = [1, 1]} : vector<2x256xf32> to vector<1x256xf32>
    %751 = vector.broadcast %750 : vector<1x256xf32> to vector<32x256xf32>
    %752 = arith.mulf %749, %751 : vector<32x256xf32>
    %c1_194 = arith.constant 1 : index
    %c0_195 = arith.constant 0 : index
    %c0_196 = arith.constant 0 : index
    %753 = vector.load %arg6[%c1_194, %c0_195, %c0_196] : memref<2x32x256xf32, #tpu.memory_space<vmem>>, vector<1x32x256xf32>
    %754 = vector.shape_cast %753 : vector<1x32x256xf32> to vector<32x256xf32>
    %755 = vector.shape_cast %752 : vector<32x256xf32> to vector<1x32x256xf32>
    tpu.vector_store %arg6[%c1_194, %c0_195, %c0_196], %755 {strides = array<i32>} : memref<2x32x256xf32, #tpu.memory_space<vmem>>, vector<1x32x256xf32>,
    return
  }
  func.func @transform_0(%arg0: i32) -> (i32, i32, i32) {
    %c0_i32 = arith.constant 0 : i32
    %c0_i32_0 = arith.constant 0 : i32
    %c0_i32_1 = arith.constant 0 : i32
    return %arg0, %c0_i32, %c0_i32_0 : i32, i32, i32
  }
  func.func @transform_1(%arg0: i32) -> (i32, i32) {
    %c0_i32 = arith.constant 0 : i32
    %c0_i32_0 = arith.constant 0 : i32
    %c0_i32_1 = arith.constant 0 : i32
    return %c0_i32, %c0_i32_0 : i32, i32
  }
  func.func @transform_2(%arg0: i32) -> (i32, i32) {
    %c0_i32 = arith.constant 0 : i32
    %c0_i32_0 = arith.constant 0 : i32
    %c0_i32_1 = arith.constant 0 : i32
    return %c0_i32, %c0_i32_0 : i32, i32
  }
  func.func @transform_3(%arg0: i32) -> i32 {
    %c0_i32 = arith.constant 0 : i32
    %c0_i32_0 = arith.constant 0 : i32
    return %c0_i32 : i32
  }
  func.func @transform_4(%arg0: i32) -> i32 {
    %c0_i32 = arith.constant 0 : i32
    %c0_i32_0 = arith.constant 0 : i32
    return %c0_i32 : i32
  }
  func.func @transform_5(%arg0: i32) -> (i32, i32, i32) {
    %c0_i32 = arith.constant 0 : i32
    %c0_i32_0 = arith.constant 0 : i32
    %c0_i32_1 = arith.constant 0 : i32
    return %arg0, %c0_i32, %c0_i32_0 : i32, i32, i32
  }
}

</mosaic_0001>

<llo_original>
// kernel: tpu_custom_call.1
$region0: #{tpu_custom_call.1}
  #allocation0 [shape = 'u32[]', space=smem, size = 0x4, offset = 0x4, fixed_abs, tag = 'smem constant byte address 0x4 - core index']
  #allocation1 [shape = 'u32[144,128]{1,0:T(1,128)}', space=vmem, size = 0x12000, scoped, tag = 'internal scratch']
  #allocation2 [shape = 'f32[22,2,22]{2,1,0:T(2,128)}', space=vmem, size = 0x5800, scoped, tag = 'scratch operand']
  #allocation3 [shape = 'f32[22,2,22]{2,1,0:T(2,128)}', space=vmem, size = 0x5800, scoped, tag = 'scratch operand']
  #allocation4 [shape = 'f32[2,256]{1,0:T(2,128)}', space=vmem, size = 0x800, scoped, tag = 'scratch operand']
  #allocation5 [shape = 'f32[1]{0:T(128)S(6)}', space=smem, size = 0x200, scoped, tag = 'scoped memory for tpu_custom_call.1']
  %s0 = inlined_call_operand.hbm [shape: f32[2,32,256], index: 0, kind: input, shape index: {}]
  %s1 = inlined_call_operand.vmem [shape: f32[32,2], index: 1, kind: input, shape index: {}]
  %s2 = inlined_call_operand.vmem [shape: f32[32,2], index: 2, kind: input, shape index: {}]
  %s3 = inlined_call_operand.vmem [shape: f32[98], index: 3, kind: input, shape index: {}]
  %s4 = inlined_call_operand.<no memory space> [shape: f32[1], index: 4, kind: input, shape index: {}]
  %s5 = inlined_call_operand.hbm [shape: f32[2,32,256], index: 5, kind: output, shape index: {}]
  %s6 = sld [smem:[#allocation0]]
  $region38: #{tpu_custom_call.1} parent=0
    _
  %s8 = ssub.s32 1, %s6
  %s9 = scalar_select 0, %s8, %s6
  %10 = sst [smem:[#allocation5]] %s4
  $region1: #{tpu_custom_call.1} parent=0
    #allocation6 [shape = 'u8[65536]{0}', space=vmem, size = 0x10000, scoped, tag = 'input window, operand 0, single buffered']
    #allocation7 [shape = 's32[1]{0}', space=sflag, size = 0x4, scoped, tag = 'scoped memory for tpu_custom_call.1']
    #allocation8 [shape = 's32[1]{0}', space=sflag, size = 0x4, scoped, tag = 'scoped memory for tpu_custom_call.1']
    #allocation9 [shape = 's32[1]{0}', space=sflag, size = 0x4, scoped, tag = 'scoped memory for tpu_custom_call.1']
    #allocation10 [shape = 'u8[512]{0}', space=smem, size = 0x200, scoped, tag = 'input window, operand 3, single buffered']
    #allocation11 [shape = 'u8[65536]{0}', space=vmem, size = 0x10000, scoped, tag = 'output window, operand 0, single buffered']
    %11 = vsyncpa [#allocation7], 0
    %12 = vsyncpa [#allocation9], 0
    %13 = vsyncpa [#allocation8], 0
    // Predicated region
    $region2: #{tpu_custom_call.1} parent=1 // pred_check
      _
    $region3: #{tpu_custom_call.1} parent=1 // pred_check_branch
      %15 = sbr.rel (0) target = $region5
    $region4: #{tpu_custom_call.1} parent=1 // pred_region
      %s17 = ssub.s32 2048, 2048
      %18 = vsyncadd [#allocation7], %s17
      %s19 = sshll.u32 [#allocation6], 4
      %s20 = int_to_ptr.vmem [resolvable:$true] %s19
      %25 = dma.hbm_to_vmem [thread:$0]  %s0, 2048, %s20, [#allocation7], 256, 256, 16
    $region5: #{tpu_custom_call.1} parent=1 // pred_fallthru
      _
    // Predicated region
    $region6: #{tpu_custom_call.1} parent=1 // pred_check
      _
    $region7: #{tpu_custom_call.1} parent=1 // pred_check_branch
      %27 = sbr.rel (0) target = $region9
    $region8: #{tpu_custom_call.1} parent=1 // pred_region
      _
    $region9: #{tpu_custom_call.1} parent=1 // pred_fallthru
      _
    // Predicated region
    $region10: #{tpu_custom_call.1} parent=1 // pred_check
      _
    $region11: #{tpu_custom_call.1} parent=1 // pred_check_branch
      %29 = sbr.rel (0) target = $region13
    $region12: #{tpu_custom_call.1} parent=1 // pred_region
      _
    $region13: #{tpu_custom_call.1} parent=1 // pred_fallthru
      _
    // Predicated region
    $region14: #{tpu_custom_call.1} parent=1 // pred_check
      _
    $region15: #{tpu_custom_call.1} parent=1 // pred_check_branch
      %31 = sbr.rel (0) target = $region17
    $region16: #{tpu_custom_call.1} parent=1 // pred_region
      %s33 = ssub.s32 16, 16
      %34 = vsyncadd [#allocation9], %s33
      %s36 = sshll.u32 %s3, 4
      %s37 = int_to_ptr.vmem [resolvable:$true] %s36
      %39 = dma.vmem_to_smem %s37, 16, [#allocation10], [#allocation9]
    $region17: #{tpu_custom_call.1} parent=1 // pred_fallthru
      _
    // Predicated region
    $region18: #{tpu_custom_call.1} parent=1 // pred_check
      _
    $region19: #{tpu_custom_call.1} parent=1 // pred_check_branch
      %41 = sbr.rel (0) target = $region21
    $region20: #{tpu_custom_call.1} parent=1 // pred_region
      _
    $region21: #{tpu_custom_call.1} parent=1 // pred_fallthru
      _
    // Predicated region
    $region22: #{tpu_custom_call.1} parent=1 // pred_check
      _
    $region23: #{tpu_custom_call.1} parent=1 // pred_check_branch
      %43 = sbr.rel (0) target = $region25
    $region24: #{tpu_custom_call.1} parent=1 // pred_region
      %44 = dma.done [#allocation7], 2048
    $region25: #{tpu_custom_call.1} parent=1 // pred_fallthru
      _
    // Predicated region
    $region26: #{tpu_custom_call.1} parent=1 // pred_check
      _
    $region27: #{tpu_custom_call.1} parent=1 // pred_check_branch
      %46 = sbr.rel (0) target = $region29
    $region28: #{tpu_custom_call.1} parent=1 // pred_region
      %47 = dma.done [#allocation9], 16
    $region29: #{tpu_custom_call.1} parent=1 // pred_fallthru
      _
    %48 = sfence
    %v49 = vld [vmem:[#allocation6] sm:$0xff]
    %v50 = vld [vmem:[#allocation6 + $0x8] sm:$0xff]
    %v51 = vld [vmem:[#allocation6 + $0x10] sm:$0xff]
    %v52 = vld [vmem:[#allocation6 + $0x18] sm:$0xff]
    %v53 = vld [vmem:[#allocation6 + $0x20] sm:$0xff]
    %v54 = vld [vmem:[#allocation6 + $0x28] sm:$0xff]
    %v55 = vld [vmem:[#allocation6 + $0x30] sm:$0xff]
    %v56 = vld [vmem:[#allocation6 + $0x38] sm:$0xff]
    %v57 = vld [vmem:[#allocation6 + $0x40] sm:$0xff]
    %v58 = vld [vmem:[#allocation6 + $0x48] sm:$0xff]
    %v59 = vld [vmem:[#allocation6 + $0x50] sm:$0xff]
    %v60 = vld [vmem:[#allocation6 + $0x58] sm:$0xff]
    %v61 = vld [vmem:[#allocation6 + $0x60] sm:$0xff]
    %v62 = vld [vmem:[#allocation6 + $0x68] sm:$0xff]
    %v63 = vld [vmem:[#allocation6 + $0x70] sm:$0xff]
    %v64 = vld [vmem:[#allocation6 + $0x78] sm:$0xff]
    %v65 = vld [vmem:[%s1] sm:$0xff]
    %v66 = vld [vmem:[%s1 + $0x8] sm:$0xff]
    %v67 = vld [vmem:[%s1 + $0x10] sm:$0xff]
    %v68 = vld [vmem:[%s1 + $0x18] sm:$0xff]
    %v69 = vld [vmem:[%s2] sm:$0xff]
    %v70 = vld [vmem:[%s2 + $0x8] sm:$0xff]
    %v71 = vld [vmem:[%s2 + $0x10] sm:$0xff]
    %v72 = vld [vmem:[%s2 + $0x18] sm:$0xff]
    %v73 = vadd.f32 %v49, %v50
    %74 = vadd.xlane.f32.xlu0 %v73
    %v75 = vpop.xlane.xlu0 %74
    %v76 = vadd.f32 %v51, %v52
    %77 = vadd.xlane.f32.xlu0 %v76
    %v78 = vpop.xlane.xlu0 %77
    %v79 = vadd.f32 %v53, %v54
    %80 = vadd.xlane.f32.xlu0 %v79
    %v81 = vpop.xlane.xlu0 %80
    %v82 = vadd.f32 %v55, %v56
    %83 = vadd.xlane.f32.xlu0 %v82
    %v84 = vpop.xlane.xlu0 %83
    %v85 = vadd.f32 %v57, %v58
    %86 = vadd.xlane.f32.xlu0 %v85
    %v87 = vpop.xlane.xlu0 %86
    %v88 = vadd.f32 %v59, %v60
    %89 = vadd.xlane.f32.xlu0 %v88
    %v90 = vpop.xlane.xlu0 %89
    %v91 = vadd.f32 %v61, %v62
    %92 = vadd.xlane.f32.xlu0 %v91
    %v93 = vpop.xlane.xlu0 %92
    %v94 = vadd.f32 %v63, %v64
    %95 = vadd.xlane.f32.xlu0 %v94
    %v96 = vpop.xlane.xlu0 %95
    %v97 = vrcp.pop 256.0
    %v98 = vmul.f32 %v75, %v97
    %v99 = vmul.f32 %v78, %v97
    %v100 = vmul.f32 %v81, %v97
    %v101 = vmul.f32 %v84, %v97
    %v102 = vmul.f32 %v87, %v97
    %v103 = vmul.f32 %v90, %v97
    %v104 = vmul.f32 %v93, %v97
    %v105 = vmul.f32 %v96, %v97
    %v106 = vmax.f32 %v49, %v50
    %107 = vmax.xlane.f32.xlu0 %v106
    %v108 = vpop.xlane.xlu0 %107
    %v109 = vmax.f32 %v51, %v52
    %110 = vmax.xlane.f32.xlu0 %v109
    %v111 = vpop.xlane.xlu0 %110
    %v112 = vmax.f32 %v53, %v54
    %113 = vmax.xlane.f32.xlu0 %v112
    %v114 = vpop.xlane.xlu0 %113
    %v115 = vmax.f32 %v55, %v56
    %116 = vmax.xlane.f32.xlu0 %v115
    %v117 = vpop.xlane.xlu0 %116
    %v118 = vmax.f32 %v57, %v58
    %119 = vmax.xlane.f32.xlu0 %v118
    %v120 = vpop.xlane.xlu0 %119
    %v121 = vmax.f32 %v59, %v60
    %122 = vmax.xlane.f32.xlu0 %v121
    %v123 = vpop.xlane.xlu0 %122
    %v124 = vmax.f32 %v61, %v62
    %125 = vmax.xlane.f32.xlu0 %v124
    %v126 = vpop.xlane.xlu0 %125
    %v127 = vmax.f32 %v63, %v64
    %128 = vmax.xlane.f32.xlu0 %v127
    %v129 = vpop.xlane.xlu0 %128
    %v130 = vmul.f32 %v98, %v65
    %v131 = vmul.f32 %v99, %v66
    %v132 = vmul.f32 %v100, %v67
    %v133 = vmul.f32 %v101, %v68
    %v134 = vmul.f32 %v102, %v65
    %v135 = vmul.f32 %v103, %v66
    %v136 = vmul.f32 %v104, %v67
    %v137 = vmul.f32 %v105, %v68
    %vm138 = vcmask 15360
    %v139 = vsel %vm138, %v130, 0.0
    %v140 = vsel %vm138, %v131, 0.0
    %v141 = vadd.f32 %v139, %v140
    %v142 = vsel %vm138, %v132, 0.0
    %v143 = vadd.f32 %v141, %v142
    %v144 = vsel %vm138, %v133, 0.0
    %v145 = vadd.f32 %v143, %v144
    %v146 = vrot.slane %v145, 4
    %v147 = vadd.f32 %v145, %v146
    %v148 = vrot.slane %v147, 2
    %v149 = vadd.f32 %v147, %v148
    %v150 = vrot.slane %v149, 1
    %v151 = vadd.f32 %v149, %v150
    %v152 = vsel %vm138, %v134, 0.0
    %v153 = vsel %vm138, %v135, 0.0
    %v154 = vadd.f32 %v152, %v153
    %v155 = vsel %vm138, %v136, 0.0
    %v156 = vadd.f32 %v154, %v155
    %v157 = vsel %vm138, %v137, 0.0
    %v158 = vadd.f32 %v156, %v157
    %v159 = vrot.slane %v158, 4
    %v160 = vadd.f32 %v158, %v159
    %v161 = vrot.slane %v160, 2
    %v162 = vadd.f32 %v160, %v161
    %v163 = vrot.slane %v162, 1
    %v164 = vadd.f32 %v162, %v163
    %v165 = vmax.f32 %v151, 0.0
    %v166 = vmax.f32 %v164, 0.0
    %v167 = vmul.f32 %v165, %v69
    %v168 = vmul.f32 %v165, %v70
    %v169 = vmul.f32 %v165, %v71
    %v170 = vmul.f32 %v165, %v72
    %v171 = vmul.f32 %v166, %v69
    %v172 = vmul.f32 %v166, %v70
    %v173 = vmul.f32 %v166, %v71
    %v174 = vmul.f32 %v166, %v72
    %v175 = vsel %vm138, %v167, 0.0
    %176 = vadd.xlane.f32.xlu0 %v175
    %v177 = vpop.xlane.xlu0 %176
    %v178 = vsel %vm138, %v168, 0.0
    %179 = vadd.xlane.f32.xlu0 %v178
    %v180 = vpop.xlane.xlu0 %179
    %v181 = vsel %vm138, %v169, 0.0
    %182 = vadd.xlane.f32.xlu0 %v181
    %v183 = vpop.xlane.xlu0 %182
    %v184 = vsel %vm138, %v170, 0.0
    %185 = vadd.xlane.f32.xlu0 %v184
    %v186 = vpop.xlane.xlu0 %185
    %v187 = vsel %vm138, %v171, 0.0
    %188 = vadd.xlane.f32.xlu0 %v187
    %v189 = vpop.xlane.xlu0 %188
    %v190 = vsel %vm138, %v172, 0.0
    %191 = vadd.xlane.f32.xlu0 %v190
    %v192 = vpop.xlane.xlu0 %191
    %v193 = vsel %vm138, %v173, 0.0
    %194 = vadd.xlane.f32.xlu0 %v193
    %v195 = vpop.xlane.xlu0 %194
    %v196 = vsel %vm138, %v174, 0.0
    %197 = vadd.xlane.f32.xlu0 %v196
    %v198 = vpop.xlane.xlu0 %197
    %v199 = vmul.f32 %v108, %v65
    %v200 = vmul.f32 %v111, %v66
    %v201 = vmul.f32 %v114, %v67
    %v202 = vmul.f32 %v117, %v68
    %v203 = vmul.f32 %v120, %v65
    %v204 = vmul.f32 %v123, %v66
    %v205 = vmul.f32 %v126, %v67
    %v206 = vmul.f32 %v129, %v68
    %v207 = vsel %vm138, %v199, 0.0
    %v208 = vsel %vm138, %v200, 0.0
    %v209 = vadd.f32 %v207, %v208
    %v210 = vsel %vm138, %v201, 0.0
    %v211 = vadd.f32 %v209, %v210
    %v212 = vsel %vm138, %v202, 0.0
    %v213 = vadd.f32 %v211, %v212
    %v214 = vrot.slane %v213, 4
    %v215 = vadd.f32 %v213, %v214
    %v216 = vrot.slane %v215, 2
    %v217 = vadd.f32 %v215, %v216
    %v218 = vrot.slane %v217, 1
    %v219 = vadd.f32 %v217, %v218
    %v220 = vsel %vm138, %v203, 0.0
    %v221 = vsel %vm138, %v204, 0.0
    %v222 = vadd.f32 %v220, %v221
    %v223 = vsel %vm138, %v205, 0.0
    %v224 = vadd.f32 %v222, %v223
    %v225 = vsel %vm138, %v206, 0.0
    %v226 = vadd.f32 %v224, %v225
    %v227 = vrot.slane %v226, 4
    %v228 = vadd.f32 %v226, %v227
    %v229 = vrot.slane %v228, 2
    %v230 = vadd.f32 %v228, %v229
    %v231 = vrot.slane %v230, 1
    %v232 = vadd.f32 %v230, %v231
    %v233 = vmax.f32 %v219, 0.0
    %v234 = vmax.f32 %v232, 0.0
    %v235 = vmul.f32 %v233, %v69
    %v236 = vmul.f32 %v233, %v70
    %v237 = vmul.f32 %v233, %v71
    %v238 = vmul.f32 %v233, %v72
    %v239 = vmul.f32 %v234, %v69
    %v240 = vmul.f32 %v234, %v70
    %v241 = vmul.f32 %v234, %v71
    %v242 = vmul.f32 %v234, %v72
    %v243 = vsel %vm138, %v235, 0.0
    %244 = vadd.xlane.f32.xlu0 %v243
    %v245 = vpop.xlane.xlu0 %244
    %v246 = vsel %vm138, %v236, 0.0
    %247 = vadd.xlane.f32.xlu0 %v246
    %v248 = vpop.xlane.xlu0 %247
    %v249 = vsel %vm138, %v237, 0.0
    %250 = vadd.xlane.f32.xlu0 %v249
    %v251 = vpop.xlane.xlu0 %250
    %v252 = vsel %vm138, %v238, 0.0
    %253 = vadd.xlane.f32.xlu0 %v252
    %v254 = vpop.xlane.xlu0 %253
    %v255 = vsel %vm138, %v239, 0.0
    %256 = vadd.xlane.f32.xlu0 %v255
    %v257 = vpop.xlane.xlu0 %256
    %v258 = vsel %vm138, %v240, 0.0
    %259 = vadd.xlane.f32.xlu0 %v258
    %v260 = vpop.xlane.xlu0 %259
    %v261 = vsel %vm138, %v241, 0.0
    %262 = vadd.xlane.f32.xlu0 %v261
    %v263 = vpop.xlane.xlu0 %262
    %v264 = vsel %vm138, %v242, 0.0
    %265 = vadd.xlane.f32.xlu0 %v264
    %v266 = vpop.xlane.xlu0 %265
    %v267 = vadd.f32 %v177, %v245
    %v268 = vadd.f32 %v180, %v248
    %v269 = vadd.f32 %v183, %v251
    %v270 = vadd.f32 %v186, %v254
    %v271 = vadd.f32 %v189, %v257
    %v272 = vadd.f32 %v192, %v260
    %v273 = vadd.f32 %v195, %v263
    %v274 = vadd.f32 %v198, %v266
    %v275 = vxor.u32 %v267, 2147483648
    %v276 = vxor.u32 %v268, 2147483648
    %v277 = vxor.u32 %v269, 2147483648
    %v278 = vxor.u32 %v270, 2147483648
    %v279 = vxor.u32 %v271, 2147483648
    %v280 = vxor.u32 %v272, 2147483648
    %v281 = vxor.u32 %v273, 2147483648
    %v282 = vxor.u32 %v274, 2147483648
    %v283 = vmul.f32 %v275, 1.442695
    %v284 = vpow.pop %v283
    %v285 = vmul.f32 %v276, 1.442695
    %v286 = vpow.pop %v285
    %v287 = vmul.f32 %v277, 1.442695
    %v288 = vpow.pop %v287
    %v289 = vmul.f32 %v278, 1.442695
    %v290 = vpow.pop %v289
    %v291 = vmul.f32 %v279, 1.442695
    %v292 = vpow.pop %v291
    %v293 = vmul.f32 %v280, 1.442695
    %v294 = vpow.pop %v293
    %v295 = vmul.f32 %v281, 1.442695
    %v296 = vpow.pop %v295
    %v297 = vmul.f32 %v282, 1.442695
    %v298 = vpow.pop %v297
    %v299 = vadd.f32 %v284, 1.0
    %v300 = vadd.f32 %v286, 1.0
    %v301 = vadd.f32 %v288, 1.0
    %v302 = vadd.f32 %v290, 1.0
    %v303 = vadd.f32 %v292, 1.0
    %v304 = vadd.f32 %v294, 1.0
    %v305 = vadd.f32 %v296, 1.0
    %v306 = vadd.f32 %v298, 1.0
    %v307 = vrcp.pop %v299
    %v308 = vmul.f32 1.0, %v307
    %v309 = vrcp.pop %v300
    %v310 = vmul.f32 1.0, %v309
    %v311 = vrcp.pop %v301
    %v312 = vmul.f32 1.0, %v311
    %v313 = vrcp.pop %v302
    %v314 = vmul.f32 1.0, %v313
    %v315 = vrcp.pop %v303
    %v316 = vmul.f32 1.0, %v315
    %v317 = vrcp.pop %v304
    %v318 = vmul.f32 1.0, %v317
    %v319 = vrcp.pop %v305
    %v320 = vmul.f32 1.0, %v319
    %v321 = vrcp.pop %v306
    %v322 = vmul.f32 1.0, %v321
    %v323 = vmul.f32 %v49, %v308
    %v324 = vmul.f32 %v50, %v308
    %v325 = vmul.f32 %v51, %v310
    %v326 = vmul.f32 %v52, %v310
    %v327 = vmul.f32 %v53, %v312
    %v328 = vmul.f32 %v54, %v312
    %v329 = vmul.f32 %v55, %v314
    %v330 = vmul.f32 %v56, %v314
    %v331 = vmul.f32 %v57, %v316
    %v332 = vmul.f32 %v58, %v316
    %v333 = vmul.f32 %v59, %v318
    %v334 = vmul.f32 %v60, %v318
    %v335 = vmul.f32 %v61, %v320
    %v336 = vmul.f32 %v62, %v320
    %v337 = vmul.f32 %v63, %v322
    %v338 = vmul.f32 %v64, %v322
    %v339 = vadd.f32 %v323, %v325
    %v340 = vadd.f32 %v339, %v327
    %v341 = vadd.f32 %v340, %v329
    %v342 = vrot.slane %v341, 4
    %v343 = vadd.f32 %v341, %v342
    %v344 = vrot.slane %v343, 2
    %v345 = vadd.f32 %v343, %v344
    %v346 = vrot.slane %v345, 1
    %v347 = vadd.f32 %v345, %v346
    %v348 = vadd.f32 %v324, %v326
    %v349 = vadd.f32 %v348, %v328
    %v350 = vadd.f32 %v349, %v330
    %v351 = vrot.slane %v350, 4
    %v352 = vadd.f32 %v350, %v351
    %v353 = vrot.slane %v352, 2
    %v354 = vadd.f32 %v352, %v353
    %v355 = vrot.slane %v354, 1
    %v356 = vadd.f32 %v354, %v355
    %v357 = vadd.f32 %v331, %v333
    %v358 = vadd.f32 %v357, %v335
    %v359 = vadd.f32 %v358, %v337
    %v360 = vrot.slane %v359, 4
    %v361 = vadd.f32 %v359, %v360
    %v362 = vrot.slane %v361, 2
    %v363 = vadd.f32 %v361, %v362
    %v364 = vrot.slane %v363, 1
    %v365 = vadd.f32 %v363, %v364
    %v366 = vadd.f32 %v332, %v334
    %v367 = vadd.f32 %v366, %v336
    %v368 = vadd.f32 %v367, %v338
    %v369 = vrot.slane %v368, 4
    %v370 = vadd.f32 %v368, %v369
    %v371 = vrot.slane %v370, 2
    %v372 = vadd.f32 %v370, %v371
    %v373 = vrot.slane %v372, 1
    %v374 = vadd.f32 %v372, %v373
    %v375 = vrcp.pop 32.0
    %v376 = vmul.f32 %v347, %v375
    %v377 = vmul.f32 %v356, %v375
    %v378 = vmul.f32 %v365, %v375
    %v379 = vmul.f32 %v374, %v375
    %v380 = vmax.f32 %v323, %v325
    %v381 = vmax.f32 %v380, %v327
    %v382 = vmax.f32 %v381, %v329
    %v383 = vrot.slane %v382, 4
    %v384 = vmax.f32 %v382, %v383
    %v385 = vrot.slane %v384, 2
    %v386 = vmax.f32 %v384, %v385
    %v387 = vrot.slane %v386, 1
    %v388 = vmax.f32 %v386, %v387
    %v389 = vmax.f32 %v324, %v326
    %v390 = vmax.f32 %v389, %v328
    %v391 = vmax.f32 %v390, %v330
    %v392 = vrot.slane %v391, 4
    %v393 = vmax.f32 %v391, %v392
    %v394 = vrot.slane %v393, 2
    %v395 = vmax.f32 %v393, %v394
    %v396 = vrot.slane %v395, 1
    %v397 = vmax.f32 %v395, %v396
    %v398 = vmax.f32 %v331, %v333
    %v399 = vmax.f32 %v398, %v335
    %v400 = vmax.f32 %v399, %v337
    %v401 = vrot.slane %v400, 4
    %v402 = vmax.f32 %v400, %v401
    %v403 = vrot.slane %v402, 2
    %v404 = vmax.f32 %v402, %v403
    %v405 = vrot.slane %v404, 1
    %v406 = vmax.f32 %v404, %v405
    %v407 = vmax.f32 %v332, %v334
    %v408 = vmax.f32 %v407, %v336
    %v409 = vmax.f32 %v408, %v338
    %v410 = vrot.slane %v409, 4
    %v411 = vmax.f32 %v409, %v410
    %v412 = vrot.slane %v411, 2
    %v413 = vmax.f32 %v411, %v412
    %v414 = vrot.slane %v413, 1
    %v415 = vmax.f32 %v413, %v414
    %vm416 = vcmask 173056
    %417 = vst.msk [vmem:[#allocation2] sm:$0x3] %vm416, 0.0
    %418 = vst.msk [vmem:[#allocation2 + $0x2] sm:$0x3] %vm416, 0.0
    %419 = vst.msk [vmem:[#allocation2 + $0x4] sm:$0x3] %vm416, 0.0
    %420 = vst.msk [vmem:[#allocation2 + $0x6] sm:$0x3] %vm416, 0.0
    %421 = vst.msk [vmem:[#allocation2 + $0x8] sm:$0x3] %vm416, 0.0
    %422 = vst.msk [vmem:[#allocation2 + $0xa] sm:$0x3] %vm416, 0.0
    %423 = vst.msk [vmem:[#allocation2 + $0xc] sm:$0x3] %vm416, 0.0
    %424 = vst.msk [vmem:[#allocation2 + $0xe] sm:$0x3] %vm416, 0.0
    %425 = vst.msk [vmem:[#allocation2 + $0x10] sm:$0x3] %vm416, 0.0
    %426 = vst.msk [vmem:[#allocation2 + $0x12] sm:$0x3] %vm416, 0.0
    %427 = vst.msk [vmem:[#allocation2 + $0x14] sm:$0x3] %vm416, 0.0
    %428 = vst.msk [vmem:[#allocation2 + $0x16] sm:$0x3] %vm416, 0.0
    %429 = vst.msk [vmem:[#allocation2 + $0x18] sm:$0x3] %vm416, 0.0
    %430 = vst.msk [vmem:[#allocation2 + $0x1a] sm:$0x3] %vm416, 0.0
    %431 = vst.msk [vmem:[#allocation2 + $0x1c] sm:$0x3] %vm416, 0.0
    %432 = vst.msk [vmem:[#allocation2 + $0x1e] sm:$0x3] %vm416, 0.0
    %433 = vst.msk [vmem:[#allocation2 + $0x20] sm:$0x3] %vm416, 0.0
    %434 = vst.msk [vmem:[#allocation2 + $0x22] sm:$0x3] %vm416, 0.0
    %435 = vst.msk [vmem:[#allocation2 + $0x24] sm:$0x3] %vm416, 0.0
    %436 = vst.msk [vmem:[#allocation2 + $0x26] sm:$0x3] %vm416, 0.0
    %437 = vst.msk [vmem:[#allocation2 + $0x28] sm:$0x3] %vm416, 0.0
    %438 = vst.msk [vmem:[#allocation2 + $0x2a] sm:$0x3] %vm416, 0.0
    %439 = vst.msk [vmem:[#allocation3] sm:$0x3] %vm416, 0.0
    %440 = vst.msk [vmem:[#allocation3 + $0x2] sm:$0x3] %vm416, 0.0
    %441 = vst.msk [vmem:[#allocation3 + $0x4] sm:$0x3] %vm416, 0.0
    %442 = vst.msk [vmem:[#allocation3 + $0x6] sm:$0x3] %vm416, 0.0
    %443 = vst.msk [vmem:[#allocation3 + $0x8] sm:$0x3] %vm416, 0.0
    %444 = vst.msk [vmem:[#allocation3 + $0xa] sm:$0x3] %vm416, 0.0
    %445 = vst.msk [vmem:[#allocation3 + $0xc] sm:$0x3] %vm416, 0.0
    %446 = vst.msk [vmem:[#allocation3 + $0xe] sm:$0x3] %vm416, 0.0
    %447 = vst.msk [vmem:[#allocation3 + $0x10] sm:$0x3] %vm416, 0.0
    %448 = vst.msk [vmem:[#allocation3 + $0x12] sm:$0x3] %vm416, 0.0
    %449 = vst.msk [vmem:[#allocation3 + $0x14] sm:$0x3] %vm416, 0.0
    %450 = vst.msk [vmem:[#allocation3 + $0x16] sm:$0x3] %vm416, 0.0
    %451 = vst.msk [vmem:[#allocation3 + $0x18] sm:$0x3] %vm416, 0.0
    %452 = vst.msk [vmem:[#allocation3 + $0x1a] sm:$0x3] %vm416, 0.0
    %453 = vst.msk [vmem:[#allocation3 + $0x1c] sm:$0x3] %vm416, 0.0
    %454 = vst.msk [vmem:[#allocation3 + $0x1e] sm:$0x3] %vm416, 0.0
    %455 = vst.msk [vmem:[#allocation3 + $0x20] sm:$0x3] %vm416, 0.0
    %456 = vst.msk [vmem:[#allocation3 + $0x22] sm:$0x3] %vm416, 0.0
    %457 = vst.msk [vmem:[#allocation3 + $0x24] sm:$0x3] %vm416, 0.0
    %458 = vst.msk [vmem:[#allocation3 + $0x26] sm:$0x3] %vm416, 0.0
    %459 = vst.msk [vmem:[#allocation3 + $0x28] sm:$0x3] %vm416, 0.0
    %460 = vst.msk [vmem:[#allocation3 + $0x2a] sm:$0x3] %vm416, 0.0
    %vm463 = vcmask 1041409
    %v464 = vsel %vm463, %v378, %v376
    %465 = vrot.lane.b32.xlu0 %v464, 3
    %v466 = vpop.permute.xlu0 %465
    %s468 = scalar_lea.vmem [#allocation2], 6
    %vm469 = vcmask 148504
    %470 = vst.msk [vmem:[%s468] sm:$0x3] %vm469, %v466
    %v473 = vsel %vm463, %v406, %v388
    %474 = vrot.lane.b32.xlu0 %v473, 3
    %v475 = vpop.permute.xlu0 %474
    %s477 = scalar_lea.vmem [#allocation3], 6
    %478 = vst.msk [vmem:[%s477] sm:$0x3] %vm469, %v475
    %479 = vrot.lane.b32.xlu0 %v464, 115
    %v480 = vpop.permute.xlu0 %479
    %s482 = scalar_lea.vmem [#allocation2], 8
    %483 = vst.msk [vmem:[%s482] sm:$0x3] %vm469, %v480
    %484 = vrot.lane.b32.xlu0 %v473, 115
    %v485 = vpop.permute.xlu0 %484
    %s487 = scalar_lea.vmem [#allocation3], 8
    %488 = vst.msk [vmem:[%s487] sm:$0x3] %vm469, %v485
    %489 = vrot.lane.b32.xlu0 %v464, 99
    %v490 = vpop.permute.xlu0 %489
    %s492 = scalar_lea.vmem [#allocation2], 10
    %493 = vst.msk [vmem:[%s492] sm:$0x3] %vm469, %v490
    %494 = vrot.lane.b32.xlu0 %v473, 99
    %v495 = vpop.permute.xlu0 %494
    %s497 = scalar_lea.vmem [#allocation3], 10
    %498 = vst.msk [vmem:[%s497] sm:$0x3] %vm469, %v495
    %499 = vrot.lane.b32.xlu0 %v464, 83
    %v500 = vpop.permute.xlu0 %499
    %s502 = scalar_lea.vmem [#allocation2], 12
    %503 = vst.msk [vmem:[%s502] sm:$0x3] %vm469, %v500
    %504 = vrot.lane.b32.xlu0 %v473, 83
    %v505 = vpop.permute.xlu0 %504
    %s507 = scalar_lea.vmem [#allocation3], 12
    %508 = vst.msk [vmem:[%s507] sm:$0x3] %vm469, %v505
    %509 = vrot.lane.b32.xlu0 %v464, 67
    %v510 = vpop.permute.xlu0 %509
    %s512 = scalar_lea.vmem [#allocation2], 14
    %513 = vst.msk [vmem:[%s512] sm:$0x3] %vm469, %v510
    %514 = vrot.lane.b32.xlu0 %v473, 67
    %v515 = vpop.permute.xlu0 %514
    %s517 = scalar_lea.vmem [#allocation3], 14
    %518 = vst.msk [vmem:[%s517] sm:$0x3] %vm469, %v515
    %519 = vrot.lane.b32.xlu0 %v464, 51
    %v520 = vpop.permute.xlu0 %519
    %s522 = scalar_lea.vmem [#allocation2], 16
    %523 = vst.msk [vmem:[%s522] sm:$0x3] %vm469, %v520
    %524 = vrot.lane.b32.xlu0 %v473, 51
    %v525 = vpop.permute.xlu0 %524
    %s527 = scalar_lea.vmem [#allocation3], 16
    %528 = vst.msk [vmem:[%s527] sm:$0x3] %vm469, %v525
    %529 = vrot.lane.b32.xlu0 %v464, 35
    %v530 = vpop.permute.xlu0 %529
    %s532 = scalar_lea.vmem [#allocation2], 18
    %533 = vst.msk [vmem:[%s532] sm:$0x3] %vm469, %v530
    %534 = vrot.lane.b32.xlu0 %v473, 35
    %v535 = vpop.permute.xlu0 %534
    %s537 = scalar_lea.vmem [#allocation3], 18
    %538 = vst.msk [vmem:[%s537] sm:$0x3] %vm469, %v535
    %539 = vrot.lane.b32.xlu0 %v464, 19
    %v540 = vpop.permute.xlu0 %539
    %s542 = scalar_lea.vmem [#allocation2], 20
    %543 = vst.msk [vmem:[%s542] sm:$0x3] %vm469, %v540
    %544 = vrot.lane.b32.xlu0 %v473, 19
    %v545 = vpop.permute.xlu0 %544
    %s547 = scalar_lea.vmem [#allocation3], 20
    %548 = vst.msk [vmem:[%s547] sm:$0x3] %vm469, %v545
    %v551 = vsel %vm463, %v379, %v377
    %552 = vrot.lane.b32.xlu0 %v551, 3
    %v553 = vpop.permute.xlu0 %552
    %s555 = scalar_lea.vmem [#allocation2], 22
    %556 = vst.msk [vmem:[%s555] sm:$0x3] %vm469, %v553
    %v559 = vsel %vm463, %v415, %v397
    %560 = vrot.lane.b32.xlu0 %v559, 3
    %v561 = vpop.permute.xlu0 %560
    %s563 = scalar_lea.vmem [#allocation3], 22
    %564 = vst.msk [vmem:[%s563] sm:$0x3] %vm469, %v561
    %565 = vrot.lane.b32.xlu0 %v551, 115
    %v566 = vpop.permute.xlu0 %565
    %s568 = scalar_lea.vmem [#allocation2], 24
    %569 = vst.msk [vmem:[%s568] sm:$0x3] %vm469, %v566
    %570 = vrot.lane.b32.xlu0 %v559, 115
    %v571 = vpop.permute.xlu0 %570
    %s573 = scalar_lea.vmem [#allocation3], 24
    %574 = vst.msk [vmem:[%s573] sm:$0x3] %vm469, %v571
    %575 = vrot.lane.b32.xlu0 %v551, 99
    %v576 = vpop.permute.xlu0 %575
    %s578 = scalar_lea.vmem [#allocation2], 26
    %579 = vst.msk [vmem:[%s578] sm:$0x3] %vm469, %v576
    %580 = vrot.lane.b32.xlu0 %v559, 99
    %v581 = vpop.permute.xlu0 %580
    %s583 = scalar_lea.vmem [#allocation3], 26
    %584 = vst.msk [vmem:[%s583] sm:$0x3] %vm469, %v581
    %585 = vrot.lane.b32.xlu0 %v551, 83
    %v586 = vpop.permute.xlu0 %585
    %s588 = scalar_lea.vmem [#allocation2], 28
    %589 = vst.msk [vmem:[%s588] sm:$0x3] %vm469, %v586
    %590 = vrot.lane.b32.xlu0 %v559, 83
    %v591 = vpop.permute.xlu0 %590
    %s593 = scalar_lea.vmem [#allocation3], 28
    %594 = vst.msk [vmem:[%s593] sm:$0x3] %vm469, %v591
    %595 = vrot.lane.b32.xlu0 %v551, 67
    %v596 = vpop.permute.xlu0 %595
    %s598 = scalar_lea.vmem [#allocation2], 30
    %599 = vst.msk [vmem:[%s598] sm:$0x3] %vm469, %v596
    %600 = vrot.lane.b32.xlu0 %v559, 67
    %v601 = vpop.permute.xlu0 %600
    %s603 = scalar_lea.vmem [#allocation3], 30
    %604 = vst.msk [vmem:[%s603] sm:$0x3] %vm469, %v601
    %605 = vrot.lane.b32.xlu0 %v551, 51
    %v606 = vpop.permute.xlu0 %605
    %s608 = scalar_lea.vmem [#allocation2], 32
    %609 = vst.msk [vmem:[%s608] sm:$0x3] %vm469, %v606
    %610 = vrot.lane.b32.xlu0 %v559, 51
    %v611 = vpop.permute.xlu0 %610
    %s613 = scalar_lea.vmem [#allocation3], 32
    %614 = vst.msk [vmem:[%s613] sm:$0x3] %vm469, %v611
    %615 = vrot.lane.b32.xlu0 %v551, 35
    %v616 = vpop.permute.xlu0 %615
    %s618 = scalar_lea.vmem [#allocation2], 34
    %619 = vst.msk [vmem:[%s618] sm:$0x3] %vm469, %v616
    %620 = vrot.lane.b32.xlu0 %v559, 35
    %v621 = vpop.permute.xlu0 %620
    %s623 = scalar_lea.vmem [#allocation3], 34
    %624 = vst.msk [vmem:[%s623] sm:$0x3] %vm469, %v621
    %625 = vrot.lane.b32.xlu0 %v551, 19
    %v626 = vpop.permute.xlu0 %625
    %s628 = scalar_lea.vmem [#allocation2], 36
    %629 = vst.msk [vmem:[%s628] sm:$0x3] %vm469, %v626
    %630 = vrot.lane.b32.xlu0 %v559, 19
    %v631 = vpop.permute.xlu0 %630
    %s633 = scalar_lea.vmem [#allocation3], 36
    %634 = vst.msk [vmem:[%s633] sm:$0x3] %vm469, %v631
    %s635 = sld [smem:[#allocation10]]
    %s636 = sld [smem:[#allocation10 + $0x1]]
    %s637 = sld [smem:[#allocation10 + $0x2]]
    %s638 = sld [smem:[#allocation10 + $0x3]]
    %s639 = sld [smem:[#allocation10 + $0x4]]
    %s640 = sld [smem:[#allocation10 + $0x5]]
    %s641 = sld [smem:[#allocation10 + $0x6]]
    %s642 = sld [smem:[#allocation10 + $0x7]]
    %s643 = sld [smem:[#allocation10 + $0x8]]
    %s644 = sld [smem:[#allocation10 + $0x9]]
    %s645 = sld [smem:[#allocation10 + $0xa]]
    %s646 = sld [smem:[#allocation10 + $0xb]]
    %s647 = sld [smem:[#allocation10 + $0xc]]
    %s648 = sld [smem:[#allocation10 + $0xd]]
    %s649 = sld [smem:[#allocation10 + $0xe]]
    %s650 = sld [smem:[#allocation10 + $0xf]]
    %s651 = sld [smem:[#allocation10 + $0x10]]
    %s652 = sld [smem:[#allocation10 + $0x11]]
    %s653 = sld [smem:[#allocation10 + $0x12]]
    %s654 = sld [smem:[#allocation10 + $0x13]]
    %s655 = sld [smem:[#allocation10 + $0x14]]
    %s656 = sld [smem:[#allocation10 + $0x15]]
    %s657 = sld [smem:[#allocation10 + $0x16]]
    %s658 = sld [smem:[#allocation10 + $0x17]]
    %s659 = sld [smem:[#allocation10 + $0x18]]
    %s660 = sld [smem:[#allocation10 + $0x19]]
    %s661 = sld [smem:[#allocation10 + $0x1a]]
    %s662 = sld [smem:[#allocation10 + $0x1b]]
    %s663 = sld [smem:[#allocation10 + $0x1c]]
    %s664 = sld [smem:[#allocation10 + $0x1d]]
    %s665 = sld [smem:[#allocation10 + $0x1e]]
    %s666 = sld [smem:[#allocation10 + $0x1f]]
    %s667 = sld [smem:[#allocation10 + $0x20]]
    %s668 = sld [smem:[#allocation10 + $0x21]]
    %s669 = sld [smem:[#allocation10 + $0x22]]
    %s670 = sld [smem:[#allocation10 + $0x23]]
    %s671 = sld [smem:[#allocation10 + $0x24]]
    %s672 = sld [smem:[#allocation10 + $0x25]]
    %s673 = sld [smem:[#allocation10 + $0x26]]
    %s674 = sld [smem:[#allocation10 + $0x27]]
    %s675 = sld [smem:[#allocation10 + $0x28]]
    %s676 = sld [smem:[#allocation10 + $0x29]]
    %s677 = sld [smem:[#allocation10 + $0x2a]]
    %s678 = sld [smem:[#allocation10 + $0x2b]]
    %s679 = sld [smem:[#allocation10 + $0x2c]]
    %s680 = sld [smem:[#allocation10 + $0x2d]]
    %s681 = sld [smem:[#allocation10 + $0x2e]]
    %s682 = sld [smem:[#allocation10 + $0x2f]]
    %s683 = sld [smem:[#allocation10 + $0x30]]
    %s684 = sld [smem:[#allocation10 + $0x31]]
    %s685 = sld [smem:[#allocation10 + $0x32]]
    %s686 = sld [smem:[#allocation10 + $0x33]]
    %s687 = sld [smem:[#allocation10 + $0x34]]
    %s688 = sld [smem:[#allocation10 + $0x35]]
    %s689 = sld [smem:[#allocation10 + $0x36]]
    %s690 = sld [smem:[#allocation10 + $0x37]]
    %s691 = sld [smem:[#allocation10 + $0x38]]
    %s692 = sld [smem:[#allocation10 + $0x39]]
    %s693 = sld [smem:[#allocation10 + $0x3a]]
    %s694 = sld [smem:[#allocation10 + $0x3b]]
    %s695 = sld [smem:[#allocation10 + $0x3c]]
    %s696 = sld [smem:[#allocation10 + $0x3d]]
    %s697 = sld [smem:[#allocation10 + $0x3e]]
    %s698 = sld [smem:[#allocation10 + $0x3f]]
    %s699 = sld [smem:[#allocation10 + $0x40]]
    %s700 = sld [smem:[#allocation10 + $0x41]]
    %s701 = sld [smem:[#allocation10 + $0x42]]
    %s702 = sld [smem:[#allocation10 + $0x43]]
    %s703 = sld [smem:[#allocation10 + $0x44]]
    %s704 = sld [smem:[#allocation10 + $0x45]]
    %s705 = sld [smem:[#allocation10 + $0x46]]
    %s706 = sld [smem:[#allocation10 + $0x47]]
    %s707 = sld [smem:[#allocation10 + $0x48]]
    %s708 = sld [smem:[#allocation10 + $0x49]]
    %s709 = sld [smem:[#allocation10 + $0x4a]]
    %s710 = sld [smem:[#allocation10 + $0x4b]]
    %s711 = sld [smem:[#allocation10 + $0x4c]]
    %s712 = sld [smem:[#allocation10 + $0x4d]]
    %s713 = sld [smem:[#allocation10 + $0x4e]]
    %s714 = sld [smem:[#allocation10 + $0x4f]]
    %s715 = sld [smem:[#allocation10 + $0x50]]
    %s716 = sld [smem:[#allocation10 + $0x51]]
    %s717 = sld [smem:[#allocation10 + $0x52]]
    %s718 = sld [smem:[#allocation10 + $0x53]]
    %s719 = sld [smem:[#allocation10 + $0x54]]
    %s720 = sld [smem:[#allocation10 + $0x55]]
    %s721 = sld [smem:[#allocation10 + $0x56]]
    %s722 = sld [smem:[#allocation10 + $0x57]]
    %s723 = sld [smem:[#allocation10 + $0x58]]
    %s724 = sld [smem:[#allocation10 + $0x59]]
    %s725 = sld [smem:[#allocation10 + $0x5a]]
    %s726 = sld [smem:[#allocation10 + $0x5b]]
    %s727 = sld [smem:[#allocation10 + $0x5c]]
    %s728 = sld [smem:[#allocation10 + $0x5d]]
    %s729 = sld [smem:[#allocation10 + $0x5e]]
    %s730 = sld [smem:[#allocation10 + $0x5f]]
    %s731 = sld [smem:[#allocation10 + $0x60]]
    %s732 = sld [smem:[#allocation10 + $0x61]]
    %s733 = sld [smem:[#allocation5]]
    %v734 = vstv %s733
    %v735 = vld [vmem:[#allocation2] sm:$0x3]
    %v736 = vld [vmem:[#allocation2 + $0x2] sm:$0x3]
    %v737 = vld [vmem:[#allocation2 + $0x4] sm:$0x3]
    %v738 = vld [vmem:[#allocation2 + $0x6] sm:$0x3]
    %v739 = vld [vmem:[#allocation2 + $0x8] sm:$0x3]
    %v740 = vld [vmem:[#allocation2 + $0xa] sm:$0x3]
    %v741 = vld [vmem:[#allocation2 + $0xc] sm:$0x3]
    %v742 = vld [vmem:[#allocation2 + $0xe] sm:$0x3]
    %v743 = vld [vmem:[#allocation2 + $0x10] sm:$0x3]
    %v744 = vld [vmem:[#allocation2 + $0x12] sm:$0x3]
    %v745 = vld [vmem:[#allocation2 + $0x14] sm:$0x3]
    %v746 = vld [vmem:[#allocation2 + $0x16] sm:$0x3]
    %v747 = vld [vmem:[#allocation2 + $0x18] sm:$0x3]
    %v748 = vld [vmem:[#allocation2 + $0x1a] sm:$0x3]
    %v749 = vld [vmem:[#allocation2 + $0x1c] sm:$0x3]
    %v750 = vld [vmem:[#allocation2 + $0x1e] sm:$0x3]
    %v751 = vld [vmem:[#allocation2 + $0x20] sm:$0x3]
    %v752 = vld [vmem:[#allocation2 + $0x22] sm:$0x3]
    %v753 = vld [vmem:[#allocation2 + $0x24] sm:$0x3]
    %v754 = vld [vmem:[#allocation2 + $0x26] sm:$0x3]
    %v755 = vld [vmem:[#allocation2 + $0x28] sm:$0x3]
    %v756 = vld [vmem:[#allocation2 + $0x2a] sm:$0x3]
    %v757 = vld [vmem:[#allocation3] sm:$0x3]
    %v758 = vld [vmem:[#allocation3 + $0x2] sm:$0x3]
    %v759 = vld [vmem:[#allocation3 + $0x4] sm:$0x3]
    %v760 = vld [vmem:[#allocation3 + $0x6] sm:$0x3]
    %v761 = vld [vmem:[#allocation3 + $0x8] sm:$0x3]
    %v762 = vld [vmem:[#allocation3 + $0xa] sm:$0x3]
    %v763 = vld [vmem:[#allocation3 + $0xc] sm:$0x3]
    %v764 = vld [vmem:[#allocation3 + $0xe] sm:$0x3]
    %v765 = vld [vmem:[#allocation3 + $0x10] sm:$0x3]
    %v766 = vld [vmem:[#allocation3 + $0x12] sm:$0x3]
    %v767 = vld [vmem:[#allocation3 + $0x14] sm:$0x3]
    %v768 = vld [vmem:[#allocation3 + $0x16] sm:$0x3]
    %v769 = vld [vmem:[#allocation3 + $0x18] sm:$0x3]
    %v770 = vld [vmem:[#allocation3 + $0x1a] sm:$0x3]
    %v771 = vld [vmem:[#allocation3 + $0x1c] sm:$0x3]
    %v772 = vld [vmem:[#allocation3 + $0x1e] sm:$0x3]
    %v773 = vld [vmem:[#allocation3 + $0x20] sm:$0x3]
    %v774 = vld [vmem:[#allocation3 + $0x22] sm:$0x3]
    %v775 = vld [vmem:[#allocation3 + $0x24] sm:$0x3]
    %v776 = vld [vmem:[#allocation3 + $0x26] sm:$0x3]
    %v777 = vld [vmem:[#allocation3 + $0x28] sm:$0x3]
    %v778 = vld [vmem:[#allocation3 + $0x2a] sm:$0x3]
    %v779 = vstv %s635
    %v780 = vmul.f32 %v779, %v735
    %v781 = vmul.f32 %v779, %v736
    %v782 = vmul.f32 %v779, %v737
    %v783 = vmul.f32 %v779, %v738
    %v784 = vmul.f32 %v779, %v739
    %v785 = vmul.f32 %v779, %v740
    %v786 = vmul.f32 %v779, %v741
    %v787 = vmul.f32 %v779, %v742
    %v788 = vmul.f32 %v779, %v743
    %v789 = vmul.f32 %v779, %v744
    %v790 = vmul.f32 %v779, %v745
    %v791 = vmul.f32 %v779, %v746
    %v792 = vmul.f32 %v779, %v747
    %v793 = vmul.f32 %v779, %v748
    %v794 = vmul.f32 %v779, %v749
    %v795 = vmul.f32 %v779, %v750
    %v796 = vadd.f32 %v734, %v780
    %v797 = vadd.f32 %v734, %v781
    %v798 = vadd.f32 %v734, %v782
    %v799 = vadd.f32 %v734, %v783
    %v800 = vadd.f32 %v734, %v784
    %v801 = vadd.f32 %v734, %v785
    %v802 = vadd.f32 %v734, %v786
    %v803 = vadd.f32 %v734, %v787
    %v804 = vadd.f32 %v734, %v788
    %v805 = vadd.f32 %v734, %v789
    %v806 = vadd.f32 %v734, %v790
    %v807 = vadd.f32 %v734, %v791
    %v808 = vadd.f32 %v734, %v792
    %v809 = vadd.f32 %v734, %v793
    %v810 = vadd.f32 %v734, %v794
    %v811 = vadd.f32 %v734, %v795
    %v812 = vstv %s684
    %v813 = vmul.f32 %v812, %v757
    %v814 = vmul.f32 %v812, %v758
    %v815 = vmul.f32 %v812, %v759
    %v816 = vmul.f32 %v812, %v760
    %v817 = vmul.f32 %v812, %v761
    %v818 = vmul.f32 %v812, %v762
    %v819 = vmul.f32 %v812, %v763
    %v820 = vmul.f32 %v812, %v764
    %v821 = vmul.f32 %v812, %v765
    %v822 = vmul.f32 %v812, %v766
    %v823 = vmul.f32 %v812, %v767
    %v824 = vmul.f32 %v812, %v768
    %v825 = vmul.f32 %v812, %v769
    %v826 = vmul.f32 %v812, %v770
    %v827 = vmul.f32 %v812, %v771
    %v828 = vmul.f32 %v812, %v772
    %v829 = vadd.f32 %v796, %v813
    %v830 = vadd.f32 %v797, %v814
    %v831 = vadd.f32 %v798, %v815
    %v832 = vadd.f32 %v799, %v816
    %v833 = vadd.f32 %v800, %v817
    %v834 = vadd.f32 %v801, %v818
    %v835 = vadd.f32 %v802, %v819
    %v836 = vadd.f32 %v803, %v820
    %v837 = vadd.f32 %v804, %v821
    %v838 = vadd.f32 %v805, %v822
    %v839 = vadd.f32 %v806, %v823
    %v840 = vadd.f32 %v807, %v824
    %v841 = vadd.f32 %v808, %v825
    %v842 = vadd.f32 %v809, %v826
    %v843 = vadd.f32 %v810, %v827
    %v844 = vadd.f32 %v811, %v828
    %v845 = vstv %s642
    %v846 = vmul.f32 %v845, %v736
    %v847 = vmul.f32 %v845, %v737
    %v848 = vmul.f32 %v845, %v738
    %v849 = vmul.f32 %v845, %v739
    %v850 = vmul.f32 %v845, %v740
    %v851 = vmul.f32 %v845, %v741
    %v852 = vmul.f32 %v845, %v742
    %v853 = vmul.f32 %v845, %v743
    %v854 = vmul.f32 %v845, %v744
    %v855 = vmul.f32 %v845, %v745
    %v856 = vmul.f32 %v845, %v746
    %v857 = vmul.f32 %v845, %v747
    %v858 = vmul.f32 %v845, %v748
    %v859 = vmul.f32 %v845, %v749
    %v860 = vmul.f32 %v845, %v750
    %v861 = vmul.f32 %v845, %v751
    %v862 = vadd.f32 %v829, %v846
    %v863 = vadd.f32 %v830, %v847
    %v864 = vadd.f32 %v831, %v848
    %v865 = vadd.f32 %v832, %v849
    %v866 = vadd.f32 %v833, %v850
    %v867 = vadd.f32 %v834, %v851
    %v868 = vadd.f32 %v835, %v852
    %v869 = vadd.f32 %v836, %v853
    %v870 = vadd.f32 %v837, %v854
    %v871 = vadd.f32 %v838, %v855
    %v872 = vadd.f32 %v839, %v856
    %v873 = vadd.f32 %v840, %v857
    %v874 = vadd.f32 %v841, %v858
    %v875 = vadd.f32 %v842, %v859
    %v876 = vadd.f32 %v843, %v860
    %v877 = vadd.f32 %v844, %v861
    %v878 = vstv %s691
    %v879 = vmul.f32 %v878, %v758
    %v880 = vmul.f32 %v878, %v759
    %v881 = vmul.f32 %v878, %v760
    %v882 = vmul.f32 %v878, %v761
    %v883 = vmul.f32 %v878, %v762
    %v884 = vmul.f32 %v878, %v763
    %v885 = vmul.f32 %v878, %v764
    %v886 = vmul.f32 %v878, %v765
    %v887 = vmul.f32 %v878, %v766
    %v888 = vmul.f32 %v878, %v767
    %v889 = vmul.f32 %v878, %v768
    %v890 = vmul.f32 %v878, %v769
    %v891 = vmul.f32 %v878, %v770
    %v892 = vmul.f32 %v878, %v771
    %v893 = vmul.f32 %v878, %v772
    %v894 = vmul.f32 %v878, %v773
    %v895 = vadd.f32 %v862, %v879
    %v896 = vadd.f32 %v863, %v880
    %v897 = vadd.f32 %v864, %v881
    %v898 = vadd.f32 %v865, %v882
    %v899 = vadd.f32 %v866, %v883
    %v900 = vadd.f32 %v867, %v884
    %v901 = vadd.f32 %v868, %v885
    %v902 = vadd.f32 %v869, %v886
    %v903 = vadd.f32 %v870, %v887
    %v904 = vadd.f32 %v871, %v888
    %v905 = vadd.f32 %v872, %v889
    %v906 = vadd.f32 %v873, %v890
    %v907 = vadd.f32 %v874, %v891
    %v908 = vadd.f32 %v875, %v892
    %v909 = vadd.f32 %v876, %v893
    %v910 = vadd.f32 %v877, %v894
    %v911 = vstv %s649
    %v912 = vmul.f32 %v911, %v737
    %v913 = vmul.f32 %v911, %v738
    %v914 = vmul.f32 %v911, %v739
    %v915 = vmul.f32 %v911, %v740
    %v916 = vmul.f32 %v911, %v741
    %v917 = vmul.f32 %v911, %v742
    %v918 = vmul.f32 %v911, %v743
    %v919 = vmul.f32 %v911, %v744
    %v920 = vmul.f32 %v911, %v745
    %v921 = vmul.f32 %v911, %v746
    %v922 = vmul.f32 %v911, %v747
    %v923 = vmul.f32 %v911, %v748
    %v924 = vmul.f32 %v911, %v749
    %v925 = vmul.f32 %v911, %v750
    %v926 = vmul.f32 %v911, %v751
    %v927 = vmul.f32 %v911, %v752
    %v928 = vadd.f32 %v895, %v912
    %v929 = vadd.f32 %v896, %v913
    %v930 = vadd.f32 %v897, %v914
    %v931 = vadd.f32 %v898, %v915
    %v932 = vadd.f32 %v899, %v916
    %v933 = vadd.f32 %v900, %v917
    %v934 = vadd.f32 %v901, %v918
    %v935 = vadd.f32 %v902, %v919
    %v936 = vadd.f32 %v903, %v920
    %v937 = vadd.f32 %v904, %v921
    %v938 = vadd.f32 %v905, %v922
    %v939 = vadd.f32 %v906, %v923
    %v940 = vadd.f32 %v907, %v924
    %v941 = vadd.f32 %v908, %v925
    %v942 = vadd.f32 %v909, %v926
    %v943 = vadd.f32 %v910, %v927
    %v944 = vstv %s698
    %v945 = vmul.f32 %v944, %v759
    %v946 = vmul.f32 %v944, %v760
    %v947 = vmul.f32 %v944, %v761
    %v948 = vmul.f32 %v944, %v762
    %v949 = vmul.f32 %v944, %v763
    %v950 = vmul.f32 %v944, %v764
    %v951 = vmul.f32 %v944, %v765
    %v952 = vmul.f32 %v944, %v766
    %v953 = vmul.f32 %v944, %v767
    %v954 = vmul.f32 %v944, %v768
    %v955 = vmul.f32 %v944, %v769
    %v956 = vmul.f32 %v944, %v770
    %v957 = vmul.f32 %v944, %v771
    %v958 = vmul.f32 %v944, %v772
    %v959 = vmul.f32 %v944, %v773
    %v960 = vmul.f32 %v944, %v774
    %v961 = vadd.f32 %v928, %v945
    %v962 = vadd.f32 %v929, %v946
    %v963 = vadd.f32 %v930, %v947
    %v964 = vadd.f32 %v931, %v948
    %v965 = vadd.f32 %v932, %v949
    %v966 = vadd.f32 %v933, %v950
    %v967 = vadd.f32 %v934, %v951
    %v968 = vadd.f32 %v935, %v952
    %v969 = vadd.f32 %v936, %v953
    %v970 = vadd.f32 %v937, %v954
    %v971 = vadd.f32 %v938, %v955
    %v972 = vadd.f32 %v939, %v956
    %v973 = vadd.f32 %v940, %v957
    %v974 = vadd.f32 %v941, %v958
    %v975 = vadd.f32 %v942, %v959
    %v976 = vadd.f32 %v943, %v960
    %v977 = vstv %s656
    %v978 = vmul.f32 %v977, %v738
    %v979 = vmul.f32 %v977, %v739
    %v980 = vmul.f32 %v977, %v740
    %v981 = vmul.f32 %v977, %v741
    %v982 = vmul.f32 %v977, %v742
    %v983 = vmul.f32 %v977, %v743
    %v984 = vmul.f32 %v977, %v744
    %v985 = vmul.f32 %v977, %v745
    %v986 = vmul.f32 %v977, %v746
    %v987 = vmul.f32 %v977, %v747
    %v988 = vmul.f32 %v977, %v748
    %v989 = vmul.f32 %v977, %v749
    %v990 = vmul.f32 %v977, %v750
    %v991 = vmul.f32 %v977, %v751
    %v992 = vmul.f32 %v977, %v752
    %v993 = vmul.f32 %v977, %v753
    %v994 = vadd.f32 %v961, %v978
    %v995 = vadd.f32 %v962, %v979
    %v996 = vadd.f32 %v963, %v980
    %v997 = vadd.f32 %v964, %v981
    %v998 = vadd.f32 %v965, %v982
    %v999 = vadd.f32 %v966, %v983
    %v1000 = vadd.f32 %v967, %v984
    %v1001 = vadd.f32 %v968, %v985
    %v1002 = vadd.f32 %v969, %v986
    %v1003 = vadd.f32 %v970, %v987
    %v1004 = vadd.f32 %v971, %v988
    %v1005 = vadd.f32 %v972, %v989
    %v1006 = vadd.f32 %v973, %v990
    %v1007 = vadd.f32 %v974, %v991
    %v1008 = vadd.f32 %v975, %v992
    %v1009 = vadd.f32 %v976, %v993
    %v1010 = vstv %s705
    %v1011 = vmul.f32 %v1010, %v760
    %v1012 = vmul.f32 %v1010, %v761
    %v1013 = vmul.f32 %v1010, %v762
    %v1014 = vmul.f32 %v1010, %v763
    %v1015 = vmul.f32 %v1010, %v764
    %v1016 = vmul.f32 %v1010, %v765
    %v1017 = vmul.f32 %v1010, %v766
    %v1018 = vmul.f32 %v1010, %v767
    %v1019 = vmul.f32 %v1010, %v768
    %v1020 = vmul.f32 %v1010, %v769
    %v1021 = vmul.f32 %v1010, %v770
    %v1022 = vmul.f32 %v1010, %v771
    %v1023 = vmul.f32 %v1010, %v772
    %v1024 = vmul.f32 %v1010, %v773
    %v1025 = vmul.f32 %v1010, %v774
    %v1026 = vmul.f32 %v1010, %v775
    %v1027 = vadd.f32 %v994, %v1011
    %v1028 = vadd.f32 %v995, %v1012
    %v1029 = vadd.f32 %v996, %v1013
    %v1030 = vadd.f32 %v997, %v1014
    %v1031 = vadd.f32 %v998, %v1015
    %v1032 = vadd.f32 %v999, %v1016
    %v1033 = vadd.f32 %v1000, %v1017
    %v1034 = vadd.f32 %v1001, %v1018
    %v1035 = vadd.f32 %v1002, %v1019
    %v1036 = vadd.f32 %v1003, %v1020
    %v1037 = vadd.f32 %v1004, %v1021
    %v1038 = vadd.f32 %v1005, %v1022
    %v1039 = vadd.f32 %v1006, %v1023
    %v1040 = vadd.f32 %v1007, %v1024
    %v1041 = vadd.f32 %v1008, %v1025
    %v1042 = vadd.f32 %v1009, %v1026
    %v1043 = vstv %s663
    %v1044 = vmul.f32 %v1043, %v739
    %v1045 = vmul.f32 %v1043, %v740
    %v1046 = vmul.f32 %v1043, %v741
    %v1047 = vmul.f32 %v1043, %v742
    %v1048 = vmul.f32 %v1043, %v743
    %v1049 = vmul.f32 %v1043, %v744
    %v1050 = vmul.f32 %v1043, %v745
    %v1051 = vmul.f32 %v1043, %v746
    %v1052 = vmul.f32 %v1043, %v747
    %v1053 = vmul.f32 %v1043, %v748
    %v1054 = vmul.f32 %v1043, %v749
    %v1055 = vmul.f32 %v1043, %v750
    %v1056 = vmul.f32 %v1043, %v751
    %v1057 = vmul.f32 %v1043, %v752
    %v1058 = vmul.f32 %v1043, %v753
    %v1059 = vmul.f32 %v1043, %v754
    %v1060 = vadd.f32 %v1027, %v1044
    %v1061 = vadd.f32 %v1028, %v1045
    %v1062 = vadd.f32 %v1029, %v1046
    %v1063 = vadd.f32 %v1030, %v1047
    %v1064 = vadd.f32 %v1031, %v1048
    %v1065 = vadd.f32 %v1032, %v1049
    %v1066 = vadd.f32 %v1033, %v1050
    %v1067 = vadd.f32 %v1034, %v1051
    %v1068 = vadd.f32 %v1035, %v1052
    %v1069 = vadd.f32 %v1036, %v1053
    %v1070 = vadd.f32 %v1037, %v1054
    %v1071 = vadd.f32 %v1038, %v1055
    %v1072 = vadd.f32 %v1039, %v1056
    %v1073 = vadd.f32 %v1040, %v1057
    %v1074 = vadd.f32 %v1041, %v1058
    %v1075 = vadd.f32 %v1042, %v1059
    %v1076 = vstv %s712
    %v1077 = vmul.f32 %v1076, %v761
    %v1078 = vmul.f32 %v1076, %v762
    %v1079 = vmul.f32 %v1076, %v763
    %v1080 = vmul.f32 %v1076, %v764
    %v1081 = vmul.f32 %v1076, %v765
    %v1082 = vmul.f32 %v1076, %v766
    %v1083 = vmul.f32 %v1076, %v767
    %v1084 = vmul.f32 %v1076, %v768
    %v1085 = vmul.f32 %v1076, %v769
    %v1086 = vmul.f32 %v1076, %v770
    %v1087 = vmul.f32 %v1076, %v771
    %v1088 = vmul.f32 %v1076, %v772
    %v1089 = vmul.f32 %v1076, %v773
    %v1090 = vmul.f32 %v1076, %v774
    %v1091 = vmul.f32 %v1076, %v775
    %v1092 = vmul.f32 %v1076, %v776
    %v1093 = vadd.f32 %v1060, %v1077
    %v1094 = vadd.f32 %v1061, %v1078
    %v1095 = vadd.f32 %v1062, %v1079
    %v1096 = vadd.f32 %v1063, %v1080
    %v1097 = vadd.f32 %v1064, %v1081
    %v1098 = vadd.f32 %v1065, %v1082
    %v1099 = vadd.f32 %v1066, %v1083
    %v1100 = vadd.f32 %v1067, %v1084
    %v1101 = vadd.f32 %v1068, %v1085
    %v1102 = vadd.f32 %v1069, %v1086
    %v1103 = vadd.f32 %v1070, %v1087
    %v1104 = vadd.f32 %v1071, %v1088
    %v1105 = vadd.f32 %v1072, %v1089
    %v1106 = vadd.f32 %v1073, %v1090
    %v1107 = vadd.f32 %v1074, %v1091
    %v1108 = vadd.f32 %v1075, %v1092
    %v1109 = vstv %s670
    %v1110 = vmul.f32 %v1109, %v740
    %v1111 = vmul.f32 %v1109, %v741
    %v1112 = vmul.f32 %v1109, %v742
    %v1113 = vmul.f32 %v1109, %v743
    %v1114 = vmul.f32 %v1109, %v744
    %v1115 = vmul.f32 %v1109, %v745
    %v1116 = vmul.f32 %v1109, %v746
    %v1117 = vmul.f32 %v1109, %v747
    %v1118 = vmul.f32 %v1109, %v748
    %v1119 = vmul.f32 %v1109, %v749
    %v1120 = vmul.f32 %v1109, %v750
    %v1121 = vmul.f32 %v1109, %v751
    %v1122 = vmul.f32 %v1109, %v752
    %v1123 = vmul.f32 %v1109, %v753
    %v1124 = vmul.f32 %v1109, %v754
    %v1125 = vmul.f32 %v1109, %v755
    %v1126 = vadd.f32 %v1093, %v1110
    %v1127 = vadd.f32 %v1094, %v1111
    %v1128 = vadd.f32 %v1095, %v1112
    %v1129 = vadd.f32 %v1096, %v1113
    %v1130 = vadd.f32 %v1097, %v1114
    %v1131 = vadd.f32 %v1098, %v1115
    %v1132 = vadd.f32 %v1099, %v1116
    %v1133 = vadd.f32 %v1100, %v1117
    %v1134 = vadd.f32 %v1101, %v1118
    %v1135 = vadd.f32 %v1102, %v1119
    %v1136 = vadd.f32 %v1103, %v1120
    %v1137 = vadd.f32 %v1104, %v1121
    %v1138 = vadd.f32 %v1105, %v1122
    %v1139 = vadd.f32 %v1106, %v1123
    %v1140 = vadd.f32 %v1107, %v1124
    %v1141 = vadd.f32 %v1108, %v1125
    %v1142 = vstv %s719
    %v1143 = vmul.f32 %v1142, %v762
    %v1144 = vmul.f32 %v1142, %v763
    %v1145 = vmul.f32 %v1142, %v764
    %v1146 = vmul.f32 %v1142, %v765
    %v1147 = vmul.f32 %v1142, %v766
    %v1148 = vmul.f32 %v1142, %v767
    %v1149 = vmul.f32 %v1142, %v768
    %v1150 = vmul.f32 %v1142, %v769
    %v1151 = vmul.f32 %v1142, %v770
    %v1152 = vmul.f32 %v1142, %v771
    %v1153 = vmul.f32 %v1142, %v772
    %v1154 = vmul.f32 %v1142, %v773
    %v1155 = vmul.f32 %v1142, %v774
    %v1156 = vmul.f32 %v1142, %v775
    %v1157 = vmul.f32 %v1142, %v776
    %v1158 = vmul.f32 %v1142, %v777
    %v1159 = vadd.f32 %v1126, %v1143
    %v1160 = vadd.f32 %v1127, %v1144
    %v1161 = vadd.f32 %v1128, %v1145
    %v1162 = vadd.f32 %v1129, %v1146
    %v1163 = vadd.f32 %v1130, %v1147
    %v1164 = vadd.f32 %v1131, %v1148
    %v1165 = vadd.f32 %v1132, %v1149
    %v1166 = vadd.f32 %v1133, %v1150
    %v1167 = vadd.f32 %v1134, %v1151
    %v1168 = vadd.f32 %v1135, %v1152
    %v1169 = vadd.f32 %v1136, %v1153
    %v1170 = vadd.f32 %v1137, %v1154
    %v1171 = vadd.f32 %v1138, %v1155
    %v1172 = vadd.f32 %v1139, %v1156
    %v1173 = vadd.f32 %v1140, %v1157
    %v1174 = vadd.f32 %v1141, %v1158
    %v1175 = vstv %s677
    %v1176 = vmul.f32 %v1175, %v741
    %v1177 = vmul.f32 %v1175, %v742
    %v1178 = vmul.f32 %v1175, %v743
    %v1179 = vmul.f32 %v1175, %v744
    %v1180 = vmul.f32 %v1175, %v745
    %v1181 = vmul.f32 %v1175, %v746
    %v1182 = vmul.f32 %v1175, %v747
    %v1183 = vmul.f32 %v1175, %v748
    %v1184 = vmul.f32 %v1175, %v749
    %v1185 = vmul.f32 %v1175, %v750
    %v1186 = vmul.f32 %v1175, %v751
    %v1187 = vmul.f32 %v1175, %v752
    %v1188 = vmul.f32 %v1175, %v753
    %v1189 = vmul.f32 %v1175, %v754
    %v1190 = vmul.f32 %v1175, %v755
    %v1191 = vmul.f32 %v1175, %v756
    %v1192 = vadd.f32 %v1159, %v1176
    %v1193 = vadd.f32 %v1160, %v1177
    %v1194 = vadd.f32 %v1161, %v1178
    %v1195 = vadd.f32 %v1162, %v1179
    %v1196 = vadd.f32 %v1163, %v1180
    %v1197 = vadd.f32 %v1164, %v1181
    %v1198 = vadd.f32 %v1165, %v1182
    %v1199 = vadd.f32 %v1166, %v1183
    %v1200 = vadd.f32 %v1167, %v1184
    %v1201 = vadd.f32 %v1168, %v1185
    %v1202 = vadd.f32 %v1169, %v1186
    %v1203 = vadd.f32 %v1170, %v1187
    %v1204 = vadd.f32 %v1171, %v1188
    %v1205 = vadd.f32 %v1172, %v1189
    %v1206 = vadd.f32 %v1173, %v1190
    %v1207 = vadd.f32 %v1174, %v1191
    %v1208 = vstv %s726
    %v1209 = vmul.f32 %v1208, %v763
    %v1210 = vmul.f32 %v1208, %v764
    %v1211 = vmul.f32 %v1208, %v765
    %v1212 = vmul.f32 %v1208, %v766
    %v1213 = vmul.f32 %v1208, %v767
    %v1214 = vmul.f32 %v1208, %v768
    %v1215 = vmul.f32 %v1208, %v769
    %v1216 = vmul.f32 %v1208, %v770
    %v1217 = vmul.f32 %v1208, %v771
    %v1218 = vmul.f32 %v1208, %v772
    %v1219 = vmul.f32 %v1208, %v773
    %v1220 = vmul.f32 %v1208, %v774
    %v1221 = vmul.f32 %v1208, %v775
    %v1222 = vmul.f32 %v1208, %v776
    %v1223 = vmul.f32 %v1208, %v777
    %v1224 = vmul.f32 %v1208, %v778
    %v1225 = vadd.f32 %v1192, %v1209
    %v1226 = vadd.f32 %v1193, %v1210
    %v1227 = vadd.f32 %v1194, %v1211
    %v1228 = vadd.f32 %v1195, %v1212
    %v1229 = vadd.f32 %v1196, %v1213
    %v1230 = vadd.f32 %v1197, %v1214
    %v1231 = vadd.f32 %v1198, %v1215
    %v1232 = vadd.f32 %v1199, %v1216
    %v1233 = vadd.f32 %v1200, %v1217
    %v1234 = vadd.f32 %v1201, %v1218
    %v1235 = vadd.f32 %v1202, %v1219
    %v1236 = vadd.f32 %v1203, %v1220
    %v1237 = vadd.f32 %v1204, %v1221
    %v1238 = vadd.f32 %v1205, %v1222
    %v1239 = vadd.f32 %v1206, %v1223
    %v1240 = vadd.f32 %v1207, %v1224
    %v1241 = vstv %s636
    %v1242 = vmul.f32 %v1241, %v735
    %v1243 = vmul.f32 %v1241, %v736
    %v1244 = vmul.f32 %v1241, %v737
    %v1245 = vmul.f32 %v1241, %v738
    %v1246 = vmul.f32 %v1241, %v739
    %v1247 = vmul.f32 %v1241, %v740
    %v1248 = vmul.f32 %v1241, %v741
    %v1249 = vmul.f32 %v1241, %v742
    %v1250 = vmul.f32 %v1241, %v743
    %v1251 = vmul.f32 %v1241, %v744
    %v1252 = vmul.f32 %v1241, %v745
    %v1253 = vmul.f32 %v1241, %v746
    %v1254 = vmul.f32 %v1241, %v747
    %v1255 = vmul.f32 %v1241, %v748
    %v1256 = vmul.f32 %v1241, %v749
    %v1257 = vmul.f32 %v1241, %v750
    %1274 = vrot.lane.b32.xlu0 %v1242, 127
    %v1275 = vpop.permute.xlu0 %1274
    %1276 = vrot.lane.b32.xlu0 %v1243, 127
    %v1277 = vpop.permute.xlu0 %1276
    %1278 = vrot.lane.b32.xlu0 %v1244, 127
    %v1279 = vpop.permute.xlu0 %1278
    %1280 = vrot.lane.b32.xlu0 %v1245, 127
    %v1281 = vpop.permute.xlu0 %1280
    %1282 = vrot.lane.b32.xlu0 %v1246, 127
    %v1283 = vpop.permute.xlu0 %1282
    %1284 = vrot.lane.b32.xlu0 %v1247, 127
    %v1285 = vpop.permute.xlu0 %1284
    %1286 = vrot.lane.b32.xlu0 %v1248, 127
    %v1287 = vpop.permute.xlu0 %1286
    %1288 = vrot.lane.b32.xlu0 %v1249, 127
    %v1289 = vpop.permute.xlu0 %1288
    %1290 = vrot.lane.b32.xlu0 %v1250, 127
    %v1291 = vpop.permute.xlu0 %1290
    %1292 = vrot.lane.b32.xlu0 %v1251, 127
    %v1293 = vpop.permute.xlu0 %1292
    %1294 = vrot.lane.b32.xlu0 %v1252, 127
    %v1295 = vpop.permute.xlu0 %1294
    %1296 = vrot.lane.b32.xlu0 %v1253, 127
    %v1297 = vpop.permute.xlu0 %1296
    %1298 = vrot.lane.b32.xlu0 %v1254, 127
    %v1299 = vpop.permute.xlu0 %1298
    %1300 = vrot.lane.b32.xlu0 %v1255, 127
    %v1301 = vpop.permute.xlu0 %1300
    %1302 = vrot.lane.b32.xlu0 %v1256, 127
    %v1303 = vpop.permute.xlu0 %1302
    %1304 = vrot.lane.b32.xlu0 %v1257, 127
    %v1305 = vpop.permute.xlu0 %1304
    %v1322 = vadd.f32 %v1225, %v1275
    %v1323 = vadd.f32 %v1226, %v1277
    %v1324 = vadd.f32 %v1227, %v1279
    %v1325 = vadd.f32 %v1228, %v1281
    %v1326 = vadd.f32 %v1229, %v1283
    %v1327 = vadd.f32 %v1230, %v1285
    %v1328 = vadd.f32 %v1231, %v1287
    %v1329 = vadd.f32 %v1232, %v1289
    %v1330 = vadd.f32 %v1233, %v1291
    %v1331 = vadd.f32 %v1234, %v1293
    %v1332 = vadd.f32 %v1235, %v1295
    %v1333 = vadd.f32 %v1236, %v1297
    %v1334 = vadd.f32 %v1237, %v1299
    %v1335 = vadd.f32 %v1238, %v1301
    %v1336 = vadd.f32 %v1239, %v1303
    %v1337 = vadd.f32 %v1240, %v1305
    %v1338 = vstv %s685
    %v1339 = vmul.f32 %v1338, %v757
    %v1340 = vmul.f32 %v1338, %v758
    %v1341 = vmul.f32 %v1338, %v759
    %v1342 = vmul.f32 %v1338, %v760
    %v1343 = vmul.f32 %v1338, %v761
    %v1344 = vmul.f32 %v1338, %v762
    %v1345 = vmul.f32 %v1338, %v763
    %v1346 = vmul.f32 %v1338, %v764
    %v1347 = vmul.f32 %v1338, %v765
    %v1348 = vmul.f32 %v1338, %v766
    %v1349 = vmul.f32 %v1338, %v767
    %v1350 = vmul.f32 %v1338, %v768
    %v1351 = vmul.f32 %v1338, %v769
    %v1352 = vmul.f32 %v1338, %v770
    %v1353 = vmul.f32 %v1338, %v771
    %v1354 = vmul.f32 %v1338, %v772
    %1371 = vrot.lane.b32.xlu0 %v1339, 127
    %v1372 = vpop.permute.xlu0 %1371
    %1373 = vrot.lane.b32.xlu0 %v1340, 127
    %v1374 = vpop.permute.xlu0 %1373
    %1375 = vrot.lane.b32.xlu0 %v1341, 127
    %v1376 = vpop.permute.xlu0 %1375
    %1377 = vrot.lane.b32.xlu0 %v1342, 127
    %v1378 = vpop.permute.xlu0 %1377
    %1379 = vrot.lane.b32.xlu0 %v1343, 127
    %v1380 = vpop.permute.xlu0 %1379
    %1381 = vrot.lane.b32.xlu0 %v1344, 127
    %v1382 = vpop.permute.xlu0 %1381
    %1383 = vrot.lane.b32.xlu0 %v1345, 127
    %v1384 = vpop.permute.xlu0 %1383
    %1385 = vrot.lane.b32.xlu0 %v1346, 127
    %v1386 = vpop.permute.xlu0 %1385
    %1387 = vrot.lane.b32.xlu0 %v1347, 127
    %v1388 = vpop.permute.xlu0 %1387
    %1389 = vrot.lane.b32.xlu0 %v1348, 127
    %v1390 = vpop.permute.xlu0 %1389
    %1391 = vrot.lane.b32.xlu0 %v1349, 127
    %v1392 = vpop.permute.xlu0 %1391
    %1393 = vrot.lane.b32.xlu0 %v1350, 127
    %v1394 = vpop.permute.xlu0 %1393
    %1395 = vrot.lane.b32.xlu0 %v1351, 127
    %v1396 = vpop.permute.xlu0 %1395
    %1397 = vrot.lane.b32.xlu0 %v1352, 127
    %v1398 = vpop.permute.xlu0 %1397
    %1399 = vrot.lane.b32.xlu0 %v1353, 127
    %v1400 = vpop.permute.xlu0 %1399
    %1401 = vrot.lane.b32.xlu0 %v1354, 127
    %v1402 = vpop.permute.xlu0 %1401
    %v1419 = vadd.f32 %v1322, %v1372
    %v1420 = vadd.f32 %v1323, %v1374
    %v1421 = vadd.f32 %v1324, %v1376
    %v1422 = vadd.f32 %v1325, %v1378
    %v1423 = vadd.f32 %v1326, %v1380
    %v1424 = vadd.f32 %v1327, %v1382
    %v1425 = vadd.f32 %v1328, %v1384
    %v1426 = vadd.f32 %v1329, %v1386
    %v1427 = vadd.f32 %v1330, %v1388
    %v1428 = vadd.f32 %v1331, %v1390
    %v1429 = vadd.f32 %v1332, %v1392
    %v1430 = vadd.f32 %v1333, %v1394
    %v1431 = vadd.f32 %v1334, %v1396
    %v1432 = vadd.f32 %v1335, %v1398
    %v1433 = vadd.f32 %v1336, %v1400
    %v1434 = vadd.f32 %v1337, %v1402
    %v1435 = vstv %s643
    %v1436 = vmul.f32 %v1435, %v736
    %v1437 = vmul.f32 %v1435, %v737
    %v1438 = vmul.f32 %v1435, %v738
    %v1439 = vmul.f32 %v1435, %v739
    %v1440 = vmul.f32 %v1435, %v740
    %v1441 = vmul.f32 %v1435, %v741
    %v1442 = vmul.f32 %v1435, %v742
    %v1443 = vmul.f32 %v1435, %v743
    %v1444 = vmul.f32 %v1435, %v744
    %v1445 = vmul.f32 %v1435, %v745
    %v1446 = vmul.f32 %v1435, %v746
    %v1447 = vmul.f32 %v1435, %v747
    %v1448 = vmul.f32 %v1435, %v748
    %v1449 = vmul.f32 %v1435, %v749
    %v1450 = vmul.f32 %v1435, %v750
    %v1451 = vmul.f32 %v1435, %v751
    %1468 = vrot.lane.b32.xlu0 %v1436, 127
    %v1469 = vpop.permute.xlu0 %1468
    %1470 = vrot.lane.b32.xlu0 %v1437, 127
    %v1471 = vpop.permute.xlu0 %1470
    %1472 = vrot.lane.b32.xlu0 %v1438, 127
    %v1473 = vpop.permute.xlu0 %1472
    %1474 = vrot.lane.b32.xlu0 %v1439, 127
    %v1475 = vpop.permute.xlu0 %1474
    %1476 = vrot.lane.b32.xlu0 %v1440, 127
    %v1477 = vpop.permute.xlu0 %1476
    %1478 = vrot.lane.b32.xlu0 %v1441, 127
    %v1479 = vpop.permute.xlu0 %1478
    %1480 = vrot.lane.b32.xlu0 %v1442, 127
    %v1481 = vpop.permute.xlu0 %1480
    %1482 = vrot.lane.b32.xlu0 %v1443, 127
    %v1483 = vpop.permute.xlu0 %1482
    %1484 = vrot.lane.b32.xlu0 %v1444, 127
    %v1485 = vpop.permute.xlu0 %1484
    %1486 = vrot.lane.b32.xlu0 %v1445, 127
    %v1487 = vpop.permute.xlu0 %1486
    %1488 = vrot.lane.b32.xlu0 %v1446, 127
    %v1489 = vpop.permute.xlu0 %1488
    %1490 = vrot.lane.b32.xlu0 %v1447, 127
    %v1491 = vpop.permute.xlu0 %1490
    %1492 = vrot.lane.b32.xlu0 %v1448, 127
    %v1493 = vpop.permute.xlu0 %1492
    %1494 = vrot.lane.b32.xlu0 %v1449, 127
    %v1495 = vpop.permute.xlu0 %1494
    %1496 = vrot.lane.b32.xlu0 %v1450, 127
    %v1497 = vpop.permute.xlu0 %1496
    %1498 = vrot.lane.b32.xlu0 %v1451, 127
    %v1499 = vpop.permute.xlu0 %1498
    %v1516 = vadd.f32 %v1419, %v1469
    %v1517 = vadd.f32 %v1420, %v1471
    %v1518 = vadd.f32 %v1421, %v1473
    %v1519 = vadd.f32 %v1422, %v1475
    %v1520 = vadd.f32 %v1423, %v1477
    %v1521 = vadd.f32 %v1424, %v1479
    %v1522 = vadd.f32 %v1425, %v1481
    %v1523 = vadd.f32 %v1426, %v1483
    %v1524 = vadd.f32 %v1427, %v1485
    %v1525 = vadd.f32 %v1428, %v1487
    %v1526 = vadd.f32 %v1429, %v1489
    %v1527 = vadd.f32 %v1430, %v1491
    %v1528 = vadd.f32 %v1431, %v1493
    %v1529 = vadd.f32 %v1432, %v1495
    %v1530 = vadd.f32 %v1433, %v1497
    %v1531 = vadd.f32 %v1434, %v1499
    %v1532 = vstv %s692
    %v1533 = vmul.f32 %v1532, %v758
    %v1534 = vmul.f32 %v1532, %v759
    %v1535 = vmul.f32 %v1532, %v760
    %v1536 = vmul.f32 %v1532, %v761
    %v1537 = vmul.f32 %v1532, %v762
    %v1538 = vmul.f32 %v1532, %v763
    %v1539 = vmul.f32 %v1532, %v764
    %v1540 = vmul.f32 %v1532, %v765
    %v1541 = vmul.f32 %v1532, %v766
    %v1542 = vmul.f32 %v1532, %v767
    %v1543 = vmul.f32 %v1532, %v768
    %v1544 = vmul.f32 %v1532, %v769
    %v1545 = vmul.f32 %v1532, %v770
    %v1546 = vmul.f32 %v1532, %v771
    %v1547 = vmul.f32 %v1532, %v772
    %v1548 = vmul.f32 %v1532, %v773
    %1565 = vrot.lane.b32.xlu0 %v1533, 127
    %v1566 = vpop.permute.xlu0 %1565
    %1567 = vrot.lane.b32.xlu0 %v1534, 127
    %v1568 = vpop.permute.xlu0 %1567
    %1569 = vrot.lane.b32.xlu0 %v1535, 127
    %v1570 = vpop.permute.xlu0 %1569
    %1571 = vrot.lane.b32.xlu0 %v1536, 127
    %v1572 = vpop.permute.xlu0 %1571
    %1573 = vrot.lane.b32.xlu0 %v1537, 127
    %v1574 = vpop.permute.xlu0 %1573
    %1575 = vrot.lane.b32.xlu0 %v1538, 127
    %v1576 = vpop.permute.xlu0 %1575
    %1577 = vrot.lane.b32.xlu0 %v1539, 127
    %v1578 = vpop.permute.xlu0 %1577
    %1579 = vrot.lane.b32.xlu0 %v1540, 127
    %v1580 = vpop.permute.xlu0 %1579
    %1581 = vrot.lane.b32.xlu0 %v1541, 127
    %v1582 = vpop.permute.xlu0 %1581
    %1583 = vrot.lane.b32.xlu0 %v1542, 127
    %v1584 = vpop.permute.xlu0 %1583
    %1585 = vrot.lane.b32.xlu0 %v1543, 127
    %v1586 = vpop.permute.xlu0 %1585
    %1587 = vrot.lane.b32.xlu0 %v1544, 127
    %v1588 = vpop.permute.xlu0 %1587
    %1589 = vrot.lane.b32.xlu0 %v1545, 127
    %v1590 = vpop.permute.xlu0 %1589
    %1591 = vrot.lane.b32.xlu0 %v1546, 127
    %v1592 = vpop.permute.xlu0 %1591
    %1593 = vrot.lane.b32.xlu0 %v1547, 127
    %v1594 = vpop.permute.xlu0 %1593
    %1595 = vrot.lane.b32.xlu0 %v1548, 127
    %v1596 = vpop.permute.xlu0 %1595
    %v1613 = vadd.f32 %v1516, %v1566
    %v1614 = vadd.f32 %v1517, %v1568
    %v1615 = vadd.f32 %v1518, %v1570
    %v1616 = vadd.f32 %v1519, %v1572
    %v1617 = vadd.f32 %v1520, %v1574
    %v1618 = vadd.f32 %v1521, %v1576
    %v1619 = vadd.f32 %v1522, %v1578
    %v1620 = vadd.f32 %v1523, %v1580
    %v1621 = vadd.f32 %v1524, %v1582
    %v1622 = vadd.f32 %v1525, %v1584
    %v1623 = vadd.f32 %v1526, %v1586
    %v1624 = vadd.f32 %v1527, %v1588
    %v1625 = vadd.f32 %v1528, %v1590
    %v1626 = vadd.f32 %v1529, %v1592
    %v1627 = vadd.f32 %v1530, %v1594
    %v1628 = vadd.f32 %v1531, %v1596
    %v1629 = vstv %s650
    %v1630 = vmul.f32 %v1629, %v737
    %v1631 = vmul.f32 %v1629, %v738
    %v1632 = vmul.f32 %v1629, %v739
    %v1633 = vmul.f32 %v1629, %v740
    %v1634 = vmul.f32 %v1629, %v741
    %v1635 = vmul.f32 %v1629, %v742
    %v1636 = vmul.f32 %v1629, %v743
    %v1637 = vmul.f32 %v1629, %v744
    %v1638 = vmul.f32 %v1629, %v745
    %v1639 = vmul.f32 %v1629, %v746
    %v1640 = vmul.f32 %v1629, %v747
    %v1641 = vmul.f32 %v1629, %v748
    %v1642 = vmul.f32 %v1629, %v749
    %v1643 = vmul.f32 %v1629, %v750
    %v1644 = vmul.f32 %v1629, %v751
    %v1645 = vmul.f32 %v1629, %v752
    %1662 = vrot.lane.b32.xlu0 %v1630, 127
    %v1663 = vpop.permute.xlu0 %1662
    %1664 = vrot.lane.b32.xlu0 %v1631, 127
    %v1665 = vpop.permute.xlu0 %1664
    %1666 = vrot.lane.b32.xlu0 %v1632, 127
    %v1667 = vpop.permute.xlu0 %1666
    %1668 = vrot.lane.b32.xlu0 %v1633, 127
    %v1669 = vpop.permute.xlu0 %1668
    %1670 = vrot.lane.b32.xlu0 %v1634, 127
    %v1671 = vpop.permute.xlu0 %1670
    %1672 = vrot.lane.b32.xlu0 %v1635, 127
    %v1673 = vpop.permute.xlu0 %1672
    %1674 = vrot.lane.b32.xlu0 %v1636, 127
    %v1675 = vpop.permute.xlu0 %1674
    %1676 = vrot.lane.b32.xlu0 %v1637, 127
    %v1677 = vpop.permute.xlu0 %1676
    %1678 = vrot.lane.b32.xlu0 %v1638, 127
    %v1679 = vpop.permute.xlu0 %1678
    %1680 = vrot.lane.b32.xlu0 %v1639, 127
    %v1681 = vpop.permute.xlu0 %1680
    %1682 = vrot.lane.b32.xlu0 %v1640, 127
    %v1683 = vpop.permute.xlu0 %1682
    %1684 = vrot.lane.b32.xlu0 %v1641, 127
    %v1685 = vpop.permute.xlu0 %1684
    %1686 = vrot.lane.b32.xlu0 %v1642, 127
    %v1687 = vpop.permute.xlu0 %1686
    %1688 = vrot.lane.b32.xlu0 %v1643, 127
    %v1689 = vpop.permute.xlu0 %1688
    %1690 = vrot.lane.b32.xlu0 %v1644, 127
    %v1691 = vpop.permute.xlu0 %1690
    %1692 = vrot.lane.b32.xlu0 %v1645, 127
    %v1693 = vpop.permute.xlu0 %1692
    %v1710 = vadd.f32 %v1613, %v1663
    %v1711 = vadd.f32 %v1614, %v1665
    %v1712 = vadd.f32 %v1615, %v1667
    %v1713 = vadd.f32 %v1616, %v1669
    %v1714 = vadd.f32 %v1617, %v1671
    %v1715 = vadd.f32 %v1618, %v1673
    %v1716 = vadd.f32 %v1619, %v1675
    %v1717 = vadd.f32 %v1620, %v1677
    %v1718 = vadd.f32 %v1621, %v1679
    %v1719 = vadd.f32 %v1622, %v1681
    %v1720 = vadd.f32 %v1623, %v1683
    %v1721 = vadd.f32 %v1624, %v1685
    %v1722 = vadd.f32 %v1625, %v1687
    %v1723 = vadd.f32 %v1626, %v1689
    %v1724 = vadd.f32 %v1627, %v1691
    %v1725 = vadd.f32 %v1628, %v1693
    %v1726 = vstv %s699
    %v1727 = vmul.f32 %v1726, %v759
    %v1728 = vmul.f32 %v1726, %v760
    %v1729 = vmul.f32 %v1726, %v761
    %v1730 = vmul.f32 %v1726, %v762
    %v1731 = vmul.f32 %v1726, %v763
    %v1732 = vmul.f32 %v1726, %v764
    %v1733 = vmul.f32 %v1726, %v765
    %v1734 = vmul.f32 %v1726, %v766
    %v1735 = vmul.f32 %v1726, %v767
    %v1736 = vmul.f32 %v1726, %v768
    %v1737 = vmul.f32 %v1726, %v769
    %v1738 = vmul.f32 %v1726, %v770
    %v1739 = vmul.f32 %v1726, %v771
    %v1740 = vmul.f32 %v1726, %v772
    %v1741 = vmul.f32 %v1726, %v773
    %v1742 = vmul.f32 %v1726, %v774
    %1759 = vrot.lane.b32.xlu0 %v1727, 127
    %v1760 = vpop.permute.xlu0 %1759
    %1761 = vrot.lane.b32.xlu0 %v1728, 127
    %v1762 = vpop.permute.xlu0 %1761
    %1763 = vrot.lane.b32.xlu0 %v1729, 127
    %v1764 = vpop.permute.xlu0 %1763
    %1765 = vrot.lane.b32.xlu0 %v1730, 127
    %v1766 = vpop.permute.xlu0 %1765
    %1767 = vrot.lane.b32.xlu0 %v1731, 127
    %v1768 = vpop.permute.xlu0 %1767
    %1769 = vrot.lane.b32.xlu0 %v1732, 127
    %v1770 = vpop.permute.xlu0 %1769
    %1771 = vrot.lane.b32.xlu0 %v1733, 127
    %v1772 = vpop.permute.xlu0 %1771
    %1773 = vrot.lane.b32.xlu0 %v1734, 127
    %v1774 = vpop.permute.xlu0 %1773
    %1775 = vrot.lane.b32.xlu0 %v1735, 127
    %v1776 = vpop.permute.xlu0 %1775
    %1777 = vrot.lane.b32.xlu0 %v1736, 127
    %v1778 = vpop.permute.xlu0 %1777
    %1779 = vrot.lane.b32.xlu0 %v1737, 127
    %v1780 = vpop.permute.xlu0 %1779
    %1781 = vrot.lane.b32.xlu0 %v1738, 127
    %v1782 = vpop.permute.xlu0 %1781
    %1783 = vrot.lane.b32.xlu0 %v1739, 127
    %v1784 = vpop.permute.xlu0 %1783
    %1785 = vrot.lane.b32.xlu0 %v1740, 127
    %v1786 = vpop.permute.xlu0 %1785
    %1787 = vrot.lane.b32.xlu0 %v1741, 127
    %v1788 = vpop.permute.xlu0 %1787
    %1789 = vrot.lane.b32.xlu0 %v1742, 127
    %v1790 = vpop.permute.xlu0 %1789
    %v1807 = vadd.f32 %v1710, %v1760
    %v1808 = vadd.f32 %v1711, %v1762
    %v1809 = vadd.f32 %v1712, %v1764
    %v1810 = vadd.f32 %v1713, %v1766
    %v1811 = vadd.f32 %v1714, %v1768
    %v1812 = vadd.f32 %v1715, %v1770
    %v1813 = vadd.f32 %v1716, %v1772
    %v1814 = vadd.f32 %v1717, %v1774
    %v1815 = vadd.f32 %v1718, %v1776
    %v1816 = vadd.f32 %v1719, %v1778
    %v1817 = vadd.f32 %v1720, %v1780
    %v1818 = vadd.f32 %v1721, %v1782
    %v1819 = vadd.f32 %v1722, %v1784
    %v1820 = vadd.f32 %v1723, %v1786
    %v1821 = vadd.f32 %v1724, %v1788
    %v1822 = vadd.f32 %v1725, %v1790
    %v1823 = vstv %s657
    %v1824 = vmul.f32 %v1823, %v738
    %v1825 = vmul.f32 %v1823, %v739
    %v1826 = vmul.f32 %v1823, %v740
    %v1827 = vmul.f32 %v1823, %v741
    %v1828 = vmul.f32 %v1823, %v742
    %v1829 = vmul.f32 %v1823, %v743
    %v1830 = vmul.f32 %v1823, %v744
    %v1831 = vmul.f32 %v1823, %v745
    %v1832 = vmul.f32 %v1823, %v746
    %v1833 = vmul.f32 %v1823, %v747
    %v1834 = vmul.f32 %v1823, %v748
    %v1835 = vmul.f32 %v1823, %v749
    %v1836 = vmul.f32 %v1823, %v750
    %v1837 = vmul.f32 %v1823, %v751
    %v1838 = vmul.f32 %v1823, %v752
    %v1839 = vmul.f32 %v1823, %v753
    %1856 = vrot.lane.b32.xlu0 %v1824, 127
    %v1857 = vpop.permute.xlu0 %1856
    %1858 = vrot.lane.b32.xlu0 %v1825, 127
    %v1859 = vpop.permute.xlu0 %1858
    %1860 = vrot.lane.b32.xlu0 %v1826, 127
    %v1861 = vpop.permute.xlu0 %1860
    %1862 = vrot.lane.b32.xlu0 %v1827, 127
    %v1863 = vpop.permute.xlu0 %1862
    %1864 = vrot.lane.b32.xlu0 %v1828, 127
    %v1865 = vpop.permute.xlu0 %1864
    %1866 = vrot.lane.b32.xlu0 %v1829, 127
    %v1867 = vpop.permute.xlu0 %1866
    %1868 = vrot.lane.b32.xlu0 %v1830, 127
    %v1869 = vpop.permute.xlu0 %1868
    %1870 = vrot.lane.b32.xlu0 %v1831, 127
    %v1871 = vpop.permute.xlu0 %1870
    %1872 = vrot.lane.b32.xlu0 %v1832, 127
    %v1873 = vpop.permute.xlu0 %1872
    %1874 = vrot.lane.b32.xlu0 %v1833, 127
    %v1875 = vpop.permute.xlu0 %1874
    %1876 = vrot.lane.b32.xlu0 %v1834, 127
    %v1877 = vpop.permute.xlu0 %1876
    %1878 = vrot.lane.b32.xlu0 %v1835, 127
    %v1879 = vpop.permute.xlu0 %1878
    %1880 = vrot.lane.b32.xlu0 %v1836, 127
    %v1881 = vpop.permute.xlu0 %1880
    %1882 = vrot.lane.b32.xlu0 %v1837, 127
    %v1883 = vpop.permute.xlu0 %1882
    %1884 = vrot.lane.b32.xlu0 %v1838, 127
    %v1885 = vpop.permute.xlu0 %1884
    %1886 = vrot.lane.b32.xlu0 %v1839, 127
    %v1887 = vpop.permute.xlu0 %1886
    %v1904 = vadd.f32 %v1807, %v1857
    %v1905 = vadd.f32 %v1808, %v1859
    %v1906 = vadd.f32 %v1809, %v1861
    %v1907 = vadd.f32 %v1810, %v1863
    %v1908 = vadd.f32 %v1811, %v1865
    %v1909 = vadd.f32 %v1812, %v1867
    %v1910 = vadd.f32 %v1813, %v1869
    %v1911 = vadd.f32 %v1814, %v1871
    %v1912 = vadd.f32 %v1815, %v1873
    %v1913 = vadd.f32 %v1816, %v1875
    %v1914 = vadd.f32 %v1817, %v1877
    %v1915 = vadd.f32 %v1818, %v1879
    %v1916 = vadd.f32 %v1819, %v1881
    %v1917 = vadd.f32 %v1820, %v1883
    %v1918 = vadd.f32 %v1821, %v1885
    %v1919 = vadd.f32 %v1822, %v1887
    %v1920 = vstv %s706
    %v1921 = vmul.f32 %v1920, %v760
    %v1922 = vmul.f32 %v1920, %v761
    %v1923 = vmul.f32 %v1920, %v762
    %v1924 = vmul.f32 %v1920, %v763
    %v1925 = vmul.f32 %v1920, %v764
    %v1926 = vmul.f32 %v1920, %v765
    %v1927 = vmul.f32 %v1920, %v766
    %v1928 = vmul.f32 %v1920, %v767
    %v1929 = vmul.f32 %v1920, %v768
    %v1930 = vmul.f32 %v1920, %v769
    %v1931 = vmul.f32 %v1920, %v770
    %v1932 = vmul.f32 %v1920, %v771
    %v1933 = vmul.f32 %v1920, %v772
    %v1934 = vmul.f32 %v1920, %v773
    %v1935 = vmul.f32 %v1920, %v774
    %v1936 = vmul.f32 %v1920, %v775
    %1953 = vrot.lane.b32.xlu0 %v1921, 127
    %v1954 = vpop.permute.xlu0 %1953
    %1955 = vrot.lane.b32.xlu0 %v1922, 127
    %v1956 = vpop.permute.xlu0 %1955
    %1957 = vrot.lane.b32.xlu0 %v1923, 127
    %v1958 = vpop.permute.xlu0 %1957
    %1959 = vrot.lane.b32.xlu0 %v1924, 127
    %v1960 = vpop.permute.xlu0 %1959
    %1961 = vrot.lane.b32.xlu0 %v1925, 127
    %v1962 = vpop.permute.xlu0 %1961
    %1963 = vrot.lane.b32.xlu0 %v1926, 127
    %v1964 = vpop.permute.xlu0 %1963
    %1965 = vrot.lane.b32.xlu0 %v1927, 127
    %v1966 = vpop.permute.xlu0 %1965
    %1967 = vrot.lane.b32.xlu0 %v1928, 127
    %v1968 = vpop.permute.xlu0 %1967
    %1969 = vrot.lane.b32.xlu0 %v1929, 127
    %v1970 = vpop.permute.xlu0 %1969
    %1971 = vrot.lane.b32.xlu0 %v1930, 127
    %v1972 = vpop.permute.xlu0 %1971
    %1973 = vrot.lane.b32.xlu0 %v1931, 127
    %v1974 = vpop.permute.xlu0 %1973
    %1975 = vrot.lane.b32.xlu0 %v1932, 127
    %v1976 = vpop.permute.xlu0 %1975
    %1977 = vrot.lane.b32.xlu0 %v1933, 127
    %v1978 = vpop.permute.xlu0 %1977
    %1979 = vrot.lane.b32.xlu0 %v1934, 127
    %v1980 = vpop.permute.xlu0 %1979
    %1981 = vrot.lane.b32.xlu0 %v1935, 127
    %v1982 = vpop.permute.xlu0 %1981
    %1983 = vrot.lane.b32.xlu0 %v1936, 127
    %v1984 = vpop.permute.xlu0 %1983
    %v2001 = vadd.f32 %v1904, %v1954
    %v2002 = vadd.f32 %v1905, %v1956
    %v2003 = vadd.f32 %v1906, %v1958
    %v2004 = vadd.f32 %v1907, %v1960
    %v2005 = vadd.f32 %v1908, %v1962
    %v2006 = vadd.f32 %v1909, %v1964
    %v2007 = vadd.f32 %v1910, %v1966
    %v2008 = vadd.f32 %v1911, %v1968
    %v2009 = vadd.f32 %v1912, %v1970
    %v2010 = vadd.f32 %v1913, %v1972
    %v2011 = vadd.f32 %v1914, %v1974
    %v2012 = vadd.f32 %v1915, %v1976
    %v2013 = vadd.f32 %v1916, %v1978
    %v2014 = vadd.f32 %v1917, %v1980
    %v2015 = vadd.f32 %v1918, %v1982
    %v2016 = vadd.f32 %v1919, %v1984
    %v2017 = vstv %s664
    %v2018 = vmul.f32 %v2017, %v739
    %v2019 = vmul.f32 %v2017, %v740
    %v2020 = vmul.f32 %v2017, %v741
    %v2021 = vmul.f32 %v2017, %v742
    %v2022 = vmul.f32 %v2017, %v743
    %v2023 = vmul.f32 %v2017, %v744
    %v2024 = vmul.f32 %v2017, %v745
    %v2025 = vmul.f32 %v2017, %v746
    %v2026 = vmul.f32 %v2017, %v747
    %v2027 = vmul.f32 %v2017, %v748
    %v2028 = vmul.f32 %v2017, %v749
    %v2029 = vmul.f32 %v2017, %v750
    %v2030 = vmul.f32 %v2017, %v751
    %v2031 = vmul.f32 %v2017, %v752
    %v2032 = vmul.f32 %v2017, %v753
    %v2033 = vmul.f32 %v2017, %v754
    %2050 = vrot.lane.b32.xlu0 %v2018, 127
    %v2051 = vpop.permute.xlu0 %2050
    %2052 = vrot.lane.b32.xlu0 %v2019, 127
    %v2053 = vpop.permute.xlu0 %2052
    %2054 = vrot.lane.b32.xlu0 %v2020, 127
    %v2055 = vpop.permute.xlu0 %2054
    %2056 = vrot.lane.b32.xlu0 %v2021, 127
    %v2057 = vpop.permute.xlu0 %2056
    %2058 = vrot.lane.b32.xlu0 %v2022, 127
    %v2059 = vpop.permute.xlu0 %2058
    %2060 = vrot.lane.b32.xlu0 %v2023, 127
    %v2061 = vpop.permute.xlu0 %2060
    %2062 = vrot.lane.b32.xlu0 %v2024, 127
    %v2063 = vpop.permute.xlu0 %2062
    %2064 = vrot.lane.b32.xlu0 %v2025, 127
    %v2065 = vpop.permute.xlu0 %2064
    %2066 = vrot.lane.b32.xlu0 %v2026, 127
    %v2067 = vpop.permute.xlu0 %2066
    %2068 = vrot.lane.b32.xlu0 %v2027, 127
    %v2069 = vpop.permute.xlu0 %2068
    %2070 = vrot.lane.b32.xlu0 %v2028, 127
    %v2071 = vpop.permute.xlu0 %2070
    %2072 = vrot.lane.b32.xlu0 %v2029, 127
    %v2073 = vpop.permute.xlu0 %2072
    %2074 = vrot.lane.b32.xlu0 %v2030, 127
    %v2075 = vpop.permute.xlu0 %2074
    %2076 = vrot.lane.b32.xlu0 %v2031, 127
    %v2077 = vpop.permute.xlu0 %2076
    %2078 = vrot.lane.b32.xlu0 %v2032, 127
    %v2079 = vpop.permute.xlu0 %2078
    %2080 = vrot.lane.b32.xlu0 %v2033, 127
    %v2081 = vpop.permute.xlu0 %2080
    %v2098 = vadd.f32 %v2001, %v2051
    %v2099 = vadd.f32 %v2002, %v2053
    %v2100 = vadd.f32 %v2003, %v2055
    %v2101 = vadd.f32 %v2004, %v2057
    %v2102 = vadd.f32 %v2005, %v2059
    %v2103 = vadd.f32 %v2006, %v2061
    %v2104 = vadd.f32 %v2007, %v2063
    %v2105 = vadd.f32 %v2008, %v2065
    %v2106 = vadd.f32 %v2009, %v2067
    %v2107 = vadd.f32 %v2010, %v2069
    %v2108 = vadd.f32 %v2011, %v2071
    %v2109 = vadd.f32 %v2012, %v2073
    %v2110 = vadd.f32 %v2013, %v2075
    %v2111 = vadd.f32 %v2014, %v2077
    %v2112 = vadd.f32 %v2015, %v2079
    %v2113 = vadd.f32 %v2016, %v2081
    %v2114 = vstv %s713
    %v2115 = vmul.f32 %v2114, %v761
    %v2116 = vmul.f32 %v2114, %v762
    %v2117 = vmul.f32 %v2114, %v763
    %v2118 = vmul.f32 %v2114, %v764
    %v2119 = vmul.f32 %v2114, %v765
    %v2120 = vmul.f32 %v2114, %v766
    %v2121 = vmul.f32 %v2114, %v767
    %v2122 = vmul.f32 %v2114, %v768
    %v2123 = vmul.f32 %v2114, %v769
    %v2124 = vmul.f32 %v2114, %v770
    %v2125 = vmul.f32 %v2114, %v771
    %v2126 = vmul.f32 %v2114, %v772
    %v2127 = vmul.f32 %v2114, %v773
    %v2128 = vmul.f32 %v2114, %v774
    %v2129 = vmul.f32 %v2114, %v775
    %v2130 = vmul.f32 %v2114, %v776
    %2147 = vrot.lane.b32.xlu0 %v2115, 127
    %v2148 = vpop.permute.xlu0 %2147
    %2149 = vrot.lane.b32.xlu0 %v2116, 127
    %v2150 = vpop.permute.xlu0 %2149
    %2151 = vrot.lane.b32.xlu0 %v2117, 127
    %v2152 = vpop.permute.xlu0 %2151
    %2153 = vrot.lane.b32.xlu0 %v2118, 127
    %v2154 = vpop.permute.xlu0 %2153
    %2155 = vrot.lane.b32.xlu0 %v2119, 127
    %v2156 = vpop.permute.xlu0 %2155
    %2157 = vrot.lane.b32.xlu0 %v2120, 127
    %v2158 = vpop.permute.xlu0 %2157
    %2159 = vrot.lane.b32.xlu0 %v2121, 127
    %v2160 = vpop.permute.xlu0 %2159
    %2161 = vrot.lane.b32.xlu0 %v2122, 127
    %v2162 = vpop.permute.xlu0 %2161
    %2163 = vrot.lane.b32.xlu0 %v2123, 127
    %v2164 = vpop.permute.xlu0 %2163
    %2165 = vrot.lane.b32.xlu0 %v2124, 127
    %v2166 = vpop.permute.xlu0 %2165
    %2167 = vrot.lane.b32.xlu0 %v2125, 127
    %v2168 = vpop.permute.xlu0 %2167
    %2169 = vrot.lane.b32.xlu0 %v2126, 127
    %v2170 = vpop.permute.xlu0 %2169
    %2171 = vrot.lane.b32.xlu0 %v2127, 127
    %v2172 = vpop.permute.xlu0 %2171
    %2173 = vrot.lane.b32.xlu0 %v2128, 127
    %v2174 = vpop.permute.xlu0 %2173
    %2175 = vrot.lane.b32.xlu0 %v2129, 127
    %v2176 = vpop.permute.xlu0 %2175
    %2177 = vrot.lane.b32.xlu0 %v2130, 127
    %v2178 = vpop.permute.xlu0 %2177
    %v2195 = vadd.f32 %v2098, %v2148
    %v2196 = vadd.f32 %v2099, %v2150
    %v2197 = vadd.f32 %v2100, %v2152
    %v2198 = vadd.f32 %v2101, %v2154
    %v2199 = vadd.f32 %v2102, %v2156
    %v2200 = vadd.f32 %v2103, %v2158
    %v2201 = vadd.f32 %v2104, %v2160
    %v2202 = vadd.f32 %v2105, %v2162
    %v2203 = vadd.f32 %v2106, %v2164
    %v2204 = vadd.f32 %v2107, %v2166
    %v2205 = vadd.f32 %v2108, %v2168
    %v2206 = vadd.f32 %v2109, %v2170
    %v2207 = vadd.f32 %v2110, %v2172
    %v2208 = vadd.f32 %v2111, %v2174
    %v2209 = vadd.f32 %v2112, %v2176
    %v2210 = vadd.f32 %v2113, %v2178
    %v2211 = vstv %s671
    %v2212 = vmul.f32 %v2211, %v740
    %v2213 = vmul.f32 %v2211, %v741
    %v2214 = vmul.f32 %v2211, %v742
    %v2215 = vmul.f32 %v2211, %v743
    %v2216 = vmul.f32 %v2211, %v744
    %v2217 = vmul.f32 %v2211, %v745
    %v2218 = vmul.f32 %v2211, %v746
    %v2219 = vmul.f32 %v2211, %v747
    %v2220 = vmul.f32 %v2211, %v748
    %v2221 = vmul.f32 %v2211, %v749
    %v2222 = vmul.f32 %v2211, %v750
    %v2223 = vmul.f32 %v2211, %v751
    %v2224 = vmul.f32 %v2211, %v752
    %v2225 = vmul.f32 %v2211, %v753
    %v2226 = vmul.f32 %v2211, %v754
    %v2227 = vmul.f32 %v2211, %v755
    %2244 = vrot.lane.b32.xlu0 %v2212, 127
    %v2245 = vpop.permute.xlu0 %2244
    %2246 = vrot.lane.b32.xlu0 %v2213, 127
    %v2247 = vpop.permute.xlu0 %2246
    %2248 = vrot.lane.b32.xlu0 %v2214, 127
    %v2249 = vpop.permute.xlu0 %2248
    %2250 = vrot.lane.b32.xlu0 %v2215, 127
    %v2251 = vpop.permute.xlu0 %2250
    %2252 = vrot.lane.b32.xlu0 %v2216, 127
    %v2253 = vpop.permute.xlu0 %2252
    %2254 = vrot.lane.b32.xlu0 %v2217, 127
    %v2255 = vpop.permute.xlu0 %2254
    %2256 = vrot.lane.b32.xlu0 %v2218, 127
    %v2257 = vpop.permute.xlu0 %2256
    %2258 = vrot.lane.b32.xlu0 %v2219, 127
    %v2259 = vpop.permute.xlu0 %2258
    %2260 = vrot.lane.b32.xlu0 %v2220, 127
    %v2261 = vpop.permute.xlu0 %2260
    %2262 = vrot.lane.b32.xlu0 %v2221, 127
    %v2263 = vpop.permute.xlu0 %2262
    %2264 = vrot.lane.b32.xlu0 %v2222, 127
    %v2265 = vpop.permute.xlu0 %2264
    %2266 = vrot.lane.b32.xlu0 %v2223, 127
    %v2267 = vpop.permute.xlu0 %2266
    %2268 = vrot.lane.b32.xlu0 %v2224, 127
    %v2269 = vpop.permute.xlu0 %2268
    %2270 = vrot.lane.b32.xlu0 %v2225, 127
    %v2271 = vpop.permute.xlu0 %2270
    %2272 = vrot.lane.b32.xlu0 %v2226, 127
    %v2273 = vpop.permute.xlu0 %2272
    %2274 = vrot.lane.b32.xlu0 %v2227, 127
    %v2275 = vpop.permute.xlu0 %2274
    %v2292 = vadd.f32 %v2195, %v2245
    %v2293 = vadd.f32 %v2196, %v2247
    %v2294 = vadd.f32 %v2197, %v2249
    %v2295 = vadd.f32 %v2198, %v2251
    %v2296 = vadd.f32 %v2199, %v2253
    %v2297 = vadd.f32 %v2200, %v2255
    %v2298 = vadd.f32 %v2201, %v2257
    %v2299 = vadd.f32 %v2202, %v2259
    %v2300 = vadd.f32 %v2203, %v2261
    %v2301 = vadd.f32 %v2204, %v2263
    %v2302 = vadd.f32 %v2205, %v2265
    %v2303 = vadd.f32 %v2206, %v2267
    %v2304 = vadd.f32 %v2207, %v2269
    %v2305 = vadd.f32 %v2208, %v2271
    %v2306 = vadd.f32 %v2209, %v2273
    %v2307 = vadd.f32 %v2210, %v2275
    %v2308 = vstv %s720
    %v2309 = vmul.f32 %v2308, %v762
    %v2310 = vmul.f32 %v2308, %v763
    %v2311 = vmul.f32 %v2308, %v764
    %v2312 = vmul.f32 %v2308, %v765
    %v2313 = vmul.f32 %v2308, %v766
    %v2314 = vmul.f32 %v2308, %v767
    %v2315 = vmul.f32 %v2308, %v768
    %v2316 = vmul.f32 %v2308, %v769
    %v2317 = vmul.f32 %v2308, %v770
    %v2318 = vmul.f32 %v2308, %v771
    %v2319 = vmul.f32 %v2308, %v772
    %v2320 = vmul.f32 %v2308, %v773
    %v2321 = vmul.f32 %v2308, %v774
    %v2322 = vmul.f32 %v2308, %v775
    %v2323 = vmul.f32 %v2308, %v776
    %v2324 = vmul.f32 %v2308, %v777
    %2341 = vrot.lane.b32.xlu0 %v2309, 127
    %v2342 = vpop.permute.xlu0 %2341
    %2343 = vrot.lane.b32.xlu0 %v2310, 127
    %v2344 = vpop.permute.xlu0 %2343
    %2345 = vrot.lane.b32.xlu0 %v2311, 127
    %v2346 = vpop.permute.xlu0 %2345
    %2347 = vrot.lane.b32.xlu0 %v2312, 127
    %v2348 = vpop.permute.xlu0 %2347
    %2349 = vrot.lane.b32.xlu0 %v2313, 127
    %v2350 = vpop.permute.xlu0 %2349
    %2351 = vrot.lane.b32.xlu0 %v2314, 127
    %v2352 = vpop.permute.xlu0 %2351
    %2353 = vrot.lane.b32.xlu0 %v2315, 127
    %v2354 = vpop.permute.xlu0 %2353
    %2355 = vrot.lane.b32.xlu0 %v2316, 127
    %v2356 = vpop.permute.xlu0 %2355
    %2357 = vrot.lane.b32.xlu0 %v2317, 127
    %v2358 = vpop.permute.xlu0 %2357
    %2359 = vrot.lane.b32.xlu0 %v2318, 127
    %v2360 = vpop.permute.xlu0 %2359
    %2361 = vrot.lane.b32.xlu0 %v2319, 127
    %v2362 = vpop.permute.xlu0 %2361
    %2363 = vrot.lane.b32.xlu0 %v2320, 127
    %v2364 = vpop.permute.xlu0 %2363
    %2365 = vrot.lane.b32.xlu0 %v2321, 127
    %v2366 = vpop.permute.xlu0 %2365
    %2367 = vrot.lane.b32.xlu0 %v2322, 127
    %v2368 = vpop.permute.xlu0 %2367
    %2369 = vrot.lane.b32.xlu0 %v2323, 127
    %v2370 = vpop.permute.xlu0 %2369
    %2371 = vrot.lane.b32.xlu0 %v2324, 127
    %v2372 = vpop.permute.xlu0 %2371
    %v2389 = vadd.f32 %v2292, %v2342
    %v2390 = vadd.f32 %v2293, %v2344
    %v2391 = vadd.f32 %v2294, %v2346
    %v2392 = vadd.f32 %v2295, %v2348
    %v2393 = vadd.f32 %v2296, %v2350
    %v2394 = vadd.f32 %v2297, %v2352
    %v2395 = vadd.f32 %v2298, %v2354
    %v2396 = vadd.f32 %v2299, %v2356
    %v2397 = vadd.f32 %v2300, %v2358
    %v2398 = vadd.f32 %v2301, %v2360
    %v2399 = vadd.f32 %v2302, %v2362
    %v2400 = vadd.f32 %v2303, %v2364
    %v2401 = vadd.f32 %v2304, %v2366
    %v2402 = vadd.f32 %v2305, %v2368
    %v2403 = vadd.f32 %v2306, %v2370
    %v2404 = vadd.f32 %v2307, %v2372
    %v2405 = vstv %s678
    %v2406 = vmul.f32 %v2405, %v741
    %v2407 = vmul.f32 %v2405, %v742
    %v2408 = vmul.f32 %v2405, %v743
    %v2409 = vmul.f32 %v2405, %v744
    %v2410 = vmul.f32 %v2405, %v745
    %v2411 = vmul.f32 %v2405, %v746
    %v2412 = vmul.f32 %v2405, %v747
    %v2413 = vmul.f32 %v2405, %v748
    %v2414 = vmul.f32 %v2405, %v749
    %v2415 = vmul.f32 %v2405, %v750
    %v2416 = vmul.f32 %v2405, %v751
    %v2417 = vmul.f32 %v2405, %v752
    %v2418 = vmul.f32 %v2405, %v753
    %v2419 = vmul.f32 %v2405, %v754
    %v2420 = vmul.f32 %v2405, %v755
    %v2421 = vmul.f32 %v2405, %v756
    %2438 = vrot.lane.b32.xlu0 %v2406, 127
    %v2439 = vpop.permute.xlu0 %2438
    %2440 = vrot.lane.b32.xlu0 %v2407, 127
    %v2441 = vpop.permute.xlu0 %2440
    %2442 = vrot.lane.b32.xlu0 %v2408, 127
    %v2443 = vpop.permute.xlu0 %2442
    %2444 = vrot.lane.b32.xlu0 %v2409, 127
    %v2445 = vpop.permute.xlu0 %2444
    %2446 = vrot.lane.b32.xlu0 %v2410, 127
    %v2447 = vpop.permute.xlu0 %2446
    %2448 = vrot.lane.b32.xlu0 %v2411, 127
    %v2449 = vpop.permute.xlu0 %2448
    %2450 = vrot.lane.b32.xlu0 %v2412, 127
    %v2451 = vpop.permute.xlu0 %2450
    %2452 = vrot.lane.b32.xlu0 %v2413, 127
    %v2453 = vpop.permute.xlu0 %2452
    %2454 = vrot.lane.b32.xlu0 %v2414, 127
    %v2455 = vpop.permute.xlu0 %2454
    %2456 = vrot.lane.b32.xlu0 %v2415, 127
    %v2457 = vpop.permute.xlu0 %2456
    %2458 = vrot.lane.b32.xlu0 %v2416, 127
    %v2459 = vpop.permute.xlu0 %2458
    %2460 = vrot.lane.b32.xlu0 %v2417, 127
    %v2461 = vpop.permute.xlu0 %2460
    %2462 = vrot.lane.b32.xlu0 %v2418, 127
    %v2463 = vpop.permute.xlu0 %2462
    %2464 = vrot.lane.b32.xlu0 %v2419, 127
    %v2465 = vpop.permute.xlu0 %2464
    %2466 = vrot.lane.b32.xlu0 %v2420, 127
    %v2467 = vpop.permute.xlu0 %2466
    %2468 = vrot.lane.b32.xlu0 %v2421, 127
    %v2469 = vpop.permute.xlu0 %2468
    %v2486 = vadd.f32 %v2389, %v2439
    %v2487 = vadd.f32 %v2390, %v2441
    %v2488 = vadd.f32 %v2391, %v2443
    %v2489 = vadd.f32 %v2392, %v2445
    %v2490 = vadd.f32 %v2393, %v2447
    %v2491 = vadd.f32 %v2394, %v2449
    %v2492 = vadd.f32 %v2395, %v2451
    %v2493 = vadd.f32 %v2396, %v2453
    %v2494 = vadd.f32 %v2397, %v2455
    %v2495 = vadd.f32 %v2398, %v2457
    %v2496 = vadd.f32 %v2399, %v2459
    %v2497 = vadd.f32 %v2400, %v2461
    %v2498 = vadd.f32 %v2401, %v2463
    %v2499 = vadd.f32 %v2402, %v2465
    %v2500 = vadd.f32 %v2403, %v2467
    %v2501 = vadd.f32 %v2404, %v2469
    %v2502 = vstv %s727
    %v2503 = vmul.f32 %v2502, %v763
    %v2504 = vmul.f32 %v2502, %v764
    %v2505 = vmul.f32 %v2502, %v765
    %v2506 = vmul.f32 %v2502, %v766
    %v2507 = vmul.f32 %v2502, %v767
    %v2508 = vmul.f32 %v2502, %v768
    %v2509 = vmul.f32 %v2502, %v769
    %v2510 = vmul.f32 %v2502, %v770
    %v2511 = vmul.f32 %v2502, %v771
    %v2512 = vmul.f32 %v2502, %v772
    %v2513 = vmul.f32 %v2502, %v773
    %v2514 = vmul.f32 %v2502, %v774
    %v2515 = vmul.f32 %v2502, %v775
    %v2516 = vmul.f32 %v2502, %v776
    %v2517 = vmul.f32 %v2502, %v777
    %v2518 = vmul.f32 %v2502, %v778
    %2535 = vrot.lane.b32.xlu0 %v2503, 127
    %v2536 = vpop.permute.xlu0 %2535
    %2537 = vrot.lane.b32.xlu0 %v2504, 127
    %v2538 = vpop.permute.xlu0 %2537
    %2539 = vrot.lane.b32.xlu0 %v2505, 127
    %v2540 = vpop.permute.xlu0 %2539
    %2541 = vrot.lane.b32.xlu0 %v2506, 127
    %v2542 = vpop.permute.xlu0 %2541
    %2543 = vrot.lane.b32.xlu0 %v2507, 127
    %v2544 = vpop.permute.xlu0 %2543
    %2545 = vrot.lane.b32.xlu0 %v2508, 127
    %v2546 = vpop.permute.xlu0 %2545
    %2547 = vrot.lane.b32.xlu0 %v2509, 127
    %v2548 = vpop.permute.xlu0 %2547
    %2549 = vrot.lane.b32.xlu0 %v2510, 127
    %v2550 = vpop.permute.xlu0 %2549
    %2551 = vrot.lane.b32.xlu0 %v2511, 127
    %v2552 = vpop.permute.xlu0 %2551
    %2553 = vrot.lane.b32.xlu0 %v2512, 127
    %v2554 = vpop.permute.xlu0 %2553
    %2555 = vrot.lane.b32.xlu0 %v2513, 127
    %v2556 = vpop.permute.xlu0 %2555
    %2557 = vrot.lane.b32.xlu0 %v2514, 127
    %v2558 = vpop.permute.xlu0 %2557
    %2559 = vrot.lane.b32.xlu0 %v2515, 127
    %v2560 = vpop.permute.xlu0 %2559
    %2561 = vrot.lane.b32.xlu0 %v2516, 127
    %v2562 = vpop.permute.xlu0 %2561
    %2563 = vrot.lane.b32.xlu0 %v2517, 127
    %v2564 = vpop.permute.xlu0 %2563
    %2565 = vrot.lane.b32.xlu0 %v2518, 127
    %v2566 = vpop.permute.xlu0 %2565
    %v2583 = vadd.f32 %v2486, %v2536
    %v2584 = vadd.f32 %v2487, %v2538
    %v2585 = vadd.f32 %v2488, %v2540
    %v2586 = vadd.f32 %v2489, %v2542
    %v2587 = vadd.f32 %v2490, %v2544
    %v2588 = vadd.f32 %v2491, %v2546
    %v2589 = vadd.f32 %v2492, %v2548
    %v2590 = vadd.f32 %v2493, %v2550
    %v2591 = vadd.f32 %v2494, %v2552
    %v2592 = vadd.f32 %v2495, %v2554
    %v2593 = vadd.f32 %v2496, %v2556
    %v2594 = vadd.f32 %v2497, %v2558
    %v2595 = vadd.f32 %v2498, %v2560
    %v2596 = vadd.f32 %v2499, %v2562
    %v2597 = vadd.f32 %v2500, %v2564
    %v2598 = vadd.f32 %v2501, %v2566
    %v2599 = vstv %s637
    %v2600 = vmul.f32 %v2599, %v735
    %v2601 = vmul.f32 %v2599, %v736
    %v2602 = vmul.f32 %v2599, %v737
    %v2603 = vmul.f32 %v2599, %v738
    %v2604 = vmul.f32 %v2599, %v739
    %v2605 = vmul.f32 %v2599, %v740
    %v2606 = vmul.f32 %v2599, %v741
    %v2607 = vmul.f32 %v2599, %v742
    %v2608 = vmul.f32 %v2599, %v743
    %v2609 = vmul.f32 %v2599, %v744
    %v2610 = vmul.f32 %v2599, %v745
    %v2611 = vmul.f32 %v2599, %v746
    %v2612 = vmul.f32 %v2599, %v747
    %v2613 = vmul.f32 %v2599, %v748
    %v2614 = vmul.f32 %v2599, %v749
    %v2615 = vmul.f32 %v2599, %v750
    %2632 = vrot.lane.b32.xlu0 %v2600, 126
    %v2633 = vpop.permute.xlu0 %2632
    %2634 = vrot.lane.b32.xlu0 %v2601, 126
    %v2635 = vpop.permute.xlu0 %2634
    %2636 = vrot.lane.b32.xlu0 %v2602, 126
    %v2637 = vpop.permute.xlu0 %2636
    %2638 = vrot.lane.b32.xlu0 %v2603, 126
    %v2639 = vpop.permute.xlu0 %2638
    %2640 = vrot.lane.b32.xlu0 %v2604, 126
    %v2641 = vpop.permute.xlu0 %2640
    %2642 = vrot.lane.b32.xlu0 %v2605, 126
    %v2643 = vpop.permute.xlu0 %2642
    %2644 = vrot.lane.b32.xlu0 %v2606, 126
    %v2645 = vpop.permute.xlu0 %2644
    %2646 = vrot.lane.b32.xlu0 %v2607, 126
    %v2647 = vpop.permute.xlu0 %2646
    %2648 = vrot.lane.b32.xlu0 %v2608, 126
    %v2649 = vpop.permute.xlu0 %2648
    %2650 = vrot.lane.b32.xlu0 %v2609, 126
    %v2651 = vpop.permute.xlu0 %2650
    %2652 = vrot.lane.b32.xlu0 %v2610, 126
    %v2653 = vpop.permute.xlu0 %2652
    %2654 = vrot.lane.b32.xlu0 %v2611, 126
    %v2655 = vpop.permute.xlu0 %2654
    %2656 = vrot.lane.b32.xlu0 %v2612, 126
    %v2657 = vpop.permute.xlu0 %2656
    %2658 = vrot.lane.b32.xlu0 %v2613, 126
    %v2659 = vpop.permute.xlu0 %2658
    %2660 = vrot.lane.b32.xlu0 %v2614, 126
    %v2661 = vpop.permute.xlu0 %2660
    %2662 = vrot.lane.b32.xlu0 %v2615, 126
    %v2663 = vpop.permute.xlu0 %2662
    %v2680 = vadd.f32 %v2583, %v2633
    %v2681 = vadd.f32 %v2584, %v2635
    %v2682 = vadd.f32 %v2585, %v2637
    %v2683 = vadd.f32 %v2586, %v2639
    %v2684 = vadd.f32 %v2587, %v2641
    %v2685 = vadd.f32 %v2588, %v2643
    %v2686 = vadd.f32 %v2589, %v2645
    %v2687 = vadd.f32 %v2590, %v2647
    %v2688 = vadd.f32 %v2591, %v2649
    %v2689 = vadd.f32 %v2592, %v2651
    %v2690 = vadd.f32 %v2593, %v2653
    %v2691 = vadd.f32 %v2594, %v2655
    %v2692 = vadd.f32 %v2595, %v2657
    %v2693 = vadd.f32 %v2596, %v2659
    %v2694 = vadd.f32 %v2597, %v2661
    %v2695 = vadd.f32 %v2598, %v2663
    %v2696 = vstv %s686
    %v2697 = vmul.f32 %v2696, %v757
    %v2698 = vmul.f32 %v2696, %v758
    %v2699 = vmul.f32 %v2696, %v759
    %v2700 = vmul.f32 %v2696, %v760
    %v2701 = vmul.f32 %v2696, %v761
    %v2702 = vmul.f32 %v2696, %v762
    %v2703 = vmul.f32 %v2696, %v763
    %v2704 = vmul.f32 %v2696, %v764
    %v2705 = vmul.f32 %v2696, %v765
    %v2706 = vmul.f32 %v2696, %v766
    %v2707 = vmul.f32 %v2696, %v767
    %v2708 = vmul.f32 %v2696, %v768
    %v2709 = vmul.f32 %v2696, %v769
    %v2710 = vmul.f32 %v2696, %v770
    %v2711 = vmul.f32 %v2696, %v771
    %v2712 = vmul.f32 %v2696, %v772
    %2729 = vrot.lane.b32.xlu0 %v2697, 126
    %v2730 = vpop.permute.xlu0 %2729
    %2731 = vrot.lane.b32.xlu0 %v2698, 126
    %v2732 = vpop.permute.xlu0 %2731
    %2733 = vrot.lane.b32.xlu0 %v2699, 126
    %v2734 = vpop.permute.xlu0 %2733
    %2735 = vrot.lane.b32.xlu0 %v2700, 126
    %v2736 = vpop.permute.xlu0 %2735
    %2737 = vrot.lane.b32.xlu0 %v2701, 126
    %v2738 = vpop.permute.xlu0 %2737
    %2739 = vrot.lane.b32.xlu0 %v2702, 126
    %v2740 = vpop.permute.xlu0 %2739
    %2741 = vrot.lane.b32.xlu0 %v2703, 126
    %v2742 = vpop.permute.xlu0 %2741
    %2743 = vrot.lane.b32.xlu0 %v2704, 126
    %v2744 = vpop.permute.xlu0 %2743
    %2745 = vrot.lane.b32.xlu0 %v2705, 126
    %v2746 = vpop.permute.xlu0 %2745
    %2747 = vrot.lane.b32.xlu0 %v2706, 126
    %v2748 = vpop.permute.xlu0 %2747
    %2749 = vrot.lane.b32.xlu0 %v2707, 126
    %v2750 = vpop.permute.xlu0 %2749
    %2751 = vrot.lane.b32.xlu0 %v2708, 126
    %v2752 = vpop.permute.xlu0 %2751
    %2753 = vrot.lane.b32.xlu0 %v2709, 126
    %v2754 = vpop.permute.xlu0 %2753
    %2755 = vrot.lane.b32.xlu0 %v2710, 126
    %v2756 = vpop.permute.xlu0 %2755
    %2757 = vrot.lane.b32.xlu0 %v2711, 126
    %v2758 = vpop.permute.xlu0 %2757
    %2759 = vrot.lane.b32.xlu0 %v2712, 126
    %v2760 = vpop.permute.xlu0 %2759
    %v2777 = vadd.f32 %v2680, %v2730
    %v2778 = vadd.f32 %v2681, %v2732
    %v2779 = vadd.f32 %v2682, %v2734
    %v2780 = vadd.f32 %v2683, %v2736
    %v2781 = vadd.f32 %v2684, %v2738
    %v2782 = vadd.f32 %v2685, %v2740
    %v2783 = vadd.f32 %v2686, %v2742
    %v2784 = vadd.f32 %v2687, %v2744
    %v2785 = vadd.f32 %v2688, %v2746
    %v2786 = vadd.f32 %v2689, %v2748
    %v2787 = vadd.f32 %v2690, %v2750
    %v2788 = vadd.f32 %v2691, %v2752
    %v2789 = vadd.f32 %v2692, %v2754
    %v2790 = vadd.f32 %v2693, %v2756
    %v2791 = vadd.f32 %v2694, %v2758
    %v2792 = vadd.f32 %v2695, %v2760
    %v2793 = vstv %s644
    %v2794 = vmul.f32 %v2793, %v736
    %v2795 = vmul.f32 %v2793, %v737
    %v2796 = vmul.f32 %v2793, %v738
    %v2797 = vmul.f32 %v2793, %v739
    %v2798 = vmul.f32 %v2793, %v740
    %v2799 = vmul.f32 %v2793, %v741
    %v2800 = vmul.f32 %v2793, %v742
    %v2801 = vmul.f32 %v2793, %v743
    %v2802 = vmul.f32 %v2793, %v744
    %v2803 = vmul.f32 %v2793, %v745
    %v2804 = vmul.f32 %v2793, %v746
    %v2805 = vmul.f32 %v2793, %v747
    %v2806 = vmul.f32 %v2793, %v748
    %v2807 = vmul.f32 %v2793, %v749
    %v2808 = vmul.f32 %v2793, %v750
    %v2809 = vmul.f32 %v2793, %v751
    %2826 = vrot.lane.b32.xlu0 %v2794, 126
    %v2827 = vpop.permute.xlu0 %2826
    %2828 = vrot.lane.b32.xlu0 %v2795, 126
    %v2829 = vpop.permute.xlu0 %2828
    %2830 = vrot.lane.b32.xlu0 %v2796, 126
    %v2831 = vpop.permute.xlu0 %2830
    %2832 = vrot.lane.b32.xlu0 %v2797, 126
    %v2833 = vpop.permute.xlu0 %2832
    %2834 = vrot.lane.b32.xlu0 %v2798, 126
    %v2835 = vpop.permute.xlu0 %2834
    %2836 = vrot.lane.b32.xlu0 %v2799, 126
    %v2837 = vpop.permute.xlu0 %2836
    %2838 = vrot.lane.b32.xlu0 %v2800, 126
    %v2839 = vpop.permute.xlu0 %2838
    %2840 = vrot.lane.b32.xlu0 %v2801, 126
    %v2841 = vpop.permute.xlu0 %2840
    %2842 = vrot.lane.b32.xlu0 %v2802, 126
    %v2843 = vpop.permute.xlu0 %2842
    %2844 = vrot.lane.b32.xlu0 %v2803, 126
    %v2845 = vpop.permute.xlu0 %2844
    %2846 = vrot.lane.b32.xlu0 %v2804, 126
    %v2847 = vpop.permute.xlu0 %2846
    %2848 = vrot.lane.b32.xlu0 %v2805, 126
    %v2849 = vpop.permute.xlu0 %2848
    %2850 = vrot.lane.b32.xlu0 %v2806, 126
    %v2851 = vpop.permute.xlu0 %2850
    %2852 = vrot.lane.b32.xlu0 %v2807, 126
    %v2853 = vpop.permute.xlu0 %2852
    %2854 = vrot.lane.b32.xlu0 %v2808, 126
    %v2855 = vpop.permute.xlu0 %2854
    %2856 = vrot.lane.b32.xlu0 %v2809, 126
    %v2857 = vpop.permute.xlu0 %2856
    %v2874 = vadd.f32 %v2777, %v2827
    %v2875 = vadd.f32 %v2778, %v2829
    %v2876 = vadd.f32 %v2779, %v2831
    %v2877 = vadd.f32 %v2780, %v2833
    %v2878 = vadd.f32 %v2781, %v2835
    %v2879 = vadd.f32 %v2782, %v2837
    %v2880 = vadd.f32 %v2783, %v2839
    %v2881 = vadd.f32 %v2784, %v2841
    %v2882 = vadd.f32 %v2785, %v2843
    %v2883 = vadd.f32 %v2786, %v2845
    %v2884 = vadd.f32 %v2787, %v2847
    %v2885 = vadd.f32 %v2788, %v2849
    %v2886 = vadd.f32 %v2789, %v2851
    %v2887 = vadd.f32 %v2790, %v2853
    %v2888 = vadd.f32 %v2791, %v2855
    %v2889 = vadd.f32 %v2792, %v2857
    %v2890 = vstv %s693
    %v2891 = vmul.f32 %v2890, %v758
    %v2892 = vmul.f32 %v2890, %v759
    %v2893 = vmul.f32 %v2890, %v760
    %v2894 = vmul.f32 %v2890, %v761
    %v2895 = vmul.f32 %v2890, %v762
    %v2896 = vmul.f32 %v2890, %v763
    %v2897 = vmul.f32 %v2890, %v764
    %v2898 = vmul.f32 %v2890, %v765
    %v2899 = vmul.f32 %v2890, %v766
    %v2900 = vmul.f32 %v2890, %v767
    %v2901 = vmul.f32 %v2890, %v768
    %v2902 = vmul.f32 %v2890, %v769
    %v2903 = vmul.f32 %v2890, %v770
    %v2904 = vmul.f32 %v2890, %v771
    %v2905 = vmul.f32 %v2890, %v772
    %v2906 = vmul.f32 %v2890, %v773
    %2923 = vrot.lane.b32.xlu0 %v2891, 126
    %v2924 = vpop.permute.xlu0 %2923
    %2925 = vrot.lane.b32.xlu0 %v2892, 126
    %v2926 = vpop.permute.xlu0 %2925
    %2927 = vrot.lane.b32.xlu0 %v2893, 126
    %v2928 = vpop.permute.xlu0 %2927
    %2929 = vrot.lane.b32.xlu0 %v2894, 126
    %v2930 = vpop.permute.xlu0 %2929
    %2931 = vrot.lane.b32.xlu0 %v2895, 126
    %v2932 = vpop.permute.xlu0 %2931
    %2933 = vrot.lane.b32.xlu0 %v2896, 126
    %v2934 = vpop.permute.xlu0 %2933
    %2935 = vrot.lane.b32.xlu0 %v2897, 126
    %v2936 = vpop.permute.xlu0 %2935
    %2937 = vrot.lane.b32.xlu0 %v2898, 126
    %v2938 = vpop.permute.xlu0 %2937
    %2939 = vrot.lane.b32.xlu0 %v2899, 126
    %v2940 = vpop.permute.xlu0 %2939
    %2941 = vrot.lane.b32.xlu0 %v2900, 126
    %v2942 = vpop.permute.xlu0 %2941
    %2943 = vrot.lane.b32.xlu0 %v2901, 126
    %v2944 = vpop.permute.xlu0 %2943
    %2945 = vrot.lane.b32.xlu0 %v2902, 126
    %v2946 = vpop.permute.xlu0 %2945
    %2947 = vrot.lane.b32.xlu0 %v2903, 126
    %v2948 = vpop.permute.xlu0 %2947
    %2949 = vrot.lane.b32.xlu0 %v2904, 126
    %v2950 = vpop.permute.xlu0 %2949
    %2951 = vrot.lane.b32.xlu0 %v2905, 126
    %v2952 = vpop.permute.xlu0 %2951
    %2953 = vrot.lane.b32.xlu0 %v2906, 126
    %v2954 = vpop.permute.xlu0 %2953
    %v2971 = vadd.f32 %v2874, %v2924
    %v2972 = vadd.f32 %v2875, %v2926
    %v2973 = vadd.f32 %v2876, %v2928
    %v2974 = vadd.f32 %v2877, %v2930
    %v2975 = vadd.f32 %v2878, %v2932
    %v2976 = vadd.f32 %v2879, %v2934
    %v2977 = vadd.f32 %v2880, %v2936
    %v2978 = vadd.f32 %v2881, %v2938
    %v2979 = vadd.f32 %v2882, %v2940
    %v2980 = vadd.f32 %v2883, %v2942
    %v2981 = vadd.f32 %v2884, %v2944
    %v2982 = vadd.f32 %v2885, %v2946
    %v2983 = vadd.f32 %v2886, %v2948
    %v2984 = vadd.f32 %v2887, %v2950
    %v2985 = vadd.f32 %v2888, %v2952
    %v2986 = vadd.f32 %v2889, %v2954
    %v2987 = vstv %s651
    %v2988 = vmul.f32 %v2987, %v737
    %v2989 = vmul.f32 %v2987, %v738
    %v2990 = vmul.f32 %v2987, %v739
    %v2991 = vmul.f32 %v2987, %v740
    %v2992 = vmul.f32 %v2987, %v741
    %v2993 = vmul.f32 %v2987, %v742
    %v2994 = vmul.f32 %v2987, %v743
    %v2995 = vmul.f32 %v2987, %v744
    %v2996 = vmul.f32 %v2987, %v745
    %v2997 = vmul.f32 %v2987, %v746
    %v2998 = vmul.f32 %v2987, %v747
    %v2999 = vmul.f32 %v2987, %v748
    %v3000 = vmul.f32 %v2987, %v749
    %v3001 = vmul.f32 %v2987, %v750
    %v3002 = vmul.f32 %v2987, %v751
    %v3003 = vmul.f32 %v2987, %v752
    %3020 = vrot.lane.b32.xlu0 %v2988, 126
    %v3021 = vpop.permute.xlu0 %3020
    %3022 = vrot.lane.b32.xlu0 %v2989, 126
    %v3023 = vpop.permute.xlu0 %3022
    %3024 = vrot.lane.b32.xlu0 %v2990, 126
    %v3025 = vpop.permute.xlu0 %3024
    %3026 = vrot.lane.b32.xlu0 %v2991, 126
    %v3027 = vpop.permute.xlu0 %3026
    %3028 = vrot.lane.b32.xlu0 %v2992, 126
    %v3029 = vpop.permute.xlu0 %3028
    %3030 = vrot.lane.b32.xlu0 %v2993, 126
    %v3031 = vpop.permute.xlu0 %3030
    %3032 = vrot.lane.b32.xlu0 %v2994, 126
    %v3033 = vpop.permute.xlu0 %3032
    %3034 = vrot.lane.b32.xlu0 %v2995, 126
    %v3035 = vpop.permute.xlu0 %3034
    %3036 = vrot.lane.b32.xlu0 %v2996, 126
    %v3037 = vpop.permute.xlu0 %3036
    %3038 = vrot.lane.b32.xlu0 %v2997, 126
    %v3039 = vpop.permute.xlu0 %3038
    %3040 = vrot.lane.b32.xlu0 %v2998, 126
    %v3041 = vpop.permute.xlu0 %3040
    %3042 = vrot.lane.b32.xlu0 %v2999, 126
    %v3043 = vpop.permute.xlu0 %3042
    %3044 = vrot.lane.b32.xlu0 %v3000, 126
    %v3045 = vpop.permute.xlu0 %3044
    %3046 = vrot.lane.b32.xlu0 %v3001, 126
    %v3047 = vpop.permute.xlu0 %3046
    %3048 = vrot.lane.b32.xlu0 %v3002, 126
    %v3049 = vpop.permute.xlu0 %3048
    %3050 = vrot.lane.b32.xlu0 %v3003, 126
    %v3051 = vpop.permute.xlu0 %3050
    %v3068 = vadd.f32 %v2971, %v3021
    %v3069 = vadd.f32 %v2972, %v3023
    %v3070 = vadd.f32 %v2973, %v3025
    %v3071 = vadd.f32 %v2974, %v3027
    %v3072 = vadd.f32 %v2975, %v3029
    %v3073 = vadd.f32 %v2976, %v3031
    %v3074 = vadd.f32 %v2977, %v3033
    %v3075 = vadd.f32 %v2978, %v3035
    %v3076 = vadd.f32 %v2979, %v3037
    %v3077 = vadd.f32 %v2980, %v3039
    %v3078 = vadd.f32 %v2981, %v3041
    %v3079 = vadd.f32 %v2982, %v3043
    %v3080 = vadd.f32 %v2983, %v3045
    %v3081 = vadd.f32 %v2984, %v3047
    %v3082 = vadd.f32 %v2985, %v3049
    %v3083 = vadd.f32 %v2986, %v3051
    %v3084 = vstv %s700
    %v3085 = vmul.f32 %v3084, %v759
    %v3086 = vmul.f32 %v3084, %v760
    %v3087 = vmul.f32 %v3084, %v761
    %v3088 = vmul.f32 %v3084, %v762
    %v3089 = vmul.f32 %v3084, %v763
    %v3090 = vmul.f32 %v3084, %v764
    %v3091 = vmul.f32 %v3084, %v765
    %v3092 = vmul.f32 %v3084, %v766
    %v3093 = vmul.f32 %v3084, %v767
    %v3094 = vmul.f32 %v3084, %v768
    %v3095 = vmul.f32 %v3084, %v769
    %v3096 = vmul.f32 %v3084, %v770
    %v3097 = vmul.f32 %v3084, %v771
    %v3098 = vmul.f32 %v3084, %v772
    %v3099 = vmul.f32 %v3084, %v773
    %v3100 = vmul.f32 %v3084, %v774
    %3117 = vrot.lane.b32.xlu0 %v3085, 126
    %v3118 = vpop.permute.xlu0 %3117
    %3119 = vrot.lane.b32.xlu0 %v3086, 126
    %v3120 = vpop.permute.xlu0 %3119
    %3121 = vrot.lane.b32.xlu0 %v3087, 126
    %v3122 = vpop.permute.xlu0 %3121
    %3123 = vrot.lane.b32.xlu0 %v3088, 126
    %v3124 = vpop.permute.xlu0 %3123
    %3125 = vrot.lane.b32.xlu0 %v3089, 126
    %v3126 = vpop.permute.xlu0 %3125
    %3127 = vrot.lane.b32.xlu0 %v3090, 126
    %v3128 = vpop.permute.xlu0 %3127
    %3129 = vrot.lane.b32.xlu0 %v3091, 126
    %v3130 = vpop.permute.xlu0 %3129
    %3131 = vrot.lane.b32.xlu0 %v3092, 126
    %v3132 = vpop.permute.xlu0 %3131
    %3133 = vrot.lane.b32.xlu0 %v3093, 126
    %v3134 = vpop.permute.xlu0 %3133
    %3135 = vrot.lane.b32.xlu0 %v3094, 126
    %v3136 = vpop.permute.xlu0 %3135
    %3137 = vrot.lane.b32.xlu0 %v3095, 126
    %v3138 = vpop.permute.xlu0 %3137
    %3139 = vrot.lane.b32.xlu0 %v3096, 126
    %v3140 = vpop.permute.xlu0 %3139
    %3141 = vrot.lane.b32.xlu0 %v3097, 126
    %v3142 = vpop.permute.xlu0 %3141
    %3143 = vrot.lane.b32.xlu0 %v3098, 126
    %v3144 = vpop.permute.xlu0 %3143
    %3145 = vrot.lane.b32.xlu0 %v3099, 126
    %v3146 = vpop.permute.xlu0 %3145
    %3147 = vrot.lane.b32.xlu0 %v3100, 126
    %v3148 = vpop.permute.xlu0 %3147
    %v3165 = vadd.f32 %v3068, %v3118
    %v3166 = vadd.f32 %v3069, %v3120
    %v3167 = vadd.f32 %v3070, %v3122
    %v3168 = vadd.f32 %v3071, %v3124
    %v3169 = vadd.f32 %v3072, %v3126
    %v3170 = vadd.f32 %v3073, %v3128
    %v3171 = vadd.f32 %v3074, %v3130
    %v3172 = vadd.f32 %v3075, %v3132
    %v3173 = vadd.f32 %v3076, %v3134
    %v3174 = vadd.f32 %v3077, %v3136
    %v3175 = vadd.f32 %v3078, %v3138
    %v3176 = vadd.f32 %v3079, %v3140
    %v3177 = vadd.f32 %v3080, %v3142
    %v3178 = vadd.f32 %v3081, %v3144
    %v3179 = vadd.f32 %v3082, %v3146
    %v3180 = vadd.f32 %v3083, %v3148
    %v3181 = vstv %s658
    %v3182 = vmul.f32 %v3181, %v738
    %v3183 = vmul.f32 %v3181, %v739
    %v3184 = vmul.f32 %v3181, %v740
    %v3185 = vmul.f32 %v3181, %v741
    %v3186 = vmul.f32 %v3181, %v742
    %v3187 = vmul.f32 %v3181, %v743
    %v3188 = vmul.f32 %v3181, %v744
    %v3189 = vmul.f32 %v3181, %v745
    %v3190 = vmul.f32 %v3181, %v746
    %v3191 = vmul.f32 %v3181, %v747
    %v3192 = vmul.f32 %v3181, %v748
    %v3193 = vmul.f32 %v3181, %v749
    %v3194 = vmul.f32 %v3181, %v750
    %v3195 = vmul.f32 %v3181, %v751
    %v3196 = vmul.f32 %v3181, %v752
    %v3197 = vmul.f32 %v3181, %v753
    %3214 = vrot.lane.b32.xlu0 %v3182, 126
    %v3215 = vpop.permute.xlu0 %3214
    %3216 = vrot.lane.b32.xlu0 %v3183, 126
    %v3217 = vpop.permute.xlu0 %3216
    %3218 = vrot.lane.b32.xlu0 %v3184, 126
    %v3219 = vpop.permute.xlu0 %3218
    %3220 = vrot.lane.b32.xlu0 %v3185, 126
    %v3221 = vpop.permute.xlu0 %3220
    %3222 = vrot.lane.b32.xlu0 %v3186, 126
    %v3223 = vpop.permute.xlu0 %3222
    %3224 = vrot.lane.b32.xlu0 %v3187, 126
    %v3225 = vpop.permute.xlu0 %3224
    %3226 = vrot.lane.b32.xlu0 %v3188, 126
    %v3227 = vpop.permute.xlu0 %3226
    %3228 = vrot.lane.b32.xlu0 %v3189, 126
    %v3229 = vpop.permute.xlu0 %3228
    %3230 = vrot.lane.b32.xlu0 %v3190, 126
    %v3231 = vpop.permute.xlu0 %3230
    %3232 = vrot.lane.b32.xlu0 %v3191, 126
    %v3233 = vpop.permute.xlu0 %3232
    %3234 = vrot.lane.b32.xlu0 %v3192, 126
    %v3235 = vpop.permute.xlu0 %3234
    %3236 = vrot.lane.b32.xlu0 %v3193, 126
    %v3237 = vpop.permute.xlu0 %3236
    %3238 = vrot.lane.b32.xlu0 %v3194, 126
    %v3239 = vpop.permute.xlu0 %3238
    %3240 = vrot.lane.b32.xlu0 %v3195, 126
    %v3241 = vpop.permute.xlu0 %3240
    %3242 = vrot.lane.b32.xlu0 %v3196, 126
    %v3243 = vpop.permute.xlu0 %3242
    %3244 = vrot.lane.b32.xlu0 %v3197, 126
    %v3245 = vpop.permute.xlu0 %3244
    %v3262 = vadd.f32 %v3165, %v3215
    %v3263 = vadd.f32 %v3166, %v3217
    %v3264 = vadd.f32 %v3167, %v3219
    %v3265 = vadd.f32 %v3168, %v3221
    %v3266 = vadd.f32 %v3169, %v3223
    %v3267 = vadd.f32 %v3170, %v3225
    %v3268 = vadd.f32 %v3171, %v3227
    %v3269 = vadd.f32 %v3172, %v3229
    %v3270 = vadd.f32 %v3173, %v3231
    %v3271 = vadd.f32 %v3174, %v3233
    %v3272 = vadd.f32 %v3175, %v3235
    %v3273 = vadd.f32 %v3176, %v3237
    %v3274 = vadd.f32 %v3177, %v3239
    %v3275 = vadd.f32 %v3178, %v3241
    %v3276 = vadd.f32 %v3179, %v3243
    %v3277 = vadd.f32 %v3180, %v3245
    %v3278 = vstv %s707
    %v3279 = vmul.f32 %v3278, %v760
    %v3280 = vmul.f32 %v3278, %v761
    %v3281 = vmul.f32 %v3278, %v762
    %v3282 = vmul.f32 %v3278, %v763
    %v3283 = vmul.f32 %v3278, %v764
    %v3284 = vmul.f32 %v3278, %v765
    %v3285 = vmul.f32 %v3278, %v766
    %v3286 = vmul.f32 %v3278, %v767
    %v3287 = vmul.f32 %v3278, %v768
    %v3288 = vmul.f32 %v3278, %v769
    %v3289 = vmul.f32 %v3278, %v770
    %v3290 = vmul.f32 %v3278, %v771
    %v3291 = vmul.f32 %v3278, %v772
    %v3292 = vmul.f32 %v3278, %v773
    %v3293 = vmul.f32 %v3278, %v774
    %v3294 = vmul.f32 %v3278, %v775
    %3311 = vrot.lane.b32.xlu0 %v3279, 126
    %v3312 = vpop.permute.xlu0 %3311
    %3313 = vrot.lane.b32.xlu0 %v3280, 126
    %v3314 = vpop.permute.xlu0 %3313
    %3315 = vrot.lane.b32.xlu0 %v3281, 126
    %v3316 = vpop.permute.xlu0 %3315
    %3317 = vrot.lane.b32.xlu0 %v3282, 126
    %v3318 = vpop.permute.xlu0 %3317
    %3319 = vrot.lane.b32.xlu0 %v3283, 126
    %v3320 = vpop.permute.xlu0 %3319
    %3321 = vrot.lane.b32.xlu0 %v3284, 126
    %v3322 = vpop.permute.xlu0 %3321
    %3323 = vrot.lane.b32.xlu0 %v3285, 126
    %v3324 = vpop.permute.xlu0 %3323
    %3325 = vrot.lane.b32.xlu0 %v3286, 126
    %v3326 = vpop.permute.xlu0 %3325
    %3327 = vrot.lane.b32.xlu0 %v3287, 126
    %v3328 = vpop.permute.xlu0 %3327
    %3329 = vrot.lane.b32.xlu0 %v3288, 126
    %v3330 = vpop.permute.xlu0 %3329
    %3331 = vrot.lane.b32.xlu0 %v3289, 126
    %v3332 = vpop.permute.xlu0 %3331
    %3333 = vrot.lane.b32.xlu0 %v3290, 126
    %v3334 = vpop.permute.xlu0 %3333
    %3335 = vrot.lane.b32.xlu0 %v3291, 126
    %v3336 = vpop.permute.xlu0 %3335
    %3337 = vrot.lane.b32.xlu0 %v3292, 126
    %v3338 = vpop.permute.xlu0 %3337
    %3339 = vrot.lane.b32.xlu0 %v3293, 126
    %v3340 = vpop.permute.xlu0 %3339
    %3341 = vrot.lane.b32.xlu0 %v3294, 126
    %v3342 = vpop.permute.xlu0 %3341
    %v3359 = vadd.f32 %v3262, %v3312
    %v3360 = vadd.f32 %v3263, %v3314
    %v3361 = vadd.f32 %v3264, %v3316
    %v3362 = vadd.f32 %v3265, %v3318
    %v3363 = vadd.f32 %v3266, %v3320
    %v3364 = vadd.f32 %v3267, %v3322
    %v3365 = vadd.f32 %v3268, %v3324
    %v3366 = vadd.f32 %v3269, %v3326
    %v3367 = vadd.f32 %v3270, %v3328
    %v3368 = vadd.f32 %v3271, %v3330
    %v3369 = vadd.f32 %v3272, %v3332
    %v3370 = vadd.f32 %v3273, %v3334
    %v3371 = vadd.f32 %v3274, %v3336
    %v3372 = vadd.f32 %v3275, %v3338
    %v3373 = vadd.f32 %v3276, %v3340
    %v3374 = vadd.f32 %v3277, %v3342
    %v3375 = vstv %s665
    %v3376 = vmul.f32 %v3375, %v739
    %v3377 = vmul.f32 %v3375, %v740
    %v3378 = vmul.f32 %v3375, %v741
    %v3379 = vmul.f32 %v3375, %v742
    %v3380 = vmul.f32 %v3375, %v743
    %v3381 = vmul.f32 %v3375, %v744
    %v3382 = vmul.f32 %v3375, %v745
    %v3383 = vmul.f32 %v3375, %v746
    %v3384 = vmul.f32 %v3375, %v747
    %v3385 = vmul.f32 %v3375, %v748
    %v3386 = vmul.f32 %v3375, %v749
    %v3387 = vmul.f32 %v3375, %v750
    %v3388 = vmul.f32 %v3375, %v751
    %v3389 = vmul.f32 %v3375, %v752
    %v3390 = vmul.f32 %v3375, %v753
    %v3391 = vmul.f32 %v3375, %v754
    %3408 = vrot.lane.b32.xlu0 %v3376, 126
    %v3409 = vpop.permute.xlu0 %3408
    %3410 = vrot.lane.b32.xlu0 %v3377, 126
    %v3411 = vpop.permute.xlu0 %3410
    %3412 = vrot.lane.b32.xlu0 %v3378, 126
    %v3413 = vpop.permute.xlu0 %3412
    %3414 = vrot.lane.b32.xlu0 %v3379, 126
    %v3415 = vpop.permute.xlu0 %3414
    %3416 = vrot.lane.b32.xlu0 %v3380, 126
    %v3417 = vpop.permute.xlu0 %3416
    %3418 = vrot.lane.b32.xlu0 %v3381, 126
    %v3419 = vpop.permute.xlu0 %3418
    %3420 = vrot.lane.b32.xlu0 %v3382, 126
    %v3421 = vpop.permute.xlu0 %3420
    %3422 = vrot.lane.b32.xlu0 %v3383, 126
    %v3423 = vpop.permute.xlu0 %3422
    %3424 = vrot.lane.b32.xlu0 %v3384, 126
    %v3425 = vpop.permute.xlu0 %3424
    %3426 = vrot.lane.b32.xlu0 %v3385, 126
    %v3427 = vpop.permute.xlu0 %3426
    %3428 = vrot.lane.b32.xlu0 %v3386, 126
    %v3429 = vpop.permute.xlu0 %3428
    %3430 = vrot.lane.b32.xlu0 %v3387, 126
    %v3431 = vpop.permute.xlu0 %3430
    %3432 = vrot.lane.b32.xlu0 %v3388, 126
    %v3433 = vpop.permute.xlu0 %3432
    %3434 = vrot.lane.b32.xlu0 %v3389, 126
    %v3435 = vpop.permute.xlu0 %3434
    %3436 = vrot.lane.b32.xlu0 %v3390, 126
    %v3437 = vpop.permute.xlu0 %3436
    %3438 = vrot.lane.b32.xlu0 %v3391, 126
    %v3439 = vpop.permute.xlu0 %3438
    %v3456 = vadd.f32 %v3359, %v3409
    %v3457 = vadd.f32 %v3360, %v3411
    %v3458 = vadd.f32 %v3361, %v3413
    %v3459 = vadd.f32 %v3362, %v3415
    %v3460 = vadd.f32 %v3363, %v3417
    %v3461 = vadd.f32 %v3364, %v3419
    %v3462 = vadd.f32 %v3365, %v3421
    %v3463 = vadd.f32 %v3366, %v3423
    %v3464 = vadd.f32 %v3367, %v3425
    %v3465 = vadd.f32 %v3368, %v3427
    %v3466 = vadd.f32 %v3369, %v3429
    %v3467 = vadd.f32 %v3370, %v3431
    %v3468 = vadd.f32 %v3371, %v3433
    %v3469 = vadd.f32 %v3372, %v3435
    %v3470 = vadd.f32 %v3373, %v3437
    %v3471 = vadd.f32 %v3374, %v3439
    %v3472 = vstv %s714
    %v3473 = vmul.f32 %v3472, %v761
    %v3474 = vmul.f32 %v3472, %v762
    %v3475 = vmul.f32 %v3472, %v763
    %v3476 = vmul.f32 %v3472, %v764
    %v3477 = vmul.f32 %v3472, %v765
    %v3478 = vmul.f32 %v3472, %v766
    %v3479 = vmul.f32 %v3472, %v767
    %v3480 = vmul.f32 %v3472, %v768
    %v3481 = vmul.f32 %v3472, %v769
    %v3482 = vmul.f32 %v3472, %v770
    %v3483 = vmul.f32 %v3472, %v771
    %v3484 = vmul.f32 %v3472, %v772
    %v3485 = vmul.f32 %v3472, %v773
    %v3486 = vmul.f32 %v3472, %v774
    %v3487 = vmul.f32 %v3472, %v775
    %v3488 = vmul.f32 %v3472, %v776
    %3505 = vrot.lane.b32.xlu0 %v3473, 126
    %v3506 = vpop.permute.xlu0 %3505
    %3507 = vrot.lane.b32.xlu0 %v3474, 126
    %v3508 = vpop.permute.xlu0 %3507
    %3509 = vrot.lane.b32.xlu0 %v3475, 126
    %v3510 = vpop.permute.xlu0 %3509
    %3511 = vrot.lane.b32.xlu0 %v3476, 126
    %v3512 = vpop.permute.xlu0 %3511
    %3513 = vrot.lane.b32.xlu0 %v3477, 126
    %v3514 = vpop.permute.xlu0 %3513
    %3515 = vrot.lane.b32.xlu0 %v3478, 126
    %v3516 = vpop.permute.xlu0 %3515
    %3517 = vrot.lane.b32.xlu0 %v3479, 126
    %v3518 = vpop.permute.xlu0 %3517
    %3519 = vrot.lane.b32.xlu0 %v3480, 126
    %v3520 = vpop.permute.xlu0 %3519
    %3521 = vrot.lane.b32.xlu0 %v3481, 126
    %v3522 = vpop.permute.xlu0 %3521
    %3523 = vrot.lane.b32.xlu0 %v3482, 126
    %v3524 = vpop.permute.xlu0 %3523
    %3525 = vrot.lane.b32.xlu0 %v3483, 126
    %v3526 = vpop.permute.xlu0 %3525
    %3527 = vrot.lane.b32.xlu0 %v3484, 126
    %v3528 = vpop.permute.xlu0 %3527
    %3529 = vrot.lane.b32.xlu0 %v3485, 126
    %v3530 = vpop.permute.xlu0 %3529
    %3531 = vrot.lane.b32.xlu0 %v3486, 126
    %v3532 = vpop.permute.xlu0 %3531
    %3533 = vrot.lane.b32.xlu0 %v3487, 126
    %v3534 = vpop.permute.xlu0 %3533
    %3535 = vrot.lane.b32.xlu0 %v3488, 126
    %v3536 = vpop.permute.xlu0 %3535
    %v3553 = vadd.f32 %v3456, %v3506
    %v3554 = vadd.f32 %v3457, %v3508
    %v3555 = vadd.f32 %v3458, %v3510
    %v3556 = vadd.f32 %v3459, %v3512
    %v3557 = vadd.f32 %v3460, %v3514
    %v3558 = vadd.f32 %v3461, %v3516
    %v3559 = vadd.f32 %v3462, %v3518
    %v3560 = vadd.f32 %v3463, %v3520
    %v3561 = vadd.f32 %v3464, %v3522
    %v3562 = vadd.f32 %v3465, %v3524
    %v3563 = vadd.f32 %v3466, %v3526
    %v3564 = vadd.f32 %v3467, %v3528
    %v3565 = vadd.f32 %v3468, %v3530
    %v3566 = vadd.f32 %v3469, %v3532
    %v3567 = vadd.f32 %v3470, %v3534
    %v3568 = vadd.f32 %v3471, %v3536
    %v3569 = vstv %s672
    %v3570 = vmul.f32 %v3569, %v740
    %v3571 = vmul.f32 %v3569, %v741
    %v3572 = vmul.f32 %v3569, %v742
    %v3573 = vmul.f32 %v3569, %v743
    %v3574 = vmul.f32 %v3569, %v744
    %v3575 = vmul.f32 %v3569, %v745
    %v3576 = vmul.f32 %v3569, %v746
    %v3577 = vmul.f32 %v3569, %v747
    %v3578 = vmul.f32 %v3569, %v748
    %v3579 = vmul.f32 %v3569, %v749
    %v3580 = vmul.f32 %v3569, %v750
    %v3581 = vmul.f32 %v3569, %v751
    %v3582 = vmul.f32 %v3569, %v752
    %v3583 = vmul.f32 %v3569, %v753
    %v3584 = vmul.f32 %v3569, %v754
    %v3585 = vmul.f32 %v3569, %v755
    %3602 = vrot.lane.b32.xlu0 %v3570, 126
    %v3603 = vpop.permute.xlu0 %3602
    %3604 = vrot.lane.b32.xlu0 %v3571, 126
    %v3605 = vpop.permute.xlu0 %3604
    %3606 = vrot.lane.b32.xlu0 %v3572, 126
    %v3607 = vpop.permute.xlu0 %3606
    %3608 = vrot.lane.b32.xlu0 %v3573, 126
    %v3609 = vpop.permute.xlu0 %3608
    %3610 = vrot.lane.b32.xlu0 %v3574, 126
    %v3611 = vpop.permute.xlu0 %3610
    %3612 = vrot.lane.b32.xlu0 %v3575, 126
    %v3613 = vpop.permute.xlu0 %3612
    %3614 = vrot.lane.b32.xlu0 %v3576, 126
    %v3615 = vpop.permute.xlu0 %3614
    %3616 = vrot.lane.b32.xlu0 %v3577, 126
    %v3617 = vpop.permute.xlu0 %3616
    %3618 = vrot.lane.b32.xlu0 %v3578, 126
    %v3619 = vpop.permute.xlu0 %3618
    %3620 = vrot.lane.b32.xlu0 %v3579, 126
    %v3621 = vpop.permute.xlu0 %3620
    %3622 = vrot.lane.b32.xlu0 %v3580, 126
    %v3623 = vpop.permute.xlu0 %3622
    %3624 = vrot.lane.b32.xlu0 %v3581, 126
    %v3625 = vpop.permute.xlu0 %3624
    %3626 = vrot.lane.b32.xlu0 %v3582, 126
    %v3627 = vpop.permute.xlu0 %3626
    %3628 = vrot.lane.b32.xlu0 %v3583, 126
    %v3629 = vpop.permute.xlu0 %3628
    %3630 = vrot.lane.b32.xlu0 %v3584, 126
    %v3631 = vpop.permute.xlu0 %3630
    %3632 = vrot.lane.b32.xlu0 %v3585, 126
    %v3633 = vpop.permute.xlu0 %3632
    %v3650 = vadd.f32 %v3553, %v3603
    %v3651 = vadd.f32 %v3554, %v3605
    %v3652 = vadd.f32 %v3555, %v3607
    %v3653 = vadd.f32 %v3556, %v3609
    %v3654 = vadd.f32 %v3557, %v3611
    %v3655 = vadd.f32 %v3558, %v3613
    %v3656 = vadd.f32 %v3559, %v3615
    %v3657 = vadd.f32 %v3560, %v3617
    %v3658 = vadd.f32 %v3561, %v3619
    %v3659 = vadd.f32 %v3562, %v3621
    %v3660 = vadd.f32 %v3563, %v3623
    %v3661 = vadd.f32 %v3564, %v3625
    %v3662 = vadd.f32 %v3565, %v3627
    %v3663 = vadd.f32 %v3566, %v3629
    %v3664 = vadd.f32 %v3567, %v3631
    %v3665 = vadd.f32 %v3568, %v3633
    %v3666 = vstv %s721
    %v3667 = vmul.f32 %v3666, %v762
    %v3668 = vmul.f32 %v3666, %v763
    %v3669 = vmul.f32 %v3666, %v764
    %v3670 = vmul.f32 %v3666, %v765
    %v3671 = vmul.f32 %v3666, %v766
    %v3672 = vmul.f32 %v3666, %v767
    %v3673 = vmul.f32 %v3666, %v768
    %v3674 = vmul.f32 %v3666, %v769
    %v3675 = vmul.f32 %v3666, %v770
    %v3676 = vmul.f32 %v3666, %v771
    %v3677 = vmul.f32 %v3666, %v772
    %v3678 = vmul.f32 %v3666, %v773
    %v3679 = vmul.f32 %v3666, %v774
    %v3680 = vmul.f32 %v3666, %v775
    %v3681 = vmul.f32 %v3666, %v776
    %v3682 = vmul.f32 %v3666, %v777
    %3699 = vrot.lane.b32.xlu0 %v3667, 126
    %v3700 = vpop.permute.xlu0 %3699
    %3701 = vrot.lane.b32.xlu0 %v3668, 126
    %v3702 = vpop.permute.xlu0 %3701
    %3703 = vrot.lane.b32.xlu0 %v3669, 126
    %v3704 = vpop.permute.xlu0 %3703
    %3705 = vrot.lane.b32.xlu0 %v3670, 126
    %v3706 = vpop.permute.xlu0 %3705
    %3707 = vrot.lane.b32.xlu0 %v3671, 126
    %v3708 = vpop.permute.xlu0 %3707
    %3709 = vrot.lane.b32.xlu0 %v3672, 126
    %v3710 = vpop.permute.xlu0 %3709
    %3711 = vrot.lane.b32.xlu0 %v3673, 126
    %v3712 = vpop.permute.xlu0 %3711
    %3713 = vrot.lane.b32.xlu0 %v3674, 126
    %v3714 = vpop.permute.xlu0 %3713
    %3715 = vrot.lane.b32.xlu0 %v3675, 126
    %v3716 = vpop.permute.xlu0 %3715
    %3717 = vrot.lane.b32.xlu0 %v3676, 126
    %v3718 = vpop.permute.xlu0 %3717
    %3719 = vrot.lane.b32.xlu0 %v3677, 126
    %v3720 = vpop.permute.xlu0 %3719
    %3721 = vrot.lane.b32.xlu0 %v3678, 126
    %v3722 = vpop.permute.xlu0 %3721
    %3723 = vrot.lane.b32.xlu0 %v3679, 126
    %v3724 = vpop.permute.xlu0 %3723
    %3725 = vrot.lane.b32.xlu0 %v3680, 126
    %v3726 = vpop.permute.xlu0 %3725
    %3727 = vrot.lane.b32.xlu0 %v3681, 126
    %v3728 = vpop.permute.xlu0 %3727
    %3729 = vrot.lane.b32.xlu0 %v3682, 126
    %v3730 = vpop.permute.xlu0 %3729
    %v3747 = vadd.f32 %v3650, %v3700
    %v3748 = vadd.f32 %v3651, %v3702
    %v3749 = vadd.f32 %v3652, %v3704
    %v3750 = vadd.f32 %v3653, %v3706
    %v3751 = vadd.f32 %v3654, %v3708
    %v3752 = vadd.f32 %v3655, %v3710
    %v3753 = vadd.f32 %v3656, %v3712
    %v3754 = vadd.f32 %v3657, %v3714
    %v3755 = vadd.f32 %v3658, %v3716
    %v3756 = vadd.f32 %v3659, %v3718
    %v3757 = vadd.f32 %v3660, %v3720
    %v3758 = vadd.f32 %v3661, %v3722
    %v3759 = vadd.f32 %v3662, %v3724
    %v3760 = vadd.f32 %v3663, %v3726
    %v3761 = vadd.f32 %v3664, %v3728
    %v3762 = vadd.f32 %v3665, %v3730
    %v3763 = vstv %s679
    %v3764 = vmul.f32 %v3763, %v741
    %v3765 = vmul.f32 %v3763, %v742
    %v3766 = vmul.f32 %v3763, %v743
    %v3767 = vmul.f32 %v3763, %v744
    %v3768 = vmul.f32 %v3763, %v745
    %v3769 = vmul.f32 %v3763, %v746
    %v3770 = vmul.f32 %v3763, %v747
    %v3771 = vmul.f32 %v3763, %v748
    %v3772 = vmul.f32 %v3763, %v749
    %v3773 = vmul.f32 %v3763, %v750
    %v3774 = vmul.f32 %v3763, %v751
    %v3775 = vmul.f32 %v3763, %v752
    %v3776 = vmul.f32 %v3763, %v753
    %v3777 = vmul.f32 %v3763, %v754
    %v3778 = vmul.f32 %v3763, %v755
    %v3779 = vmul.f32 %v3763, %v756
    %3796 = vrot.lane.b32.xlu0 %v3764, 126
    %v3797 = vpop.permute.xlu0 %3796
    %3798 = vrot.lane.b32.xlu0 %v3765, 126
    %v3799 = vpop.permute.xlu0 %3798
    %3800 = vrot.lane.b32.xlu0 %v3766, 126
    %v3801 = vpop.permute.xlu0 %3800
    %3802 = vrot.lane.b32.xlu0 %v3767, 126
    %v3803 = vpop.permute.xlu0 %3802
    %3804 = vrot.lane.b32.xlu0 %v3768, 126
    %v3805 = vpop.permute.xlu0 %3804
    %3806 = vrot.lane.b32.xlu0 %v3769, 126
    %v3807 = vpop.permute.xlu0 %3806
    %3808 = vrot.lane.b32.xlu0 %v3770, 126
    %v3809 = vpop.permute.xlu0 %3808
    %3810 = vrot.lane.b32.xlu0 %v3771, 126
    %v3811 = vpop.permute.xlu0 %3810
    %3812 = vrot.lane.b32.xlu0 %v3772, 126
    %v3813 = vpop.permute.xlu0 %3812
    %3814 = vrot.lane.b32.xlu0 %v3773, 126
    %v3815 = vpop.permute.xlu0 %3814
    %3816 = vrot.lane.b32.xlu0 %v3774, 126
    %v3817 = vpop.permute.xlu0 %3816
    %3818 = vrot.lane.b32.xlu0 %v3775, 126
    %v3819 = vpop.permute.xlu0 %3818
    %3820 = vrot.lane.b32.xlu0 %v3776, 126
    %v3821 = vpop.permute.xlu0 %3820
    %3822 = vrot.lane.b32.xlu0 %v3777, 126
    %v3823 = vpop.permute.xlu0 %3822
    %3824 = vrot.lane.b32.xlu0 %v3778, 126
    %v3825 = vpop.permute.xlu0 %3824
    %3826 = vrot.lane.b32.xlu0 %v3779, 126
    %v3827 = vpop.permute.xlu0 %3826
    %v3844 = vadd.f32 %v3747, %v3797
    %v3845 = vadd.f32 %v3748, %v3799
    %v3846 = vadd.f32 %v3749, %v3801
    %v3847 = vadd.f32 %v3750, %v3803
    %v3848 = vadd.f32 %v3751, %v3805
    %v3849 = vadd.f32 %v3752, %v3807
    %v3850 = vadd.f32 %v3753, %v3809
    %v3851 = vadd.f32 %v3754, %v3811
    %v3852 = vadd.f32 %v3755, %v3813
    %v3853 = vadd.f32 %v3756, %v3815
    %v3854 = vadd.f32 %v3757, %v3817
    %v3855 = vadd.f32 %v3758, %v3819
    %v3856 = vadd.f32 %v3759, %v3821
    %v3857 = vadd.f32 %v3760, %v3823
    %v3858 = vadd.f32 %v3761, %v3825
    %v3859 = vadd.f32 %v3762, %v3827
    %v3860 = vstv %s728
    %v3861 = vmul.f32 %v3860, %v763
    %v3862 = vmul.f32 %v3860, %v764
    %v3863 = vmul.f32 %v3860, %v765
    %v3864 = vmul.f32 %v3860, %v766
    %v3865 = vmul.f32 %v3860, %v767
    %v3866 = vmul.f32 %v3860, %v768
    %v3867 = vmul.f32 %v3860, %v769
    %v3868 = vmul.f32 %v3860, %v770
    %v3869 = vmul.f32 %v3860, %v771
    %v3870 = vmul.f32 %v3860, %v772
    %v3871 = vmul.f32 %v3860, %v773
    %v3872 = vmul.f32 %v3860, %v774
    %v3873 = vmul.f32 %v3860, %v775
    %v3874 = vmul.f32 %v3860, %v776
    %v3875 = vmul.f32 %v3860, %v777
    %v3876 = vmul.f32 %v3860, %v778
    %3893 = vrot.lane.b32.xlu0 %v3861, 126
    %v3894 = vpop.permute.xlu0 %3893
    %3895 = vrot.lane.b32.xlu0 %v3862, 126
    %v3896 = vpop.permute.xlu0 %3895
    %3897 = vrot.lane.b32.xlu0 %v3863, 126
    %v3898 = vpop.permute.xlu0 %3897
    %3899 = vrot.lane.b32.xlu0 %v3864, 126
    %v3900 = vpop.permute.xlu0 %3899
    %3901 = vrot.lane.b32.xlu0 %v3865, 126
    %v3902 = vpop.permute.xlu0 %3901
    %3903 = vrot.lane.b32.xlu0 %v3866, 126
    %v3904 = vpop.permute.xlu0 %3903
    %3905 = vrot.lane.b32.xlu0 %v3867, 126
    %v3906 = vpop.permute.xlu0 %3905
    %3907 = vrot.lane.b32.xlu0 %v3868, 126
    %v3908 = vpop.permute.xlu0 %3907
    %3909 = vrot.lane.b32.xlu0 %v3869, 126
    %v3910 = vpop.permute.xlu0 %3909
    %3911 = vrot.lane.b32.xlu0 %v3870, 126
    %v3912 = vpop.permute.xlu0 %3911
    %3913 = vrot.lane.b32.xlu0 %v3871, 126
    %v3914 = vpop.permute.xlu0 %3913
    %3915 = vrot.lane.b32.xlu0 %v3872, 126
    %v3916 = vpop.permute.xlu0 %3915
    %3917 = vrot.lane.b32.xlu0 %v3873, 126
    %v3918 = vpop.permute.xlu0 %3917
    %3919 = vrot.lane.b32.xlu0 %v3874, 126
    %v3920 = vpop.permute.xlu0 %3919
    %3921 = vrot.lane.b32.xlu0 %v3875, 126
    %v3922 = vpop.permute.xlu0 %3921
    %3923 = vrot.lane.b32.xlu0 %v3876, 126
    %v3924 = vpop.permute.xlu0 %3923
    %v3941 = vadd.f32 %v3844, %v3894
    %v3942 = vadd.f32 %v3845, %v3896
    %v3943 = vadd.f32 %v3846, %v3898
    %v3944 = vadd.f32 %v3847, %v3900
    %v3945 = vadd.f32 %v3848, %v3902
    %v3946 = vadd.f32 %v3849, %v3904
    %v3947 = vadd.f32 %v3850, %v3906
    %v3948 = vadd.f32 %v3851, %v3908
    %v3949 = vadd.f32 %v3852, %v3910
    %v3950 = vadd.f32 %v3853, %v3912
    %v3951 = vadd.f32 %v3854, %v3914
    %v3952 = vadd.f32 %v3855, %v3916
    %v3953 = vadd.f32 %v3856, %v3918
    %v3954 = vadd.f32 %v3857, %v3920
    %v3955 = vadd.f32 %v3858, %v3922
    %v3956 = vadd.f32 %v3859, %v3924
    %v3957 = vstv %s638
    %v3958 = vmul.f32 %v3957, %v735
    %v3959 = vmul.f32 %v3957, %v736
    %v3960 = vmul.f32 %v3957, %v737
    %v3961 = vmul.f32 %v3957, %v738
    %v3962 = vmul.f32 %v3957, %v739
    %v3963 = vmul.f32 %v3957, %v740
    %v3964 = vmul.f32 %v3957, %v741
    %v3965 = vmul.f32 %v3957, %v742
    %v3966 = vmul.f32 %v3957, %v743
    %v3967 = vmul.f32 %v3957, %v744
    %v3968 = vmul.f32 %v3957, %v745
    %v3969 = vmul.f32 %v3957, %v746
    %v3970 = vmul.f32 %v3957, %v747
    %v3971 = vmul.f32 %v3957, %v748
    %v3972 = vmul.f32 %v3957, %v749
    %v3973 = vmul.f32 %v3957, %v750
    %3990 = vrot.lane.b32.xlu0 %v3958, 125
    %v3991 = vpop.permute.xlu0 %3990
    %3992 = vrot.lane.b32.xlu0 %v3959, 125
    %v3993 = vpop.permute.xlu0 %3992
    %3994 = vrot.lane.b32.xlu0 %v3960, 125
    %v3995 = vpop.permute.xlu0 %3994
    %3996 = vrot.lane.b32.xlu0 %v3961, 125
    %v3997 = vpop.permute.xlu0 %3996
    %3998 = vrot.lane.b32.xlu0 %v3962, 125
    %v3999 = vpop.permute.xlu0 %3998
    %4000 = vrot.lane.b32.xlu0 %v3963, 125
    %v4001 = vpop.permute.xlu0 %4000
    %4002 = vrot.lane.b32.xlu0 %v3964, 125
    %v4003 = vpop.permute.xlu0 %4002
    %4004 = vrot.lane.b32.xlu0 %v3965, 125
    %v4005 = vpop.permute.xlu0 %4004
    %4006 = vrot.lane.b32.xlu0 %v3966, 125
    %v4007 = vpop.permute.xlu0 %4006
    %4008 = vrot.lane.b32.xlu0 %v3967, 125
    %v4009 = vpop.permute.xlu0 %4008
    %4010 = vrot.lane.b32.xlu0 %v3968, 125
    %v4011 = vpop.permute.xlu0 %4010
    %4012 = vrot.lane.b32.xlu0 %v3969, 125
    %v4013 = vpop.permute.xlu0 %4012
    %4014 = vrot.lane.b32.xlu0 %v3970, 125
    %v4015 = vpop.permute.xlu0 %4014
    %4016 = vrot.lane.b32.xlu0 %v3971, 125
    %v4017 = vpop.permute.xlu0 %4016
    %4018 = vrot.lane.b32.xlu0 %v3972, 125
    %v4019 = vpop.permute.xlu0 %4018
    %4020 = vrot.lane.b32.xlu0 %v3973, 125
    %v4021 = vpop.permute.xlu0 %4020
    %v4038 = vadd.f32 %v3941, %v3991
    %v4039 = vadd.f32 %v3942, %v3993
    %v4040 = vadd.f32 %v3943, %v3995
    %v4041 = vadd.f32 %v3944, %v3997
    %v4042 = vadd.f32 %v3945, %v3999
    %v4043 = vadd.f32 %v3946, %v4001
    %v4044 = vadd.f32 %v3947, %v4003
    %v4045 = vadd.f32 %v3948, %v4005
    %v4046 = vadd.f32 %v3949, %v4007
    %v4047 = vadd.f32 %v3950, %v4009
    %v4048 = vadd.f32 %v3951, %v4011
    %v4049 = vadd.f32 %v3952, %v4013
    %v4050 = vadd.f32 %v3953, %v4015
    %v4051 = vadd.f32 %v3954, %v4017
    %v4052 = vadd.f32 %v3955, %v4019
    %v4053 = vadd.f32 %v3956, %v4021
    %v4054 = vstv %s687
    %v4055 = vmul.f32 %v4054, %v757
    %v4056 = vmul.f32 %v4054, %v758
    %v4057 = vmul.f32 %v4054, %v759
    %v4058 = vmul.f32 %v4054, %v760
    %v4059 = vmul.f32 %v4054, %v761
    %v4060 = vmul.f32 %v4054, %v762
    %v4061 = vmul.f32 %v4054, %v763
    %v4062 = vmul.f32 %v4054, %v764
    %v4063 = vmul.f32 %v4054, %v765
    %v4064 = vmul.f32 %v4054, %v766
    %v4065 = vmul.f32 %v4054, %v767
    %v4066 = vmul.f32 %v4054, %v768
    %v4067 = vmul.f32 %v4054, %v769
    %v4068 = vmul.f32 %v4054, %v770
    %v4069 = vmul.f32 %v4054, %v771
    %v4070 = vmul.f32 %v4054, %v772
    %4087 = vrot.lane.b32.xlu0 %v4055, 125
    %v4088 = vpop.permute.xlu0 %4087
    %4089 = vrot.lane.b32.xlu0 %v4056, 125
    %v4090 = vpop.permute.xlu0 %4089
    %4091 = vrot.lane.b32.xlu0 %v4057, 125
    %v4092 = vpop.permute.xlu0 %4091
    %4093 = vrot.lane.b32.xlu0 %v4058, 125
    %v4094 = vpop.permute.xlu0 %4093
    %4095 = vrot.lane.b32.xlu0 %v4059, 125
    %v4096 = vpop.permute.xlu0 %4095
    %4097 = vrot.lane.b32.xlu0 %v4060, 125
    %v4098 = vpop.permute.xlu0 %4097
    %4099 = vrot.lane.b32.xlu0 %v4061, 125
    %v4100 = vpop.permute.xlu0 %4099
    %4101 = vrot.lane.b32.xlu0 %v4062, 125
    %v4102 = vpop.permute.xlu0 %4101
    %4103 = vrot.lane.b32.xlu0 %v4063, 125
    %v4104 = vpop.permute.xlu0 %4103
    %4105 = vrot.lane.b32.xlu0 %v4064, 125
    %v4106 = vpop.permute.xlu0 %4105
    %4107 = vrot.lane.b32.xlu0 %v4065, 125
    %v4108 = vpop.permute.xlu0 %4107
    %4109 = vrot.lane.b32.xlu0 %v4066, 125
    %v4110 = vpop.permute.xlu0 %4109
    %4111 = vrot.lane.b32.xlu0 %v4067, 125
    %v4112 = vpop.permute.xlu0 %4111
    %4113 = vrot.lane.b32.xlu0 %v4068, 125
    %v4114 = vpop.permute.xlu0 %4113
    %4115 = vrot.lane.b32.xlu0 %v4069, 125
    %v4116 = vpop.permute.xlu0 %4115
    %4117 = vrot.lane.b32.xlu0 %v4070, 125
    %v4118 = vpop.permute.xlu0 %4117
    %v4135 = vadd.f32 %v4038, %v4088
    %v4136 = vadd.f32 %v4039, %v4090
    %v4137 = vadd.f32 %v4040, %v4092
    %v4138 = vadd.f32 %v4041, %v4094
    %v4139 = vadd.f32 %v4042, %v4096
    %v4140 = vadd.f32 %v4043, %v4098
    %v4141 = vadd.f32 %v4044, %v4100
    %v4142 = vadd.f32 %v4045, %v4102
    %v4143 = vadd.f32 %v4046, %v4104
    %v4144 = vadd.f32 %v4047, %v4106
    %v4145 = vadd.f32 %v4048, %v4108
    %v4146 = vadd.f32 %v4049, %v4110
    %v4147 = vadd.f32 %v4050, %v4112
    %v4148 = vadd.f32 %v4051, %v4114
    %v4149 = vadd.f32 %v4052, %v4116
    %v4150 = vadd.f32 %v4053, %v4118
    %v4151 = vstv %s645
    %v4152 = vmul.f32 %v4151, %v736
    %v4153 = vmul.f32 %v4151, %v737
    %v4154 = vmul.f32 %v4151, %v738
    %v4155 = vmul.f32 %v4151, %v739
    %v4156 = vmul.f32 %v4151, %v740
    %v4157 = vmul.f32 %v4151, %v741
    %v4158 = vmul.f32 %v4151, %v742
    %v4159 = vmul.f32 %v4151, %v743
    %v4160 = vmul.f32 %v4151, %v744
    %v4161 = vmul.f32 %v4151, %v745
    %v4162 = vmul.f32 %v4151, %v746
    %v4163 = vmul.f32 %v4151, %v747
    %v4164 = vmul.f32 %v4151, %v748
    %v4165 = vmul.f32 %v4151, %v749
    %v4166 = vmul.f32 %v4151, %v750
    %v4167 = vmul.f32 %v4151, %v751
    %4184 = vrot.lane.b32.xlu0 %v4152, 125
    %v4185 = vpop.permute.xlu0 %4184
    %4186 = vrot.lane.b32.xlu0 %v4153, 125
    %v4187 = vpop.permute.xlu0 %4186
    %4188 = vrot.lane.b32.xlu0 %v4154, 125
    %v4189 = vpop.permute.xlu0 %4188
    %4190 = vrot.lane.b32.xlu0 %v4155, 125
    %v4191 = vpop.permute.xlu0 %4190
    %4192 = vrot.lane.b32.xlu0 %v4156, 125
    %v4193 = vpop.permute.xlu0 %4192
    %4194 = vrot.lane.b32.xlu0 %v4157, 125
    %v4195 = vpop.permute.xlu0 %4194
    %4196 = vrot.lane.b32.xlu0 %v4158, 125
    %v4197 = vpop.permute.xlu0 %4196
    %4198 = vrot.lane.b32.xlu0 %v4159, 125
    %v4199 = vpop.permute.xlu0 %4198
    %4200 = vrot.lane.b32.xlu0 %v4160, 125
    %v4201 = vpop.permute.xlu0 %4200
    %4202 = vrot.lane.b32.xlu0 %v4161, 125
    %v4203 = vpop.permute.xlu0 %4202
    %4204 = vrot.lane.b32.xlu0 %v4162, 125
    %v4205 = vpop.permute.xlu0 %4204
    %4206 = vrot.lane.b32.xlu0 %v4163, 125
    %v4207 = vpop.permute.xlu0 %4206
    %4208 = vrot.lane.b32.xlu0 %v4164, 125
    %v4209 = vpop.permute.xlu0 %4208
    %4210 = vrot.lane.b32.xlu0 %v4165, 125
    %v4211 = vpop.permute.xlu0 %4210
    %4212 = vrot.lane.b32.xlu0 %v4166, 125
    %v4213 = vpop.permute.xlu0 %4212
    %4214 = vrot.lane.b32.xlu0 %v4167, 125
    %v4215 = vpop.permute.xlu0 %4214
    %v4232 = vadd.f32 %v4135, %v4185
    %v4233 = vadd.f32 %v4136, %v4187
    %v4234 = vadd.f32 %v4137, %v4189
    %v4235 = vadd.f32 %v4138, %v4191
    %v4236 = vadd.f32 %v4139, %v4193
    %v4237 = vadd.f32 %v4140, %v4195
    %v4238 = vadd.f32 %v4141, %v4197
    %v4239 = vadd.f32 %v4142, %v4199
    %v4240 = vadd.f32 %v4143, %v4201
    %v4241 = vadd.f32 %v4144, %v4203
    %v4242 = vadd.f32 %v4145, %v4205
    %v4243 = vadd.f32 %v4146, %v4207
    %v4244 = vadd.f32 %v4147, %v4209
    %v4245 = vadd.f32 %v4148, %v4211
    %v4246 = vadd.f32 %v4149, %v4213
    %v4247 = vadd.f32 %v4150, %v4215
    %v4248 = vstv %s694
    %v4249 = vmul.f32 %v4248, %v758
    %v4250 = vmul.f32 %v4248, %v759
    %v4251 = vmul.f32 %v4248, %v760
    %v4252 = vmul.f32 %v4248, %v761
    %v4253 = vmul.f32 %v4248, %v762
    %v4254 = vmul.f32 %v4248, %v763
    %v4255 = vmul.f32 %v4248, %v764
    %v4256 = vmul.f32 %v4248, %v765
    %v4257 = vmul.f32 %v4248, %v766
    %v4258 = vmul.f32 %v4248, %v767
    %v4259 = vmul.f32 %v4248, %v768
    %v4260 = vmul.f32 %v4248, %v769
    %v4261 = vmul.f32 %v4248, %v770
    %v4262 = vmul.f32 %v4248, %v771
    %v4263 = vmul.f32 %v4248, %v772
    %v4264 = vmul.f32 %v4248, %v773
    %4281 = vrot.lane.b32.xlu0 %v4249, 125
    %v4282 = vpop.permute.xlu0 %4281
    %4283 = vrot.lane.b32.xlu0 %v4250, 125
    %v4284 = vpop.permute.xlu0 %4283
    %4285 = vrot.lane.b32.xlu0 %v4251, 125
    %v4286 = vpop.permute.xlu0 %4285
    %4287 = vrot.lane.b32.xlu0 %v4252, 125
    %v4288 = vpop.permute.xlu0 %4287
    %4289 = vrot.lane.b32.xlu0 %v4253, 125
    %v4290 = vpop.permute.xlu0 %4289
    %4291 = vrot.lane.b32.xlu0 %v4254, 125
    %v4292 = vpop.permute.xlu0 %4291
    %4293 = vrot.lane.b32.xlu0 %v4255, 125
    %v4294 = vpop.permute.xlu0 %4293
    %4295 = vrot.lane.b32.xlu0 %v4256, 125
    %v4296 = vpop.permute.xlu0 %4295
    %4297 = vrot.lane.b32.xlu0 %v4257, 125
    %v4298 = vpop.permute.xlu0 %4297
    %4299 = vrot.lane.b32.xlu0 %v4258, 125
    %v4300 = vpop.permute.xlu0 %4299
    %4301 = vrot.lane.b32.xlu0 %v4259, 125
    %v4302 = vpop.permute.xlu0 %4301
    %4303 = vrot.lane.b32.xlu0 %v4260, 125
    %v4304 = vpop.permute.xlu0 %4303
    %4305 = vrot.lane.b32.xlu0 %v4261, 125
    %v4306 = vpop.permute.xlu0 %4305
    %4307 = vrot.lane.b32.xlu0 %v4262, 125
    %v4308 = vpop.permute.xlu0 %4307
    %4309 = vrot.lane.b32.xlu0 %v4263, 125
    %v4310 = vpop.permute.xlu0 %4309
    %4311 = vrot.lane.b32.xlu0 %v4264, 125
    %v4312 = vpop.permute.xlu0 %4311
    %v4329 = vadd.f32 %v4232, %v4282
    %v4330 = vadd.f32 %v4233, %v4284
    %v4331 = vadd.f32 %v4234, %v4286
    %v4332 = vadd.f32 %v4235, %v4288
    %v4333 = vadd.f32 %v4236, %v4290
    %v4334 = vadd.f32 %v4237, %v4292
    %v4335 = vadd.f32 %v4238, %v4294
    %v4336 = vadd.f32 %v4239, %v4296
    %v4337 = vadd.f32 %v4240, %v4298
    %v4338 = vadd.f32 %v4241, %v4300
    %v4339 = vadd.f32 %v4242, %v4302
    %v4340 = vadd.f32 %v4243, %v4304
    %v4341 = vadd.f32 %v4244, %v4306
    %v4342 = vadd.f32 %v4245, %v4308
    %v4343 = vadd.f32 %v4246, %v4310
    %v4344 = vadd.f32 %v4247, %v4312
    %v4345 = vstv %s652
    %v4346 = vmul.f32 %v4345, %v737
    %v4347 = vmul.f32 %v4345, %v738
    %v4348 = vmul.f32 %v4345, %v739
    %v4349 = vmul.f32 %v4345, %v740
    %v4350 = vmul.f32 %v4345, %v741
    %v4351 = vmul.f32 %v4345, %v742
    %v4352 = vmul.f32 %v4345, %v743
    %v4353 = vmul.f32 %v4345, %v744
    %v4354 = vmul.f32 %v4345, %v745
    %v4355 = vmul.f32 %v4345, %v746
    %v4356 = vmul.f32 %v4345, %v747
    %v4357 = vmul.f32 %v4345, %v748
    %v4358 = vmul.f32 %v4345, %v749
    %v4359 = vmul.f32 %v4345, %v750
    %v4360 = vmul.f32 %v4345, %v751
    %v4361 = vmul.f32 %v4345, %v752
    %4378 = vrot.lane.b32.xlu0 %v4346, 125
    %v4379 = vpop.permute.xlu0 %4378
    %4380 = vrot.lane.b32.xlu0 %v4347, 125
    %v4381 = vpop.permute.xlu0 %4380
    %4382 = vrot.lane.b32.xlu0 %v4348, 125
    %v4383 = vpop.permute.xlu0 %4382
    %4384 = vrot.lane.b32.xlu0 %v4349, 125
    %v4385 = vpop.permute.xlu0 %4384
    %4386 = vrot.lane.b32.xlu0 %v4350, 125
    %v4387 = vpop.permute.xlu0 %4386
    %4388 = vrot.lane.b32.xlu0 %v4351, 125
    %v4389 = vpop.permute.xlu0 %4388
    %4390 = vrot.lane.b32.xlu0 %v4352, 125
    %v4391 = vpop.permute.xlu0 %4390
    %4392 = vrot.lane.b32.xlu0 %v4353, 125
    %v4393 = vpop.permute.xlu0 %4392
    %4394 = vrot.lane.b32.xlu0 %v4354, 125
    %v4395 = vpop.permute.xlu0 %4394
    %4396 = vrot.lane.b32.xlu0 %v4355, 125
    %v4397 = vpop.permute.xlu0 %4396
    %4398 = vrot.lane.b32.xlu0 %v4356, 125
    %v4399 = vpop.permute.xlu0 %4398
    %4400 = vrot.lane.b32.xlu0 %v4357, 125
    %v4401 = vpop.permute.xlu0 %4400
    %4402 = vrot.lane.b32.xlu0 %v4358, 125
    %v4403 = vpop.permute.xlu0 %4402
    %4404 = vrot.lane.b32.xlu0 %v4359, 125
    %v4405 = vpop.permute.xlu0 %4404
    %4406 = vrot.lane.b32.xlu0 %v4360, 125
    %v4407 = vpop.permute.xlu0 %4406
    %4408 = vrot.lane.b32.xlu0 %v4361, 125
    %v4409 = vpop.permute.xlu0 %4408
    %v4426 = vadd.f32 %v4329, %v4379
    %v4427 = vadd.f32 %v4330, %v4381
    %v4428 = vadd.f32 %v4331, %v4383
    %v4429 = vadd.f32 %v4332, %v4385
    %v4430 = vadd.f32 %v4333, %v4387
    %v4431 = vadd.f32 %v4334, %v4389
    %v4432 = vadd.f32 %v4335, %v4391
    %v4433 = vadd.f32 %v4336, %v4393
    %v4434 = vadd.f32 %v4337, %v4395
    %v4435 = vadd.f32 %v4338, %v4397
    %v4436 = vadd.f32 %v4339, %v4399
    %v4437 = vadd.f32 %v4340, %v4401
    %v4438 = vadd.f32 %v4341, %v4403
    %v4439 = vadd.f32 %v4342, %v4405
    %v4440 = vadd.f32 %v4343, %v4407
    %v4441 = vadd.f32 %v4344, %v4409
    %v4442 = vstv %s701
    %v4443 = vmul.f32 %v4442, %v759
    %v4444 = vmul.f32 %v4442, %v760
    %v4445 = vmul.f32 %v4442, %v761
    %v4446 = vmul.f32 %v4442, %v762
    %v4447 = vmul.f32 %v4442, %v763
    %v4448 = vmul.f32 %v4442, %v764
    %v4449 = vmul.f32 %v4442, %v765
    %v4450 = vmul.f32 %v4442, %v766
    %v4451 = vmul.f32 %v4442, %v767
    %v4452 = vmul.f32 %v4442, %v768
    %v4453 = vmul.f32 %v4442, %v769
    %v4454 = vmul.f32 %v4442, %v770
    %v4455 = vmul.f32 %v4442, %v771
    %v4456 = vmul.f32 %v4442, %v772
    %v4457 = vmul.f32 %v4442, %v773
    %v4458 = vmul.f32 %v4442, %v774
    %4475 = vrot.lane.b32.xlu0 %v4443, 125
    %v4476 = vpop.permute.xlu0 %4475
    %4477 = vrot.lane.b32.xlu0 %v4444, 125
    %v4478 = vpop.permute.xlu0 %4477
    %4479 = vrot.lane.b32.xlu0 %v4445, 125
    %v4480 = vpop.permute.xlu0 %4479
    %4481 = vrot.lane.b32.xlu0 %v4446, 125
    %v4482 = vpop.permute.xlu0 %4481
    %4483 = vrot.lane.b32.xlu0 %v4447, 125
    %v4484 = vpop.permute.xlu0 %4483
    %4485 = vrot.lane.b32.xlu0 %v4448, 125
    %v4486 = vpop.permute.xlu0 %4485
    %4487 = vrot.lane.b32.xlu0 %v4449, 125
    %v4488 = vpop.permute.xlu0 %4487
    %4489 = vrot.lane.b32.xlu0 %v4450, 125
    %v4490 = vpop.permute.xlu0 %4489
    %4491 = vrot.lane.b32.xlu0 %v4451, 125
    %v4492 = vpop.permute.xlu0 %4491
    %4493 = vrot.lane.b32.xlu0 %v4452, 125
    %v4494 = vpop.permute.xlu0 %4493
    %4495 = vrot.lane.b32.xlu0 %v4453, 125
    %v4496 = vpop.permute.xlu0 %4495
    %4497 = vrot.lane.b32.xlu0 %v4454, 125
    %v4498 = vpop.permute.xlu0 %4497
    %4499 = vrot.lane.b32.xlu0 %v4455, 125
    %v4500 = vpop.permute.xlu0 %4499
    %4501 = vrot.lane.b32.xlu0 %v4456, 125
    %v4502 = vpop.permute.xlu0 %4501
    %4503 = vrot.lane.b32.xlu0 %v4457, 125
    %v4504 = vpop.permute.xlu0 %4503
    %4505 = vrot.lane.b32.xlu0 %v4458, 125
    %v4506 = vpop.permute.xlu0 %4505
    %v4523 = vadd.f32 %v4426, %v4476
    %v4524 = vadd.f32 %v4427, %v4478
    %v4525 = vadd.f32 %v4428, %v4480
    %v4526 = vadd.f32 %v4429, %v4482
    %v4527 = vadd.f32 %v4430, %v4484
    %v4528 = vadd.f32 %v4431, %v4486
    %v4529 = vadd.f32 %v4432, %v4488
    %v4530 = vadd.f32 %v4433, %v4490
    %v4531 = vadd.f32 %v4434, %v4492
    %v4532 = vadd.f32 %v4435, %v4494
    %v4533 = vadd.f32 %v4436, %v4496
    %v4534 = vadd.f32 %v4437, %v4498
    %v4535 = vadd.f32 %v4438, %v4500
    %v4536 = vadd.f32 %v4439, %v4502
    %v4537 = vadd.f32 %v4440, %v4504
    %v4538 = vadd.f32 %v4441, %v4506
    %v4539 = vstv %s659
    %v4540 = vmul.f32 %v4539, %v738
    %v4541 = vmul.f32 %v4539, %v739
    %v4542 = vmul.f32 %v4539, %v740
    %v4543 = vmul.f32 %v4539, %v741
    %v4544 = vmul.f32 %v4539, %v742
    %v4545 = vmul.f32 %v4539, %v743
    %v4546 = vmul.f32 %v4539, %v744
    %v4547 = vmul.f32 %v4539, %v745
    %v4548 = vmul.f32 %v4539, %v746
    %v4549 = vmul.f32 %v4539, %v747
    %v4550 = vmul.f32 %v4539, %v748
    %v4551 = vmul.f32 %v4539, %v749
    %v4552 = vmul.f32 %v4539, %v750
    %v4553 = vmul.f32 %v4539, %v751
    %v4554 = vmul.f32 %v4539, %v752
    %v4555 = vmul.f32 %v4539, %v753
    %4572 = vrot.lane.b32.xlu0 %v4540, 125
    %v4573 = vpop.permute.xlu0 %4572
    %4574 = vrot.lane.b32.xlu0 %v4541, 125
    %v4575 = vpop.permute.xlu0 %4574
    %4576 = vrot.lane.b32.xlu0 %v4542, 125
    %v4577 = vpop.permute.xlu0 %4576
    %4578 = vrot.lane.b32.xlu0 %v4543, 125
    %v4579 = vpop.permute.xlu0 %4578
    %4580 = vrot.lane.b32.xlu0 %v4544, 125
    %v4581 = vpop.permute.xlu0 %4580
    %4582 = vrot.lane.b32.xlu0 %v4545, 125
    %v4583 = vpop.permute.xlu0 %4582
    %4584 = vrot.lane.b32.xlu0 %v4546, 125
    %v4585 = vpop.permute.xlu0 %4584
    %4586 = vrot.lane.b32.xlu0 %v4547, 125
    %v4587 = vpop.permute.xlu0 %4586
    %4588 = vrot.lane.b32.xlu0 %v4548, 125
    %v4589 = vpop.permute.xlu0 %4588
    %4590 = vrot.lane.b32.xlu0 %v4549, 125
    %v4591 = vpop.permute.xlu0 %4590
    %4592 = vrot.lane.b32.xlu0 %v4550, 125
    %v4593 = vpop.permute.xlu0 %4592
    %4594 = vrot.lane.b32.xlu0 %v4551, 125
    %v4595 = vpop.permute.xlu0 %4594
    %4596 = vrot.lane.b32.xlu0 %v4552, 125
    %v4597 = vpop.permute.xlu0 %4596
    %4598 = vrot.lane.b32.xlu0 %v4553, 125
    %v4599 = vpop.permute.xlu0 %4598
    %4600 = vrot.lane.b32.xlu0 %v4554, 125
    %v4601 = vpop.permute.xlu0 %4600
    %4602 = vrot.lane.b32.xlu0 %v4555, 125
    %v4603 = vpop.permute.xlu0 %4602
    %v4620 = vadd.f32 %v4523, %v4573
    %v4621 = vadd.f32 %v4524, %v4575
    %v4622 = vadd.f32 %v4525, %v4577
    %v4623 = vadd.f32 %v4526, %v4579
    %v4624 = vadd.f32 %v4527, %v4581
    %v4625 = vadd.f32 %v4528, %v4583
    %v4626 = vadd.f32 %v4529, %v4585
    %v4627 = vadd.f32 %v4530, %v4587
    %v4628 = vadd.f32 %v4531, %v4589
    %v4629 = vadd.f32 %v4532, %v4591
    %v4630 = vadd.f32 %v4533, %v4593
    %v4631 = vadd.f32 %v4534, %v4595
    %v4632 = vadd.f32 %v4535, %v4597
    %v4633 = vadd.f32 %v4536, %v4599
    %v4634 = vadd.f32 %v4537, %v4601
    %v4635 = vadd.f32 %v4538, %v4603
    %v4636 = vstv %s708
    %v4637 = vmul.f32 %v4636, %v760
    %v4638 = vmul.f32 %v4636, %v761
    %v4639 = vmul.f32 %v4636, %v762
    %v4640 = vmul.f32 %v4636, %v763
    %v4641 = vmul.f32 %v4636, %v764
    %v4642 = vmul.f32 %v4636, %v765
    %v4643 = vmul.f32 %v4636, %v766
    %v4644 = vmul.f32 %v4636, %v767
    %v4645 = vmul.f32 %v4636, %v768
    %v4646 = vmul.f32 %v4636, %v769
    %v4647 = vmul.f32 %v4636, %v770
    %v4648 = vmul.f32 %v4636, %v771
    %v4649 = vmul.f32 %v4636, %v772
    %v4650 = vmul.f32 %v4636, %v773
    %v4651 = vmul.f32 %v4636, %v774
    %v4652 = vmul.f32 %v4636, %v775
    %4669 = vrot.lane.b32.xlu0 %v4637, 125
    %v4670 = vpop.permute.xlu0 %4669
    %4671 = vrot.lane.b32.xlu0 %v4638, 125
    %v4672 = vpop.permute.xlu0 %4671
    %4673 = vrot.lane.b32.xlu0 %v4639, 125
    %v4674 = vpop.permute.xlu0 %4673
    %4675 = vrot.lane.b32.xlu0 %v4640, 125
    %v4676 = vpop.permute.xlu0 %4675
    %4677 = vrot.lane.b32.xlu0 %v4641, 125
    %v4678 = vpop.permute.xlu0 %4677
    %4679 = vrot.lane.b32.xlu0 %v4642, 125
    %v4680 = vpop.permute.xlu0 %4679
    %4681 = vrot.lane.b32.xlu0 %v4643, 125
    %v4682 = vpop.permute.xlu0 %4681
    %4683 = vrot.lane.b32.xlu0 %v4644, 125
    %v4684 = vpop.permute.xlu0 %4683
    %4685 = vrot.lane.b32.xlu0 %v4645, 125
    %v4686 = vpop.permute.xlu0 %4685
    %4687 = vrot.lane.b32.xlu0 %v4646, 125
    %v4688 = vpop.permute.xlu0 %4687
    %4689 = vrot.lane.b32.xlu0 %v4647, 125
    %v4690 = vpop.permute.xlu0 %4689
    %4691 = vrot.lane.b32.xlu0 %v4648, 125
    %v4692 = vpop.permute.xlu0 %4691
    %4693 = vrot.lane.b32.xlu0 %v4649, 125
    %v4694 = vpop.permute.xlu0 %4693
    %4695 = vrot.lane.b32.xlu0 %v4650, 125
    %v4696 = vpop.permute.xlu0 %4695
    %4697 = vrot.lane.b32.xlu0 %v4651, 125
    %v4698 = vpop.permute.xlu0 %4697
    %4699 = vrot.lane.b32.xlu0 %v4652, 125
    %v4700 = vpop.permute.xlu0 %4699
    %v4717 = vadd.f32 %v4620, %v4670
    %v4718 = vadd.f32 %v4621, %v4672
    %v4719 = vadd.f32 %v4622, %v4674
    %v4720 = vadd.f32 %v4623, %v4676
    %v4721 = vadd.f32 %v4624, %v4678
    %v4722 = vadd.f32 %v4625, %v4680
    %v4723 = vadd.f32 %v4626, %v4682
    %v4724 = vadd.f32 %v4627, %v4684
    %v4725 = vadd.f32 %v4628, %v4686
    %v4726 = vadd.f32 %v4629, %v4688
    %v4727 = vadd.f32 %v4630, %v4690
    %v4728 = vadd.f32 %v4631, %v4692
    %v4729 = vadd.f32 %v4632, %v4694
    %v4730 = vadd.f32 %v4633, %v4696
    %v4731 = vadd.f32 %v4634, %v4698
    %v4732 = vadd.f32 %v4635, %v4700
    %v4733 = vstv %s666
    %v4734 = vmul.f32 %v4733, %v739
    %v4735 = vmul.f32 %v4733, %v740
    %v4736 = vmul.f32 %v4733, %v741
    %v4737 = vmul.f32 %v4733, %v742
    %v4738 = vmul.f32 %v4733, %v743
    %v4739 = vmul.f32 %v4733, %v744
    %v4740 = vmul.f32 %v4733, %v745
    %v4741 = vmul.f32 %v4733, %v746
    %v4742 = vmul.f32 %v4733, %v747
    %v4743 = vmul.f32 %v4733, %v748
    %v4744 = vmul.f32 %v4733, %v749
    %v4745 = vmul.f32 %v4733, %v750
    %v4746 = vmul.f32 %v4733, %v751
    %v4747 = vmul.f32 %v4733, %v752
    %v4748 = vmul.f32 %v4733, %v753
    %v4749 = vmul.f32 %v4733, %v754
    %4766 = vrot.lane.b32.xlu0 %v4734, 125
    %v4767 = vpop.permute.xlu0 %4766
    %4768 = vrot.lane.b32.xlu0 %v4735, 125
    %v4769 = vpop.permute.xlu0 %4768
    %4770 = vrot.lane.b32.xlu0 %v4736, 125
    %v4771 = vpop.permute.xlu0 %4770
    %4772 = vrot.lane.b32.xlu0 %v4737, 125
    %v4773 = vpop.permute.xlu0 %4772
    %4774 = vrot.lane.b32.xlu0 %v4738, 125
    %v4775 = vpop.permute.xlu0 %4774
    %4776 = vrot.lane.b32.xlu0 %v4739, 125
    %v4777 = vpop.permute.xlu0 %4776
    %4778 = vrot.lane.b32.xlu0 %v4740, 125
    %v4779 = vpop.permute.xlu0 %4778
    %4780 = vrot.lane.b32.xlu0 %v4741, 125
    %v4781 = vpop.permute.xlu0 %4780
    %4782 = vrot.lane.b32.xlu0 %v4742, 125
    %v4783 = vpop.permute.xlu0 %4782
    %4784 = vrot.lane.b32.xlu0 %v4743, 125
    %v4785 = vpop.permute.xlu0 %4784
    %4786 = vrot.lane.b32.xlu0 %v4744, 125
    %v4787 = vpop.permute.xlu0 %4786
    %4788 = vrot.lane.b32.xlu0 %v4745, 125
    %v4789 = vpop.permute.xlu0 %4788
    %4790 = vrot.lane.b32.xlu0 %v4746, 125
    %v4791 = vpop.permute.xlu0 %4790
    %4792 = vrot.lane.b32.xlu0 %v4747, 125
    %v4793 = vpop.permute.xlu0 %4792
    %4794 = vrot.lane.b32.xlu0 %v4748, 125
    %v4795 = vpop.permute.xlu0 %4794
    %4796 = vrot.lane.b32.xlu0 %v4749, 125
    %v4797 = vpop.permute.xlu0 %4796
    %v4814 = vadd.f32 %v4717, %v4767
    %v4815 = vadd.f32 %v4718, %v4769
    %v4816 = vadd.f32 %v4719, %v4771
    %v4817 = vadd.f32 %v4720, %v4773
    %v4818 = vadd.f32 %v4721, %v4775
    %v4819 = vadd.f32 %v4722, %v4777
    %v4820 = vadd.f32 %v4723, %v4779
    %v4821 = vadd.f32 %v4724, %v4781
    %v4822 = vadd.f32 %v4725, %v4783
    %v4823 = vadd.f32 %v4726, %v4785
    %v4824 = vadd.f32 %v4727, %v4787
    %v4825 = vadd.f32 %v4728, %v4789
    %v4826 = vadd.f32 %v4729, %v4791
    %v4827 = vadd.f32 %v4730, %v4793
    %v4828 = vadd.f32 %v4731, %v4795
    %v4829 = vadd.f32 %v4732, %v4797
    %v4830 = vstv %s715
    %v4831 = vmul.f32 %v4830, %v761
    %v4832 = vmul.f32 %v4830, %v762
    %v4833 = vmul.f32 %v4830, %v763
    %v4834 = vmul.f32 %v4830, %v764
    %v4835 = vmul.f32 %v4830, %v765
    %v4836 = vmul.f32 %v4830, %v766
    %v4837 = vmul.f32 %v4830, %v767
    %v4838 = vmul.f32 %v4830, %v768
    %v4839 = vmul.f32 %v4830, %v769
    %v4840 = vmul.f32 %v4830, %v770
    %v4841 = vmul.f32 %v4830, %v771
    %v4842 = vmul.f32 %v4830, %v772
    %v4843 = vmul.f32 %v4830, %v773
    %v4844 = vmul.f32 %v4830, %v774
    %v4845 = vmul.f32 %v4830, %v775
    %v4846 = vmul.f32 %v4830, %v776
    %4863 = vrot.lane.b32.xlu0 %v4831, 125
    %v4864 = vpop.permute.xlu0 %4863
    %4865 = vrot.lane.b32.xlu0 %v4832, 125
    %v4866 = vpop.permute.xlu0 %4865
    %4867 = vrot.lane.b32.xlu0 %v4833, 125
    %v4868 = vpop.permute.xlu0 %4867
    %4869 = vrot.lane.b32.xlu0 %v4834, 125
    %v4870 = vpop.permute.xlu0 %4869
    %4871 = vrot.lane.b32.xlu0 %v4835, 125
    %v4872 = vpop.permute.xlu0 %4871
    %4873 = vrot.lane.b32.xlu0 %v4836, 125
    %v4874 = vpop.permute.xlu0 %4873
    %4875 = vrot.lane.b32.xlu0 %v4837, 125
    %v4876 = vpop.permute.xlu0 %4875
    %4877 = vrot.lane.b32.xlu0 %v4838, 125
    %v4878 = vpop.permute.xlu0 %4877
    %4879 = vrot.lane.b32.xlu0 %v4839, 125
    %v4880 = vpop.permute.xlu0 %4879
    %4881 = vrot.lane.b32.xlu0 %v4840, 125
    %v4882 = vpop.permute.xlu0 %4881
    %4883 = vrot.lane.b32.xlu0 %v4841, 125
    %v4884 = vpop.permute.xlu0 %4883
    %4885 = vrot.lane.b32.xlu0 %v4842, 125
    %v4886 = vpop.permute.xlu0 %4885
    %4887 = vrot.lane.b32.xlu0 %v4843, 125
    %v4888 = vpop.permute.xlu0 %4887
    %4889 = vrot.lane.b32.xlu0 %v4844, 125
    %v4890 = vpop.permute.xlu0 %4889
    %4891 = vrot.lane.b32.xlu0 %v4845, 125
    %v4892 = vpop.permute.xlu0 %4891
    %4893 = vrot.lane.b32.xlu0 %v4846, 125
    %v4894 = vpop.permute.xlu0 %4893
    %v4911 = vadd.f32 %v4814, %v4864
    %v4912 = vadd.f32 %v4815, %v4866
    %v4913 = vadd.f32 %v4816, %v4868
    %v4914 = vadd.f32 %v4817, %v4870
    %v4915 = vadd.f32 %v4818, %v4872
    %v4916 = vadd.f32 %v4819, %v4874
    %v4917 = vadd.f32 %v4820, %v4876
    %v4918 = vadd.f32 %v4821, %v4878
    %v4919 = vadd.f32 %v4822, %v4880
    %v4920 = vadd.f32 %v4823, %v4882
    %v4921 = vadd.f32 %v4824, %v4884
    %v4922 = vadd.f32 %v4825, %v4886
    %v4923 = vadd.f32 %v4826, %v4888
    %v4924 = vadd.f32 %v4827, %v4890
    %v4925 = vadd.f32 %v4828, %v4892
    %v4926 = vadd.f32 %v4829, %v4894
    %v4927 = vstv %s673
    %v4928 = vmul.f32 %v4927, %v740
    %v4929 = vmul.f32 %v4927, %v741
    %v4930 = vmul.f32 %v4927, %v742
    %v4931 = vmul.f32 %v4927, %v743
    %v4932 = vmul.f32 %v4927, %v744
    %v4933 = vmul.f32 %v4927, %v745
    %v4934 = vmul.f32 %v4927, %v746
    %v4935 = vmul.f32 %v4927, %v747
    %v4936 = vmul.f32 %v4927, %v748
    %v4937 = vmul.f32 %v4927, %v749
    %v4938 = vmul.f32 %v4927, %v750
    %v4939 = vmul.f32 %v4927, %v751
    %v4940 = vmul.f32 %v4927, %v752
    %v4941 = vmul.f32 %v4927, %v753
    %v4942 = vmul.f32 %v4927, %v754
    %v4943 = vmul.f32 %v4927, %v755
    %4960 = vrot.lane.b32.xlu0 %v4928, 125
    %v4961 = vpop.permute.xlu0 %4960
    %4962 = vrot.lane.b32.xlu0 %v4929, 125
    %v4963 = vpop.permute.xlu0 %4962
    %4964 = vrot.lane.b32.xlu0 %v4930, 125
    %v4965 = vpop.permute.xlu0 %4964
    %4966 = vrot.lane.b32.xlu0 %v4931, 125
    %v4967 = vpop.permute.xlu0 %4966
    %4968 = vrot.lane.b32.xlu0 %v4932, 125
    %v4969 = vpop.permute.xlu0 %4968
    %4970 = vrot.lane.b32.xlu0 %v4933, 125
    %v4971 = vpop.permute.xlu0 %4970
    %4972 = vrot.lane.b32.xlu0 %v4934, 125
    %v4973 = vpop.permute.xlu0 %4972
    %4974 = vrot.lane.b32.xlu0 %v4935, 125
    %v4975 = vpop.permute.xlu0 %4974
    %4976 = vrot.lane.b32.xlu0 %v4936, 125
    %v4977 = vpop.permute.xlu0 %4976
    %4978 = vrot.lane.b32.xlu0 %v4937, 125
    %v4979 = vpop.permute.xlu0 %4978
    %4980 = vrot.lane.b32.xlu0 %v4938, 125
    %v4981 = vpop.permute.xlu0 %4980
    %4982 = vrot.lane.b32.xlu0 %v4939, 125
    %v4983 = vpop.permute.xlu0 %4982
    %4984 = vrot.lane.b32.xlu0 %v4940, 125
    %v4985 = vpop.permute.xlu0 %4984
    %4986 = vrot.lane.b32.xlu0 %v4941, 125
    %v4987 = vpop.permute.xlu0 %4986
    %4988 = vrot.lane.b32.xlu0 %v4942, 125
    %v4989 = vpop.permute.xlu0 %4988
    %4990 = vrot.lane.b32.xlu0 %v4943, 125
    %v4991 = vpop.permute.xlu0 %4990
    %v5008 = vadd.f32 %v4911, %v4961
    %v5009 = vadd.f32 %v4912, %v4963
    %v5010 = vadd.f32 %v4913, %v4965
    %v5011 = vadd.f32 %v4914, %v4967
    %v5012 = vadd.f32 %v4915, %v4969
    %v5013 = vadd.f32 %v4916, %v4971
    %v5014 = vadd.f32 %v4917, %v4973
    %v5015 = vadd.f32 %v4918, %v4975
    %v5016 = vadd.f32 %v4919, %v4977
    %v5017 = vadd.f32 %v4920, %v4979
    %v5018 = vadd.f32 %v4921, %v4981
    %v5019 = vadd.f32 %v4922, %v4983
    %v5020 = vadd.f32 %v4923, %v4985
    %v5021 = vadd.f32 %v4924, %v4987
    %v5022 = vadd.f32 %v4925, %v4989
    %v5023 = vadd.f32 %v4926, %v4991
    %v5024 = vstv %s722
    %v5025 = vmul.f32 %v5024, %v762
    %v5026 = vmul.f32 %v5024, %v763
    %v5027 = vmul.f32 %v5024, %v764
    %v5028 = vmul.f32 %v5024, %v765
    %v5029 = vmul.f32 %v5024, %v766
    %v5030 = vmul.f32 %v5024, %v767
    %v5031 = vmul.f32 %v5024, %v768
    %v5032 = vmul.f32 %v5024, %v769
    %v5033 = vmul.f32 %v5024, %v770
    %v5034 = vmul.f32 %v5024, %v771
    %v5035 = vmul.f32 %v5024, %v772
    %v5036 = vmul.f32 %v5024, %v773
    %v5037 = vmul.f32 %v5024, %v774
    %v5038 = vmul.f32 %v5024, %v775
    %v5039 = vmul.f32 %v5024, %v776
    %v5040 = vmul.f32 %v5024, %v777
    %5057 = vrot.lane.b32.xlu0 %v5025, 125
    %v5058 = vpop.permute.xlu0 %5057
    %5059 = vrot.lane.b32.xlu0 %v5026, 125
    %v5060 = vpop.permute.xlu0 %5059
    %5061 = vrot.lane.b32.xlu0 %v5027, 125
    %v5062 = vpop.permute.xlu0 %5061
    %5063 = vrot.lane.b32.xlu0 %v5028, 125
    %v5064 = vpop.permute.xlu0 %5063
    %5065 = vrot.lane.b32.xlu0 %v5029, 125
    %v5066 = vpop.permute.xlu0 %5065
    %5067 = vrot.lane.b32.xlu0 %v5030, 125
    %v5068 = vpop.permute.xlu0 %5067
    %5069 = vrot.lane.b32.xlu0 %v5031, 125
    %v5070 = vpop.permute.xlu0 %5069
    %5071 = vrot.lane.b32.xlu0 %v5032, 125
    %v5072 = vpop.permute.xlu0 %5071
    %5073 = vrot.lane.b32.xlu0 %v5033, 125
    %v5074 = vpop.permute.xlu0 %5073
    %5075 = vrot.lane.b32.xlu0 %v5034, 125
    %v5076 = vpop.permute.xlu0 %5075
    %5077 = vrot.lane.b32.xlu0 %v5035, 125
    %v5078 = vpop.permute.xlu0 %5077
    %5079 = vrot.lane.b32.xlu0 %v5036, 125
    %v5080 = vpop.permute.xlu0 %5079
    %5081 = vrot.lane.b32.xlu0 %v5037, 125
    %v5082 = vpop.permute.xlu0 %5081
    %5083 = vrot.lane.b32.xlu0 %v5038, 125
    %v5084 = vpop.permute.xlu0 %5083
    %5085 = vrot.lane.b32.xlu0 %v5039, 125
    %v5086 = vpop.permute.xlu0 %5085
    %5087 = vrot.lane.b32.xlu0 %v5040, 125
    %v5088 = vpop.permute.xlu0 %5087
    %v5105 = vadd.f32 %v5008, %v5058
    %v5106 = vadd.f32 %v5009, %v5060
    %v5107 = vadd.f32 %v5010, %v5062
    %v5108 = vadd.f32 %v5011, %v5064
    %v5109 = vadd.f32 %v5012, %v5066
    %v5110 = vadd.f32 %v5013, %v5068
    %v5111 = vadd.f32 %v5014, %v5070
    %v5112 = vadd.f32 %v5015, %v5072
    %v5113 = vadd.f32 %v5016, %v5074
    %v5114 = vadd.f32 %v5017, %v5076
    %v5115 = vadd.f32 %v5018, %v5078
    %v5116 = vadd.f32 %v5019, %v5080
    %v5117 = vadd.f32 %v5020, %v5082
    %v5118 = vadd.f32 %v5021, %v5084
    %v5119 = vadd.f32 %v5022, %v5086
    %v5120 = vadd.f32 %v5023, %v5088
    %v5121 = vstv %s680
    %v5122 = vmul.f32 %v5121, %v741
    %v5123 = vmul.f32 %v5121, %v742
    %v5124 = vmul.f32 %v5121, %v743
    %v5125 = vmul.f32 %v5121, %v744
    %v5126 = vmul.f32 %v5121, %v745
    %v5127 = vmul.f32 %v5121, %v746
    %v5128 = vmul.f32 %v5121, %v747
    %v5129 = vmul.f32 %v5121, %v748
    %v5130 = vmul.f32 %v5121, %v749
    %v5131 = vmul.f32 %v5121, %v750
    %v5132 = vmul.f32 %v5121, %v751
    %v5133 = vmul.f32 %v5121, %v752
    %v5134 = vmul.f32 %v5121, %v753
    %v5135 = vmul.f32 %v5121, %v754
    %v5136 = vmul.f32 %v5121, %v755
    %v5137 = vmul.f32 %v5121, %v756
    %5154 = vrot.lane.b32.xlu0 %v5122, 125
    %v5155 = vpop.permute.xlu0 %5154
    %5156 = vrot.lane.b32.xlu0 %v5123, 125
    %v5157 = vpop.permute.xlu0 %5156
    %5158 = vrot.lane.b32.xlu0 %v5124, 125
    %v5159 = vpop.permute.xlu0 %5158
    %5160 = vrot.lane.b32.xlu0 %v5125, 125
    %v5161 = vpop.permute.xlu0 %5160
    %5162 = vrot.lane.b32.xlu0 %v5126, 125
    %v5163 = vpop.permute.xlu0 %5162
    %5164 = vrot.lane.b32.xlu0 %v5127, 125
    %v5165 = vpop.permute.xlu0 %5164
    %5166 = vrot.lane.b32.xlu0 %v5128, 125
    %v5167 = vpop.permute.xlu0 %5166
    %5168 = vrot.lane.b32.xlu0 %v5129, 125
    %v5169 = vpop.permute.xlu0 %5168
    %5170 = vrot.lane.b32.xlu0 %v5130, 125
    %v5171 = vpop.permute.xlu0 %5170
    %5172 = vrot.lane.b32.xlu0 %v5131, 125
    %v5173 = vpop.permute.xlu0 %5172
    %5174 = vrot.lane.b32.xlu0 %v5132, 125
    %v5175 = vpop.permute.xlu0 %5174
    %5176 = vrot.lane.b32.xlu0 %v5133, 125
    %v5177 = vpop.permute.xlu0 %5176
    %5178 = vrot.lane.b32.xlu0 %v5134, 125
    %v5179 = vpop.permute.xlu0 %5178
    %5180 = vrot.lane.b32.xlu0 %v5135, 125
    %v5181 = vpop.permute.xlu0 %5180
    %5182 = vrot.lane.b32.xlu0 %v5136, 125
    %v5183 = vpop.permute.xlu0 %5182
    %5184 = vrot.lane.b32.xlu0 %v5137, 125
    %v5185 = vpop.permute.xlu0 %5184
    %v5202 = vadd.f32 %v5105, %v5155
    %v5203 = vadd.f32 %v5106, %v5157
    %v5204 = vadd.f32 %v5107, %v5159
    %v5205 = vadd.f32 %v5108, %v5161
    %v5206 = vadd.f32 %v5109, %v5163
    %v5207 = vadd.f32 %v5110, %v5165
    %v5208 = vadd.f32 %v5111, %v5167
    %v5209 = vadd.f32 %v5112, %v5169
    %v5210 = vadd.f32 %v5113, %v5171
    %v5211 = vadd.f32 %v5114, %v5173
    %v5212 = vadd.f32 %v5115, %v5175
    %v5213 = vadd.f32 %v5116, %v5177
    %v5214 = vadd.f32 %v5117, %v5179
    %v5215 = vadd.f32 %v5118, %v5181
    %v5216 = vadd.f32 %v5119, %v5183
    %v5217 = vadd.f32 %v5120, %v5185
    %v5218 = vstv %s729
    %v5219 = vmul.f32 %v5218, %v763
    %v5220 = vmul.f32 %v5218, %v764
    %v5221 = vmul.f32 %v5218, %v765
    %v5222 = vmul.f32 %v5218, %v766
    %v5223 = vmul.f32 %v5218, %v767
    %v5224 = vmul.f32 %v5218, %v768
    %v5225 = vmul.f32 %v5218, %v769
    %v5226 = vmul.f32 %v5218, %v770
    %v5227 = vmul.f32 %v5218, %v771
    %v5228 = vmul.f32 %v5218, %v772
    %v5229 = vmul.f32 %v5218, %v773
    %v5230 = vmul.f32 %v5218, %v774
    %v5231 = vmul.f32 %v5218, %v775
    %v5232 = vmul.f32 %v5218, %v776
    %v5233 = vmul.f32 %v5218, %v777
    %v5234 = vmul.f32 %v5218, %v778
    %5251 = vrot.lane.b32.xlu0 %v5219, 125
    %v5252 = vpop.permute.xlu0 %5251
    %5253 = vrot.lane.b32.xlu0 %v5220, 125
    %v5254 = vpop.permute.xlu0 %5253
    %5255 = vrot.lane.b32.xlu0 %v5221, 125
    %v5256 = vpop.permute.xlu0 %5255
    %5257 = vrot.lane.b32.xlu0 %v5222, 125
    %v5258 = vpop.permute.xlu0 %5257
    %5259 = vrot.lane.b32.xlu0 %v5223, 125
    %v5260 = vpop.permute.xlu0 %5259
    %5261 = vrot.lane.b32.xlu0 %v5224, 125
    %v5262 = vpop.permute.xlu0 %5261
    %5263 = vrot.lane.b32.xlu0 %v5225, 125
    %v5264 = vpop.permute.xlu0 %5263
    %5265 = vrot.lane.b32.xlu0 %v5226, 125
    %v5266 = vpop.permute.xlu0 %5265
    %5267 = vrot.lane.b32.xlu0 %v5227, 125
    %v5268 = vpop.permute.xlu0 %5267
    %5269 = vrot.lane.b32.xlu0 %v5228, 125
    %v5270 = vpop.permute.xlu0 %5269
    %5271 = vrot.lane.b32.xlu0 %v5229, 125
    %v5272 = vpop.permute.xlu0 %5271
    %5273 = vrot.lane.b32.xlu0 %v5230, 125
    %v5274 = vpop.permute.xlu0 %5273
    %5275 = vrot.lane.b32.xlu0 %v5231, 125
    %v5276 = vpop.permute.xlu0 %5275
    %5277 = vrot.lane.b32.xlu0 %v5232, 125
    %v5278 = vpop.permute.xlu0 %5277
    %5279 = vrot.lane.b32.xlu0 %v5233, 125
    %v5280 = vpop.permute.xlu0 %5279
    %5281 = vrot.lane.b32.xlu0 %v5234, 125
    %v5282 = vpop.permute.xlu0 %5281
    %v5299 = vadd.f32 %v5202, %v5252
    %v5300 = vadd.f32 %v5203, %v5254
    %v5301 = vadd.f32 %v5204, %v5256
    %v5302 = vadd.f32 %v5205, %v5258
    %v5303 = vadd.f32 %v5206, %v5260
    %v5304 = vadd.f32 %v5207, %v5262
    %v5305 = vadd.f32 %v5208, %v5264
    %v5306 = vadd.f32 %v5209, %v5266
    %v5307 = vadd.f32 %v5210, %v5268
    %v5308 = vadd.f32 %v5211, %v5270
    %v5309 = vadd.f32 %v5212, %v5272
    %v5310 = vadd.f32 %v5213, %v5274
    %v5311 = vadd.f32 %v5214, %v5276
    %v5312 = vadd.f32 %v5215, %v5278
    %v5313 = vadd.f32 %v5216, %v5280
    %v5314 = vadd.f32 %v5217, %v5282
    %v5315 = vstv %s639
    %v5316 = vmul.f32 %v5315, %v735
    %v5317 = vmul.f32 %v5315, %v736
    %v5318 = vmul.f32 %v5315, %v737
    %v5319 = vmul.f32 %v5315, %v738
    %v5320 = vmul.f32 %v5315, %v739
    %v5321 = vmul.f32 %v5315, %v740
    %v5322 = vmul.f32 %v5315, %v741
    %v5323 = vmul.f32 %v5315, %v742
    %v5324 = vmul.f32 %v5315, %v743
    %v5325 = vmul.f32 %v5315, %v744
    %v5326 = vmul.f32 %v5315, %v745
    %v5327 = vmul.f32 %v5315, %v746
    %v5328 = vmul.f32 %v5315, %v747
    %v5329 = vmul.f32 %v5315, %v748
    %v5330 = vmul.f32 %v5315, %v749
    %v5331 = vmul.f32 %v5315, %v750
    %5348 = vrot.lane.b32.xlu0 %v5316, 124
    %v5349 = vpop.permute.xlu0 %5348
    %5350 = vrot.lane.b32.xlu0 %v5317, 124
    %v5351 = vpop.permute.xlu0 %5350
    %5352 = vrot.lane.b32.xlu0 %v5318, 124
    %v5353 = vpop.permute.xlu0 %5352
    %5354 = vrot.lane.b32.xlu0 %v5319, 124
    %v5355 = vpop.permute.xlu0 %5354
    %5356 = vrot.lane.b32.xlu0 %v5320, 124
    %v5357 = vpop.permute.xlu0 %5356
    %5358 = vrot.lane.b32.xlu0 %v5321, 124
    %v5359 = vpop.permute.xlu0 %5358
    %5360 = vrot.lane.b32.xlu0 %v5322, 124
    %v5361 = vpop.permute.xlu0 %5360
    %5362 = vrot.lane.b32.xlu0 %v5323, 124
    %v5363 = vpop.permute.xlu0 %5362
    %5364 = vrot.lane.b32.xlu0 %v5324, 124
    %v5365 = vpop.permute.xlu0 %5364
    %5366 = vrot.lane.b32.xlu0 %v5325, 124
    %v5367 = vpop.permute.xlu0 %5366
    %5368 = vrot.lane.b32.xlu0 %v5326, 124
    %v5369 = vpop.permute.xlu0 %5368
    %5370 = vrot.lane.b32.xlu0 %v5327, 124
    %v5371 = vpop.permute.xlu0 %5370
    %5372 = vrot.lane.b32.xlu0 %v5328, 124
    %v5373 = vpop.permute.xlu0 %5372
    %5374 = vrot.lane.b32.xlu0 %v5329, 124
    %v5375 = vpop.permute.xlu0 %5374
    %5376 = vrot.lane.b32.xlu0 %v5330, 124
    %v5377 = vpop.permute.xlu0 %5376
    %5378 = vrot.lane.b32.xlu0 %v5331, 124
    %v5379 = vpop.permute.xlu0 %5378
    %v5396 = vadd.f32 %v5299, %v5349
    %v5397 = vadd.f32 %v5300, %v5351
    %v5398 = vadd.f32 %v5301, %v5353
    %v5399 = vadd.f32 %v5302, %v5355
    %v5400 = vadd.f32 %v5303, %v5357
    %v5401 = vadd.f32 %v5304, %v5359
    %v5402 = vadd.f32 %v5305, %v5361
    %v5403 = vadd.f32 %v5306, %v5363
    %v5404 = vadd.f32 %v5307, %v5365
    %v5405 = vadd.f32 %v5308, %v5367
    %v5406 = vadd.f32 %v5309, %v5369
    %v5407 = vadd.f32 %v5310, %v5371
    %v5408 = vadd.f32 %v5311, %v5373
    %v5409 = vadd.f32 %v5312, %v5375
    %v5410 = vadd.f32 %v5313, %v5377
    %v5411 = vadd.f32 %v5314, %v5379
    %v5412 = vstv %s688
    %v5413 = vmul.f32 %v5412, %v757
    %v5414 = vmul.f32 %v5412, %v758
    %v5415 = vmul.f32 %v5412, %v759
    %v5416 = vmul.f32 %v5412, %v760
    %v5417 = vmul.f32 %v5412, %v761
    %v5418 = vmul.f32 %v5412, %v762
    %v5419 = vmul.f32 %v5412, %v763
    %v5420 = vmul.f32 %v5412, %v764
    %v5421 = vmul.f32 %v5412, %v765
    %v5422 = vmul.f32 %v5412, %v766
    %v5423 = vmul.f32 %v5412, %v767
    %v5424 = vmul.f32 %v5412, %v768
    %v5425 = vmul.f32 %v5412, %v769
    %v5426 = vmul.f32 %v5412, %v770
    %v5427 = vmul.f32 %v5412, %v771
    %v5428 = vmul.f32 %v5412, %v772
    %5445 = vrot.lane.b32.xlu0 %v5413, 124
    %v5446 = vpop.permute.xlu0 %5445
    %5447 = vrot.lane.b32.xlu0 %v5414, 124
    %v5448 = vpop.permute.xlu0 %5447
    %5449 = vrot.lane.b32.xlu0 %v5415, 124
    %v5450 = vpop.permute.xlu0 %5449
    %5451 = vrot.lane.b32.xlu0 %v5416, 124
    %v5452 = vpop.permute.xlu0 %5451
    %5453 = vrot.lane.b32.xlu0 %v5417, 124
    %v5454 = vpop.permute.xlu0 %5453
    %5455 = vrot.lane.b32.xlu0 %v5418, 124
    %v5456 = vpop.permute.xlu0 %5455
    %5457 = vrot.lane.b32.xlu0 %v5419, 124
    %v5458 = vpop.permute.xlu0 %5457
    %5459 = vrot.lane.b32.xlu0 %v5420, 124
    %v5460 = vpop.permute.xlu0 %5459
    %5461 = vrot.lane.b32.xlu0 %v5421, 124
    %v5462 = vpop.permute.xlu0 %5461
    %5463 = vrot.lane.b32.xlu0 %v5422, 124
    %v5464 = vpop.permute.xlu0 %5463
    %5465 = vrot.lane.b32.xlu0 %v5423, 124
    %v5466 = vpop.permute.xlu0 %5465
    %5467 = vrot.lane.b32.xlu0 %v5424, 124
    %v5468 = vpop.permute.xlu0 %5467
    %5469 = vrot.lane.b32.xlu0 %v5425, 124
    %v5470 = vpop.permute.xlu0 %5469
    %5471 = vrot.lane.b32.xlu0 %v5426, 124
    %v5472 = vpop.permute.xlu0 %5471
    %5473 = vrot.lane.b32.xlu0 %v5427, 124
    %v5474 = vpop.permute.xlu0 %5473
    %5475 = vrot.lane.b32.xlu0 %v5428, 124
    %v5476 = vpop.permute.xlu0 %5475
    %v5493 = vadd.f32 %v5396, %v5446
    %v5494 = vadd.f32 %v5397, %v5448
    %v5495 = vadd.f32 %v5398, %v5450
    %v5496 = vadd.f32 %v5399, %v5452
    %v5497 = vadd.f32 %v5400, %v5454
    %v5498 = vadd.f32 %v5401, %v5456
    %v5499 = vadd.f32 %v5402, %v5458
    %v5500 = vadd.f32 %v5403, %v5460
    %v5501 = vadd.f32 %v5404, %v5462
    %v5502 = vadd.f32 %v5405, %v5464
    %v5503 = vadd.f32 %v5406, %v5466
    %v5504 = vadd.f32 %v5407, %v5468
    %v5505 = vadd.f32 %v5408, %v5470
    %v5506 = vadd.f32 %v5409, %v5472
    %v5507 = vadd.f32 %v5410, %v5474
    %v5508 = vadd.f32 %v5411, %v5476
    %v5509 = vstv %s646
    %v5510 = vmul.f32 %v5509, %v736
    %v5511 = vmul.f32 %v5509, %v737
    %v5512 = vmul.f32 %v5509, %v738
    %v5513 = vmul.f32 %v5509, %v739
    %v5514 = vmul.f32 %v5509, %v740
    %v5515 = vmul.f32 %v5509, %v741
    %v5516 = vmul.f32 %v5509, %v742
    %v5517 = vmul.f32 %v5509, %v743
    %v5518 = vmul.f32 %v5509, %v744
    %v5519 = vmul.f32 %v5509, %v745
    %v5520 = vmul.f32 %v5509, %v746
    %v5521 = vmul.f32 %v5509, %v747
    %v5522 = vmul.f32 %v5509, %v748
    %v5523 = vmul.f32 %v5509, %v749
    %v5524 = vmul.f32 %v5509, %v750
    %v5525 = vmul.f32 %v5509, %v751
    %5542 = vrot.lane.b32.xlu0 %v5510, 124
    %v5543 = vpop.permute.xlu0 %5542
    %5544 = vrot.lane.b32.xlu0 %v5511, 124
    %v5545 = vpop.permute.xlu0 %5544
    %5546 = vrot.lane.b32.xlu0 %v5512, 124
    %v5547 = vpop.permute.xlu0 %5546
    %5548 = vrot.lane.b32.xlu0 %v5513, 124
    %v5549 = vpop.permute.xlu0 %5548
    %5550 = vrot.lane.b32.xlu0 %v5514, 124
    %v5551 = vpop.permute.xlu0 %5550
    %5552 = vrot.lane.b32.xlu0 %v5515, 124
    %v5553 = vpop.permute.xlu0 %5552
    %5554 = vrot.lane.b32.xlu0 %v5516, 124
    %v5555 = vpop.permute.xlu0 %5554
    %5556 = vrot.lane.b32.xlu0 %v5517, 124
    %v5557 = vpop.permute.xlu0 %5556
    %5558 = vrot.lane.b32.xlu0 %v5518, 124
    %v5559 = vpop.permute.xlu0 %5558
    %5560 = vrot.lane.b32.xlu0 %v5519, 124
    %v5561 = vpop.permute.xlu0 %5560
    %5562 = vrot.lane.b32.xlu0 %v5520, 124
    %v5563 = vpop.permute.xlu0 %5562
    %5564 = vrot.lane.b32.xlu0 %v5521, 124
    %v5565 = vpop.permute.xlu0 %5564
    %5566 = vrot.lane.b32.xlu0 %v5522, 124
    %v5567 = vpop.permute.xlu0 %5566
    %5568 = vrot.lane.b32.xlu0 %v5523, 124
    %v5569 = vpop.permute.xlu0 %5568
    %5570 = vrot.lane.b32.xlu0 %v5524, 124
    %v5571 = vpop.permute.xlu0 %5570
    %5572 = vrot.lane.b32.xlu0 %v5525, 124
    %v5573 = vpop.permute.xlu0 %5572
    %v5590 = vadd.f32 %v5493, %v5543
    %v5591 = vadd.f32 %v5494, %v5545
    %v5592 = vadd.f32 %v5495, %v5547
    %v5593 = vadd.f32 %v5496, %v5549
    %v5594 = vadd.f32 %v5497, %v5551
    %v5595 = vadd.f32 %v5498, %v5553
    %v5596 = vadd.f32 %v5499, %v5555
    %v5597 = vadd.f32 %v5500, %v5557
    %v5598 = vadd.f32 %v5501, %v5559
    %v5599 = vadd.f32 %v5502, %v5561
    %v5600 = vadd.f32 %v5503, %v5563
    %v5601 = vadd.f32 %v5504, %v5565
    %v5602 = vadd.f32 %v5505, %v5567
    %v5603 = vadd.f32 %v5506, %v5569
    %v5604 = vadd.f32 %v5507, %v5571
    %v5605 = vadd.f32 %v5508, %v5573
    %v5606 = vstv %s695
    %v5607 = vmul.f32 %v5606, %v758
    %v5608 = vmul.f32 %v5606, %v759
    %v5609 = vmul.f32 %v5606, %v760
    %v5610 = vmul.f32 %v5606, %v761
    %v5611 = vmul.f32 %v5606, %v762
    %v5612 = vmul.f32 %v5606, %v763
    %v5613 = vmul.f32 %v5606, %v764
    %v5614 = vmul.f32 %v5606, %v765
    %v5615 = vmul.f32 %v5606, %v766
    %v5616 = vmul.f32 %v5606, %v767
    %v5617 = vmul.f32 %v5606, %v768
    %v5618 = vmul.f32 %v5606, %v769
    %v5619 = vmul.f32 %v5606, %v770
    %v5620 = vmul.f32 %v5606, %v771
    %v5621 = vmul.f32 %v5606, %v772
    %v5622 = vmul.f32 %v5606, %v773
    %5639 = vrot.lane.b32.xlu0 %v5607, 124
    %v5640 = vpop.permute.xlu0 %5639
    %5641 = vrot.lane.b32.xlu0 %v5608, 124
    %v5642 = vpop.permute.xlu0 %5641
    %5643 = vrot.lane.b32.xlu0 %v5609, 124
    %v5644 = vpop.permute.xlu0 %5643
    %5645 = vrot.lane.b32.xlu0 %v5610, 124
    %v5646 = vpop.permute.xlu0 %5645
    %5647 = vrot.lane.b32.xlu0 %v5611, 124
    %v5648 = vpop.permute.xlu0 %5647
    %5649 = vrot.lane.b32.xlu0 %v5612, 124
    %v5650 = vpop.permute.xlu0 %5649
    %5651 = vrot.lane.b32.xlu0 %v5613, 124
    %v5652 = vpop.permute.xlu0 %5651
    %5653 = vrot.lane.b32.xlu0 %v5614, 124
    %v5654 = vpop.permute.xlu0 %5653
    %5655 = vrot.lane.b32.xlu0 %v5615, 124
    %v5656 = vpop.permute.xlu0 %5655
    %5657 = vrot.lane.b32.xlu0 %v5616, 124
    %v5658 = vpop.permute.xlu0 %5657
    %5659 = vrot.lane.b32.xlu0 %v5617, 124
    %v5660 = vpop.permute.xlu0 %5659
    %5661 = vrot.lane.b32.xlu0 %v5618, 124
    %v5662 = vpop.permute.xlu0 %5661
    %5663 = vrot.lane.b32.xlu0 %v5619, 124
    %v5664 = vpop.permute.xlu0 %5663
    %5665 = vrot.lane.b32.xlu0 %v5620, 124
    %v5666 = vpop.permute.xlu0 %5665
    %5667 = vrot.lane.b32.xlu0 %v5621, 124
    %v5668 = vpop.permute.xlu0 %5667
    %5669 = vrot.lane.b32.xlu0 %v5622, 124
    %v5670 = vpop.permute.xlu0 %5669
    %v5687 = vadd.f32 %v5590, %v5640
    %v5688 = vadd.f32 %v5591, %v5642
    %v5689 = vadd.f32 %v5592, %v5644
    %v5690 = vadd.f32 %v5593, %v5646
    %v5691 = vadd.f32 %v5594, %v5648
    %v5692 = vadd.f32 %v5595, %v5650
    %v5693 = vadd.f32 %v5596, %v5652
    %v5694 = vadd.f32 %v5597, %v5654
    %v5695 = vadd.f32 %v5598, %v5656
    %v5696 = vadd.f32 %v5599, %v5658
    %v5697 = vadd.f32 %v5600, %v5660
    %v5698 = vadd.f32 %v5601, %v5662
    %v5699 = vadd.f32 %v5602, %v5664
    %v5700 = vadd.f32 %v5603, %v5666
    %v5701 = vadd.f32 %v5604, %v5668
    %v5702 = vadd.f32 %v5605, %v5670
    %v5703 = vstv %s653
    %v5704 = vmul.f32 %v5703, %v737
    %v5705 = vmul.f32 %v5703, %v738
    %v5706 = vmul.f32 %v5703, %v739
    %v5707 = vmul.f32 %v5703, %v740
    %v5708 = vmul.f32 %v5703, %v741
    %v5709 = vmul.f32 %v5703, %v742
    %v5710 = vmul.f32 %v5703, %v743
    %v5711 = vmul.f32 %v5703, %v744
    %v5712 = vmul.f32 %v5703, %v745
    %v5713 = vmul.f32 %v5703, %v746
    %v5714 = vmul.f32 %v5703, %v747
    %v5715 = vmul.f32 %v5703, %v748
    %v5716 = vmul.f32 %v5703, %v749
    %v5717 = vmul.f32 %v5703, %v750
    %v5718 = vmul.f32 %v5703, %v751
    %v5719 = vmul.f32 %v5703, %v752
    %5736 = vrot.lane.b32.xlu0 %v5704, 124
    %v5737 = vpop.permute.xlu0 %5736
    %5738 = vrot.lane.b32.xlu0 %v5705, 124
    %v5739 = vpop.permute.xlu0 %5738
    %5740 = vrot.lane.b32.xlu0 %v5706, 124
    %v5741 = vpop.permute.xlu0 %5740
    %5742 = vrot.lane.b32.xlu0 %v5707, 124
    %v5743 = vpop.permute.xlu0 %5742
    %5744 = vrot.lane.b32.xlu0 %v5708, 124
    %v5745 = vpop.permute.xlu0 %5744
    %5746 = vrot.lane.b32.xlu0 %v5709, 124
    %v5747 = vpop.permute.xlu0 %5746
    %5748 = vrot.lane.b32.xlu0 %v5710, 124
    %v5749 = vpop.permute.xlu0 %5748
    %5750 = vrot.lane.b32.xlu0 %v5711, 124
    %v5751 = vpop.permute.xlu0 %5750
    %5752 = vrot.lane.b32.xlu0 %v5712, 124
    %v5753 = vpop.permute.xlu0 %5752
    %5754 = vrot.lane.b32.xlu0 %v5713, 124
    %v5755 = vpop.permute.xlu0 %5754
    %5756 = vrot.lane.b32.xlu0 %v5714, 124
    %v5757 = vpop.permute.xlu0 %5756
    %5758 = vrot.lane.b32.xlu0 %v5715, 124
    %v5759 = vpop.permute.xlu0 %5758
    %5760 = vrot.lane.b32.xlu0 %v5716, 124
    %v5761 = vpop.permute.xlu0 %5760
    %5762 = vrot.lane.b32.xlu0 %v5717, 124
    %v5763 = vpop.permute.xlu0 %5762
    %5764 = vrot.lane.b32.xlu0 %v5718, 124
    %v5765 = vpop.permute.xlu0 %5764
    %5766 = vrot.lane.b32.xlu0 %v5719, 124
    %v5767 = vpop.permute.xlu0 %5766
    %v5784 = vadd.f32 %v5687, %v5737
    %v5785 = vadd.f32 %v5688, %v5739
    %v5786 = vadd.f32 %v5689, %v5741
    %v5787 = vadd.f32 %v5690, %v5743
    %v5788 = vadd.f32 %v5691, %v5745
    %v5789 = vadd.f32 %v5692, %v5747
    %v5790 = vadd.f32 %v5693, %v5749
    %v5791 = vadd.f32 %v5694, %v5751
    %v5792 = vadd.f32 %v5695, %v5753
    %v5793 = vadd.f32 %v5696, %v5755
    %v5794 = vadd.f32 %v5697, %v5757
    %v5795 = vadd.f32 %v5698, %v5759
    %v5796 = vadd.f32 %v5699, %v5761
    %v5797 = vadd.f32 %v5700, %v5763
    %v5798 = vadd.f32 %v5701, %v5765
    %v5799 = vadd.f32 %v5702, %v5767
    %v5800 = vstv %s702
    %v5801 = vmul.f32 %v5800, %v759
    %v5802 = vmul.f32 %v5800, %v760
    %v5803 = vmul.f32 %v5800, %v761
    %v5804 = vmul.f32 %v5800, %v762
    %v5805 = vmul.f32 %v5800, %v763
    %v5806 = vmul.f32 %v5800, %v764
    %v5807 = vmul.f32 %v5800, %v765
    %v5808 = vmul.f32 %v5800, %v766
    %v5809 = vmul.f32 %v5800, %v767
    %v5810 = vmul.f32 %v5800, %v768
    %v5811 = vmul.f32 %v5800, %v769
    %v5812 = vmul.f32 %v5800, %v770
    %v5813 = vmul.f32 %v5800, %v771
    %v5814 = vmul.f32 %v5800, %v772
    %v5815 = vmul.f32 %v5800, %v773
    %v5816 = vmul.f32 %v5800, %v774
    %5833 = vrot.lane.b32.xlu0 %v5801, 124
    %v5834 = vpop.permute.xlu0 %5833
    %5835 = vrot.lane.b32.xlu0 %v5802, 124
    %v5836 = vpop.permute.xlu0 %5835
    %5837 = vrot.lane.b32.xlu0 %v5803, 124
    %v5838 = vpop.permute.xlu0 %5837
    %5839 = vrot.lane.b32.xlu0 %v5804, 124
    %v5840 = vpop.permute.xlu0 %5839
    %5841 = vrot.lane.b32.xlu0 %v5805, 124
    %v5842 = vpop.permute.xlu0 %5841
    %5843 = vrot.lane.b32.xlu0 %v5806, 124
    %v5844 = vpop.permute.xlu0 %5843
    %5845 = vrot.lane.b32.xlu0 %v5807, 124
    %v5846 = vpop.permute.xlu0 %5845
    %5847 = vrot.lane.b32.xlu0 %v5808, 124
    %v5848 = vpop.permute.xlu0 %5847
    %5849 = vrot.lane.b32.xlu0 %v5809, 124
    %v5850 = vpop.permute.xlu0 %5849
    %5851 = vrot.lane.b32.xlu0 %v5810, 124
    %v5852 = vpop.permute.xlu0 %5851
    %5853 = vrot.lane.b32.xlu0 %v5811, 124
    %v5854 = vpop.permute.xlu0 %5853
    %5855 = vrot.lane.b32.xlu0 %v5812, 124
    %v5856 = vpop.permute.xlu0 %5855
    %5857 = vrot.lane.b32.xlu0 %v5813, 124
    %v5858 = vpop.permute.xlu0 %5857
    %5859 = vrot.lane.b32.xlu0 %v5814, 124
    %v5860 = vpop.permute.xlu0 %5859
    %5861 = vrot.lane.b32.xlu0 %v5815, 124
    %v5862 = vpop.permute.xlu0 %5861
    %5863 = vrot.lane.b32.xlu0 %v5816, 124
    %v5864 = vpop.permute.xlu0 %5863
    %v5881 = vadd.f32 %v5784, %v5834
    %v5882 = vadd.f32 %v5785, %v5836
    %v5883 = vadd.f32 %v5786, %v5838
    %v5884 = vadd.f32 %v5787, %v5840
    %v5885 = vadd.f32 %v5788, %v5842
    %v5886 = vadd.f32 %v5789, %v5844
    %v5887 = vadd.f32 %v5790, %v5846
    %v5888 = vadd.f32 %v5791, %v5848
    %v5889 = vadd.f32 %v5792, %v5850
    %v5890 = vadd.f32 %v5793, %v5852
    %v5891 = vadd.f32 %v5794, %v5854
    %v5892 = vadd.f32 %v5795, %v5856
    %v5893 = vadd.f32 %v5796, %v5858
    %v5894 = vadd.f32 %v5797, %v5860
    %v5895 = vadd.f32 %v5798, %v5862
    %v5896 = vadd.f32 %v5799, %v5864
    %v5897 = vstv %s660
    %v5898 = vmul.f32 %v5897, %v738
    %v5899 = vmul.f32 %v5897, %v739
    %v5900 = vmul.f32 %v5897, %v740
    %v5901 = vmul.f32 %v5897, %v741
    %v5902 = vmul.f32 %v5897, %v742
    %v5903 = vmul.f32 %v5897, %v743
    %v5904 = vmul.f32 %v5897, %v744
    %v5905 = vmul.f32 %v5897, %v745
    %v5906 = vmul.f32 %v5897, %v746
    %v5907 = vmul.f32 %v5897, %v747
    %v5908 = vmul.f32 %v5897, %v748
    %v5909 = vmul.f32 %v5897, %v749
    %v5910 = vmul.f32 %v5897, %v750
    %v5911 = vmul.f32 %v5897, %v751
    %v5912 = vmul.f32 %v5897, %v752
    %v5913 = vmul.f32 %v5897, %v753
    %5930 = vrot.lane.b32.xlu0 %v5898, 124
    %v5931 = vpop.permute.xlu0 %5930
    %5932 = vrot.lane.b32.xlu0 %v5899, 124
    %v5933 = vpop.permute.xlu0 %5932
    %5934 = vrot.lane.b32.xlu0 %v5900, 124
    %v5935 = vpop.permute.xlu0 %5934
    %5936 = vrot.lane.b32.xlu0 %v5901, 124
    %v5937 = vpop.permute.xlu0 %5936
    %5938 = vrot.lane.b32.xlu0 %v5902, 124
    %v5939 = vpop.permute.xlu0 %5938
    %5940 = vrot.lane.b32.xlu0 %v5903, 124
    %v5941 = vpop.permute.xlu0 %5940
    %5942 = vrot.lane.b32.xlu0 %v5904, 124
    %v5943 = vpop.permute.xlu0 %5942
    %5944 = vrot.lane.b32.xlu0 %v5905, 124
    %v5945 = vpop.permute.xlu0 %5944
    %5946 = vrot.lane.b32.xlu0 %v5906, 124
    %v5947 = vpop.permute.xlu0 %5946
    %5948 = vrot.lane.b32.xlu0 %v5907, 124
    %v5949 = vpop.permute.xlu0 %5948
    %5950 = vrot.lane.b32.xlu0 %v5908, 124
    %v5951 = vpop.permute.xlu0 %5950
    %5952 = vrot.lane.b32.xlu0 %v5909, 124
    %v5953 = vpop.permute.xlu0 %5952
    %5954 = vrot.lane.b32.xlu0 %v5910, 124
    %v5955 = vpop.permute.xlu0 %5954
    %5956 = vrot.lane.b32.xlu0 %v5911, 124
    %v5957 = vpop.permute.xlu0 %5956
    %5958 = vrot.lane.b32.xlu0 %v5912, 124
    %v5959 = vpop.permute.xlu0 %5958
    %5960 = vrot.lane.b32.xlu0 %v5913, 124
    %v5961 = vpop.permute.xlu0 %5960
    %v5978 = vadd.f32 %v5881, %v5931
    %v5979 = vadd.f32 %v5882, %v5933
    %v5980 = vadd.f32 %v5883, %v5935
    %v5981 = vadd.f32 %v5884, %v5937
    %v5982 = vadd.f32 %v5885, %v5939
    %v5983 = vadd.f32 %v5886, %v5941
    %v5984 = vadd.f32 %v5887, %v5943
    %v5985 = vadd.f32 %v5888, %v5945
    %v5986 = vadd.f32 %v5889, %v5947
    %v5987 = vadd.f32 %v5890, %v5949
    %v5988 = vadd.f32 %v5891, %v5951
    %v5989 = vadd.f32 %v5892, %v5953
    %v5990 = vadd.f32 %v5893, %v5955
    %v5991 = vadd.f32 %v5894, %v5957
    %v5992 = vadd.f32 %v5895, %v5959
    %v5993 = vadd.f32 %v5896, %v5961
    %v5994 = vstv %s709
    %v5995 = vmul.f32 %v5994, %v760
    %v5996 = vmul.f32 %v5994, %v761
    %v5997 = vmul.f32 %v5994, %v762
    %v5998 = vmul.f32 %v5994, %v763
    %v5999 = vmul.f32 %v5994, %v764
    %v6000 = vmul.f32 %v5994, %v765
    %v6001 = vmul.f32 %v5994, %v766
    %v6002 = vmul.f32 %v5994, %v767
    %v6003 = vmul.f32 %v5994, %v768
    %v6004 = vmul.f32 %v5994, %v769
    %v6005 = vmul.f32 %v5994, %v770
    %v6006 = vmul.f32 %v5994, %v771
    %v6007 = vmul.f32 %v5994, %v772
    %v6008 = vmul.f32 %v5994, %v773
    %v6009 = vmul.f32 %v5994, %v774
    %v6010 = vmul.f32 %v5994, %v775
    %6027 = vrot.lane.b32.xlu0 %v5995, 124
    %v6028 = vpop.permute.xlu0 %6027
    %6029 = vrot.lane.b32.xlu0 %v5996, 124
    %v6030 = vpop.permute.xlu0 %6029
    %6031 = vrot.lane.b32.xlu0 %v5997, 124
    %v6032 = vpop.permute.xlu0 %6031
    %6033 = vrot.lane.b32.xlu0 %v5998, 124
    %v6034 = vpop.permute.xlu0 %6033
    %6035 = vrot.lane.b32.xlu0 %v5999, 124
    %v6036 = vpop.permute.xlu0 %6035
    %6037 = vrot.lane.b32.xlu0 %v6000, 124
    %v6038 = vpop.permute.xlu0 %6037
    %6039 = vrot.lane.b32.xlu0 %v6001, 124
    %v6040 = vpop.permute.xlu0 %6039
    %6041 = vrot.lane.b32.xlu0 %v6002, 124
    %v6042 = vpop.permute.xlu0 %6041
    %6043 = vrot.lane.b32.xlu0 %v6003, 124
    %v6044 = vpop.permute.xlu0 %6043
    %6045 = vrot.lane.b32.xlu0 %v6004, 124
    %v6046 = vpop.permute.xlu0 %6045
    %6047 = vrot.lane.b32.xlu0 %v6005, 124
    %v6048 = vpop.permute.xlu0 %6047
    %6049 = vrot.lane.b32.xlu0 %v6006, 124
    %v6050 = vpop.permute.xlu0 %6049
    %6051 = vrot.lane.b32.xlu0 %v6007, 124
    %v6052 = vpop.permute.xlu0 %6051
    %6053 = vrot.lane.b32.xlu0 %v6008, 124
    %v6054 = vpop.permute.xlu0 %6053
    %6055 = vrot.lane.b32.xlu0 %v6009, 124
    %v6056 = vpop.permute.xlu0 %6055
    %6057 = vrot.lane.b32.xlu0 %v6010, 124
    %v6058 = vpop.permute.xlu0 %6057
    %v6075 = vadd.f32 %v5978, %v6028
    %v6076 = vadd.f32 %v5979, %v6030
    %v6077 = vadd.f32 %v5980, %v6032
    %v6078 = vadd.f32 %v5981, %v6034
    %v6079 = vadd.f32 %v5982, %v6036
    %v6080 = vadd.f32 %v5983, %v6038
    %v6081 = vadd.f32 %v5984, %v6040
    %v6082 = vadd.f32 %v5985, %v6042
    %v6083 = vadd.f32 %v5986, %v6044
    %v6084 = vadd.f32 %v5987, %v6046
    %v6085 = vadd.f32 %v5988, %v6048
    %v6086 = vadd.f32 %v5989, %v6050
    %v6087 = vadd.f32 %v5990, %v6052
    %v6088 = vadd.f32 %v5991, %v6054
    %v6089 = vadd.f32 %v5992, %v6056
    %v6090 = vadd.f32 %v5993, %v6058
    %v6091 = vstv %s667
    %v6092 = vmul.f32 %v6091, %v739
    %v6093 = vmul.f32 %v6091, %v740
    %v6094 = vmul.f32 %v6091, %v741
    %v6095 = vmul.f32 %v6091, %v742
    %v6096 = vmul.f32 %v6091, %v743
    %v6097 = vmul.f32 %v6091, %v744
    %v6098 = vmul.f32 %v6091, %v745
    %v6099 = vmul.f32 %v6091, %v746
    %v6100 = vmul.f32 %v6091, %v747
    %v6101 = vmul.f32 %v6091, %v748
    %v6102 = vmul.f32 %v6091, %v749
    %v6103 = vmul.f32 %v6091, %v750
    %v6104 = vmul.f32 %v6091, %v751
    %v6105 = vmul.f32 %v6091, %v752
    %v6106 = vmul.f32 %v6091, %v753
    %v6107 = vmul.f32 %v6091, %v754
    %6124 = vrot.lane.b32.xlu0 %v6092, 124
    %v6125 = vpop.permute.xlu0 %6124
    %6126 = vrot.lane.b32.xlu0 %v6093, 124
    %v6127 = vpop.permute.xlu0 %6126
    %6128 = vrot.lane.b32.xlu0 %v6094, 124
    %v6129 = vpop.permute.xlu0 %6128
    %6130 = vrot.lane.b32.xlu0 %v6095, 124
    %v6131 = vpop.permute.xlu0 %6130
    %6132 = vrot.lane.b32.xlu0 %v6096, 124
    %v6133 = vpop.permute.xlu0 %6132
    %6134 = vrot.lane.b32.xlu0 %v6097, 124
    %v6135 = vpop.permute.xlu0 %6134
    %6136 = vrot.lane.b32.xlu0 %v6098, 124
    %v6137 = vpop.permute.xlu0 %6136
    %6138 = vrot.lane.b32.xlu0 %v6099, 124
    %v6139 = vpop.permute.xlu0 %6138
    %6140 = vrot.lane.b32.xlu0 %v6100, 124
    %v6141 = vpop.permute.xlu0 %6140
    %6142 = vrot.lane.b32.xlu0 %v6101, 124
    %v6143 = vpop.permute.xlu0 %6142
    %6144 = vrot.lane.b32.xlu0 %v6102, 124
    %v6145 = vpop.permute.xlu0 %6144
    %6146 = vrot.lane.b32.xlu0 %v6103, 124
    %v6147 = vpop.permute.xlu0 %6146
    %6148 = vrot.lane.b32.xlu0 %v6104, 124
    %v6149 = vpop.permute.xlu0 %6148
    %6150 = vrot.lane.b32.xlu0 %v6105, 124
    %v6151 = vpop.permute.xlu0 %6150
    %6152 = vrot.lane.b32.xlu0 %v6106, 124
    %v6153 = vpop.permute.xlu0 %6152
    %6154 = vrot.lane.b32.xlu0 %v6107, 124
    %v6155 = vpop.permute.xlu0 %6154
    %v6172 = vadd.f32 %v6075, %v6125
    %v6173 = vadd.f32 %v6076, %v6127
    %v6174 = vadd.f32 %v6077, %v6129
    %v6175 = vadd.f32 %v6078, %v6131
    %v6176 = vadd.f32 %v6079, %v6133
    %v6177 = vadd.f32 %v6080, %v6135
    %v6178 = vadd.f32 %v6081, %v6137
    %v6179 = vadd.f32 %v6082, %v6139
    %v6180 = vadd.f32 %v6083, %v6141
    %v6181 = vadd.f32 %v6084, %v6143
    %v6182 = vadd.f32 %v6085, %v6145
    %v6183 = vadd.f32 %v6086, %v6147
    %v6184 = vadd.f32 %v6087, %v6149
    %v6185 = vadd.f32 %v6088, %v6151
    %v6186 = vadd.f32 %v6089, %v6153
    %v6187 = vadd.f32 %v6090, %v6155
    %v6188 = vstv %s716
    %v6189 = vmul.f32 %v6188, %v761
    %v6190 = vmul.f32 %v6188, %v762
    %v6191 = vmul.f32 %v6188, %v763
    %v6192 = vmul.f32 %v6188, %v764
    %v6193 = vmul.f32 %v6188, %v765
    %v6194 = vmul.f32 %v6188, %v766
    %v6195 = vmul.f32 %v6188, %v767
    %v6196 = vmul.f32 %v6188, %v768
    %v6197 = vmul.f32 %v6188, %v769
    %v6198 = vmul.f32 %v6188, %v770
    %v6199 = vmul.f32 %v6188, %v771
    %v6200 = vmul.f32 %v6188, %v772
    %v6201 = vmul.f32 %v6188, %v773
    %v6202 = vmul.f32 %v6188, %v774
    %v6203 = vmul.f32 %v6188, %v775
    %v6204 = vmul.f32 %v6188, %v776
    %6221 = vrot.lane.b32.xlu0 %v6189, 124
    %v6222 = vpop.permute.xlu0 %6221
    %6223 = vrot.lane.b32.xlu0 %v6190, 124
    %v6224 = vpop.permute.xlu0 %6223
    %6225 = vrot.lane.b32.xlu0 %v6191, 124
    %v6226 = vpop.permute.xlu0 %6225
    %6227 = vrot.lane.b32.xlu0 %v6192, 124
    %v6228 = vpop.permute.xlu0 %6227
    %6229 = vrot.lane.b32.xlu0 %v6193, 124
    %v6230 = vpop.permute.xlu0 %6229
    %6231 = vrot.lane.b32.xlu0 %v6194, 124
    %v6232 = vpop.permute.xlu0 %6231
    %6233 = vrot.lane.b32.xlu0 %v6195, 124
    %v6234 = vpop.permute.xlu0 %6233
    %6235 = vrot.lane.b32.xlu0 %v6196, 124
    %v6236 = vpop.permute.xlu0 %6235
    %6237 = vrot.lane.b32.xlu0 %v6197, 124
    %v6238 = vpop.permute.xlu0 %6237
    %6239 = vrot.lane.b32.xlu0 %v6198, 124
    %v6240 = vpop.permute.xlu0 %6239
    %6241 = vrot.lane.b32.xlu0 %v6199, 124
    %v6242 = vpop.permute.xlu0 %6241
    %6243 = vrot.lane.b32.xlu0 %v6200, 124
    %v6244 = vpop.permute.xlu0 %6243
    %6245 = vrot.lane.b32.xlu0 %v6201, 124
    %v6246 = vpop.permute.xlu0 %6245
    %6247 = vrot.lane.b32.xlu0 %v6202, 124
    %v6248 = vpop.permute.xlu0 %6247
    %6249 = vrot.lane.b32.xlu0 %v6203, 124
    %v6250 = vpop.permute.xlu0 %6249
    %6251 = vrot.lane.b32.xlu0 %v6204, 124
    %v6252 = vpop.permute.xlu0 %6251
    %v6269 = vadd.f32 %v6172, %v6222
    %v6270 = vadd.f32 %v6173, %v6224
    %v6271 = vadd.f32 %v6174, %v6226
    %v6272 = vadd.f32 %v6175, %v6228
    %v6273 = vadd.f32 %v6176, %v6230
    %v6274 = vadd.f32 %v6177, %v6232
    %v6275 = vadd.f32 %v6178, %v6234
    %v6276 = vadd.f32 %v6179, %v6236
    %v6277 = vadd.f32 %v6180, %v6238
    %v6278 = vadd.f32 %v6181, %v6240
    %v6279 = vadd.f32 %v6182, %v6242
    %v6280 = vadd.f32 %v6183, %v6244
    %v6281 = vadd.f32 %v6184, %v6246
    %v6282 = vadd.f32 %v6185, %v6248
    %v6283 = vadd.f32 %v6186, %v6250
    %v6284 = vadd.f32 %v6187, %v6252
    %v6285 = vstv %s674
    %v6286 = vmul.f32 %v6285, %v740
    %v6287 = vmul.f32 %v6285, %v741
    %v6288 = vmul.f32 %v6285, %v742
    %v6289 = vmul.f32 %v6285, %v743
    %v6290 = vmul.f32 %v6285, %v744
    %v6291 = vmul.f32 %v6285, %v745
    %v6292 = vmul.f32 %v6285, %v746
    %v6293 = vmul.f32 %v6285, %v747
    %v6294 = vmul.f32 %v6285, %v748
    %v6295 = vmul.f32 %v6285, %v749
    %v6296 = vmul.f32 %v6285, %v750
    %v6297 = vmul.f32 %v6285, %v751
    %v6298 = vmul.f32 %v6285, %v752
    %v6299 = vmul.f32 %v6285, %v753
    %v6300 = vmul.f32 %v6285, %v754
    %v6301 = vmul.f32 %v6285, %v755
    %6318 = vrot.lane.b32.xlu0 %v6286, 124
    %v6319 = vpop.permute.xlu0 %6318
    %6320 = vrot.lane.b32.xlu0 %v6287, 124
    %v6321 = vpop.permute.xlu0 %6320
    %6322 = vrot.lane.b32.xlu0 %v6288, 124
    %v6323 = vpop.permute.xlu0 %6322
    %6324 = vrot.lane.b32.xlu0 %v6289, 124
    %v6325 = vpop.permute.xlu0 %6324
    %6326 = vrot.lane.b32.xlu0 %v6290, 124
    %v6327 = vpop.permute.xlu0 %6326
    %6328 = vrot.lane.b32.xlu0 %v6291, 124
    %v6329 = vpop.permute.xlu0 %6328
    %6330 = vrot.lane.b32.xlu0 %v6292, 124
    %v6331 = vpop.permute.xlu0 %6330
    %6332 = vrot.lane.b32.xlu0 %v6293, 124
    %v6333 = vpop.permute.xlu0 %6332
    %6334 = vrot.lane.b32.xlu0 %v6294, 124
    %v6335 = vpop.permute.xlu0 %6334
    %6336 = vrot.lane.b32.xlu0 %v6295, 124
    %v6337 = vpop.permute.xlu0 %6336
    %6338 = vrot.lane.b32.xlu0 %v6296, 124
    %v6339 = vpop.permute.xlu0 %6338
    %6340 = vrot.lane.b32.xlu0 %v6297, 124
    %v6341 = vpop.permute.xlu0 %6340
    %6342 = vrot.lane.b32.xlu0 %v6298, 124
    %v6343 = vpop.permute.xlu0 %6342
    %6344 = vrot.lane.b32.xlu0 %v6299, 124
    %v6345 = vpop.permute.xlu0 %6344
    %6346 = vrot.lane.b32.xlu0 %v6300, 124
    %v6347 = vpop.permute.xlu0 %6346
    %6348 = vrot.lane.b32.xlu0 %v6301, 124
    %v6349 = vpop.permute.xlu0 %6348
    %v6366 = vadd.f32 %v6269, %v6319
    %v6367 = vadd.f32 %v6270, %v6321
    %v6368 = vadd.f32 %v6271, %v6323
    %v6369 = vadd.f32 %v6272, %v6325
    %v6370 = vadd.f32 %v6273, %v6327
    %v6371 = vadd.f32 %v6274, %v6329
    %v6372 = vadd.f32 %v6275, %v6331
    %v6373 = vadd.f32 %v6276, %v6333
    %v6374 = vadd.f32 %v6277, %v6335
    %v6375 = vadd.f32 %v6278, %v6337
    %v6376 = vadd.f32 %v6279, %v6339
    %v6377 = vadd.f32 %v6280, %v6341
    %v6378 = vadd.f32 %v6281, %v6343
    %v6379 = vadd.f32 %v6282, %v6345
    %v6380 = vadd.f32 %v6283, %v6347
    %v6381 = vadd.f32 %v6284, %v6349
    %v6382 = vstv %s723
    %v6383 = vmul.f32 %v6382, %v762
    %v6384 = vmul.f32 %v6382, %v763
    %v6385 = vmul.f32 %v6382, %v764
    %v6386 = vmul.f32 %v6382, %v765
    %v6387 = vmul.f32 %v6382, %v766
    %v6388 = vmul.f32 %v6382, %v767
    %v6389 = vmul.f32 %v6382, %v768
    %v6390 = vmul.f32 %v6382, %v769
    %v6391 = vmul.f32 %v6382, %v770
    %v6392 = vmul.f32 %v6382, %v771
    %v6393 = vmul.f32 %v6382, %v772
    %v6394 = vmul.f32 %v6382, %v773
    %v6395 = vmul.f32 %v6382, %v774
    %v6396 = vmul.f32 %v6382, %v775
    %v6397 = vmul.f32 %v6382, %v776
    %v6398 = vmul.f32 %v6382, %v777
    %6415 = vrot.lane.b32.xlu0 %v6383, 124
    %v6416 = vpop.permute.xlu0 %6415
    %6417 = vrot.lane.b32.xlu0 %v6384, 124
    %v6418 = vpop.permute.xlu0 %6417
    %6419 = vrot.lane.b32.xlu0 %v6385, 124
    %v6420 = vpop.permute.xlu0 %6419
    %6421 = vrot.lane.b32.xlu0 %v6386, 124
    %v6422 = vpop.permute.xlu0 %6421
    %6423 = vrot.lane.b32.xlu0 %v6387, 124
    %v6424 = vpop.permute.xlu0 %6423
    %6425 = vrot.lane.b32.xlu0 %v6388, 124
    %v6426 = vpop.permute.xlu0 %6425
    %6427 = vrot.lane.b32.xlu0 %v6389, 124
    %v6428 = vpop.permute.xlu0 %6427
    %6429 = vrot.lane.b32.xlu0 %v6390, 124
    %v6430 = vpop.permute.xlu0 %6429
    %6431 = vrot.lane.b32.xlu0 %v6391, 124
    %v6432 = vpop.permute.xlu0 %6431
    %6433 = vrot.lane.b32.xlu0 %v6392, 124
    %v6434 = vpop.permute.xlu0 %6433
    %6435 = vrot.lane.b32.xlu0 %v6393, 124
    %v6436 = vpop.permute.xlu0 %6435
    %6437 = vrot.lane.b32.xlu0 %v6394, 124
    %v6438 = vpop.permute.xlu0 %6437
    %6439 = vrot.lane.b32.xlu0 %v6395, 124
    %v6440 = vpop.permute.xlu0 %6439
    %6441 = vrot.lane.b32.xlu0 %v6396, 124
    %v6442 = vpop.permute.xlu0 %6441
    %6443 = vrot.lane.b32.xlu0 %v6397, 124
    %v6444 = vpop.permute.xlu0 %6443
    %6445 = vrot.lane.b32.xlu0 %v6398, 124
    %v6446 = vpop.permute.xlu0 %6445
    %v6463 = vadd.f32 %v6366, %v6416
    %v6464 = vadd.f32 %v6367, %v6418
    %v6465 = vadd.f32 %v6368, %v6420
    %v6466 = vadd.f32 %v6369, %v6422
    %v6467 = vadd.f32 %v6370, %v6424
    %v6468 = vadd.f32 %v6371, %v6426
    %v6469 = vadd.f32 %v6372, %v6428
    %v6470 = vadd.f32 %v6373, %v6430
    %v6471 = vadd.f32 %v6374, %v6432
    %v6472 = vadd.f32 %v6375, %v6434
    %v6473 = vadd.f32 %v6376, %v6436
    %v6474 = vadd.f32 %v6377, %v6438
    %v6475 = vadd.f32 %v6378, %v6440
    %v6476 = vadd.f32 %v6379, %v6442
    %v6477 = vadd.f32 %v6380, %v6444
    %v6478 = vadd.f32 %v6381, %v6446
    %v6479 = vstv %s681
    %v6480 = vmul.f32 %v6479, %v741
    %v6481 = vmul.f32 %v6479, %v742
    %v6482 = vmul.f32 %v6479, %v743
    %v6483 = vmul.f32 %v6479, %v744
    %v6484 = vmul.f32 %v6479, %v745
    %v6485 = vmul.f32 %v6479, %v746
    %v6486 = vmul.f32 %v6479, %v747
    %v6487 = vmul.f32 %v6479, %v748
    %v6488 = vmul.f32 %v6479, %v749
    %v6489 = vmul.f32 %v6479, %v750
    %v6490 = vmul.f32 %v6479, %v751
    %v6491 = vmul.f32 %v6479, %v752
    %v6492 = vmul.f32 %v6479, %v753
    %v6493 = vmul.f32 %v6479, %v754
    %v6494 = vmul.f32 %v6479, %v755
    %v6495 = vmul.f32 %v6479, %v756
    %6512 = vrot.lane.b32.xlu0 %v6480, 124
    %v6513 = vpop.permute.xlu0 %6512
    %6514 = vrot.lane.b32.xlu0 %v6481, 124
    %v6515 = vpop.permute.xlu0 %6514
    %6516 = vrot.lane.b32.xlu0 %v6482, 124
    %v6517 = vpop.permute.xlu0 %6516
    %6518 = vrot.lane.b32.xlu0 %v6483, 124
    %v6519 = vpop.permute.xlu0 %6518
    %6520 = vrot.lane.b32.xlu0 %v6484, 124
    %v6521 = vpop.permute.xlu0 %6520
    %6522 = vrot.lane.b32.xlu0 %v6485, 124
    %v6523 = vpop.permute.xlu0 %6522
    %6524 = vrot.lane.b32.xlu0 %v6486, 124
    %v6525 = vpop.permute.xlu0 %6524
    %6526 = vrot.lane.b32.xlu0 %v6487, 124
    %v6527 = vpop.permute.xlu0 %6526
    %6528 = vrot.lane.b32.xlu0 %v6488, 124
    %v6529 = vpop.permute.xlu0 %6528
    %6530 = vrot.lane.b32.xlu0 %v6489, 124
    %v6531 = vpop.permute.xlu0 %6530
    %6532 = vrot.lane.b32.xlu0 %v6490, 124
    %v6533 = vpop.permute.xlu0 %6532
    %6534 = vrot.lane.b32.xlu0 %v6491, 124
    %v6535 = vpop.permute.xlu0 %6534
    %6536 = vrot.lane.b32.xlu0 %v6492, 124
    %v6537 = vpop.permute.xlu0 %6536
    %6538 = vrot.lane.b32.xlu0 %v6493, 124
    %v6539 = vpop.permute.xlu0 %6538
    %6540 = vrot.lane.b32.xlu0 %v6494, 124
    %v6541 = vpop.permute.xlu0 %6540
    %6542 = vrot.lane.b32.xlu0 %v6495, 124
    %v6543 = vpop.permute.xlu0 %6542
    %v6560 = vadd.f32 %v6463, %v6513
    %v6561 = vadd.f32 %v6464, %v6515
    %v6562 = vadd.f32 %v6465, %v6517
    %v6563 = vadd.f32 %v6466, %v6519
    %v6564 = vadd.f32 %v6467, %v6521
    %v6565 = vadd.f32 %v6468, %v6523
    %v6566 = vadd.f32 %v6469, %v6525
    %v6567 = vadd.f32 %v6470, %v6527
    %v6568 = vadd.f32 %v6471, %v6529
    %v6569 = vadd.f32 %v6472, %v6531
    %v6570 = vadd.f32 %v6473, %v6533
    %v6571 = vadd.f32 %v6474, %v6535
    %v6572 = vadd.f32 %v6475, %v6537
    %v6573 = vadd.f32 %v6476, %v6539
    %v6574 = vadd.f32 %v6477, %v6541
    %v6575 = vadd.f32 %v6478, %v6543
    %v6576 = vstv %s730
    %v6577 = vmul.f32 %v6576, %v763
    %v6578 = vmul.f32 %v6576, %v764
    %v6579 = vmul.f32 %v6576, %v765
    %v6580 = vmul.f32 %v6576, %v766
    %v6581 = vmul.f32 %v6576, %v767
    %v6582 = vmul.f32 %v6576, %v768
    %v6583 = vmul.f32 %v6576, %v769
    %v6584 = vmul.f32 %v6576, %v770
    %v6585 = vmul.f32 %v6576, %v771
    %v6586 = vmul.f32 %v6576, %v772
    %v6587 = vmul.f32 %v6576, %v773
    %v6588 = vmul.f32 %v6576, %v774
    %v6589 = vmul.f32 %v6576, %v775
    %v6590 = vmul.f32 %v6576, %v776
    %v6591 = vmul.f32 %v6576, %v777
    %v6592 = vmul.f32 %v6576, %v778
    %6609 = vrot.lane.b32.xlu0 %v6577, 124
    %v6610 = vpop.permute.xlu0 %6609
    %6611 = vrot.lane.b32.xlu0 %v6578, 124
    %v6612 = vpop.permute.xlu0 %6611
    %6613 = vrot.lane.b32.xlu0 %v6579, 124
    %v6614 = vpop.permute.xlu0 %6613
    %6615 = vrot.lane.b32.xlu0 %v6580, 124
    %v6616 = vpop.permute.xlu0 %6615
    %6617 = vrot.lane.b32.xlu0 %v6581, 124
    %v6618 = vpop.permute.xlu0 %6617
    %6619 = vrot.lane.b32.xlu0 %v6582, 124
    %v6620 = vpop.permute.xlu0 %6619
    %6621 = vrot.lane.b32.xlu0 %v6583, 124
    %v6622 = vpop.permute.xlu0 %6621
    %6623 = vrot.lane.b32.xlu0 %v6584, 124
    %v6624 = vpop.permute.xlu0 %6623
    %6625 = vrot.lane.b32.xlu0 %v6585, 124
    %v6626 = vpop.permute.xlu0 %6625
    %6627 = vrot.lane.b32.xlu0 %v6586, 124
    %v6628 = vpop.permute.xlu0 %6627
    %6629 = vrot.lane.b32.xlu0 %v6587, 124
    %v6630 = vpop.permute.xlu0 %6629
    %6631 = vrot.lane.b32.xlu0 %v6588, 124
    %v6632 = vpop.permute.xlu0 %6631
    %6633 = vrot.lane.b32.xlu0 %v6589, 124
    %v6634 = vpop.permute.xlu0 %6633
    %6635 = vrot.lane.b32.xlu0 %v6590, 124
    %v6636 = vpop.permute.xlu0 %6635
    %6637 = vrot.lane.b32.xlu0 %v6591, 124
    %v6638 = vpop.permute.xlu0 %6637
    %6639 = vrot.lane.b32.xlu0 %v6592, 124
    %v6640 = vpop.permute.xlu0 %6639
    %v6657 = vadd.f32 %v6560, %v6610
    %v6658 = vadd.f32 %v6561, %v6612
    %v6659 = vadd.f32 %v6562, %v6614
    %v6660 = vadd.f32 %v6563, %v6616
    %v6661 = vadd.f32 %v6564, %v6618
    %v6662 = vadd.f32 %v6565, %v6620
    %v6663 = vadd.f32 %v6566, %v6622
    %v6664 = vadd.f32 %v6567, %v6624
    %v6665 = vadd.f32 %v6568, %v6626
    %v6666 = vadd.f32 %v6569, %v6628
    %v6667 = vadd.f32 %v6570, %v6630
    %v6668 = vadd.f32 %v6571, %v6632
    %v6669 = vadd.f32 %v6572, %v6634
    %v6670 = vadd.f32 %v6573, %v6636
    %v6671 = vadd.f32 %v6574, %v6638
    %v6672 = vadd.f32 %v6575, %v6640
    %v6673 = vstv %s640
    %v6674 = vmul.f32 %v6673, %v735
    %v6675 = vmul.f32 %v6673, %v736
    %v6676 = vmul.f32 %v6673, %v737
    %v6677 = vmul.f32 %v6673, %v738
    %v6678 = vmul.f32 %v6673, %v739
    %v6679 = vmul.f32 %v6673, %v740
    %v6680 = vmul.f32 %v6673, %v741
    %v6681 = vmul.f32 %v6673, %v742
    %v6682 = vmul.f32 %v6673, %v743
    %v6683 = vmul.f32 %v6673, %v744
    %v6684 = vmul.f32 %v6673, %v745
    %v6685 = vmul.f32 %v6673, %v746
    %v6686 = vmul.f32 %v6673, %v747
    %v6687 = vmul.f32 %v6673, %v748
    %v6688 = vmul.f32 %v6673, %v749
    %v6689 = vmul.f32 %v6673, %v750
    %6706 = vrot.lane.b32.xlu0 %v6674, 123
    %v6707 = vpop.permute.xlu0 %6706
    %6708 = vrot.lane.b32.xlu0 %v6675, 123
    %v6709 = vpop.permute.xlu0 %6708
    %6710 = vrot.lane.b32.xlu0 %v6676, 123
    %v6711 = vpop.permute.xlu0 %6710
    %6712 = vrot.lane.b32.xlu0 %v6677, 123
    %v6713 = vpop.permute.xlu0 %6712
    %6714 = vrot.lane.b32.xlu0 %v6678, 123
    %v6715 = vpop.permute.xlu0 %6714
    %6716 = vrot.lane.b32.xlu0 %v6679, 123
    %v6717 = vpop.permute.xlu0 %6716
    %6718 = vrot.lane.b32.xlu0 %v6680, 123
    %v6719 = vpop.permute.xlu0 %6718
    %6720 = vrot.lane.b32.xlu0 %v6681, 123
    %v6721 = vpop.permute.xlu0 %6720
    %6722 = vrot.lane.b32.xlu0 %v6682, 123
    %v6723 = vpop.permute.xlu0 %6722
    %6724 = vrot.lane.b32.xlu0 %v6683, 123
    %v6725 = vpop.permute.xlu0 %6724
    %6726 = vrot.lane.b32.xlu0 %v6684, 123
    %v6727 = vpop.permute.xlu0 %6726
    %6728 = vrot.lane.b32.xlu0 %v6685, 123
    %v6729 = vpop.permute.xlu0 %6728
    %6730 = vrot.lane.b32.xlu0 %v6686, 123
    %v6731 = vpop.permute.xlu0 %6730
    %6732 = vrot.lane.b32.xlu0 %v6687, 123
    %v6733 = vpop.permute.xlu0 %6732
    %6734 = vrot.lane.b32.xlu0 %v6688, 123
    %v6735 = vpop.permute.xlu0 %6734
    %6736 = vrot.lane.b32.xlu0 %v6689, 123
    %v6737 = vpop.permute.xlu0 %6736
    %v6754 = vadd.f32 %v6657, %v6707
    %v6755 = vadd.f32 %v6658, %v6709
    %v6756 = vadd.f32 %v6659, %v6711
    %v6757 = vadd.f32 %v6660, %v6713
    %v6758 = vadd.f32 %v6661, %v6715
    %v6759 = vadd.f32 %v6662, %v6717
    %v6760 = vadd.f32 %v6663, %v6719
    %v6761 = vadd.f32 %v6664, %v6721
    %v6762 = vadd.f32 %v6665, %v6723
    %v6763 = vadd.f32 %v6666, %v6725
    %v6764 = vadd.f32 %v6667, %v6727
    %v6765 = vadd.f32 %v6668, %v6729
    %v6766 = vadd.f32 %v6669, %v6731
    %v6767 = vadd.f32 %v6670, %v6733
    %v6768 = vadd.f32 %v6671, %v6735
    %v6769 = vadd.f32 %v6672, %v6737
    %v6770 = vstv %s689
    %v6771 = vmul.f32 %v6770, %v757
    %v6772 = vmul.f32 %v6770, %v758
    %v6773 = vmul.f32 %v6770, %v759
    %v6774 = vmul.f32 %v6770, %v760
    %v6775 = vmul.f32 %v6770, %v761
    %v6776 = vmul.f32 %v6770, %v762
    %v6777 = vmul.f32 %v6770, %v763
    %v6778 = vmul.f32 %v6770, %v764
    %v6779 = vmul.f32 %v6770, %v765
    %v6780 = vmul.f32 %v6770, %v766
    %v6781 = vmul.f32 %v6770, %v767
    %v6782 = vmul.f32 %v6770, %v768
    %v6783 = vmul.f32 %v6770, %v769
    %v6784 = vmul.f32 %v6770, %v770
    %v6785 = vmul.f32 %v6770, %v771
    %v6786 = vmul.f32 %v6770, %v772
    %6803 = vrot.lane.b32.xlu0 %v6771, 123
    %v6804 = vpop.permute.xlu0 %6803
    %6805 = vrot.lane.b32.xlu0 %v6772, 123
    %v6806 = vpop.permute.xlu0 %6805
    %6807 = vrot.lane.b32.xlu0 %v6773, 123
    %v6808 = vpop.permute.xlu0 %6807
    %6809 = vrot.lane.b32.xlu0 %v6774, 123
    %v6810 = vpop.permute.xlu0 %6809
    %6811 = vrot.lane.b32.xlu0 %v6775, 123
    %v6812 = vpop.permute.xlu0 %6811
    %6813 = vrot.lane.b32.xlu0 %v6776, 123
    %v6814 = vpop.permute.xlu0 %6813
    %6815 = vrot.lane.b32.xlu0 %v6777, 123
    %v6816 = vpop.permute.xlu0 %6815
    %6817 = vrot.lane.b32.xlu0 %v6778, 123
    %v6818 = vpop.permute.xlu0 %6817
    %6819 = vrot.lane.b32.xlu0 %v6779, 123
    %v6820 = vpop.permute.xlu0 %6819
    %6821 = vrot.lane.b32.xlu0 %v6780, 123
    %v6822 = vpop.permute.xlu0 %6821
    %6823 = vrot.lane.b32.xlu0 %v6781, 123
    %v6824 = vpop.permute.xlu0 %6823
    %6825 = vrot.lane.b32.xlu0 %v6782, 123
    %v6826 = vpop.permute.xlu0 %6825
    %6827 = vrot.lane.b32.xlu0 %v6783, 123
    %v6828 = vpop.permute.xlu0 %6827
    %6829 = vrot.lane.b32.xlu0 %v6784, 123
    %v6830 = vpop.permute.xlu0 %6829
    %6831 = vrot.lane.b32.xlu0 %v6785, 123
    %v6832 = vpop.permute.xlu0 %6831
    %6833 = vrot.lane.b32.xlu0 %v6786, 123
    %v6834 = vpop.permute.xlu0 %6833
    %v6851 = vadd.f32 %v6754, %v6804
    %v6852 = vadd.f32 %v6755, %v6806
    %v6853 = vadd.f32 %v6756, %v6808
    %v6854 = vadd.f32 %v6757, %v6810
    %v6855 = vadd.f32 %v6758, %v6812
    %v6856 = vadd.f32 %v6759, %v6814
    %v6857 = vadd.f32 %v6760, %v6816
    %v6858 = vadd.f32 %v6761, %v6818
    %v6859 = vadd.f32 %v6762, %v6820
    %v6860 = vadd.f32 %v6763, %v6822
    %v6861 = vadd.f32 %v6764, %v6824
    %v6862 = vadd.f32 %v6765, %v6826
    %v6863 = vadd.f32 %v6766, %v6828
    %v6864 = vadd.f32 %v6767, %v6830
    %v6865 = vadd.f32 %v6768, %v6832
    %v6866 = vadd.f32 %v6769, %v6834
    %v6867 = vstv %s647
    %v6868 = vmul.f32 %v6867, %v736
    %v6869 = vmul.f32 %v6867, %v737
    %v6870 = vmul.f32 %v6867, %v738
    %v6871 = vmul.f32 %v6867, %v739
    %v6872 = vmul.f32 %v6867, %v740
    %v6873 = vmul.f32 %v6867, %v741
    %v6874 = vmul.f32 %v6867, %v742
    %v6875 = vmul.f32 %v6867, %v743
    %v6876 = vmul.f32 %v6867, %v744
    %v6877 = vmul.f32 %v6867, %v745
    %v6878 = vmul.f32 %v6867, %v746
    %v6879 = vmul.f32 %v6867, %v747
    %v6880 = vmul.f32 %v6867, %v748
    %v6881 = vmul.f32 %v6867, %v749
    %v6882 = vmul.f32 %v6867, %v750
    %v6883 = vmul.f32 %v6867, %v751
    %6900 = vrot.lane.b32.xlu0 %v6868, 123
    %v6901 = vpop.permute.xlu0 %6900
    %6902 = vrot.lane.b32.xlu0 %v6869, 123
    %v6903 = vpop.permute.xlu0 %6902
    %6904 = vrot.lane.b32.xlu0 %v6870, 123
    %v6905 = vpop.permute.xlu0 %6904
    %6906 = vrot.lane.b32.xlu0 %v6871, 123
    %v6907 = vpop.permute.xlu0 %6906
    %6908 = vrot.lane.b32.xlu0 %v6872, 123
    %v6909 = vpop.permute.xlu0 %6908
    %6910 = vrot.lane.b32.xlu0 %v6873, 123
    %v6911 = vpop.permute.xlu0 %6910
    %6912 = vrot.lane.b32.xlu0 %v6874, 123
    %v6913 = vpop.permute.xlu0 %6912
    %6914 = vrot.lane.b32.xlu0 %v6875, 123
    %v6915 = vpop.permute.xlu0 %6914
    %6916 = vrot.lane.b32.xlu0 %v6876, 123
    %v6917 = vpop.permute.xlu0 %6916
    %6918 = vrot.lane.b32.xlu0 %v6877, 123
    %v6919 = vpop.permute.xlu0 %6918
    %6920 = vrot.lane.b32.xlu0 %v6878, 123
    %v6921 = vpop.permute.xlu0 %6920
    %6922 = vrot.lane.b32.xlu0 %v6879, 123
    %v6923 = vpop.permute.xlu0 %6922
    %6924 = vrot.lane.b32.xlu0 %v6880, 123
    %v6925 = vpop.permute.xlu0 %6924
    %6926 = vrot.lane.b32.xlu0 %v6881, 123
    %v6927 = vpop.permute.xlu0 %6926
    %6928 = vrot.lane.b32.xlu0 %v6882, 123
    %v6929 = vpop.permute.xlu0 %6928
    %6930 = vrot.lane.b32.xlu0 %v6883, 123
    %v6931 = vpop.permute.xlu0 %6930
    %v6948 = vadd.f32 %v6851, %v6901
    %v6949 = vadd.f32 %v6852, %v6903
    %v6950 = vadd.f32 %v6853, %v6905
    %v6951 = vadd.f32 %v6854, %v6907
    %v6952 = vadd.f32 %v6855, %v6909
    %v6953 = vadd.f32 %v6856, %v6911
    %v6954 = vadd.f32 %v6857, %v6913
    %v6955 = vadd.f32 %v6858, %v6915
    %v6956 = vadd.f32 %v6859, %v6917
    %v6957 = vadd.f32 %v6860, %v6919
    %v6958 = vadd.f32 %v6861, %v6921
    %v6959 = vadd.f32 %v6862, %v6923
    %v6960 = vadd.f32 %v6863, %v6925
    %v6961 = vadd.f32 %v6864, %v6927
    %v6962 = vadd.f32 %v6865, %v6929
    %v6963 = vadd.f32 %v6866, %v6931
    %v6964 = vstv %s696
    %v6965 = vmul.f32 %v6964, %v758
    %v6966 = vmul.f32 %v6964, %v759
    %v6967 = vmul.f32 %v6964, %v760
    %v6968 = vmul.f32 %v6964, %v761
    %v6969 = vmul.f32 %v6964, %v762
    %v6970 = vmul.f32 %v6964, %v763
    %v6971 = vmul.f32 %v6964, %v764
    %v6972 = vmul.f32 %v6964, %v765
    %v6973 = vmul.f32 %v6964, %v766
    %v6974 = vmul.f32 %v6964, %v767
    %v6975 = vmul.f32 %v6964, %v768
    %v6976 = vmul.f32 %v6964, %v769
    %v6977 = vmul.f32 %v6964, %v770
    %v6978 = vmul.f32 %v6964, %v771
    %v6979 = vmul.f32 %v6964, %v772
    %v6980 = vmul.f32 %v6964, %v773
    %6997 = vrot.lane.b32.xlu0 %v6965, 123
    %v6998 = vpop.permute.xlu0 %6997
    %6999 = vrot.lane.b32.xlu0 %v6966, 123
    %v7000 = vpop.permute.xlu0 %6999
    %7001 = vrot.lane.b32.xlu0 %v6967, 123
    %v7002 = vpop.permute.xlu0 %7001
    %7003 = vrot.lane.b32.xlu0 %v6968, 123
    %v7004 = vpop.permute.xlu0 %7003
    %7005 = vrot.lane.b32.xlu0 %v6969, 123
    %v7006 = vpop.permute.xlu0 %7005
    %7007 = vrot.lane.b32.xlu0 %v6970, 123
    %v7008 = vpop.permute.xlu0 %7007
    %7009 = vrot.lane.b32.xlu0 %v6971, 123
    %v7010 = vpop.permute.xlu0 %7009
    %7011 = vrot.lane.b32.xlu0 %v6972, 123
    %v7012 = vpop.permute.xlu0 %7011
    %7013 = vrot.lane.b32.xlu0 %v6973, 123
    %v7014 = vpop.permute.xlu0 %7013
    %7015 = vrot.lane.b32.xlu0 %v6974, 123
    %v7016 = vpop.permute.xlu0 %7015
    %7017 = vrot.lane.b32.xlu0 %v6975, 123
    %v7018 = vpop.permute.xlu0 %7017
    %7019 = vrot.lane.b32.xlu0 %v6976, 123
    %v7020 = vpop.permute.xlu0 %7019
    %7021 = vrot.lane.b32.xlu0 %v6977, 123
    %v7022 = vpop.permute.xlu0 %7021
    %7023 = vrot.lane.b32.xlu0 %v6978, 123
    %v7024 = vpop.permute.xlu0 %7023
    %7025 = vrot.lane.b32.xlu0 %v6979, 123
    %v7026 = vpop.permute.xlu0 %7025
    %7027 = vrot.lane.b32.xlu0 %v6980, 123
    %v7028 = vpop.permute.xlu0 %7027
    %v7045 = vadd.f32 %v6948, %v6998
    %v7046 = vadd.f32 %v6949, %v7000
    %v7047 = vadd.f32 %v6950, %v7002
    %v7048 = vadd.f32 %v6951, %v7004
    %v7049 = vadd.f32 %v6952, %v7006
    %v7050 = vadd.f32 %v6953, %v7008
    %v7051 = vadd.f32 %v6954, %v7010
    %v7052 = vadd.f32 %v6955, %v7012
    %v7053 = vadd.f32 %v6956, %v7014
    %v7054 = vadd.f32 %v6957, %v7016
    %v7055 = vadd.f32 %v6958, %v7018
    %v7056 = vadd.f32 %v6959, %v7020
    %v7057 = vadd.f32 %v6960, %v7022
    %v7058 = vadd.f32 %v6961, %v7024
    %v7059 = vadd.f32 %v6962, %v7026
    %v7060 = vadd.f32 %v6963, %v7028
    %v7061 = vstv %s654
    %v7062 = vmul.f32 %v7061, %v737
    %v7063 = vmul.f32 %v7061, %v738
    %v7064 = vmul.f32 %v7061, %v739
    %v7065 = vmul.f32 %v7061, %v740
    %v7066 = vmul.f32 %v7061, %v741
    %v7067 = vmul.f32 %v7061, %v742
    %v7068 = vmul.f32 %v7061, %v743
    %v7069 = vmul.f32 %v7061, %v744
    %v7070 = vmul.f32 %v7061, %v745
    %v7071 = vmul.f32 %v7061, %v746
    %v7072 = vmul.f32 %v7061, %v747
    %v7073 = vmul.f32 %v7061, %v748
    %v7074 = vmul.f32 %v7061, %v749
    %v7075 = vmul.f32 %v7061, %v750
    %v7076 = vmul.f32 %v7061, %v751
    %v7077 = vmul.f32 %v7061, %v752
    %7094 = vrot.lane.b32.xlu0 %v7062, 123
    %v7095 = vpop.permute.xlu0 %7094
    %7096 = vrot.lane.b32.xlu0 %v7063, 123
    %v7097 = vpop.permute.xlu0 %7096
    %7098 = vrot.lane.b32.xlu0 %v7064, 123
    %v7099 = vpop.permute.xlu0 %7098
    %7100 = vrot.lane.b32.xlu0 %v7065, 123
    %v7101 = vpop.permute.xlu0 %7100
    %7102 = vrot.lane.b32.xlu0 %v7066, 123
    %v7103 = vpop.permute.xlu0 %7102
    %7104 = vrot.lane.b32.xlu0 %v7067, 123
    %v7105 = vpop.permute.xlu0 %7104
    %7106 = vrot.lane.b32.xlu0 %v7068, 123
    %v7107 = vpop.permute.xlu0 %7106
    %7108 = vrot.lane.b32.xlu0 %v7069, 123
    %v7109 = vpop.permute.xlu0 %7108
    %7110 = vrot.lane.b32.xlu0 %v7070, 123
    %v7111 = vpop.permute.xlu0 %7110
    %7112 = vrot.lane.b32.xlu0 %v7071, 123
    %v7113 = vpop.permute.xlu0 %7112
    %7114 = vrot.lane.b32.xlu0 %v7072, 123
    %v7115 = vpop.permute.xlu0 %7114
    %7116 = vrot.lane.b32.xlu0 %v7073, 123
    %v7117 = vpop.permute.xlu0 %7116
    %7118 = vrot.lane.b32.xlu0 %v7074, 123
    %v7119 = vpop.permute.xlu0 %7118
    %7120 = vrot.lane.b32.xlu0 %v7075, 123
    %v7121 = vpop.permute.xlu0 %7120
    %7122 = vrot.lane.b32.xlu0 %v7076, 123
    %v7123 = vpop.permute.xlu0 %7122
    %7124 = vrot.lane.b32.xlu0 %v7077, 123
    %v7125 = vpop.permute.xlu0 %7124
    %v7142 = vadd.f32 %v7045, %v7095
    %v7143 = vadd.f32 %v7046, %v7097
    %v7144 = vadd.f32 %v7047, %v7099
    %v7145 = vadd.f32 %v7048, %v7101
    %v7146 = vadd.f32 %v7049, %v7103
    %v7147 = vadd.f32 %v7050, %v7105
    %v7148 = vadd.f32 %v7051, %v7107
    %v7149 = vadd.f32 %v7052, %v7109
    %v7150 = vadd.f32 %v7053, %v7111
    %v7151 = vadd.f32 %v7054, %v7113
    %v7152 = vadd.f32 %v7055, %v7115
    %v7153 = vadd.f32 %v7056, %v7117
    %v7154 = vadd.f32 %v7057, %v7119
    %v7155 = vadd.f32 %v7058, %v7121
    %v7156 = vadd.f32 %v7059, %v7123
    %v7157 = vadd.f32 %v7060, %v7125
    %v7158 = vstv %s703
    %v7159 = vmul.f32 %v7158, %v759
    %v7160 = vmul.f32 %v7158, %v760
    %v7161 = vmul.f32 %v7158, %v761
    %v7162 = vmul.f32 %v7158, %v762
    %v7163 = vmul.f32 %v7158, %v763
    %v7164 = vmul.f32 %v7158, %v764
    %v7165 = vmul.f32 %v7158, %v765
    %v7166 = vmul.f32 %v7158, %v766
    %v7167 = vmul.f32 %v7158, %v767
    %v7168 = vmul.f32 %v7158, %v768
    %v7169 = vmul.f32 %v7158, %v769
    %v7170 = vmul.f32 %v7158, %v770
    %v7171 = vmul.f32 %v7158, %v771
    %v7172 = vmul.f32 %v7158, %v772
    %v7173 = vmul.f32 %v7158, %v773
    %v7174 = vmul.f32 %v7158, %v774
    %7191 = vrot.lane.b32.xlu0 %v7159, 123
    %v7192 = vpop.permute.xlu0 %7191
    %7193 = vrot.lane.b32.xlu0 %v7160, 123
    %v7194 = vpop.permute.xlu0 %7193
    %7195 = vrot.lane.b32.xlu0 %v7161, 123
    %v7196 = vpop.permute.xlu0 %7195
    %7197 = vrot.lane.b32.xlu0 %v7162, 123
    %v7198 = vpop.permute.xlu0 %7197
    %7199 = vrot.lane.b32.xlu0 %v7163, 123
    %v7200 = vpop.permute.xlu0 %7199
    %7201 = vrot.lane.b32.xlu0 %v7164, 123
    %v7202 = vpop.permute.xlu0 %7201
    %7203 = vrot.lane.b32.xlu0 %v7165, 123
    %v7204 = vpop.permute.xlu0 %7203
    %7205 = vrot.lane.b32.xlu0 %v7166, 123
    %v7206 = vpop.permute.xlu0 %7205
    %7207 = vrot.lane.b32.xlu0 %v7167, 123
    %v7208 = vpop.permute.xlu0 %7207
    %7209 = vrot.lane.b32.xlu0 %v7168, 123
    %v7210 = vpop.permute.xlu0 %7209
    %7211 = vrot.lane.b32.xlu0 %v7169, 123
    %v7212 = vpop.permute.xlu0 %7211
    %7213 = vrot.lane.b32.xlu0 %v7170, 123
    %v7214 = vpop.permute.xlu0 %7213
    %7215 = vrot.lane.b32.xlu0 %v7171, 123
    %v7216 = vpop.permute.xlu0 %7215
    %7217 = vrot.lane.b32.xlu0 %v7172, 123
    %v7218 = vpop.permute.xlu0 %7217
    %7219 = vrot.lane.b32.xlu0 %v7173, 123
    %v7220 = vpop.permute.xlu0 %7219
    %7221 = vrot.lane.b32.xlu0 %v7174, 123
    %v7222 = vpop.permute.xlu0 %7221
    %v7239 = vadd.f32 %v7142, %v7192
    %v7240 = vadd.f32 %v7143, %v7194
    %v7241 = vadd.f32 %v7144, %v7196
    %v7242 = vadd.f32 %v7145, %v7198
    %v7243 = vadd.f32 %v7146, %v7200
    %v7244 = vadd.f32 %v7147, %v7202
    %v7245 = vadd.f32 %v7148, %v7204
    %v7246 = vadd.f32 %v7149, %v7206
    %v7247 = vadd.f32 %v7150, %v7208
    %v7248 = vadd.f32 %v7151, %v7210
    %v7249 = vadd.f32 %v7152, %v7212
    %v7250 = vadd.f32 %v7153, %v7214
    %v7251 = vadd.f32 %v7154, %v7216
    %v7252 = vadd.f32 %v7155, %v7218
    %v7253 = vadd.f32 %v7156, %v7220
    %v7254 = vadd.f32 %v7157, %v7222
    %v7255 = vstv %s661
    %v7256 = vmul.f32 %v7255, %v738
    %v7257 = vmul.f32 %v7255, %v739
    %v7258 = vmul.f32 %v7255, %v740
    %v7259 = vmul.f32 %v7255, %v741
    %v7260 = vmul.f32 %v7255, %v742
    %v7261 = vmul.f32 %v7255, %v743
    %v7262 = vmul.f32 %v7255, %v744
    %v7263 = vmul.f32 %v7255, %v745
    %v7264 = vmul.f32 %v7255, %v746
    %v7265 = vmul.f32 %v7255, %v747
    %v7266 = vmul.f32 %v7255, %v748
    %v7267 = vmul.f32 %v7255, %v749
    %v7268 = vmul.f32 %v7255, %v750
    %v7269 = vmul.f32 %v7255, %v751
    %v7270 = vmul.f32 %v7255, %v752
    %v7271 = vmul.f32 %v7255, %v753
    %7288 = vrot.lane.b32.xlu0 %v7256, 123
    %v7289 = vpop.permute.xlu0 %7288
    %7290 = vrot.lane.b32.xlu0 %v7257, 123
    %v7291 = vpop.permute.xlu0 %7290
    %7292 = vrot.lane.b32.xlu0 %v7258, 123
    %v7293 = vpop.permute.xlu0 %7292
    %7294 = vrot.lane.b32.xlu0 %v7259, 123
    %v7295 = vpop.permute.xlu0 %7294
    %7296 = vrot.lane.b32.xlu0 %v7260, 123
    %v7297 = vpop.permute.xlu0 %7296
    %7298 = vrot.lane.b32.xlu0 %v7261, 123
    %v7299 = vpop.permute.xlu0 %7298
    %7300 = vrot.lane.b32.xlu0 %v7262, 123
    %v7301 = vpop.permute.xlu0 %7300
    %7302 = vrot.lane.b32.xlu0 %v7263, 123
    %v7303 = vpop.permute.xlu0 %7302
    %7304 = vrot.lane.b32.xlu0 %v7264, 123
    %v7305 = vpop.permute.xlu0 %7304
    %7306 = vrot.lane.b32.xlu0 %v7265, 123
    %v7307 = vpop.permute.xlu0 %7306
    %7308 = vrot.lane.b32.xlu0 %v7266, 123
    %v7309 = vpop.permute.xlu0 %7308
    %7310 = vrot.lane.b32.xlu0 %v7267, 123
    %v7311 = vpop.permute.xlu0 %7310
    %7312 = vrot.lane.b32.xlu0 %v7268, 123
    %v7313 = vpop.permute.xlu0 %7312
    %7314 = vrot.lane.b32.xlu0 %v7269, 123
    %v7315 = vpop.permute.xlu0 %7314
    %7316 = vrot.lane.b32.xlu0 %v7270, 123
    %v7317 = vpop.permute.xlu0 %7316
    %7318 = vrot.lane.b32.xlu0 %v7271, 123
    %v7319 = vpop.permute.xlu0 %7318
    %v7336 = vadd.f32 %v7239, %v7289
    %v7337 = vadd.f32 %v7240, %v7291
    %v7338 = vadd.f32 %v7241, %v7293
    %v7339 = vadd.f32 %v7242, %v7295
    %v7340 = vadd.f32 %v7243, %v7297
    %v7341 = vadd.f32 %v7244, %v7299
    %v7342 = vadd.f32 %v7245, %v7301
    %v7343 = vadd.f32 %v7246, %v7303
    %v7344 = vadd.f32 %v7247, %v7305
    %v7345 = vadd.f32 %v7248, %v7307
    %v7346 = vadd.f32 %v7249, %v7309
    %v7347 = vadd.f32 %v7250, %v7311
    %v7348 = vadd.f32 %v7251, %v7313
    %v7349 = vadd.f32 %v7252, %v7315
    %v7350 = vadd.f32 %v7253, %v7317
    %v7351 = vadd.f32 %v7254, %v7319
    %v7352 = vstv %s710
    %v7353 = vmul.f32 %v7352, %v760
    %v7354 = vmul.f32 %v7352, %v761
    %v7355 = vmul.f32 %v7352, %v762
    %v7356 = vmul.f32 %v7352, %v763
    %v7357 = vmul.f32 %v7352, %v764
    %v7358 = vmul.f32 %v7352, %v765
    %v7359 = vmul.f32 %v7352, %v766
    %v7360 = vmul.f32 %v7352, %v767
    %v7361 = vmul.f32 %v7352, %v768
    %v7362 = vmul.f32 %v7352, %v769
    %v7363 = vmul.f32 %v7352, %v770
    %v7364 = vmul.f32 %v7352, %v771
    %v7365 = vmul.f32 %v7352, %v772
    %v7366 = vmul.f32 %v7352, %v773
    %v7367 = vmul.f32 %v7352, %v774
    %v7368 = vmul.f32 %v7352, %v775
    %7385 = vrot.lane.b32.xlu0 %v7353, 123
    %v7386 = vpop.permute.xlu0 %7385
    %7387 = vrot.lane.b32.xlu0 %v7354, 123
    %v7388 = vpop.permute.xlu0 %7387
    %7389 = vrot.lane.b32.xlu0 %v7355, 123
    %v7390 = vpop.permute.xlu0 %7389
    %7391 = vrot.lane.b32.xlu0 %v7356, 123
    %v7392 = vpop.permute.xlu0 %7391
    %7393 = vrot.lane.b32.xlu0 %v7357, 123
    %v7394 = vpop.permute.xlu0 %7393
    %7395 = vrot.lane.b32.xlu0 %v7358, 123
    %v7396 = vpop.permute.xlu0 %7395
    %7397 = vrot.lane.b32.xlu0 %v7359, 123
    %v7398 = vpop.permute.xlu0 %7397
    %7399 = vrot.lane.b32.xlu0 %v7360, 123
    %v7400 = vpop.permute.xlu0 %7399
    %7401 = vrot.lane.b32.xlu0 %v7361, 123
    %v7402 = vpop.permute.xlu0 %7401
    %7403 = vrot.lane.b32.xlu0 %v7362, 123
    %v7404 = vpop.permute.xlu0 %7403
    %7405 = vrot.lane.b32.xlu0 %v7363, 123
    %v7406 = vpop.permute.xlu0 %7405
    %7407 = vrot.lane.b32.xlu0 %v7364, 123
    %v7408 = vpop.permute.xlu0 %7407
    %7409 = vrot.lane.b32.xlu0 %v7365, 123
    %v7410 = vpop.permute.xlu0 %7409
    %7411 = vrot.lane.b32.xlu0 %v7366, 123
    %v7412 = vpop.permute.xlu0 %7411
    %7413 = vrot.lane.b32.xlu0 %v7367, 123
    %v7414 = vpop.permute.xlu0 %7413
    %7415 = vrot.lane.b32.xlu0 %v7368, 123
    %v7416 = vpop.permute.xlu0 %7415
    %v7433 = vadd.f32 %v7336, %v7386
    %v7434 = vadd.f32 %v7337, %v7388
    %v7435 = vadd.f32 %v7338, %v7390
    %v7436 = vadd.f32 %v7339, %v7392
    %v7437 = vadd.f32 %v7340, %v7394
    %v7438 = vadd.f32 %v7341, %v7396
    %v7439 = vadd.f32 %v7342, %v7398
    %v7440 = vadd.f32 %v7343, %v7400
    %v7441 = vadd.f32 %v7344, %v7402
    %v7442 = vadd.f32 %v7345, %v7404
    %v7443 = vadd.f32 %v7346, %v7406
    %v7444 = vadd.f32 %v7347, %v7408
    %v7445 = vadd.f32 %v7348, %v7410
    %v7446 = vadd.f32 %v7349, %v7412
    %v7447 = vadd.f32 %v7350, %v7414
    %v7448 = vadd.f32 %v7351, %v7416
    %v7449 = vstv %s668
    %v7450 = vmul.f32 %v7449, %v739
    %v7451 = vmul.f32 %v7449, %v740
    %v7452 = vmul.f32 %v7449, %v741
    %v7453 = vmul.f32 %v7449, %v742
    %v7454 = vmul.f32 %v7449, %v743
    %v7455 = vmul.f32 %v7449, %v744
    %v7456 = vmul.f32 %v7449, %v745
    %v7457 = vmul.f32 %v7449, %v746
    %v7458 = vmul.f32 %v7449, %v747
    %v7459 = vmul.f32 %v7449, %v748
    %v7460 = vmul.f32 %v7449, %v749
    %v7461 = vmul.f32 %v7449, %v750
    %v7462 = vmul.f32 %v7449, %v751
    %v7463 = vmul.f32 %v7449, %v752
    %v7464 = vmul.f32 %v7449, %v753
    %v7465 = vmul.f32 %v7449, %v754
    %7482 = vrot.lane.b32.xlu0 %v7450, 123
    %v7483 = vpop.permute.xlu0 %7482
    %7484 = vrot.lane.b32.xlu0 %v7451, 123
    %v7485 = vpop.permute.xlu0 %7484
    %7486 = vrot.lane.b32.xlu0 %v7452, 123
    %v7487 = vpop.permute.xlu0 %7486
    %7488 = vrot.lane.b32.xlu0 %v7453, 123
    %v7489 = vpop.permute.xlu0 %7488
    %7490 = vrot.lane.b32.xlu0 %v7454, 123
    %v7491 = vpop.permute.xlu0 %7490
    %7492 = vrot.lane.b32.xlu0 %v7455, 123
    %v7493 = vpop.permute.xlu0 %7492
    %7494 = vrot.lane.b32.xlu0 %v7456, 123
    %v7495 = vpop.permute.xlu0 %7494
    %7496 = vrot.lane.b32.xlu0 %v7457, 123
    %v7497 = vpop.permute.xlu0 %7496
    %7498 = vrot.lane.b32.xlu0 %v7458, 123
    %v7499 = vpop.permute.xlu0 %7498
    %7500 = vrot.lane.b32.xlu0 %v7459, 123
    %v7501 = vpop.permute.xlu0 %7500
    %7502 = vrot.lane.b32.xlu0 %v7460, 123
    %v7503 = vpop.permute.xlu0 %7502
    %7504 = vrot.lane.b32.xlu0 %v7461, 123
    %v7505 = vpop.permute.xlu0 %7504
    %7506 = vrot.lane.b32.xlu0 %v7462, 123
    %v7507 = vpop.permute.xlu0 %7506
    %7508 = vrot.lane.b32.xlu0 %v7463, 123
    %v7509 = vpop.permute.xlu0 %7508
    %7510 = vrot.lane.b32.xlu0 %v7464, 123
    %v7511 = vpop.permute.xlu0 %7510
    %7512 = vrot.lane.b32.xlu0 %v7465, 123
    %v7513 = vpop.permute.xlu0 %7512
    %v7530 = vadd.f32 %v7433, %v7483
    %v7531 = vadd.f32 %v7434, %v7485
    %v7532 = vadd.f32 %v7435, %v7487
    %v7533 = vadd.f32 %v7436, %v7489
    %v7534 = vadd.f32 %v7437, %v7491
    %v7535 = vadd.f32 %v7438, %v7493
    %v7536 = vadd.f32 %v7439, %v7495
    %v7537 = vadd.f32 %v7440, %v7497
    %v7538 = vadd.f32 %v7441, %v7499
    %v7539 = vadd.f32 %v7442, %v7501
    %v7540 = vadd.f32 %v7443, %v7503
    %v7541 = vadd.f32 %v7444, %v7505
    %v7542 = vadd.f32 %v7445, %v7507
    %v7543 = vadd.f32 %v7446, %v7509
    %v7544 = vadd.f32 %v7447, %v7511
    %v7545 = vadd.f32 %v7448, %v7513
    %v7546 = vstv %s717
    %v7547 = vmul.f32 %v7546, %v761
    %v7548 = vmul.f32 %v7546, %v762
    %v7549 = vmul.f32 %v7546, %v763
    %v7550 = vmul.f32 %v7546, %v764
    %v7551 = vmul.f32 %v7546, %v765
    %v7552 = vmul.f32 %v7546, %v766
    %v7553 = vmul.f32 %v7546, %v767
    %v7554 = vmul.f32 %v7546, %v768
    %v7555 = vmul.f32 %v7546, %v769
    %v7556 = vmul.f32 %v7546, %v770
    %v7557 = vmul.f32 %v7546, %v771
    %v7558 = vmul.f32 %v7546, %v772
    %v7559 = vmul.f32 %v7546, %v773
    %v7560 = vmul.f32 %v7546, %v774
    %v7561 = vmul.f32 %v7546, %v775
    %v7562 = vmul.f32 %v7546, %v776
    %7579 = vrot.lane.b32.xlu0 %v7547, 123
    %v7580 = vpop.permute.xlu0 %7579
    %7581 = vrot.lane.b32.xlu0 %v7548, 123
    %v7582 = vpop.permute.xlu0 %7581
    %7583 = vrot.lane.b32.xlu0 %v7549, 123
    %v7584 = vpop.permute.xlu0 %7583
    %7585 = vrot.lane.b32.xlu0 %v7550, 123
    %v7586 = vpop.permute.xlu0 %7585
    %7587 = vrot.lane.b32.xlu0 %v7551, 123
    %v7588 = vpop.permute.xlu0 %7587
    %7589 = vrot.lane.b32.xlu0 %v7552, 123
    %v7590 = vpop.permute.xlu0 %7589
    %7591 = vrot.lane.b32.xlu0 %v7553, 123
    %v7592 = vpop.permute.xlu0 %7591
    %7593 = vrot.lane.b32.xlu0 %v7554, 123
    %v7594 = vpop.permute.xlu0 %7593
    %7595 = vrot.lane.b32.xlu0 %v7555, 123
    %v7596 = vpop.permute.xlu0 %7595
    %7597 = vrot.lane.b32.xlu0 %v7556, 123
    %v7598 = vpop.permute.xlu0 %7597
    %7599 = vrot.lane.b32.xlu0 %v7557, 123
    %v7600 = vpop.permute.xlu0 %7599
    %7601 = vrot.lane.b32.xlu0 %v7558, 123
    %v7602 = vpop.permute.xlu0 %7601
    %7603 = vrot.lane.b32.xlu0 %v7559, 123
    %v7604 = vpop.permute.xlu0 %7603
    %7605 = vrot.lane.b32.xlu0 %v7560, 123
    %v7606 = vpop.permute.xlu0 %7605
    %7607 = vrot.lane.b32.xlu0 %v7561, 123
    %v7608 = vpop.permute.xlu0 %7607
    %7609 = vrot.lane.b32.xlu0 %v7562, 123
    %v7610 = vpop.permute.xlu0 %7609
    %v7627 = vadd.f32 %v7530, %v7580
    %v7628 = vadd.f32 %v7531, %v7582
    %v7629 = vadd.f32 %v7532, %v7584
    %v7630 = vadd.f32 %v7533, %v7586
    %v7631 = vadd.f32 %v7534, %v7588
    %v7632 = vadd.f32 %v7535, %v7590
    %v7633 = vadd.f32 %v7536, %v7592
    %v7634 = vadd.f32 %v7537, %v7594
    %v7635 = vadd.f32 %v7538, %v7596
    %v7636 = vadd.f32 %v7539, %v7598
    %v7637 = vadd.f32 %v7540, %v7600
    %v7638 = vadd.f32 %v7541, %v7602
    %v7639 = vadd.f32 %v7542, %v7604
    %v7640 = vadd.f32 %v7543, %v7606
    %v7641 = vadd.f32 %v7544, %v7608
    %v7642 = vadd.f32 %v7545, %v7610
    %v7643 = vstv %s675
    %v7644 = vmul.f32 %v7643, %v740
    %v7645 = vmul.f32 %v7643, %v741
    %v7646 = vmul.f32 %v7643, %v742
    %v7647 = vmul.f32 %v7643, %v743
    %v7648 = vmul.f32 %v7643, %v744
    %v7649 = vmul.f32 %v7643, %v745
    %v7650 = vmul.f32 %v7643, %v746
    %v7651 = vmul.f32 %v7643, %v747
    %v7652 = vmul.f32 %v7643, %v748
    %v7653 = vmul.f32 %v7643, %v749
    %v7654 = vmul.f32 %v7643, %v750
    %v7655 = vmul.f32 %v7643, %v751
    %v7656 = vmul.f32 %v7643, %v752
    %v7657 = vmul.f32 %v7643, %v753
    %v7658 = vmul.f32 %v7643, %v754
    %v7659 = vmul.f32 %v7643, %v755
    %7676 = vrot.lane.b32.xlu0 %v7644, 123
    %v7677 = vpop.permute.xlu0 %7676
    %7678 = vrot.lane.b32.xlu0 %v7645, 123
    %v7679 = vpop.permute.xlu0 %7678
    %7680 = vrot.lane.b32.xlu0 %v7646, 123
    %v7681 = vpop.permute.xlu0 %7680
    %7682 = vrot.lane.b32.xlu0 %v7647, 123
    %v7683 = vpop.permute.xlu0 %7682
    %7684 = vrot.lane.b32.xlu0 %v7648, 123
    %v7685 = vpop.permute.xlu0 %7684
    %7686 = vrot.lane.b32.xlu0 %v7649, 123
    %v7687 = vpop.permute.xlu0 %7686
    %7688 = vrot.lane.b32.xlu0 %v7650, 123
    %v7689 = vpop.permute.xlu0 %7688
    %7690 = vrot.lane.b32.xlu0 %v7651, 123
    %v7691 = vpop.permute.xlu0 %7690
    %7692 = vrot.lane.b32.xlu0 %v7652, 123
    %v7693 = vpop.permute.xlu0 %7692
    %7694 = vrot.lane.b32.xlu0 %v7653, 123
    %v7695 = vpop.permute.xlu0 %7694
    %7696 = vrot.lane.b32.xlu0 %v7654, 123
    %v7697 = vpop.permute.xlu0 %7696
    %7698 = vrot.lane.b32.xlu0 %v7655, 123
    %v7699 = vpop.permute.xlu0 %7698
    %7700 = vrot.lane.b32.xlu0 %v7656, 123
    %v7701 = vpop.permute.xlu0 %7700
    %7702 = vrot.lane.b32.xlu0 %v7657, 123
    %v7703 = vpop.permute.xlu0 %7702
    %7704 = vrot.lane.b32.xlu0 %v7658, 123
    %v7705 = vpop.permute.xlu0 %7704
    %7706 = vrot.lane.b32.xlu0 %v7659, 123
    %v7707 = vpop.permute.xlu0 %7706
    %v7724 = vadd.f32 %v7627, %v7677
    %v7725 = vadd.f32 %v7628, %v7679
    %v7726 = vadd.f32 %v7629, %v7681
    %v7727 = vadd.f32 %v7630, %v7683
    %v7728 = vadd.f32 %v7631, %v7685
    %v7729 = vadd.f32 %v7632, %v7687
    %v7730 = vadd.f32 %v7633, %v7689
    %v7731 = vadd.f32 %v7634, %v7691
    %v7732 = vadd.f32 %v7635, %v7693
    %v7733 = vadd.f32 %v7636, %v7695
    %v7734 = vadd.f32 %v7637, %v7697
    %v7735 = vadd.f32 %v7638, %v7699
    %v7736 = vadd.f32 %v7639, %v7701
    %v7737 = vadd.f32 %v7640, %v7703
    %v7738 = vadd.f32 %v7641, %v7705
    %v7739 = vadd.f32 %v7642, %v7707
    %v7740 = vstv %s724
    %v7741 = vmul.f32 %v7740, %v762
    %v7742 = vmul.f32 %v7740, %v763
    %v7743 = vmul.f32 %v7740, %v764
    %v7744 = vmul.f32 %v7740, %v765
    %v7745 = vmul.f32 %v7740, %v766
    %v7746 = vmul.f32 %v7740, %v767
    %v7747 = vmul.f32 %v7740, %v768
    %v7748 = vmul.f32 %v7740, %v769
    %v7749 = vmul.f32 %v7740, %v770
    %v7750 = vmul.f32 %v7740, %v771
    %v7751 = vmul.f32 %v7740, %v772
    %v7752 = vmul.f32 %v7740, %v773
    %v7753 = vmul.f32 %v7740, %v774
    %v7754 = vmul.f32 %v7740, %v775
    %v7755 = vmul.f32 %v7740, %v776
    %v7756 = vmul.f32 %v7740, %v777
    %7773 = vrot.lane.b32.xlu0 %v7741, 123
    %v7774 = vpop.permute.xlu0 %7773
    %7775 = vrot.lane.b32.xlu0 %v7742, 123
    %v7776 = vpop.permute.xlu0 %7775
    %7777 = vrot.lane.b32.xlu0 %v7743, 123
    %v7778 = vpop.permute.xlu0 %7777
    %7779 = vrot.lane.b32.xlu0 %v7744, 123
    %v7780 = vpop.permute.xlu0 %7779
    %7781 = vrot.lane.b32.xlu0 %v7745, 123
    %v7782 = vpop.permute.xlu0 %7781
    %7783 = vrot.lane.b32.xlu0 %v7746, 123
    %v7784 = vpop.permute.xlu0 %7783
    %7785 = vrot.lane.b32.xlu0 %v7747, 123
    %v7786 = vpop.permute.xlu0 %7785
    %7787 = vrot.lane.b32.xlu0 %v7748, 123
    %v7788 = vpop.permute.xlu0 %7787
    %7789 = vrot.lane.b32.xlu0 %v7749, 123
    %v7790 = vpop.permute.xlu0 %7789
    %7791 = vrot.lane.b32.xlu0 %v7750, 123
    %v7792 = vpop.permute.xlu0 %7791
    %7793 = vrot.lane.b32.xlu0 %v7751, 123
    %v7794 = vpop.permute.xlu0 %7793
    %7795 = vrot.lane.b32.xlu0 %v7752, 123
    %v7796 = vpop.permute.xlu0 %7795
    %7797 = vrot.lane.b32.xlu0 %v7753, 123
    %v7798 = vpop.permute.xlu0 %7797
    %7799 = vrot.lane.b32.xlu0 %v7754, 123
    %v7800 = vpop.permute.xlu0 %7799
    %7801 = vrot.lane.b32.xlu0 %v7755, 123
    %v7802 = vpop.permute.xlu0 %7801
    %7803 = vrot.lane.b32.xlu0 %v7756, 123
    %v7804 = vpop.permute.xlu0 %7803
    %v7821 = vadd.f32 %v7724, %v7774
    %v7822 = vadd.f32 %v7725, %v7776
    %v7823 = vadd.f32 %v7726, %v7778
    %v7824 = vadd.f32 %v7727, %v7780
    %v7825 = vadd.f32 %v7728, %v7782
    %v7826 = vadd.f32 %v7729, %v7784
    %v7827 = vadd.f32 %v7730, %v7786
    %v7828 = vadd.f32 %v7731, %v7788
    %v7829 = vadd.f32 %v7732, %v7790
    %v7830 = vadd.f32 %v7733, %v7792
    %v7831 = vadd.f32 %v7734, %v7794
    %v7832 = vadd.f32 %v7735, %v7796
    %v7833 = vadd.f32 %v7736, %v7798
    %v7834 = vadd.f32 %v7737, %v7800
    %v7835 = vadd.f32 %v7738, %v7802
    %v7836 = vadd.f32 %v7739, %v7804
    %v7837 = vstv %s682
    %v7838 = vmul.f32 %v7837, %v741
    %v7839 = vmul.f32 %v7837, %v742
    %v7840 = vmul.f32 %v7837, %v743
    %v7841 = vmul.f32 %v7837, %v744
    %v7842 = vmul.f32 %v7837, %v745
    %v7843 = vmul.f32 %v7837, %v746
    %v7844 = vmul.f32 %v7837, %v747
    %v7845 = vmul.f32 %v7837, %v748
    %v7846 = vmul.f32 %v7837, %v749
    %v7847 = vmul.f32 %v7837, %v750
    %v7848 = vmul.f32 %v7837, %v751
    %v7849 = vmul.f32 %v7837, %v752
    %v7850 = vmul.f32 %v7837, %v753
    %v7851 = vmul.f32 %v7837, %v754
    %v7852 = vmul.f32 %v7837, %v755
    %v7853 = vmul.f32 %v7837, %v756
    %7870 = vrot.lane.b32.xlu0 %v7838, 123
    %v7871 = vpop.permute.xlu0 %7870
    %7872 = vrot.lane.b32.xlu0 %v7839, 123
    %v7873 = vpop.permute.xlu0 %7872
    %7874 = vrot.lane.b32.xlu0 %v7840, 123
    %v7875 = vpop.permute.xlu0 %7874
    %7876 = vrot.lane.b32.xlu0 %v7841, 123
    %v7877 = vpop.permute.xlu0 %7876
    %7878 = vrot.lane.b32.xlu0 %v7842, 123
    %v7879 = vpop.permute.xlu0 %7878
    %7880 = vrot.lane.b32.xlu0 %v7843, 123
    %v7881 = vpop.permute.xlu0 %7880
    %7882 = vrot.lane.b32.xlu0 %v7844, 123
    %v7883 = vpop.permute.xlu0 %7882
    %7884 = vrot.lane.b32.xlu0 %v7845, 123
    %v7885 = vpop.permute.xlu0 %7884
    %7886 = vrot.lane.b32.xlu0 %v7846, 123
    %v7887 = vpop.permute.xlu0 %7886
    %7888 = vrot.lane.b32.xlu0 %v7847, 123
    %v7889 = vpop.permute.xlu0 %7888
    %7890 = vrot.lane.b32.xlu0 %v7848, 123
    %v7891 = vpop.permute.xlu0 %7890
    %7892 = vrot.lane.b32.xlu0 %v7849, 123
    %v7893 = vpop.permute.xlu0 %7892
    %7894 = vrot.lane.b32.xlu0 %v7850, 123
    %v7895 = vpop.permute.xlu0 %7894
    %7896 = vrot.lane.b32.xlu0 %v7851, 123
    %v7897 = vpop.permute.xlu0 %7896
    %7898 = vrot.lane.b32.xlu0 %v7852, 123
    %v7899 = vpop.permute.xlu0 %7898
    %7900 = vrot.lane.b32.xlu0 %v7853, 123
    %v7901 = vpop.permute.xlu0 %7900
    %v7918 = vadd.f32 %v7821, %v7871
    %v7919 = vadd.f32 %v7822, %v7873
    %v7920 = vadd.f32 %v7823, %v7875
    %v7921 = vadd.f32 %v7824, %v7877
    %v7922 = vadd.f32 %v7825, %v7879
    %v7923 = vadd.f32 %v7826, %v7881
    %v7924 = vadd.f32 %v7827, %v7883
    %v7925 = vadd.f32 %v7828, %v7885
    %v7926 = vadd.f32 %v7829, %v7887
    %v7927 = vadd.f32 %v7830, %v7889
    %v7928 = vadd.f32 %v7831, %v7891
    %v7929 = vadd.f32 %v7832, %v7893
    %v7930 = vadd.f32 %v7833, %v7895
    %v7931 = vadd.f32 %v7834, %v7897
    %v7932 = vadd.f32 %v7835, %v7899
    %v7933 = vadd.f32 %v7836, %v7901
    %v7934 = vstv %s731
    %v7935 = vmul.f32 %v7934, %v763
    %v7936 = vmul.f32 %v7934, %v764
    %v7937 = vmul.f32 %v7934, %v765
    %v7938 = vmul.f32 %v7934, %v766
    %v7939 = vmul.f32 %v7934, %v767
    %v7940 = vmul.f32 %v7934, %v768
    %v7941 = vmul.f32 %v7934, %v769
    %v7942 = vmul.f32 %v7934, %v770
    %v7943 = vmul.f32 %v7934, %v771
    %v7944 = vmul.f32 %v7934, %v772
    %v7945 = vmul.f32 %v7934, %v773
    %v7946 = vmul.f32 %v7934, %v774
    %v7947 = vmul.f32 %v7934, %v775
    %v7948 = vmul.f32 %v7934, %v776
    %v7949 = vmul.f32 %v7934, %v777
    %v7950 = vmul.f32 %v7934, %v778
    %7967 = vrot.lane.b32.xlu0 %v7935, 123
    %v7968 = vpop.permute.xlu0 %7967
    %7969 = vrot.lane.b32.xlu0 %v7936, 123
    %v7970 = vpop.permute.xlu0 %7969
    %7971 = vrot.lane.b32.xlu0 %v7937, 123
    %v7972 = vpop.permute.xlu0 %7971
    %7973 = vrot.lane.b32.xlu0 %v7938, 123
    %v7974 = vpop.permute.xlu0 %7973
    %7975 = vrot.lane.b32.xlu0 %v7939, 123
    %v7976 = vpop.permute.xlu0 %7975
    %7977 = vrot.lane.b32.xlu0 %v7940, 123
    %v7978 = vpop.permute.xlu0 %7977
    %7979 = vrot.lane.b32.xlu0 %v7941, 123
    %v7980 = vpop.permute.xlu0 %7979
    %7981 = vrot.lane.b32.xlu0 %v7942, 123
    %v7982 = vpop.permute.xlu0 %7981
    %7983 = vrot.lane.b32.xlu0 %v7943, 123
    %v7984 = vpop.permute.xlu0 %7983
    %7985 = vrot.lane.b32.xlu0 %v7944, 123
    %v7986 = vpop.permute.xlu0 %7985
    %7987 = vrot.lane.b32.xlu0 %v7945, 123
    %v7988 = vpop.permute.xlu0 %7987
    %7989 = vrot.lane.b32.xlu0 %v7946, 123
    %v7990 = vpop.permute.xlu0 %7989
    %7991 = vrot.lane.b32.xlu0 %v7947, 123
    %v7992 = vpop.permute.xlu0 %7991
    %7993 = vrot.lane.b32.xlu0 %v7948, 123
    %v7994 = vpop.permute.xlu0 %7993
    %7995 = vrot.lane.b32.xlu0 %v7949, 123
    %v7996 = vpop.permute.xlu0 %7995
    %7997 = vrot.lane.b32.xlu0 %v7950, 123
    %v7998 = vpop.permute.xlu0 %7997
    %v8015 = vadd.f32 %v7918, %v7968
    %v8016 = vadd.f32 %v7919, %v7970
    %v8017 = vadd.f32 %v7920, %v7972
    %v8018 = vadd.f32 %v7921, %v7974
    %v8019 = vadd.f32 %v7922, %v7976
    %v8020 = vadd.f32 %v7923, %v7978
    %v8021 = vadd.f32 %v7924, %v7980
    %v8022 = vadd.f32 %v7925, %v7982
    %v8023 = vadd.f32 %v7926, %v7984
    %v8024 = vadd.f32 %v7927, %v7986
    %v8025 = vadd.f32 %v7928, %v7988
    %v8026 = vadd.f32 %v7929, %v7990
    %v8027 = vadd.f32 %v7930, %v7992
    %v8028 = vadd.f32 %v7931, %v7994
    %v8029 = vadd.f32 %v7932, %v7996
    %v8030 = vadd.f32 %v7933, %v7998
    %v8031 = vstv %s641
    %v8032 = vmul.f32 %v8031, %v735
    %v8033 = vmul.f32 %v8031, %v736
    %v8034 = vmul.f32 %v8031, %v737
    %v8035 = vmul.f32 %v8031, %v738
    %v8036 = vmul.f32 %v8031, %v739
    %v8037 = vmul.f32 %v8031, %v740
    %v8038 = vmul.f32 %v8031, %v741
    %v8039 = vmul.f32 %v8031, %v742
    %v8040 = vmul.f32 %v8031, %v743
    %v8041 = vmul.f32 %v8031, %v744
    %v8042 = vmul.f32 %v8031, %v745
    %v8043 = vmul.f32 %v8031, %v746
    %v8044 = vmul.f32 %v8031, %v747
    %v8045 = vmul.f32 %v8031, %v748
    %v8046 = vmul.f32 %v8031, %v749
    %v8047 = vmul.f32 %v8031, %v750
    %8064 = vrot.lane.b32.xlu0 %v8032, 122
    %v8065 = vpop.permute.xlu0 %8064
    %8066 = vrot.lane.b32.xlu0 %v8033, 122
    %v8067 = vpop.permute.xlu0 %8066
    %8068 = vrot.lane.b32.xlu0 %v8034, 122
    %v8069 = vpop.permute.xlu0 %8068
    %8070 = vrot.lane.b32.xlu0 %v8035, 122
    %v8071 = vpop.permute.xlu0 %8070
    %8072 = vrot.lane.b32.xlu0 %v8036, 122
    %v8073 = vpop.permute.xlu0 %8072
    %8074 = vrot.lane.b32.xlu0 %v8037, 122
    %v8075 = vpop.permute.xlu0 %8074
    %8076 = vrot.lane.b32.xlu0 %v8038, 122
    %v8077 = vpop.permute.xlu0 %8076
    %8078 = vrot.lane.b32.xlu0 %v8039, 122
    %v8079 = vpop.permute.xlu0 %8078
    %8080 = vrot.lane.b32.xlu0 %v8040, 122
    %v8081 = vpop.permute.xlu0 %8080
    %8082 = vrot.lane.b32.xlu0 %v8041, 122
    %v8083 = vpop.permute.xlu0 %8082
    %8084 = vrot.lane.b32.xlu0 %v8042, 122
    %v8085 = vpop.permute.xlu0 %8084
    %8086 = vrot.lane.b32.xlu0 %v8043, 122
    %v8087 = vpop.permute.xlu0 %8086
    %8088 = vrot.lane.b32.xlu0 %v8044, 122
    %v8089 = vpop.permute.xlu0 %8088
    %8090 = vrot.lane.b32.xlu0 %v8045, 122
    %v8091 = vpop.permute.xlu0 %8090
    %8092 = vrot.lane.b32.xlu0 %v8046, 122
    %v8093 = vpop.permute.xlu0 %8092
    %8094 = vrot.lane.b32.xlu0 %v8047, 122
    %v8095 = vpop.permute.xlu0 %8094
    %v8112 = vadd.f32 %v8015, %v8065
    %v8113 = vadd.f32 %v8016, %v8067
    %v8114 = vadd.f32 %v8017, %v8069
    %v8115 = vadd.f32 %v8018, %v8071
    %v8116 = vadd.f32 %v8019, %v8073
    %v8117 = vadd.f32 %v8020, %v8075
    %v8118 = vadd.f32 %v8021, %v8077
    %v8119 = vadd.f32 %v8022, %v8079
    %v8120 = vadd.f32 %v8023, %v8081
    %v8121 = vadd.f32 %v8024, %v8083
    %v8122 = vadd.f32 %v8025, %v8085
    %v8123 = vadd.f32 %v8026, %v8087
    %v8124 = vadd.f32 %v8027, %v8089
    %v8125 = vadd.f32 %v8028, %v8091
    %v8126 = vadd.f32 %v8029, %v8093
    %v8127 = vadd.f32 %v8030, %v8095
    %v8128 = vstv %s690
    %v8129 = vmul.f32 %v8128, %v757
    %v8130 = vmul.f32 %v8128, %v758
    %v8131 = vmul.f32 %v8128, %v759
    %v8132 = vmul.f32 %v8128, %v760
    %v8133 = vmul.f32 %v8128, %v761
    %v8134 = vmul.f32 %v8128, %v762
    %v8135 = vmul.f32 %v8128, %v763
    %v8136 = vmul.f32 %v8128, %v764
    %v8137 = vmul.f32 %v8128, %v765
    %v8138 = vmul.f32 %v8128, %v766
    %v8139 = vmul.f32 %v8128, %v767
    %v8140 = vmul.f32 %v8128, %v768
    %v8141 = vmul.f32 %v8128, %v769
    %v8142 = vmul.f32 %v8128, %v770
    %v8143 = vmul.f32 %v8128, %v771
    %v8144 = vmul.f32 %v8128, %v772
    %8161 = vrot.lane.b32.xlu0 %v8129, 122
    %v8162 = vpop.permute.xlu0 %8161
    %8163 = vrot.lane.b32.xlu0 %v8130, 122
    %v8164 = vpop.permute.xlu0 %8163
    %8165 = vrot.lane.b32.xlu0 %v8131, 122
    %v8166 = vpop.permute.xlu0 %8165
    %8167 = vrot.lane.b32.xlu0 %v8132, 122
    %v8168 = vpop.permute.xlu0 %8167
    %8169 = vrot.lane.b32.xlu0 %v8133, 122
    %v8170 = vpop.permute.xlu0 %8169
    %8171 = vrot.lane.b32.xlu0 %v8134, 122
    %v8172 = vpop.permute.xlu0 %8171
    %8173 = vrot.lane.b32.xlu0 %v8135, 122
    %v8174 = vpop.permute.xlu0 %8173
    %8175 = vrot.lane.b32.xlu0 %v8136, 122
    %v8176 = vpop.permute.xlu0 %8175
    %8177 = vrot.lane.b32.xlu0 %v8137, 122
    %v8178 = vpop.permute.xlu0 %8177
    %8179 = vrot.lane.b32.xlu0 %v8138, 122
    %v8180 = vpop.permute.xlu0 %8179
    %8181 = vrot.lane.b32.xlu0 %v8139, 122
    %v8182 = vpop.permute.xlu0 %8181
    %8183 = vrot.lane.b32.xlu0 %v8140, 122
    %v8184 = vpop.permute.xlu0 %8183
    %8185 = vrot.lane.b32.xlu0 %v8141, 122
    %v8186 = vpop.permute.xlu0 %8185
    %8187 = vrot.lane.b32.xlu0 %v8142, 122
    %v8188 = vpop.permute.xlu0 %8187
    %8189 = vrot.lane.b32.xlu0 %v8143, 122
    %v8190 = vpop.permute.xlu0 %8189
    %8191 = vrot.lane.b32.xlu0 %v8144, 122
    %v8192 = vpop.permute.xlu0 %8191
    %v8209 = vadd.f32 %v8112, %v8162
    %v8210 = vadd.f32 %v8113, %v8164
    %v8211 = vadd.f32 %v8114, %v8166
    %v8212 = vadd.f32 %v8115, %v8168
    %v8213 = vadd.f32 %v8116, %v8170
    %v8214 = vadd.f32 %v8117, %v8172
    %v8215 = vadd.f32 %v8118, %v8174
    %v8216 = vadd.f32 %v8119, %v8176
    %v8217 = vadd.f32 %v8120, %v8178
    %v8218 = vadd.f32 %v8121, %v8180
    %v8219 = vadd.f32 %v8122, %v8182
    %v8220 = vadd.f32 %v8123, %v8184
    %v8221 = vadd.f32 %v8124, %v8186
    %v8222 = vadd.f32 %v8125, %v8188
    %v8223 = vadd.f32 %v8126, %v8190
    %v8224 = vadd.f32 %v8127, %v8192
    %v8225 = vstv %s648
    %v8226 = vmul.f32 %v8225, %v736
    %v8227 = vmul.f32 %v8225, %v737
    %v8228 = vmul.f32 %v8225, %v738
    %v8229 = vmul.f32 %v8225, %v739
    %v8230 = vmul.f32 %v8225, %v740
    %v8231 = vmul.f32 %v8225, %v741
    %v8232 = vmul.f32 %v8225, %v742
    %v8233 = vmul.f32 %v8225, %v743
    %v8234 = vmul.f32 %v8225, %v744
    %v8235 = vmul.f32 %v8225, %v745
    %v8236 = vmul.f32 %v8225, %v746
    %v8237 = vmul.f32 %v8225, %v747
    %v8238 = vmul.f32 %v8225, %v748
    %v8239 = vmul.f32 %v8225, %v749
    %v8240 = vmul.f32 %v8225, %v750
    %v8241 = vmul.f32 %v8225, %v751
    %8258 = vrot.lane.b32.xlu0 %v8226, 122
    %v8259 = vpop.permute.xlu0 %8258
    %8260 = vrot.lane.b32.xlu0 %v8227, 122
    %v8261 = vpop.permute.xlu0 %8260
    %8262 = vrot.lane.b32.xlu0 %v8228, 122
    %v8263 = vpop.permute.xlu0 %8262
    %8264 = vrot.lane.b32.xlu0 %v8229, 122
    %v8265 = vpop.permute.xlu0 %8264
    %8266 = vrot.lane.b32.xlu0 %v8230, 122
    %v8267 = vpop.permute.xlu0 %8266
    %8268 = vrot.lane.b32.xlu0 %v8231, 122
    %v8269 = vpop.permute.xlu0 %8268
    %8270 = vrot.lane.b32.xlu0 %v8232, 122
    %v8271 = vpop.permute.xlu0 %8270
    %8272 = vrot.lane.b32.xlu0 %v8233, 122
    %v8273 = vpop.permute.xlu0 %8272
    %8274 = vrot.lane.b32.xlu0 %v8234, 122
    %v8275 = vpop.permute.xlu0 %8274
    %8276 = vrot.lane.b32.xlu0 %v8235, 122
    %v8277 = vpop.permute.xlu0 %8276
    %8278 = vrot.lane.b32.xlu0 %v8236, 122
    %v8279 = vpop.permute.xlu0 %8278
    %8280 = vrot.lane.b32.xlu0 %v8237, 122
    %v8281 = vpop.permute.xlu0 %8280
    %8282 = vrot.lane.b32.xlu0 %v8238, 122
    %v8283 = vpop.permute.xlu0 %8282
    %8284 = vrot.lane.b32.xlu0 %v8239, 122
    %v8285 = vpop.permute.xlu0 %8284
    %8286 = vrot.lane.b32.xlu0 %v8240, 122
    %v8287 = vpop.permute.xlu0 %8286
    %8288 = vrot.lane.b32.xlu0 %v8241, 122
    %v8289 = vpop.permute.xlu0 %8288
    %v8306 = vadd.f32 %v8209, %v8259
    %v8307 = vadd.f32 %v8210, %v8261
    %v8308 = vadd.f32 %v8211, %v8263
    %v8309 = vadd.f32 %v8212, %v8265
    %v8310 = vadd.f32 %v8213, %v8267
    %v8311 = vadd.f32 %v8214, %v8269
    %v8312 = vadd.f32 %v8215, %v8271
    %v8313 = vadd.f32 %v8216, %v8273
    %v8314 = vadd.f32 %v8217, %v8275
    %v8315 = vadd.f32 %v8218, %v8277
    %v8316 = vadd.f32 %v8219, %v8279
    %v8317 = vadd.f32 %v8220, %v8281
    %v8318 = vadd.f32 %v8221, %v8283
    %v8319 = vadd.f32 %v8222, %v8285
    %v8320 = vadd.f32 %v8223, %v8287
    %v8321 = vadd.f32 %v8224, %v8289
    %v8322 = vstv %s697
    %v8323 = vmul.f32 %v8322, %v758
    %v8324 = vmul.f32 %v8322, %v759
    %v8325 = vmul.f32 %v8322, %v760
    %v8326 = vmul.f32 %v8322, %v761
    %v8327 = vmul.f32 %v8322, %v762
    %v8328 = vmul.f32 %v8322, %v763
    %v8329 = vmul.f32 %v8322, %v764
    %v8330 = vmul.f32 %v8322, %v765
    %v8331 = vmul.f32 %v8322, %v766
    %v8332 = vmul.f32 %v8322, %v767
    %v8333 = vmul.f32 %v8322, %v768
    %v8334 = vmul.f32 %v8322, %v769
    %v8335 = vmul.f32 %v8322, %v770
    %v8336 = vmul.f32 %v8322, %v771
    %v8337 = vmul.f32 %v8322, %v772
    %v8338 = vmul.f32 %v8322, %v773
    %8355 = vrot.lane.b32.xlu0 %v8323, 122
    %v8356 = vpop.permute.xlu0 %8355
    %8357 = vrot.lane.b32.xlu0 %v8324, 122
    %v8358 = vpop.permute.xlu0 %8357
    %8359 = vrot.lane.b32.xlu0 %v8325, 122
    %v8360 = vpop.permute.xlu0 %8359
    %8361 = vrot.lane.b32.xlu0 %v8326, 122
    %v8362 = vpop.permute.xlu0 %8361
    %8363 = vrot.lane.b32.xlu0 %v8327, 122
    %v8364 = vpop.permute.xlu0 %8363
    %8365 = vrot.lane.b32.xlu0 %v8328, 122
    %v8366 = vpop.permute.xlu0 %8365
    %8367 = vrot.lane.b32.xlu0 %v8329, 122
    %v8368 = vpop.permute.xlu0 %8367
    %8369 = vrot.lane.b32.xlu0 %v8330, 122
    %v8370 = vpop.permute.xlu0 %8369
    %8371 = vrot.lane.b32.xlu0 %v8331, 122
    %v8372 = vpop.permute.xlu0 %8371
    %8373 = vrot.lane.b32.xlu0 %v8332, 122
    %v8374 = vpop.permute.xlu0 %8373
    %8375 = vrot.lane.b32.xlu0 %v8333, 122
    %v8376 = vpop.permute.xlu0 %8375
    %8377 = vrot.lane.b32.xlu0 %v8334, 122
    %v8378 = vpop.permute.xlu0 %8377
    %8379 = vrot.lane.b32.xlu0 %v8335, 122
    %v8380 = vpop.permute.xlu0 %8379
    %8381 = vrot.lane.b32.xlu0 %v8336, 122
    %v8382 = vpop.permute.xlu0 %8381
    %8383 = vrot.lane.b32.xlu0 %v8337, 122
    %v8384 = vpop.permute.xlu0 %8383
    %8385 = vrot.lane.b32.xlu0 %v8338, 122
    %v8386 = vpop.permute.xlu0 %8385
    %v8403 = vadd.f32 %v8306, %v8356
    %v8404 = vadd.f32 %v8307, %v8358
    %v8405 = vadd.f32 %v8308, %v8360
    %v8406 = vadd.f32 %v8309, %v8362
    %v8407 = vadd.f32 %v8310, %v8364
    %v8408 = vadd.f32 %v8311, %v8366
    %v8409 = vadd.f32 %v8312, %v8368
    %v8410 = vadd.f32 %v8313, %v8370
    %v8411 = vadd.f32 %v8314, %v8372
    %v8412 = vadd.f32 %v8315, %v8374
    %v8413 = vadd.f32 %v8316, %v8376
    %v8414 = vadd.f32 %v8317, %v8378
    %v8415 = vadd.f32 %v8318, %v8380
    %v8416 = vadd.f32 %v8319, %v8382
    %v8417 = vadd.f32 %v8320, %v8384
    %v8418 = vadd.f32 %v8321, %v8386
    %v8419 = vstv %s655
    %v8420 = vmul.f32 %v8419, %v737
    %v8421 = vmul.f32 %v8419, %v738
    %v8422 = vmul.f32 %v8419, %v739
    %v8423 = vmul.f32 %v8419, %v740
    %v8424 = vmul.f32 %v8419, %v741
    %v8425 = vmul.f32 %v8419, %v742
    %v8426 = vmul.f32 %v8419, %v743
    %v8427 = vmul.f32 %v8419, %v744
    %v8428 = vmul.f32 %v8419, %v745
    %v8429 = vmul.f32 %v8419, %v746
    %v8430 = vmul.f32 %v8419, %v747
    %v8431 = vmul.f32 %v8419, %v748
    %v8432 = vmul.f32 %v8419, %v749
    %v8433 = vmul.f32 %v8419, %v750
    %v8434 = vmul.f32 %v8419, %v751
    %v8435 = vmul.f32 %v8419, %v752
    %8452 = vrot.lane.b32.xlu0 %v8420, 122
    %v8453 = vpop.permute.xlu0 %8452
    %8454 = vrot.lane.b32.xlu0 %v8421, 122
    %v8455 = vpop.permute.xlu0 %8454
    %8456 = vrot.lane.b32.xlu0 %v8422, 122
    %v8457 = vpop.permute.xlu0 %8456
    %8458 = vrot.lane.b32.xlu0 %v8423, 122
    %v8459 = vpop.permute.xlu0 %8458
    %8460 = vrot.lane.b32.xlu0 %v8424, 122
    %v8461 = vpop.permute.xlu0 %8460
    %8462 = vrot.lane.b32.xlu0 %v8425, 122
    %v8463 = vpop.permute.xlu0 %8462
    %8464 = vrot.lane.b32.xlu0 %v8426, 122
    %v8465 = vpop.permute.xlu0 %8464
    %8466 = vrot.lane.b32.xlu0 %v8427, 122
    %v8467 = vpop.permute.xlu0 %8466
    %8468 = vrot.lane.b32.xlu0 %v8428, 122
    %v8469 = vpop.permute.xlu0 %8468
    %8470 = vrot.lane.b32.xlu0 %v8429, 122
    %v8471 = vpop.permute.xlu0 %8470
    %8472 = vrot.lane.b32.xlu0 %v8430, 122
    %v8473 = vpop.permute.xlu0 %8472
    %8474 = vrot.lane.b32.xlu0 %v8431, 122
    %v8475 = vpop.permute.xlu0 %8474
    %8476 = vrot.lane.b32.xlu0 %v8432, 122
    %v8477 = vpop.permute.xlu0 %8476
    %8478 = vrot.lane.b32.xlu0 %v8433, 122
    %v8479 = vpop.permute.xlu0 %8478
    %8480 = vrot.lane.b32.xlu0 %v8434, 122
    %v8481 = vpop.permute.xlu0 %8480
    %8482 = vrot.lane.b32.xlu0 %v8435, 122
    %v8483 = vpop.permute.xlu0 %8482
    %v8500 = vadd.f32 %v8403, %v8453
    %v8501 = vadd.f32 %v8404, %v8455
    %v8502 = vadd.f32 %v8405, %v8457
    %v8503 = vadd.f32 %v8406, %v8459
    %v8504 = vadd.f32 %v8407, %v8461
    %v8505 = vadd.f32 %v8408, %v8463
    %v8506 = vadd.f32 %v8409, %v8465
    %v8507 = vadd.f32 %v8410, %v8467
    %v8508 = vadd.f32 %v8411, %v8469
    %v8509 = vadd.f32 %v8412, %v8471
    %v8510 = vadd.f32 %v8413, %v8473
    %v8511 = vadd.f32 %v8414, %v8475
    %v8512 = vadd.f32 %v8415, %v8477
    %v8513 = vadd.f32 %v8416, %v8479
    %v8514 = vadd.f32 %v8417, %v8481
    %v8515 = vadd.f32 %v8418, %v8483
    %v8516 = vstv %s704
    %v8517 = vmul.f32 %v8516, %v759
    %v8518 = vmul.f32 %v8516, %v760
    %v8519 = vmul.f32 %v8516, %v761
    %v8520 = vmul.f32 %v8516, %v762
    %v8521 = vmul.f32 %v8516, %v763
    %v8522 = vmul.f32 %v8516, %v764
    %v8523 = vmul.f32 %v8516, %v765
    %v8524 = vmul.f32 %v8516, %v766
    %v8525 = vmul.f32 %v8516, %v767
    %v8526 = vmul.f32 %v8516, %v768
    %v8527 = vmul.f32 %v8516, %v769
    %v8528 = vmul.f32 %v8516, %v770
    %v8529 = vmul.f32 %v8516, %v771
    %v8530 = vmul.f32 %v8516, %v772
    %v8531 = vmul.f32 %v8516, %v773
    %v8532 = vmul.f32 %v8516, %v774
    %8549 = vrot.lane.b32.xlu0 %v8517, 122
    %v8550 = vpop.permute.xlu0 %8549
    %8551 = vrot.lane.b32.xlu0 %v8518, 122
    %v8552 = vpop.permute.xlu0 %8551
    %8553 = vrot.lane.b32.xlu0 %v8519, 122
    %v8554 = vpop.permute.xlu0 %8553
    %8555 = vrot.lane.b32.xlu0 %v8520, 122
    %v8556 = vpop.permute.xlu0 %8555
    %8557 = vrot.lane.b32.xlu0 %v8521, 122
    %v8558 = vpop.permute.xlu0 %8557
    %8559 = vrot.lane.b32.xlu0 %v8522, 122
    %v8560 = vpop.permute.xlu0 %8559
    %8561 = vrot.lane.b32.xlu0 %v8523, 122
    %v8562 = vpop.permute.xlu0 %8561
    %8563 = vrot.lane.b32.xlu0 %v8524, 122
    %v8564 = vpop.permute.xlu0 %8563
    %8565 = vrot.lane.b32.xlu0 %v8525, 122
    %v8566 = vpop.permute.xlu0 %8565
    %8567 = vrot.lane.b32.xlu0 %v8526, 122
    %v8568 = vpop.permute.xlu0 %8567
    %8569 = vrot.lane.b32.xlu0 %v8527, 122
    %v8570 = vpop.permute.xlu0 %8569
    %8571 = vrot.lane.b32.xlu0 %v8528, 122
    %v8572 = vpop.permute.xlu0 %8571
    %8573 = vrot.lane.b32.xlu0 %v8529, 122
    %v8574 = vpop.permute.xlu0 %8573
    %8575 = vrot.lane.b32.xlu0 %v8530, 122
    %v8576 = vpop.permute.xlu0 %8575
    %8577 = vrot.lane.b32.xlu0 %v8531, 122
    %v8578 = vpop.permute.xlu0 %8577
    %8579 = vrot.lane.b32.xlu0 %v8532, 122
    %v8580 = vpop.permute.xlu0 %8579
    %v8597 = vadd.f32 %v8500, %v8550
    %v8598 = vadd.f32 %v8501, %v8552
    %v8599 = vadd.f32 %v8502, %v8554
    %v8600 = vadd.f32 %v8503, %v8556
    %v8601 = vadd.f32 %v8504, %v8558
    %v8602 = vadd.f32 %v8505, %v8560
    %v8603 = vadd.f32 %v8506, %v8562
    %v8604 = vadd.f32 %v8507, %v8564
    %v8605 = vadd.f32 %v8508, %v8566
    %v8606 = vadd.f32 %v8509, %v8568
    %v8607 = vadd.f32 %v8510, %v8570
    %v8608 = vadd.f32 %v8511, %v8572
    %v8609 = vadd.f32 %v8512, %v8574
    %v8610 = vadd.f32 %v8513, %v8576
    %v8611 = vadd.f32 %v8514, %v8578
    %v8612 = vadd.f32 %v8515, %v8580
    %v8613 = vstv %s662
    %v8614 = vmul.f32 %v8613, %v738
    %v8615 = vmul.f32 %v8613, %v739
    %v8616 = vmul.f32 %v8613, %v740
    %v8617 = vmul.f32 %v8613, %v741
    %v8618 = vmul.f32 %v8613, %v742
    %v8619 = vmul.f32 %v8613, %v743
    %v8620 = vmul.f32 %v8613, %v744
    %v8621 = vmul.f32 %v8613, %v745
    %v8622 = vmul.f32 %v8613, %v746
    %v8623 = vmul.f32 %v8613, %v747
    %v8624 = vmul.f32 %v8613, %v748
    %v8625 = vmul.f32 %v8613, %v749
    %v8626 = vmul.f32 %v8613, %v750
    %v8627 = vmul.f32 %v8613, %v751
    %v8628 = vmul.f32 %v8613, %v752
    %v8629 = vmul.f32 %v8613, %v753
    %8646 = vrot.lane.b32.xlu0 %v8614, 122
    %v8647 = vpop.permute.xlu0 %8646
    %8648 = vrot.lane.b32.xlu0 %v8615, 122
    %v8649 = vpop.permute.xlu0 %8648
    %8650 = vrot.lane.b32.xlu0 %v8616, 122
    %v8651 = vpop.permute.xlu0 %8650
    %8652 = vrot.lane.b32.xlu0 %v8617, 122
    %v8653 = vpop.permute.xlu0 %8652
    %8654 = vrot.lane.b32.xlu0 %v8618, 122
    %v8655 = vpop.permute.xlu0 %8654
    %8656 = vrot.lane.b32.xlu0 %v8619, 122
    %v8657 = vpop.permute.xlu0 %8656
    %8658 = vrot.lane.b32.xlu0 %v8620, 122
    %v8659 = vpop.permute.xlu0 %8658
    %8660 = vrot.lane.b32.xlu0 %v8621, 122
    %v8661 = vpop.permute.xlu0 %8660
    %8662 = vrot.lane.b32.xlu0 %v8622, 122
    %v8663 = vpop.permute.xlu0 %8662
    %8664 = vrot.lane.b32.xlu0 %v8623, 122
    %v8665 = vpop.permute.xlu0 %8664
    %8666 = vrot.lane.b32.xlu0 %v8624, 122
    %v8667 = vpop.permute.xlu0 %8666
    %8668 = vrot.lane.b32.xlu0 %v8625, 122
    %v8669 = vpop.permute.xlu0 %8668
    %8670 = vrot.lane.b32.xlu0 %v8626, 122
    %v8671 = vpop.permute.xlu0 %8670
    %8672 = vrot.lane.b32.xlu0 %v8627, 122
    %v8673 = vpop.permute.xlu0 %8672
    %8674 = vrot.lane.b32.xlu0 %v8628, 122
    %v8675 = vpop.permute.xlu0 %8674
    %8676 = vrot.lane.b32.xlu0 %v8629, 122
    %v8677 = vpop.permute.xlu0 %8676
    %v8694 = vadd.f32 %v8597, %v8647
    %v8695 = vadd.f32 %v8598, %v8649
    %v8696 = vadd.f32 %v8599, %v8651
    %v8697 = vadd.f32 %v8600, %v8653
    %v8698 = vadd.f32 %v8601, %v8655
    %v8699 = vadd.f32 %v8602, %v8657
    %v8700 = vadd.f32 %v8603, %v8659
    %v8701 = vadd.f32 %v8604, %v8661
    %v8702 = vadd.f32 %v8605, %v8663
    %v8703 = vadd.f32 %v8606, %v8665
    %v8704 = vadd.f32 %v8607, %v8667
    %v8705 = vadd.f32 %v8608, %v8669
    %v8706 = vadd.f32 %v8609, %v8671
    %v8707 = vadd.f32 %v8610, %v8673
    %v8708 = vadd.f32 %v8611, %v8675
    %v8709 = vadd.f32 %v8612, %v8677
    %v8710 = vstv %s711
    %v8711 = vmul.f32 %v8710, %v760
    %v8712 = vmul.f32 %v8710, %v761
    %v8713 = vmul.f32 %v8710, %v762
    %v8714 = vmul.f32 %v8710, %v763
    %v8715 = vmul.f32 %v8710, %v764
    %v8716 = vmul.f32 %v8710, %v765
    %v8717 = vmul.f32 %v8710, %v766
    %v8718 = vmul.f32 %v8710, %v767
    %v8719 = vmul.f32 %v8710, %v768
    %v8720 = vmul.f32 %v8710, %v769
    %v8721 = vmul.f32 %v8710, %v770
    %v8722 = vmul.f32 %v8710, %v771
    %v8723 = vmul.f32 %v8710, %v772
    %v8724 = vmul.f32 %v8710, %v773
    %v8725 = vmul.f32 %v8710, %v774
    %v8726 = vmul.f32 %v8710, %v775
    %8743 = vrot.lane.b32.xlu0 %v8711, 122
    %v8744 = vpop.permute.xlu0 %8743
    %8745 = vrot.lane.b32.xlu0 %v8712, 122
    %v8746 = vpop.permute.xlu0 %8745
    %8747 = vrot.lane.b32.xlu0 %v8713, 122
    %v8748 = vpop.permute.xlu0 %8747
    %8749 = vrot.lane.b32.xlu0 %v8714, 122
    %v8750 = vpop.permute.xlu0 %8749
    %8751 = vrot.lane.b32.xlu0 %v8715, 122
    %v8752 = vpop.permute.xlu0 %8751
    %8753 = vrot.lane.b32.xlu0 %v8716, 122
    %v8754 = vpop.permute.xlu0 %8753
    %8755 = vrot.lane.b32.xlu0 %v8717, 122
    %v8756 = vpop.permute.xlu0 %8755
    %8757 = vrot.lane.b32.xlu0 %v8718, 122
    %v8758 = vpop.permute.xlu0 %8757
    %8759 = vrot.lane.b32.xlu0 %v8719, 122
    %v8760 = vpop.permute.xlu0 %8759
    %8761 = vrot.lane.b32.xlu0 %v8720, 122
    %v8762 = vpop.permute.xlu0 %8761
    %8763 = vrot.lane.b32.xlu0 %v8721, 122
    %v8764 = vpop.permute.xlu0 %8763
    %8765 = vrot.lane.b32.xlu0 %v8722, 122
    %v8766 = vpop.permute.xlu0 %8765
    %8767 = vrot.lane.b32.xlu0 %v8723, 122
    %v8768 = vpop.permute.xlu0 %8767
    %8769 = vrot.lane.b32.xlu0 %v8724, 122
    %v8770 = vpop.permute.xlu0 %8769
    %8771 = vrot.lane.b32.xlu0 %v8725, 122
    %v8772 = vpop.permute.xlu0 %8771
    %8773 = vrot.lane.b32.xlu0 %v8726, 122
    %v8774 = vpop.permute.xlu0 %8773
    %v8791 = vadd.f32 %v8694, %v8744
    %v8792 = vadd.f32 %v8695, %v8746
    %v8793 = vadd.f32 %v8696, %v8748
    %v8794 = vadd.f32 %v8697, %v8750
    %v8795 = vadd.f32 %v8698, %v8752
    %v8796 = vadd.f32 %v8699, %v8754
    %v8797 = vadd.f32 %v8700, %v8756
    %v8798 = vadd.f32 %v8701, %v8758
    %v8799 = vadd.f32 %v8702, %v8760
    %v8800 = vadd.f32 %v8703, %v8762
    %v8801 = vadd.f32 %v8704, %v8764
    %v8802 = vadd.f32 %v8705, %v8766
    %v8803 = vadd.f32 %v8706, %v8768
    %v8804 = vadd.f32 %v8707, %v8770
    %v8805 = vadd.f32 %v8708, %v8772
    %v8806 = vadd.f32 %v8709, %v8774
    %v8807 = vstv %s669
    %v8808 = vmul.f32 %v8807, %v739
    %v8809 = vmul.f32 %v8807, %v740
    %v8810 = vmul.f32 %v8807, %v741
    %v8811 = vmul.f32 %v8807, %v742
    %v8812 = vmul.f32 %v8807, %v743
    %v8813 = vmul.f32 %v8807, %v744
    %v8814 = vmul.f32 %v8807, %v745
    %v8815 = vmul.f32 %v8807, %v746
    %v8816 = vmul.f32 %v8807, %v747
    %v8817 = vmul.f32 %v8807, %v748
    %v8818 = vmul.f32 %v8807, %v749
    %v8819 = vmul.f32 %v8807, %v750
    %v8820 = vmul.f32 %v8807, %v751
    %v8821 = vmul.f32 %v8807, %v752
    %v8822 = vmul.f32 %v8807, %v753
    %v8823 = vmul.f32 %v8807, %v754
    %8840 = vrot.lane.b32.xlu0 %v8808, 122
    %v8841 = vpop.permute.xlu0 %8840
    %8842 = vrot.lane.b32.xlu0 %v8809, 122
    %v8843 = vpop.permute.xlu0 %8842
    %8844 = vrot.lane.b32.xlu0 %v8810, 122
    %v8845 = vpop.permute.xlu0 %8844
    %8846 = vrot.lane.b32.xlu0 %v8811, 122
    %v8847 = vpop.permute.xlu0 %8846
    %8848 = vrot.lane.b32.xlu0 %v8812, 122
    %v8849 = vpop.permute.xlu0 %8848
    %8850 = vrot.lane.b32.xlu0 %v8813, 122
    %v8851 = vpop.permute.xlu0 %8850
    %8852 = vrot.lane.b32.xlu0 %v8814, 122
    %v8853 = vpop.permute.xlu0 %8852
    %8854 = vrot.lane.b32.xlu0 %v8815, 122
    %v8855 = vpop.permute.xlu0 %8854
    %8856 = vrot.lane.b32.xlu0 %v8816, 122
    %v8857 = vpop.permute.xlu0 %8856
    %8858 = vrot.lane.b32.xlu0 %v8817, 122
    %v8859 = vpop.permute.xlu0 %8858
    %8860 = vrot.lane.b32.xlu0 %v8818, 122
    %v8861 = vpop.permute.xlu0 %8860
    %8862 = vrot.lane.b32.xlu0 %v8819, 122
    %v8863 = vpop.permute.xlu0 %8862
    %8864 = vrot.lane.b32.xlu0 %v8820, 122
    %v8865 = vpop.permute.xlu0 %8864
    %8866 = vrot.lane.b32.xlu0 %v8821, 122
    %v8867 = vpop.permute.xlu0 %8866
    %8868 = vrot.lane.b32.xlu0 %v8822, 122
    %v8869 = vpop.permute.xlu0 %8868
    %8870 = vrot.lane.b32.xlu0 %v8823, 122
    %v8871 = vpop.permute.xlu0 %8870
    %v8888 = vadd.f32 %v8791, %v8841
    %v8889 = vadd.f32 %v8792, %v8843
    %v8890 = vadd.f32 %v8793, %v8845
    %v8891 = vadd.f32 %v8794, %v8847
    %v8892 = vadd.f32 %v8795, %v8849
    %v8893 = vadd.f32 %v8796, %v8851
    %v8894 = vadd.f32 %v8797, %v8853
    %v8895 = vadd.f32 %v8798, %v8855
    %v8896 = vadd.f32 %v8799, %v8857
    %v8897 = vadd.f32 %v8800, %v8859
    %v8898 = vadd.f32 %v8801, %v8861
    %v8899 = vadd.f32 %v8802, %v8863
    %v8900 = vadd.f32 %v8803, %v8865
    %v8901 = vadd.f32 %v8804, %v8867
    %v8902 = vadd.f32 %v8805, %v8869
    %v8903 = vadd.f32 %v8806, %v8871
    %v8904 = vstv %s718
    %v8905 = vmul.f32 %v8904, %v761
    %v8906 = vmul.f32 %v8904, %v762
    %v8907 = vmul.f32 %v8904, %v763
    %v8908 = vmul.f32 %v8904, %v764
    %v8909 = vmul.f32 %v8904, %v765
    %v8910 = vmul.f32 %v8904, %v766
    %v8911 = vmul.f32 %v8904, %v767
    %v8912 = vmul.f32 %v8904, %v768
    %v8913 = vmul.f32 %v8904, %v769
    %v8914 = vmul.f32 %v8904, %v770
    %v8915 = vmul.f32 %v8904, %v771
    %v8916 = vmul.f32 %v8904, %v772
    %v8917 = vmul.f32 %v8904, %v773
    %v8918 = vmul.f32 %v8904, %v774
    %v8919 = vmul.f32 %v8904, %v775
    %v8920 = vmul.f32 %v8904, %v776
    %8937 = vrot.lane.b32.xlu0 %v8905, 122
    %v8938 = vpop.permute.xlu0 %8937
    %8939 = vrot.lane.b32.xlu0 %v8906, 122
    %v8940 = vpop.permute.xlu0 %8939
    %8941 = vrot.lane.b32.xlu0 %v8907, 122
    %v8942 = vpop.permute.xlu0 %8941
    %8943 = vrot.lane.b32.xlu0 %v8908, 122
    %v8944 = vpop.permute.xlu0 %8943
    %8945 = vrot.lane.b32.xlu0 %v8909, 122
    %v8946 = vpop.permute.xlu0 %8945
    %8947 = vrot.lane.b32.xlu0 %v8910, 122
    %v8948 = vpop.permute.xlu0 %8947
    %8949 = vrot.lane.b32.xlu0 %v8911, 122
    %v8950 = vpop.permute.xlu0 %8949
    %8951 = vrot.lane.b32.xlu0 %v8912, 122
    %v8952 = vpop.permute.xlu0 %8951
    %8953 = vrot.lane.b32.xlu0 %v8913, 122
    %v8954 = vpop.permute.xlu0 %8953
    %8955 = vrot.lane.b32.xlu0 %v8914, 122
    %v8956 = vpop.permute.xlu0 %8955
    %8957 = vrot.lane.b32.xlu0 %v8915, 122
    %v8958 = vpop.permute.xlu0 %8957
    %8959 = vrot.lane.b32.xlu0 %v8916, 122
    %v8960 = vpop.permute.xlu0 %8959
    %8961 = vrot.lane.b32.xlu0 %v8917, 122
    %v8962 = vpop.permute.xlu0 %8961
    %8963 = vrot.lane.b32.xlu0 %v8918, 122
    %v8964 = vpop.permute.xlu0 %8963
    %8965 = vrot.lane.b32.xlu0 %v8919, 122
    %v8966 = vpop.permute.xlu0 %8965
    %8967 = vrot.lane.b32.xlu0 %v8920, 122
    %v8968 = vpop.permute.xlu0 %8967
    %v8985 = vadd.f32 %v8888, %v8938
    %v8986 = vadd.f32 %v8889, %v8940
    %v8987 = vadd.f32 %v8890, %v8942
    %v8988 = vadd.f32 %v8891, %v8944
    %v8989 = vadd.f32 %v8892, %v8946
    %v8990 = vadd.f32 %v8893, %v8948
    %v8991 = vadd.f32 %v8894, %v8950
    %v8992 = vadd.f32 %v8895, %v8952
    %v8993 = vadd.f32 %v8896, %v8954
    %v8994 = vadd.f32 %v8897, %v8956
    %v8995 = vadd.f32 %v8898, %v8958
    %v8996 = vadd.f32 %v8899, %v8960
    %v8997 = vadd.f32 %v8900, %v8962
    %v8998 = vadd.f32 %v8901, %v8964
    %v8999 = vadd.f32 %v8902, %v8966
    %v9000 = vadd.f32 %v8903, %v8968
    %v9001 = vstv %s676
    %v9002 = vmul.f32 %v9001, %v740
    %v9003 = vmul.f32 %v9001, %v741
    %v9004 = vmul.f32 %v9001, %v742
    %v9005 = vmul.f32 %v9001, %v743
    %v9006 = vmul.f32 %v9001, %v744
    %v9007 = vmul.f32 %v9001, %v745
    %v9008 = vmul.f32 %v9001, %v746
    %v9009 = vmul.f32 %v9001, %v747
    %v9010 = vmul.f32 %v9001, %v748
    %v9011 = vmul.f32 %v9001, %v749
    %v9012 = vmul.f32 %v9001, %v750
    %v9013 = vmul.f32 %v9001, %v751
    %v9014 = vmul.f32 %v9001, %v752
    %v9015 = vmul.f32 %v9001, %v753
    %v9016 = vmul.f32 %v9001, %v754
    %v9017 = vmul.f32 %v9001, %v755
    %9034 = vrot.lane.b32.xlu0 %v9002, 122
    %v9035 = vpop.permute.xlu0 %9034
    %9036 = vrot.lane.b32.xlu0 %v9003, 122
    %v9037 = vpop.permute.xlu0 %9036
    %9038 = vrot.lane.b32.xlu0 %v9004, 122
    %v9039 = vpop.permute.xlu0 %9038
    %9040 = vrot.lane.b32.xlu0 %v9005, 122
    %v9041 = vpop.permute.xlu0 %9040
    %9042 = vrot.lane.b32.xlu0 %v9006, 122
    %v9043 = vpop.permute.xlu0 %9042
    %9044 = vrot.lane.b32.xlu0 %v9007, 122
    %v9045 = vpop.permute.xlu0 %9044
    %9046 = vrot.lane.b32.xlu0 %v9008, 122
    %v9047 = vpop.permute.xlu0 %9046
    %9048 = vrot.lane.b32.xlu0 %v9009, 122
    %v9049 = vpop.permute.xlu0 %9048
    %9050 = vrot.lane.b32.xlu0 %v9010, 122
    %v9051 = vpop.permute.xlu0 %9050
    %9052 = vrot.lane.b32.xlu0 %v9011, 122
    %v9053 = vpop.permute.xlu0 %9052
    %9054 = vrot.lane.b32.xlu0 %v9012, 122
    %v9055 = vpop.permute.xlu0 %9054
    %9056 = vrot.lane.b32.xlu0 %v9013, 122
    %v9057 = vpop.permute.xlu0 %9056
    %9058 = vrot.lane.b32.xlu0 %v9014, 122
    %v9059 = vpop.permute.xlu0 %9058
    %9060 = vrot.lane.b32.xlu0 %v9015, 122
    %v9061 = vpop.permute.xlu0 %9060
    %9062 = vrot.lane.b32.xlu0 %v9016, 122
    %v9063 = vpop.permute.xlu0 %9062
    %9064 = vrot.lane.b32.xlu0 %v9017, 122
    %v9065 = vpop.permute.xlu0 %9064
    %v9082 = vadd.f32 %v8985, %v9035
    %v9083 = vadd.f32 %v8986, %v9037
    %v9084 = vadd.f32 %v8987, %v9039
    %v9085 = vadd.f32 %v8988, %v9041
    %v9086 = vadd.f32 %v8989, %v9043
    %v9087 = vadd.f32 %v8990, %v9045
    %v9088 = vadd.f32 %v8991, %v9047
    %v9089 = vadd.f32 %v8992, %v9049
    %v9090 = vadd.f32 %v8993, %v9051
    %v9091 = vadd.f32 %v8994, %v9053
    %v9092 = vadd.f32 %v8995, %v9055
    %v9093 = vadd.f32 %v8996, %v9057
    %v9094 = vadd.f32 %v8997, %v9059
    %v9095 = vadd.f32 %v8998, %v9061
    %v9096 = vadd.f32 %v8999, %v9063
    %v9097 = vadd.f32 %v9000, %v9065
    %v9098 = vstv %s725
    %v9099 = vmul.f32 %v9098, %v762
    %v9100 = vmul.f32 %v9098, %v763
    %v9101 = vmul.f32 %v9098, %v764
    %v9102 = vmul.f32 %v9098, %v765
    %v9103 = vmul.f32 %v9098, %v766
    %v9104 = vmul.f32 %v9098, %v767
    %v9105 = vmul.f32 %v9098, %v768
    %v9106 = vmul.f32 %v9098, %v769
    %v9107 = vmul.f32 %v9098, %v770
    %v9108 = vmul.f32 %v9098, %v771
    %v9109 = vmul.f32 %v9098, %v772
    %v9110 = vmul.f32 %v9098, %v773
    %v9111 = vmul.f32 %v9098, %v774
    %v9112 = vmul.f32 %v9098, %v775
    %v9113 = vmul.f32 %v9098, %v776
    %v9114 = vmul.f32 %v9098, %v777
    %9131 = vrot.lane.b32.xlu0 %v9099, 122
    %v9132 = vpop.permute.xlu0 %9131
    %9133 = vrot.lane.b32.xlu0 %v9100, 122
    %v9134 = vpop.permute.xlu0 %9133
    %9135 = vrot.lane.b32.xlu0 %v9101, 122
    %v9136 = vpop.permute.xlu0 %9135
    %9137 = vrot.lane.b32.xlu0 %v9102, 122
    %v9138 = vpop.permute.xlu0 %9137
    %9139 = vrot.lane.b32.xlu0 %v9103, 122
    %v9140 = vpop.permute.xlu0 %9139
    %9141 = vrot.lane.b32.xlu0 %v9104, 122
    %v9142 = vpop.permute.xlu0 %9141
    %9143 = vrot.lane.b32.xlu0 %v9105, 122
    %v9144 = vpop.permute.xlu0 %9143
    %9145 = vrot.lane.b32.xlu0 %v9106, 122
    %v9146 = vpop.permute.xlu0 %9145
    %9147 = vrot.lane.b32.xlu0 %v9107, 122
    %v9148 = vpop.permute.xlu0 %9147
    %9149 = vrot.lane.b32.xlu0 %v9108, 122
    %v9150 = vpop.permute.xlu0 %9149
    %9151 = vrot.lane.b32.xlu0 %v9109, 122
    %v9152 = vpop.permute.xlu0 %9151
    %9153 = vrot.lane.b32.xlu0 %v9110, 122
    %v9154 = vpop.permute.xlu0 %9153
    %9155 = vrot.lane.b32.xlu0 %v9111, 122
    %v9156 = vpop.permute.xlu0 %9155
    %9157 = vrot.lane.b32.xlu0 %v9112, 122
    %v9158 = vpop.permute.xlu0 %9157
    %9159 = vrot.lane.b32.xlu0 %v9113, 122
    %v9160 = vpop.permute.xlu0 %9159
    %9161 = vrot.lane.b32.xlu0 %v9114, 122
    %v9162 = vpop.permute.xlu0 %9161
    %v9179 = vadd.f32 %v9082, %v9132
    %v9180 = vadd.f32 %v9083, %v9134
    %v9181 = vadd.f32 %v9084, %v9136
    %v9182 = vadd.f32 %v9085, %v9138
    %v9183 = vadd.f32 %v9086, %v9140
    %v9184 = vadd.f32 %v9087, %v9142
    %v9185 = vadd.f32 %v9088, %v9144
    %v9186 = vadd.f32 %v9089, %v9146
    %v9187 = vadd.f32 %v9090, %v9148
    %v9188 = vadd.f32 %v9091, %v9150
    %v9189 = vadd.f32 %v9092, %v9152
    %v9190 = vadd.f32 %v9093, %v9154
    %v9191 = vadd.f32 %v9094, %v9156
    %v9192 = vadd.f32 %v9095, %v9158
    %v9193 = vadd.f32 %v9096, %v9160
    %v9194 = vadd.f32 %v9097, %v9162
    %v9195 = vstv %s683
    %v9196 = vmul.f32 %v9195, %v741
    %v9197 = vmul.f32 %v9195, %v742
    %v9198 = vmul.f32 %v9195, %v743
    %v9199 = vmul.f32 %v9195, %v744
    %v9200 = vmul.f32 %v9195, %v745
    %v9201 = vmul.f32 %v9195, %v746
    %v9202 = vmul.f32 %v9195, %v747
    %v9203 = vmul.f32 %v9195, %v748
    %v9204 = vmul.f32 %v9195, %v749
    %v9205 = vmul.f32 %v9195, %v750
    %v9206 = vmul.f32 %v9195, %v751
    %v9207 = vmul.f32 %v9195, %v752
    %v9208 = vmul.f32 %v9195, %v753
    %v9209 = vmul.f32 %v9195, %v754
    %v9210 = vmul.f32 %v9195, %v755
    %v9211 = vmul.f32 %v9195, %v756
    %9228 = vrot.lane.b32.xlu0 %v9196, 122
    %v9229 = vpop.permute.xlu0 %9228
    %9230 = vrot.lane.b32.xlu0 %v9197, 122
    %v9231 = vpop.permute.xlu0 %9230
    %9232 = vrot.lane.b32.xlu0 %v9198, 122
    %v9233 = vpop.permute.xlu0 %9232
    %9234 = vrot.lane.b32.xlu0 %v9199, 122
    %v9235 = vpop.permute.xlu0 %9234
    %9236 = vrot.lane.b32.xlu0 %v9200, 122
    %v9237 = vpop.permute.xlu0 %9236
    %9238 = vrot.lane.b32.xlu0 %v9201, 122
    %v9239 = vpop.permute.xlu0 %9238
    %9240 = vrot.lane.b32.xlu0 %v9202, 122
    %v9241 = vpop.permute.xlu0 %9240
    %9242 = vrot.lane.b32.xlu0 %v9203, 122
    %v9243 = vpop.permute.xlu0 %9242
    %9244 = vrot.lane.b32.xlu0 %v9204, 122
    %v9245 = vpop.permute.xlu0 %9244
    %9246 = vrot.lane.b32.xlu0 %v9205, 122
    %v9247 = vpop.permute.xlu0 %9246
    %9248 = vrot.lane.b32.xlu0 %v9206, 122
    %v9249 = vpop.permute.xlu0 %9248
    %9250 = vrot.lane.b32.xlu0 %v9207, 122
    %v9251 = vpop.permute.xlu0 %9250
    %9252 = vrot.lane.b32.xlu0 %v9208, 122
    %v9253 = vpop.permute.xlu0 %9252
    %9254 = vrot.lane.b32.xlu0 %v9209, 122
    %v9255 = vpop.permute.xlu0 %9254
    %9256 = vrot.lane.b32.xlu0 %v9210, 122
    %v9257 = vpop.permute.xlu0 %9256
    %9258 = vrot.lane.b32.xlu0 %v9211, 122
    %v9259 = vpop.permute.xlu0 %9258
    %v9276 = vadd.f32 %v9179, %v9229
    %v9277 = vadd.f32 %v9180, %v9231
    %v9278 = vadd.f32 %v9181, %v9233
    %v9279 = vadd.f32 %v9182, %v9235
    %v9280 = vadd.f32 %v9183, %v9237
    %v9281 = vadd.f32 %v9184, %v9239
    %v9282 = vadd.f32 %v9185, %v9241
    %v9283 = vadd.f32 %v9186, %v9243
    %v9284 = vadd.f32 %v9187, %v9245
    %v9285 = vadd.f32 %v9188, %v9247
    %v9286 = vadd.f32 %v9189, %v9249
    %v9287 = vadd.f32 %v9190, %v9251
    %v9288 = vadd.f32 %v9191, %v9253
    %v9289 = vadd.f32 %v9192, %v9255
    %v9290 = vadd.f32 %v9193, %v9257
    %v9291 = vadd.f32 %v9194, %v9259
    %v9292 = vstv %s732
    %v9293 = vmul.f32 %v9292, %v763
    %v9294 = vmul.f32 %v9292, %v764
    %v9295 = vmul.f32 %v9292, %v765
    %v9296 = vmul.f32 %v9292, %v766
    %v9297 = vmul.f32 %v9292, %v767
    %v9298 = vmul.f32 %v9292, %v768
    %v9299 = vmul.f32 %v9292, %v769
    %v9300 = vmul.f32 %v9292, %v770
    %v9301 = vmul.f32 %v9292, %v771
    %v9302 = vmul.f32 %v9292, %v772
    %v9303 = vmul.f32 %v9292, %v773
    %v9304 = vmul.f32 %v9292, %v774
    %v9305 = vmul.f32 %v9292, %v775
    %v9306 = vmul.f32 %v9292, %v776
    %v9307 = vmul.f32 %v9292, %v777
    %v9308 = vmul.f32 %v9292, %v778
    %9325 = vrot.lane.b32.xlu0 %v9293, 122
    %v9326 = vpop.permute.xlu0 %9325
    %9327 = vrot.lane.b32.xlu0 %v9294, 122
    %v9328 = vpop.permute.xlu0 %9327
    %9329 = vrot.lane.b32.xlu0 %v9295, 122
    %v9330 = vpop.permute.xlu0 %9329
    %9331 = vrot.lane.b32.xlu0 %v9296, 122
    %v9332 = vpop.permute.xlu0 %9331
    %9333 = vrot.lane.b32.xlu0 %v9297, 122
    %v9334 = vpop.permute.xlu0 %9333
    %9335 = vrot.lane.b32.xlu0 %v9298, 122
    %v9336 = vpop.permute.xlu0 %9335
    %9337 = vrot.lane.b32.xlu0 %v9299, 122
    %v9338 = vpop.permute.xlu0 %9337
    %9339 = vrot.lane.b32.xlu0 %v9300, 122
    %v9340 = vpop.permute.xlu0 %9339
    %9341 = vrot.lane.b32.xlu0 %v9301, 122
    %v9342 = vpop.permute.xlu0 %9341
    %9343 = vrot.lane.b32.xlu0 %v9302, 122
    %v9344 = vpop.permute.xlu0 %9343
    %9345 = vrot.lane.b32.xlu0 %v9303, 122
    %v9346 = vpop.permute.xlu0 %9345
    %9347 = vrot.lane.b32.xlu0 %v9304, 122
    %v9348 = vpop.permute.xlu0 %9347
    %9349 = vrot.lane.b32.xlu0 %v9305, 122
    %v9350 = vpop.permute.xlu0 %9349
    %9351 = vrot.lane.b32.xlu0 %v9306, 122
    %v9352 = vpop.permute.xlu0 %9351
    %9353 = vrot.lane.b32.xlu0 %v9307, 122
    %v9354 = vpop.permute.xlu0 %9353
    %9355 = vrot.lane.b32.xlu0 %v9308, 122
    %v9356 = vpop.permute.xlu0 %9355
    %v9373 = vadd.f32 %v9276, %v9326
    %v9374 = vadd.f32 %v9277, %v9328
    %v9375 = vadd.f32 %v9278, %v9330
    %v9376 = vadd.f32 %v9279, %v9332
    %v9377 = vadd.f32 %v9280, %v9334
    %v9378 = vadd.f32 %v9281, %v9336
    %v9379 = vadd.f32 %v9282, %v9338
    %v9380 = vadd.f32 %v9283, %v9340
    %v9381 = vadd.f32 %v9284, %v9342
    %v9382 = vadd.f32 %v9285, %v9344
    %v9383 = vadd.f32 %v9286, %v9346
    %v9384 = vadd.f32 %v9287, %v9348
    %v9385 = vadd.f32 %v9288, %v9350
    %v9386 = vadd.f32 %v9289, %v9352
    %v9387 = vadd.f32 %v9290, %v9354
    %v9388 = vadd.f32 %v9291, %v9356
    %v9389 = vxor.u32 %v9373, 2147483648
    %v9390 = vxor.u32 %v9374, 2147483648
    %v9391 = vxor.u32 %v9375, 2147483648
    %v9392 = vxor.u32 %v9376, 2147483648
    %v9393 = vxor.u32 %v9377, 2147483648
    %v9394 = vxor.u32 %v9378, 2147483648
    %v9395 = vxor.u32 %v9379, 2147483648
    %v9396 = vxor.u32 %v9380, 2147483648
    %v9397 = vxor.u32 %v9381, 2147483648
    %v9398 = vxor.u32 %v9382, 2147483648
    %v9399 = vxor.u32 %v9383, 2147483648
    %v9400 = vxor.u32 %v9384, 2147483648
    %v9401 = vxor.u32 %v9385, 2147483648
    %v9402 = vxor.u32 %v9386, 2147483648
    %v9403 = vxor.u32 %v9387, 2147483648
    %v9404 = vxor.u32 %v9388, 2147483648
    %v9405 = vmul.f32 %v9389, 1.442695
    %v9406 = vpow.pop %v9405
    %v9407 = vmul.f32 %v9390, 1.442695
    %v9408 = vpow.pop %v9407
    %v9409 = vmul.f32 %v9391, 1.442695
    %v9410 = vpow.pop %v9409
    %v9411 = vmul.f32 %v9392, 1.442695
    %v9412 = vpow.pop %v9411
    %v9413 = vmul.f32 %v9393, 1.442695
    %v9414 = vpow.pop %v9413
    %v9415 = vmul.f32 %v9394, 1.442695
    %v9416 = vpow.pop %v9415
    %v9417 = vmul.f32 %v9395, 1.442695
    %v9418 = vpow.pop %v9417
    %v9419 = vmul.f32 %v9396, 1.442695
    %v9420 = vpow.pop %v9419
    %v9421 = vmul.f32 %v9397, 1.442695
    %v9422 = vpow.pop %v9421
    %v9423 = vmul.f32 %v9398, 1.442695
    %v9424 = vpow.pop %v9423
    %v9425 = vmul.f32 %v9399, 1.442695
    %v9426 = vpow.pop %v9425
    %v9427 = vmul.f32 %v9400, 1.442695
    %v9428 = vpow.pop %v9427
    %v9429 = vmul.f32 %v9401, 1.442695
    %v9430 = vpow.pop %v9429
    %v9431 = vmul.f32 %v9402, 1.442695
    %v9432 = vpow.pop %v9431
    %v9433 = vmul.f32 %v9403, 1.442695
    %v9434 = vpow.pop %v9433
    %v9435 = vmul.f32 %v9404, 1.442695
    %v9436 = vpow.pop %v9435
    %v9437 = vadd.f32 %v9406, 1.0
    %v9438 = vadd.f32 %v9408, 1.0
    %v9439 = vadd.f32 %v9410, 1.0
    %v9440 = vadd.f32 %v9412, 1.0
    %v9441 = vadd.f32 %v9414, 1.0
    %v9442 = vadd.f32 %v9416, 1.0
    %v9443 = vadd.f32 %v9418, 1.0
    %v9444 = vadd.f32 %v9420, 1.0
    %v9445 = vadd.f32 %v9422, 1.0
    %v9446 = vadd.f32 %v9424, 1.0
    %v9447 = vadd.f32 %v9426, 1.0
    %v9448 = vadd.f32 %v9428, 1.0
    %v9449 = vadd.f32 %v9430, 1.0
    %v9450 = vadd.f32 %v9432, 1.0
    %v9451 = vadd.f32 %v9434, 1.0
    %v9452 = vadd.f32 %v9436, 1.0
    %v9453 = vrcp.pop %v9437
    %v9454 = vmul.f32 1.0, %v9453
    %v9455 = vrcp.pop %v9438
    %v9456 = vmul.f32 1.0, %v9455
    %v9457 = vrcp.pop %v9439
    %v9458 = vmul.f32 1.0, %v9457
    %v9459 = vrcp.pop %v9440
    %v9460 = vmul.f32 1.0, %v9459
    %v9461 = vrcp.pop %v9441
    %v9462 = vmul.f32 1.0, %v9461
    %v9463 = vrcp.pop %v9442
    %v9464 = vmul.f32 1.0, %v9463
    %v9465 = vrcp.pop %v9443
    %v9466 = vmul.f32 1.0, %v9465
    %v9467 = vrcp.pop %v9444
    %v9468 = vmul.f32 1.0, %v9467
    %v9469 = vrcp.pop %v9445
    %v9470 = vmul.f32 1.0, %v9469
    %v9471 = vrcp.pop %v9446
    %v9472 = vmul.f32 1.0, %v9471
    %v9473 = vrcp.pop %v9447
    %v9474 = vmul.f32 1.0, %v9473
    %v9475 = vrcp.pop %v9448
    %v9476 = vmul.f32 1.0, %v9475
    %v9477 = vrcp.pop %v9449
    %v9478 = vmul.f32 1.0, %v9477
    %v9479 = vrcp.pop %v9450
    %v9480 = vmul.f32 1.0, %v9479
    %v9481 = vrcp.pop %v9451
    %v9482 = vmul.f32 1.0, %v9481
    %v9483 = vrcp.pop %v9452
    %v9484 = vmul.f32 1.0, %v9483
    %vm9485 = vcmask 123904
    %9486 = vst.msk [vmem:[#allocation4] sm:$0x3] %vm9485, %v9454
    %v9489 = vunpack.c.l.s4 1983009808
    %v9490 = vunpack.c.0.s8 %v9489
    %v9491 = vlaneseq
    %v9492 = vshrl.u32 %v9491, 7
    %v9493 = vsub.s32 %v9490, %v9492
    %v9494 = vrot.slane %v9456, %v9493
    %9495 = vrot.lane.b32.xlu0 %v9494, 16
    %v9496 = vpop.permute.xlu0 %9495
    %vm9498 = vcmask 255104
    %9499 = vst.msk [vmem:[#allocation4] sm:$0x3] %vm9498, %v9496
    %v9502 = vunpack.c.l.s4 1983009808
    %v9503 = vunpack.c.0.s8 %v9502
    %v9504 = vlaneseq
    %v9505 = vshrl.u32 %v9504, 7
    %v9506 = vsub.s32 %v9503, %v9505
    %v9507 = vrot.slane %v9458, %v9506
    %9508 = vrot.lane.b32.xlu0 %v9507, 32
    %v9509 = vpop.permute.xlu0 %9508
    %vm9511 = vcmask 386304
    %9512 = vst.msk [vmem:[#allocation4] sm:$0x3] %vm9511, %v9509
    %v9515 = vunpack.c.l.s4 1983009808
    %v9516 = vunpack.c.0.s8 %v9515
    %v9517 = vlaneseq
    %v9518 = vshrl.u32 %v9517, 7
    %v9519 = vsub.s32 %v9516, %v9518
    %v9520 = vrot.slane %v9460, %v9519
    %9521 = vrot.lane.b32.xlu0 %v9520, 48
    %v9522 = vpop.permute.xlu0 %9521
    %vm9524 = vcmask 517504
    %9525 = vst.msk [vmem:[#allocation4] sm:$0x3] %vm9524, %v9522
    %v9528 = vunpack.c.l.s4 1983009808
    %v9529 = vunpack.c.0.s8 %v9528
    %v9530 = vlaneseq
    %v9531 = vshrl.u32 %v9530, 7
    %v9532 = vsub.s32 %v9529, %v9531
    %v9533 = vrot.slane %v9462, %v9532
    %9534 = vrot.lane.b32.xlu0 %v9533, 64
    %v9535 = vpop.permute.xlu0 %9534
    %vm9537 = vcmask 648704
    %9538 = vst.msk [vmem:[#allocation4] sm:$0x3] %vm9537, %v9535
    %v9541 = vunpack.c.l.s4 1983009808
    %v9542 = vunpack.c.0.s8 %v9541
    %v9543 = vlaneseq
    %v9544 = vshrl.u32 %v9543, 7
    %v9545 = vsub.s32 %v9542, %v9544
    %v9546 = vrot.slane %v9464, %v9545
    %9547 = vrot.lane.b32.xlu0 %v9546, 80
    %v9548 = vpop.permute.xlu0 %9547
    %vm9550 = vcmask 779904
    %9551 = vst.msk [vmem:[#allocation4] sm:$0x3] %vm9550, %v9548
    %v9554 = vunpack.c.l.s4 1983009808
    %v9555 = vunpack.c.0.s8 %v9554
    %v9556 = vlaneseq
    %v9557 = vshrl.u32 %v9556, 7
    %v9558 = vsub.s32 %v9555, %v9557
    %v9559 = vrot.slane %v9466, %v9558
    %9560 = vrot.lane.b32.xlu0 %v9559, 96
    %v9561 = vpop.permute.xlu0 %9560
    %vm9563 = vcmask 911104
    %9564 = vst.msk [vmem:[#allocation4] sm:$0x3] %vm9563, %v9561
    %v9567 = vunpack.c.l.s4 1983009808
    %v9568 = vunpack.c.0.s8 %v9567
    %v9569 = vlaneseq
    %v9570 = vshrl.u32 %v9569, 7
    %v9571 = vsub.s32 %v9568, %v9570
    %v9572 = vrot.slane %v9468, %v9571
    %9573 = vrot.lane.b32.xlu0 %v9572, 112
    %v9574 = vpop.permute.xlu0 %9573
    %vm9576 = vcmask 1042304
    %9577 = vst.msk [vmem:[#allocation4] sm:$0x3] %vm9576, %v9574
    %9578 = vst.msk [vmem:[#allocation4 + $0x2] sm:$0x3] %vm9485, %v9470
    %v9581 = vunpack.c.l.s4 1983009808
    %v9582 = vunpack.c.0.s8 %v9581
    %v9583 = vlaneseq
    %v9584 = vshrl.u32 %v9583, 7
    %v9585 = vsub.s32 %v9582, %v9584
    %v9586 = vrot.slane %v9472, %v9585
    %9587 = vrot.lane.b32.xlu0 %v9586, 16
    %v9588 = vpop.permute.xlu0 %9587
    %9590 = vst.msk [vmem:[#allocation4 + $0x2] sm:$0x3] %vm9498, %v9588
    %v9593 = vunpack.c.l.s4 1983009808
    %v9594 = vunpack.c.0.s8 %v9593
    %v9595 = vlaneseq
    %v9596 = vshrl.u32 %v9595, 7
    %v9597 = vsub.s32 %v9594, %v9596
    %v9598 = vrot.slane %v9474, %v9597
    %9599 = vrot.lane.b32.xlu0 %v9598, 32
    %v9600 = vpop.permute.xlu0 %9599
    %9602 = vst.msk [vmem:[#allocation4 + $0x2] sm:$0x3] %vm9511, %v9600
    %v9605 = vunpack.c.l.s4 1983009808
    %v9606 = vunpack.c.0.s8 %v9605
    %v9607 = vlaneseq
    %v9608 = vshrl.u32 %v9607, 7
    %v9609 = vsub.s32 %v9606, %v9608
    %v9610 = vrot.slane %v9476, %v9609
    %9611 = vrot.lane.b32.xlu0 %v9610, 48
    %v9612 = vpop.permute.xlu0 %9611
    %9614 = vst.msk [vmem:[#allocation4 + $0x2] sm:$0x3] %vm9524, %v9612
    %v9617 = vunpack.c.l.s4 1983009808
    %v9618 = vunpack.c.0.s8 %v9617
    %v9619 = vlaneseq
    %v9620 = vshrl.u32 %v9619, 7
    %v9621 = vsub.s32 %v9618, %v9620
    %v9622 = vrot.slane %v9478, %v9621
    %9623 = vrot.lane.b32.xlu0 %v9622, 64
    %v9624 = vpop.permute.xlu0 %9623
    %9626 = vst.msk [vmem:[#allocation4 + $0x2] sm:$0x3] %vm9537, %v9624
    %v9629 = vunpack.c.l.s4 1983009808
    %v9630 = vunpack.c.0.s8 %v9629
    %v9631 = vlaneseq
    %v9632 = vshrl.u32 %v9631, 7
    %v9633 = vsub.s32 %v9630, %v9632
    %v9634 = vrot.slane %v9480, %v9633
    %9635 = vrot.lane.b32.xlu0 %v9634, 80
    %v9636 = vpop.permute.xlu0 %9635
    %9638 = vst.msk [vmem:[#allocation4 + $0x2] sm:$0x3] %vm9550, %v9636
    %v9641 = vunpack.c.l.s4 1983009808
    %v9642 = vunpack.c.0.s8 %v9641
    %v9643 = vlaneseq
    %v9644 = vshrl.u32 %v9643, 7
    %v9645 = vsub.s32 %v9642, %v9644
    %v9646 = vrot.slane %v9482, %v9645
    %9647 = vrot.lane.b32.xlu0 %v9646, 96
    %v9648 = vpop.permute.xlu0 %9647
    %9650 = vst.msk [vmem:[#allocation4 + $0x2] sm:$0x3] %vm9563, %v9648
    %v9653 = vunpack.c.l.s4 1983009808
    %v9654 = vunpack.c.0.s8 %v9653
    %v9655 = vlaneseq
    %v9656 = vshrl.u32 %v9655, 7
    %v9657 = vsub.s32 %v9654, %v9656
    %v9658 = vrot.slane %v9484, %v9657
    %9659 = vrot.lane.b32.xlu0 %v9658, 112
    %v9660 = vpop.permute.xlu0 %9659
    %9662 = vst.msk [vmem:[#allocation4 + $0x2] sm:$0x3] %vm9576, %v9660
    %v9663 = vld [vmem:[#allocation4] sm:$0xf]
    %v9665 = vlaneseq
    %v9666 = vshrl.u32 %v9665, 7
    %v9667 = vsub.s32 0, %v9666
    %v9668 = vrot.slane %v9663, %v9667
    %v9669 = vlaneseq
    %v9670 = vshrl.u32 %v9669, 7
    %v9671 = vsub.s32 2, %v9670
    %v9672 = vrot.slane %v9663, %v9671
    %v9675 = vlaneseq
    %v9676 = vshrl.u32 %v9675, 7
    %v9677 = vsub.s32 0, %v9676
    %v9678 = vrot.slane %v9668, %v9677
    %v9679 = vlaneseq
    %v9680 = vshrl.u32 %v9679, 7
    %v9681 = vsub.s32 0, %v9680
    %v9682 = vrot.slane %v9672, %v9681
    %v9683 = vmul.f32 %v323, %v9678
    %v9684 = vmul.f32 %v324, %v9682
    %v9685 = vmul.f32 %v325, %v9678
    %v9686 = vmul.f32 %v326, %v9682
    %v9687 = vmul.f32 %v327, %v9678
    %v9688 = vmul.f32 %v328, %v9682
    %v9689 = vmul.f32 %v329, %v9678
    %v9690 = vmul.f32 %v330, %v9682
    %9691 = vst [vmem:[#allocation11] sm:$0xff] %v9683
    %9692 = vst [vmem:[#allocation11 + $0x8] sm:$0xff] %v9684
    %9693 = vst [vmem:[#allocation11 + $0x10] sm:$0xff] %v9685
    %9694 = vst [vmem:[#allocation11 + $0x18] sm:$0xff] %v9686
    %9695 = vst [vmem:[#allocation11 + $0x20] sm:$0xff] %v9687
    %9696 = vst [vmem:[#allocation11 + $0x28] sm:$0xff] %v9688
    %9697 = vst [vmem:[#allocation11 + $0x30] sm:$0xff] %v9689
    %9698 = vst [vmem:[#allocation11 + $0x38] sm:$0xff] %v9690
    %v9699 = vlaneseq
    %v9700 = vshrl.u32 %v9699, 7
    %v9701 = vsub.s32 1, %v9700
    %v9702 = vrot.slane %v9663, %v9701
    %v9703 = vlaneseq
    %v9704 = vshrl.u32 %v9703, 7
    %v9705 = vsub.s32 3, %v9704
    %v9706 = vrot.slane %v9663, %v9705
    %v9709 = vlaneseq
    %v9710 = vshrl.u32 %v9709, 7
    %v9711 = vsub.s32 1, %v9710
    %v9712 = vrot.slane %v9702, %v9711
    %v9713 = vlaneseq
    %v9714 = vshrl.u32 %v9713, 7
    %v9715 = vsub.s32 1, %v9714
    %v9716 = vrot.slane %v9706, %v9715
    %v9717 = vmul.f32 %v331, %v9712
    %v9718 = vmul.f32 %v332, %v9716
    %v9719 = vmul.f32 %v333, %v9712
    %v9720 = vmul.f32 %v334, %v9716
    %v9721 = vmul.f32 %v335, %v9712
    %v9722 = vmul.f32 %v336, %v9716
    %v9723 = vmul.f32 %v337, %v9712
    %v9724 = vmul.f32 %v338, %v9716
    %s9725 = scalar_lea.vmem [#allocation11], 64
    %9726 = vst [vmem:[%s9725] sm:$0xff] %v9717
    %9727 = vst [vmem:[%s9725 + $0x8] sm:$0xff] %v9718
    %9728 = vst [vmem:[%s9725 + $0x10] sm:$0xff] %v9719
    %9729 = vst [vmem:[%s9725 + $0x18] sm:$0xff] %v9720
    %9730 = vst [vmem:[%s9725 + $0x20] sm:$0xff] %v9721
    %9731 = vst [vmem:[%s9725 + $0x28] sm:$0xff] %v9722
    %9732 = vst [vmem:[%s9725 + $0x30] sm:$0xff] %v9723
    %9733 = vst [vmem:[%s9725 + $0x38] sm:$0xff] %v9724
    // Predicated region
    $region30: #{tpu_custom_call.1} parent=1 // pred_check
      _
    $region31: #{tpu_custom_call.1} parent=1 // pred_check_branch
      %9735 = sbr.rel (0) target = $region33
    $region32: #{tpu_custom_call.1} parent=1 // pred_region
      %s9737 = ssub.s32 2048, 2048
      %9738 = vsyncadd [#allocation8], %s9737
      %s9739 = sshll.u32 [#allocation11], 4
      %s9740 = int_to_ptr.vmem [resolvable:$true] %s9739
      %9745 = dma.vmem_to_hbm [thread:$0]  %s9740, 2048, %s5, [#allocation8], 256, 256, 16
    $region33: #{tpu_custom_call.1} parent=1 // pred_fallthru
      _
    // Predicated region
    $region34: #{tpu_custom_call.1} parent=1 // pred_check
      _
    $region35: #{tpu_custom_call.1} parent=1 // pred_check_branch
      %9747 = sbr.rel (0) target = $region37
    $region36: #{tpu_custom_call.1} parent=1 // pred_region
      %9748 = dma.done [#allocation8], 2048
    $region37: #{tpu_custom_call.1} parent=1 // pred_fallthru
      _
    %9749 = vsyncpa [#allocation7], 1
    %9750 = vsyncpa [#allocation8], 1
    %9751 = vsyncpa [#allocation9], 1

</llo_original>
